<compile_context>
chip_gen: v6e
topology: v6e:2x2x1
jax: 0.10.0
libtpu: 0.0.40
codegen_flags: <defaults>
</compile_context>

<pallas_src>
import jax
import jax.numpy as jnp
from jax.experimental import pallas as pl
from jax.experimental.pallas import tpu as pltpu

_WDTYPE = jnp.bfloat16   # MXU operand dtype (f32 accumulate everywhere)


# ----------------------------------------------------------------------------
# Weight preparation glue (tiny arrays; constant-folded under jit).
# Activation layout everywhere: 2-D (H, W*C): rows on sublanes, W*C on lanes.
# ----------------------------------------------------------------------------
def _prep_conv(w_oikk, b, W, out_lanes=None):
    """Same-padding KxK / stride-1 conv as K banded matrices over UNPADDED width.

    Width padding is folded into the band (so only rows need explicit zero
    padding).  Returns bands (K, W*Cin, OL) [bf16] and bias (1, OL) [f32],
    where OL >= W*Cout (zero-padded for a lane-dense output store)."""
    Cout, Cin, K, _ = w_oikk.shape
    P = K // 2
    wk = jnp.transpose(w_oikk, (2, 3, 1, 0)).astype(jnp.float32)  # (K,K,Cin,Cout)
    bands = []
    for kh in range(K):
        bk = jnp.zeros((W * Cin, W * Cout), jnp.float32)
        for kw in range(K):
            off = kw - P                           # input col = output col + off
            lo, hi = max(0, -off), W - max(0, off)
            idx = jnp.arange(lo, hi)
            s = jnp.zeros((W, W), jnp.float32).at[idx + off, idx].set(1.0)
            bk = bk + jnp.kron(s, wk[kh, kw])
        bands.append(bk)
    bands = jnp.stack(bands)
    bias = jnp.tile(b.astype(jnp.float32), W).reshape(1, W * Cout)
    if out_lanes is not None and out_lanes > W * Cout:
        pad = out_lanes - W * Cout
        bands = jnp.pad(bands, ((0, 0), (0, 0), (0, pad)))
        bias = jnp.pad(bias, ((0, 0), (0, pad)))
    return bands.astype(_WDTYPE), bias


def _prep_pool(H, W, C):
    """2x2 / stride-2 max-pool as exact 0/1 selection matmuls (bf16)."""
    i = jnp.arange(H // 2)
    le = jnp.zeros((H // 2, H), jnp.float32).at[i, 2 * i].set(1.0)
    lo = jnp.zeros((H // 2, H), jnp.float32).at[i, 2 * i + 1].set(1.0)
    j = jnp.arange(W // 2)
    se = jnp.zeros((W, W // 2), jnp.float32).at[2 * j, j].set(1.0)
    so = jnp.zeros((W, W // 2), jnp.float32).at[2 * j + 1, j].set(1.0)
    eye_c = jnp.eye(C, dtype=jnp.float32)
    return (le.astype(_WDTYPE), lo.astype(_WDTYPE),
            jnp.kron(se, eye_c).astype(_WDTYPE),
            jnp.kron(so, eye_c).astype(_WDTYPE))


def _prep_tconv(w_iokk, b, H, W, stride):
    """ConvTranspose2d(stride, padding=0) as per-kh (row-scatter, weight) pairs.

    Returns B (K, W*Cin, Wo*Cout) [bf16], R (K, Ho, H) 0/1 row scatter [bf16],
    bias (1, Wo*Cout) [f32]."""
    Cin, Cout, K, _ = w_iokk.shape
    Ho, Wo = (H - 1) * stride + K, (W - 1) * stride + K
    w_idx, h_idx = jnp.arange(W), jnp.arange(H)
    bs, rs = [], []
    for kh in range(K):
        bk = jnp.zeros((W * Cin, Wo * Cout), jnp.float32)
        for kw in range(K):
            s = jnp.zeros((W, Wo), jnp.float32).at[w_idx, stride * w_idx + kw].set(1.0)
            bk = bk + jnp.kron(s, w_iokk[:, :, kh, kw].astype(jnp.float32))
        bs.append(bk)
        rs.append(jnp.zeros((Ho, H), jnp.float32)
                  .at[stride * h_idx + kh, h_idx].set(1.0))
    bias = jnp.tile(b.astype(jnp.float32), Wo).reshape(1, Wo * Cout)
    return (jnp.stack(bs).astype(_WDTYPE),
            jnp.stack(rs).astype(_WDTYPE), bias)


# ----------------------------------------------------------------------------
# In-kernel building blocks (plain 2-D MXU matmuls; all slices lane-aligned).
# ----------------------------------------------------------------------------
def _conv_pre(xp_ref, bands_ref, bias_ref, H, K):
    """KxK/stride-1 conv pre-activation on a row-padded (H+K-1, W*Cin) ref.

    One full-width, lane-aligned bf16 matmul per kh.  Returns (H, OL) f32."""
    acc = None
    for kh in range(K):
        d = jnp.dot(xp_ref[kh:kh + H, :], bands_ref[kh],
                    preferred_element_type=jnp.float32)
        acc = d if acc is None else acc + d
    return acc + bias_ref[...]


def _maxpool(y, le_ref, lo_ref, ge_ref, go_ref):
    """Exact 2x2/stride-2 max-pool of y (H, W*C) via bf16 0/1 selection dots."""
    yb = y.astype(_WDTYPE)
    rows = jnp.maximum(
        jnp.dot(le_ref[...], yb, preferred_element_type=jnp.float32),
        jnp.dot(lo_ref[...], yb, preferred_element_type=jnp.float32))
    rb = rows.astype(_WDTYPE)     # lossless: rows are selected bf16 values
    return jnp.maximum(
        jnp.dot(rb, ge_ref[...], preferred_element_type=jnp.float32),
        jnp.dot(rb, go_ref[...], preferred_element_type=jnp.float32))


def _tconv_relu(x, b_ref, r_ref, bias_ref, K):
    """relu(ConvTranspose2d(stride=2, padding=0)) of x (H, W*Cin).

    0/1 row-scatter (exact in bf16) first, then the bf16 weight matmul, so the
    only rounding is the usual activation/weight bf16 cast."""
    xb = x.astype(_WDTYPE)
    out = None
    for kh in range(K):
        xs = jnp.dot(r_ref[kh], xb, preferred_element_type=jnp.float32)
        o = jnp.dot(xs.astype(_WDTYPE), b_ref[kh],
                    preferred_element_type=jnp.float32)
        out = o if out is None else out + o
    return jnp.maximum(out + bias_ref[...], 0.0)


def _store_padded(ref, y):
    """Write y into the interior rows of a row-padded scratch; (re)zero the two
    border rows with cheap aligned 1-row stores (keeps the kernel correct when
    the batch grid is sharded across TensorCores)."""
    H = y.shape[0]
    zrow = jnp.zeros((1, ref.shape[1]), ref.dtype)
    ref[0:1, :] = zrow
    ref[H + 1:H + 2, :] = zrow
    ref[1:1 + H, :] = y.astype(ref.dtype)


# ----------------------------------------------------------------------------
# Fused forward pass: ONE pallas_call, grid over batch (parallel for v7x 2 TCs).
# ----------------------------------------------------------------------------
def conv_denoiser_forward(x_nchw, params):
    N, Cin0, H0, W0 = x_nchw.shape
    assert H0 % 8 == 0 and W0 % 8 == 0, "three 2x2 pools need H,W % 8 == 0"

    C1 = params["conv1_w"].shape[0]
    C2 = params["conv2_w"].shape[0]
    C3 = params["conv3_w"].shape[0]
    Ct3 = params["tconv3_w"].shape[1]
    Co = params["convout_w"].shape[0]
    Kt1 = params["tconv1_w"].shape[2]
    Kt2 = params["tconv2_w"].shape[2]
    Kt3 = params["tconv3_w"].shape[2]

    H1, W1 = H0, W0
    H2, W2 = H1 // 2, W1 // 2
    H3, W3 = H2 // 2, W2 // 2
    H4, W4 = H3 // 2, W3 // 2
    Ht1, Wt1 = (H4 - 1) * 2 + Kt1, (W4 - 1) * 2 + Kt1
    Ht2, Wt2 = (Ht1 - 1) * 2 + Kt2, (Wt1 - 1) * 2 + Kt2
    Ht3, Wt3 = (Ht2 - 1) * 2 + Kt3, (Wt2 - 1) * 2 + Kt3
    OUT_C = Wt3 * Co
    OUT_LANES = 128 * pl.cdiv(OUT_C, 128)          # lane-dense final store

    # ---- entry glue: NCHW -> channels-last rows, 1 zero row top/bottom, bf16
    #      (width padding is folded into the banded conv weights) ----
    x = jnp.transpose(x_nchw, (0, 2, 3, 1)).reshape(N, H0, W0 * Cin0)
    x = jnp.pad(x, ((0, 0), (1, 1), (0, 0))).astype(_WDTYPE)

    # ---- weight prep (constant-folded under jit) ----
    c1m, c1b = _prep_conv(params["conv1_w"], params["conv1_b"], W1)
    l1e, l1o, g1e, g1o = _prep_pool(H1, W1, C1)
    c2m, c2b = _prep_conv(params["conv2_w"], params["conv2_b"], W2)
    l2e, l2o, g2e, g2o = _prep_pool(H2, W2, C2)
    c3m, c3b = _prep_conv(params["conv3_w"], params["conv3_b"], W3)
    l3e, l3o, g3e, g3o = _prep_pool(H3, W3, C3)
    t1w, t1r, t1b = _prep_tconv(params["tconv1_w"], params["tconv1_b"], H4, W4, 2)
    t2w, t2r, t2b = _prep_tconv(params["tconv2_w"], params["tconv2_b"], Ht1, Wt1, 2)
    t3w, t3r, t3b = _prep_tconv(params["tconv3_w"], params["tconv3_b"], Ht2, Wt2, 2)
    cow, cob = _prep_conv(params["convout_w"], params["convout_b"], Wt3,
                          out_lanes=OUT_LANES)

    weights = (c1m, c1b, l1e, l1o, g1e, g1o,
               c2m, c2b, l2e, l2o, g2e, g2o,
               c3m, c3b, l3e, l3o, g3e, g3o,
               t1w, t1r, t1b, t2w, t2r, t2b, t3w, t3r, t3b,
               cow, cob)

    def kernel(x_ref,
               c1m_r, c1b_r, l1e_r, l1o_r, g1e_r, g1o_r,
               c2m_r, c2b_r, l2e_r, l2o_r, g2e_r, g2o_r,
               c3m_r, c3b_r, l3e_r, l3o_r, g3e_r, g3o_r,
               t1w_r, t1r_r, t1b_r, t2w_r, t2r_r, t2b_r, t3w_r, t3r_r, t3b_r,
               cow_r, cob_r,
               o_ref, xp2, xp3, xpo):
        # ---- encoder: conv + relu with fused 2x2 max-pool, x3 ----
        y = jnp.maximum(_conv_pre(x_ref, c1m_r, c1b_r, H1, 3), 0.0)
        y = _maxpool(y, l1e_r, l1o_r, g1e_r, g1o_r)            # (H2, W2*C1)
        _store_padded(xp2, y)
        y = jnp.maximum(_conv_pre(xp2, c2m_r, c2b_r, H2, 3), 0.0)
        y = _maxpool(y, l2e_r, l2o_r, g2e_r, g2o_r)            # (H3, W3*C2)
        _store_padded(xp3, y)
        y = jnp.maximum(_conv_pre(xp3, c3m_r, c3b_r, H3, 3), 0.0)
        y = _maxpool(y, l3e_r, l3o_r, g3e_r, g3o_r)            # (H4, W4*C3)
        # ---- decoder: stride-2 transposed convs + relu ----
        y = _tconv_relu(y, t1w_r, t1r_r, t1b_r, Kt1)           # (Ht1, Wt1*8)
        y = _tconv_relu(y, t2w_r, t2r_r, t2b_r, Kt2)           # (Ht2, Wt2*16)
        y = _tconv_relu(y, t3w_r, t3r_r, t3b_r, Kt3)           # (Ht3, Wt3*32)
        # ---- conv_out + sigmoid, lane-dense (OUT_LANES) unmasked store ----
        _store_padded(xpo, y)
        pre = _conv_pre(xpo, cow_r, cob_r, Ht3, 3)             # (Ht3, OUT_LANES)
        o_ref[...] = 1.0 / (1.0 + jnp.exp(-pre))

    vmem = pl.BlockSpec(memory_space=pltpu.MemorySpace.VMEM)
    out = pl.pallas_call(
        kernel,
        out_shape=jax.ShapeDtypeStruct((N, Ht3, OUT_LANES), jnp.float32),
        grid=(N,),
        in_specs=[pl.BlockSpec((None, H0 + 2, W0 * Cin0),
                               lambda n: (n, 0, 0))] + [vmem] * len(weights),
        out_specs=pl.BlockSpec((None, Ht3, OUT_LANES), lambda n: (n, 0, 0)),
        scratch_shapes=[
            pltpu.VMEM((H2 + 2, W2 * C1), _WDTYPE),     # conv2 row-padded input
            pltpu.VMEM((H3 + 2, W3 * C2), _WDTYPE),     # conv3 row-padded input
            pltpu.VMEM((Ht3 + 2, Wt3 * Ct3), _WDTYPE),  # conv_out row-padded input
        ],
        compiler_params=pltpu.CompilerParams(
            dimension_semantics=("parallel",),    # shard batch across v7x TCs
            vmem_limit_bytes=32 * 1024 * 1024),
    )(x, *weights)

    # ---- exit glue: strip lane padding, back to NCHW ----
    out = out[:, :, :OUT_C].reshape(N, Ht3, Wt3, Co)
    return jnp.transpose(out, (0, 3, 1, 2))


# ----------------------------------------------------------------------------
# Deterministic synthetic parameters (shapes from ConvDenoiser.__init__)
# ----------------------------------------------------------------------------
def init_params(key):
    shapes = {
        "conv1_w": (32, 3, 3, 3),   "conv1_b": (32,),
        "conv2_w": (16, 32, 3, 3),  "conv2_b": (16,),
        "conv3_w": (8, 16, 3, 3),   "conv3_b": (8,),
        "tconv1_w": (8, 8, 3, 3),   "tconv1_b": (8,),    # (Cin, Cout, K, K)
        "tconv2_w": (8, 16, 2, 2),  "tconv2_b": (16,),
        "tconv3_w": (16, 32, 2, 2), "tconv3_b": (32,),
        "convout_w": (3, 32, 3, 3), "convout_b": (3,),
    }
    names = sorted(shapes)
    keys = jax.random.split(key, len(names))
    return {name: 0.1 * jax.random.normal(k, shapes[name], jnp.float32)
            for name, k in zip(names, keys)}


if __name__ == "__main__":
    key = jax.random.PRNGKey(0)
    pkey, xkey = jax.random.split(key)
    params = init_params(pkey)

    # Small NCHW input consistent with the module (3 input channels).
    x = jax.random.uniform(xkey, (2, 3, 16, 16), jnp.float32)

    fwd = jax.jit(lambda inp: conv_denoiser_forward(inp, params))
    out = fwd(x)
    jax.block_until_ready(out)

    # 16 -> pool^3 -> 2 -> tconv(k3,s2) -> 5 -> tconv(k2,s2) -> 10 -> 20 -> conv_out
    assert out.shape == (2, 3, 20, 20), out.shape
    assert out.dtype == jnp.float32
    assert bool(jnp.all(jnp.isfinite(out)))
    print("KERNEL_OK")
</pallas_src>

<mosaic_0001>
module attributes {stable_mosaic.version = 11 : i64} {
  func.func @kernel(%arg0: i32, %arg1: memref<1x18x48xbf16, #tpu.memory_space<vmem>>, %arg2: memref<3x48x512xbf16, #tpu.memory_space<vmem>>, %arg3: memref<1x512xf32, #tpu.memory_space<vmem>>, %arg4: memref<8x16xbf16, #tpu.memory_space<vmem>>, %arg5: memref<8x16xbf16, #tpu.memory_space<vmem>>, %arg6: memref<512x256xbf16, #tpu.memory_space<vmem>>, %arg7: memref<512x256xbf16, #tpu.memory_space<vmem>>, %arg8: memref<3x256x128xbf16, #tpu.memory_space<vmem>>, %arg9: memref<1x128xf32, #tpu.memory_space<vmem>>, %arg10: memref<4x8xbf16, #tpu.memory_space<vmem>>, %arg11: memref<4x8xbf16, #tpu.memory_space<vmem>>, %arg12: memref<128x64xbf16, #tpu.memory_space<vmem>>, %arg13: memref<128x64xbf16, #tpu.memory_space<vmem>>, %arg14: memref<3x64x32xbf16, #tpu.memory_space<vmem>>, %arg15: memref<1x32xf32, #tpu.memory_space<vmem>>, %arg16: memref<2x4xbf16, #tpu.memory_space<vmem>>, %arg17: memref<2x4xbf16, #tpu.memory_space<vmem>>, %arg18: memref<32x16xbf16, #tpu.memory_space<vmem>>, %arg19: memref<32x16xbf16, #tpu.memory_space<vmem>>, %arg20: memref<3x16x40xbf16, #tpu.memory_space<vmem>>, %arg21: memref<3x5x2xbf16, #tpu.memory_space<vmem>>, %arg22: memref<1x40xf32, #tpu.memory_space<vmem>>, %arg23: memref<2x40x160xbf16, #tpu.memory_space<vmem>>, %arg24: memref<2x10x5xbf16, #tpu.memory_space<vmem>>, %arg25: memref<1x160xf32, #tpu.memory_space<vmem>>, %arg26: memref<2x160x640xbf16, #tpu.memory_space<vmem>>, %arg27: memref<2x20x10xbf16, #tpu.memory_space<vmem>>, %arg28: memref<1x640xf32, #tpu.memory_space<vmem>>, %arg29: memref<3x640x128xbf16, #tpu.memory_space<vmem>>, %arg30: memref<1x128xf32, #tpu.memory_space<vmem>>, %arg31: memref<1x20x128xf32, #tpu.memory_space<vmem>>, %arg32: memref<10x256xbf16, #tpu.memory_space<vmem>>, %arg33: memref<6x64xbf16, #tpu.memory_space<vmem>>, %arg34: memref<22x640xbf16, #tpu.memory_space<vmem>>) attributes {dimension_semantics = [#tpu.dimension_semantics<parallel>], iteration_bounds = array<i64: 2>, scalar_prefetch = 0 : i64, scratch_operands = 3 : i64, tpu.core_type = #tpu.core_type<tc>, window_params = [{transform_indices = @transform_0, window_bounds = array<i64: 1, 18, 48>}, {pipeline_mode = #tpu.pipeline_mode<synchronous>, transform_indices = @transform_1, window_bounds = array<i64: 3, 48, 512>}, {pipeline_mode = #tpu.pipeline_mode<synchronous>, transform_indices = @transform_2, window_bounds = array<i64: 1, 512>}, {pipeline_mode = #tpu.pipeline_mode<synchronous>, transform_indices = @transform_3, window_bounds = array<i64: 8, 16>}, {pipeline_mode = #tpu.pipeline_mode<synchronous>, transform_indices = @transform_4, window_bounds = array<i64: 8, 16>}, {pipeline_mode = #tpu.pipeline_mode<synchronous>, transform_indices = @transform_5, window_bounds = array<i64: 512, 256>}, {pipeline_mode = #tpu.pipeline_mode<synchronous>, transform_indices = @transform_6, window_bounds = array<i64: 512, 256>}, {pipeline_mode = #tpu.pipeline_mode<synchronous>, transform_indices = @transform_7, window_bounds = array<i64: 3, 256, 128>}, {pipeline_mode = #tpu.pipeline_mode<synchronous>, transform_indices = @transform_8, window_bounds = array<i64: 1, 128>}, {pipeline_mode = #tpu.pipeline_mode<synchronous>, transform_indices = @transform_9, window_bounds = array<i64: 4, 8>}, {pipeline_mode = #tpu.pipeline_mode<synchronous>, transform_indices = @transform_10, window_bounds = array<i64: 4, 8>}, {pipeline_mode = #tpu.pipeline_mode<synchronous>, transform_indices = @transform_11, window_bounds = array<i64: 128, 64>}, {pipeline_mode = #tpu.pipeline_mode<synchronous>, transform_indices = @transform_12, window_bounds = array<i64: 128, 64>}, {pipeline_mode = #tpu.pipeline_mode<synchronous>, transform_indices = @transform_13, window_bounds = array<i64: 3, 64, 32>}, {pipeline_mode = #tpu.pipeline_mode<synchronous>, transform_indices = @transform_14, window_bounds = array<i64: 1, 32>}, {pipeline_mode = #tpu.pipeline_mode<synchronous>, transform_indices = @transform_15, window_bounds = array<i64: 2, 4>}, {pipeline_mode = #tpu.pipeline_mode<synchronous>, transform_indices = @transform_16, window_bounds = array<i64: 2, 4>}, {pipeline_mode = #tpu.pipeline_mode<synchronous>, transform_indices = @transform_17, window_bounds = array<i64: 32, 16>}, {pipeline_mode = #tpu.pipeline_mode<synchronous>, transform_indices = @transform_18, window_bounds = array<i64: 32, 16>}, {pipeline_mode = #tpu.pipeline_mode<synchronous>, transform_indices = @transform_19, window_bounds = array<i64: 3, 16, 40>}, {pipeline_mode = #tpu.pipeline_mode<synchronous>, transform_indices = @transform_20, window_bounds = array<i64: 3, 5, 2>}, {pipeline_mode = #tpu.pipeline_mode<synchronous>, transform_indices = @transform_21, window_bounds = array<i64: 1, 40>}, {pipeline_mode = #tpu.pipeline_mode<synchronous>, transform_indices = @transform_22, window_bounds = array<i64: 2, 40, 160>}, {pipeline_mode = #tpu.pipeline_mode<synchronous>, transform_indices = @transform_23, window_bounds = array<i64: 2, 10, 5>}, {pipeline_mode = #tpu.pipeline_mode<synchronous>, transform_indices = @transform_24, window_bounds = array<i64: 1, 160>}, {pipeline_mode = #tpu.pipeline_mode<synchronous>, transform_indices = @transform_25, window_bounds = array<i64: 2, 160, 640>}, {pipeline_mode = #tpu.pipeline_mode<synchronous>, transform_indices = @transform_26, window_bounds = array<i64: 2, 20, 10>}, {pipeline_mode = #tpu.pipeline_mode<synchronous>, transform_indices = @transform_27, window_bounds = array<i64: 1, 640>}, {pipeline_mode = #tpu.pipeline_mode<synchronous>, transform_indices = @transform_28, window_bounds = array<i64: 3, 640, 128>}, {pipeline_mode = #tpu.pipeline_mode<synchronous>, transform_indices = @transform_29, window_bounds = array<i64: 1, 128>}, {transform_indices = @transform_30, window_bounds = array<i64: 1, 20, 128>}]} {
    %c0 = arith.constant 0 : index
    %c0_0 = arith.constant 0 : index
    %c0_1 = arith.constant 0 : index
    %0 = vector.load %arg1[%c0, %c0_0, %c0_1] : memref<1x18x48xbf16, #tpu.memory_space<vmem>>, vector<1x16x48xbf16>
    %1 = vector.shape_cast %0 : vector<1x16x48xbf16> to vector<16x48xbf16>
    %c0_2 = arith.constant 0 : index
    %c0_3 = arith.constant 0 : index
    %c0_4 = arith.constant 0 : index
    %2 = vector.load %arg2[%c0_2, %c0_3, %c0_4] : memref<3x48x512xbf16, #tpu.memory_space<vmem>>, vector<1x48x512xbf16>
    %3 = vector.shape_cast %2 : vector<1x48x512xbf16> to vector<48x512xbf16>
    %cst = arith.constant dense<0.000000e+00> : vector<16x512xf32>
    %4 = tpu.matmul %1, %3, %cst {dimension_numbers = #tpu.dot_dimension_numbers<[1], [0], [0], [1], [0, 0, 1, 1], [], []>} : vector<16x48xbf16>, vector<48x512xbf16>, vector<16x512xf32> -> vector<16x512xf32>
    %c0_5 = arith.constant 0 : index
    %c1 = arith.constant 1 : index
    %c0_6 = arith.constant 0 : index
    %5 = vector.load %arg1[%c0_5, %c1, %c0_6] : memref<1x18x48xbf16, #tpu.memory_space<vmem>>, vector<1x16x48xbf16>
    %6 = vector.shape_cast %5 : vector<1x16x48xbf16> to vector<16x48xbf16>
    %c1_7 = arith.constant 1 : index
    %c0_8 = arith.constant 0 : index
    %c0_9 = arith.constant 0 : index
    %7 = vector.load %arg2[%c1_7, %c0_8, %c0_9] : memref<3x48x512xbf16, #tpu.memory_space<vmem>>, vector<1x48x512xbf16>
    %8 = vector.shape_cast %7 : vector<1x48x512xbf16> to vector<48x512xbf16>
    %cst_10 = arith.constant dense<0.000000e+00> : vector<16x512xf32>
    %9 = tpu.matmul %6, %8, %cst_10 {dimension_numbers = #tpu.dot_dimension_numbers<[1], [0], [0], [1], [0, 0, 1, 1], [], []>} : vector<16x48xbf16>, vector<48x512xbf16>, vector<16x512xf32> -> vector<16x512xf32>
    %10 = arith.addf %4, %9 : vector<16x512xf32>
    %c0_11 = arith.constant 0 : index
    %c2 = arith.constant 2 : index
    %c0_12 = arith.constant 0 : index
    %11 = vector.load %arg1[%c0_11, %c2, %c0_12] : memref<1x18x48xbf16, #tpu.memory_space<vmem>>, vector<1x16x48xbf16>
    %12 = vector.shape_cast %11 : vector<1x16x48xbf16> to vector<16x48xbf16>
    %c2_13 = arith.constant 2 : index
    %c0_14 = arith.constant 0 : index
    %c0_15 = arith.constant 0 : index
    %13 = vector.load %arg2[%c2_13, %c0_14, %c0_15] : memref<3x48x512xbf16, #tpu.memory_space<vmem>>, vector<1x48x512xbf16>
    %14 = vector.shape_cast %13 : vector<1x48x512xbf16> to vector<48x512xbf16>
    %cst_16 = arith.constant dense<0.000000e+00> : vector<16x512xf32>
    %15 = tpu.matmul %12, %14, %cst_16 {dimension_numbers = #tpu.dot_dimension_numbers<[1], [0], [0], [1], [0, 0, 1, 1], [], []>} : vector<16x48xbf16>, vector<48x512xbf16>, vector<16x512xf32> -> vector<16x512xf32>
    %16 = arith.addf %10, %15 : vector<16x512xf32>
    %c0_17 = arith.constant 0 : index
    %c0_18 = arith.constant 0 : index
    %17 = vector.load %arg3[%c0_17, %c0_18] : memref<1x512xf32, #tpu.memory_space<vmem>>, vector<1x512xf32>
    %18 = vector.broadcast %17 : vector<1x512xf32> to vector<16x512xf32>
    %19 = arith.addf %16, %18 : vector<16x512xf32>
    %cst_19 = arith.constant 0.000000e+00 : f32
    %20 = vector.broadcast %cst_19 : f32 to vector<16x512xf32>
    %21 = arith.maximumf %19, %20 : vector<16x512xf32>
    %22 = arith.truncf %21 : vector<16x512xf32> to vector<16x512xbf16>
    %c0_20 = arith.constant 0 : index
    %c0_21 = arith.constant 0 : index
    %23 = vector.load %arg4[%c0_20, %c0_21] : memref<8x16xbf16, #tpu.memory_space<vmem>>, vector<8x16xbf16>
    %cst_22 = arith.constant dense<0.000000e+00> : vector<8x512xf32>
    %24 = tpu.matmul %23, %22, %cst_22 {dimension_numbers = #tpu.dot_dimension_numbers<[1], [0], [0], [1], [0, 0, 1, 1], [], []>} : vector<8x16xbf16>, vector<16x512xbf16>, vector<8x512xf32> -> vector<8x512xf32>
    %c0_23 = arith.constant 0 : index
    %c0_24 = arith.constant 0 : index
    %25 = vector.load %arg5[%c0_23, %c0_24] : memref<8x16xbf16, #tpu.memory_space<vmem>>, vector<8x16xbf16>
    %cst_25 = arith.constant dense<0.000000e+00> : vector<8x512xf32>
    %26 = tpu.matmul %25, %22, %cst_25 {dimension_numbers = #tpu.dot_dimension_numbers<[1], [0], [0], [1], [0, 0, 1, 1], [], []>} : vector<8x16xbf16>, vector<16x512xbf16>, vector<8x512xf32> -> vector<8x512xf32>
    %27 = arith.maximumf %24, %26 : vector<8x512xf32>
    %28 = arith.truncf %27 : vector<8x512xf32> to vector<8x512xbf16>
    %c0_26 = arith.constant 0 : index
    %c0_27 = arith.constant 0 : index
    %29 = vector.load %arg6[%c0_26, %c0_27] : memref<512x256xbf16, #tpu.memory_space<vmem>>, vector<512x256xbf16>
    %cst_28 = arith.constant dense<0.000000e+00> : vector<8x256xf32>
    %30 = tpu.matmul %28, %29, %cst_28 {dimension_numbers = #tpu.dot_dimension_numbers<[1], [0], [0], [1], [0, 0, 1, 1], [], []>} : vector<8x512xbf16>, vector<512x256xbf16>, vector<8x256xf32> -> vector<8x256xf32>
    %c0_29 = arith.constant 0 : index
    %c0_30 = arith.constant 0 : index
    %31 = vector.load %arg7[%c0_29, %c0_30] : memref<512x256xbf16, #tpu.memory_space<vmem>>, vector<512x256xbf16>
    %cst_31 = arith.constant dense<0.000000e+00> : vector<8x256xf32>
    %32 = tpu.matmul %28, %31, %cst_31 {dimension_numbers = #tpu.dot_dimension_numbers<[1], [0], [0], [1], [0, 0, 1, 1], [], []>} : vector<8x512xbf16>, vector<512x256xbf16>, vector<8x256xf32> -> vector<8x256xf32>
    %33 = arith.maximumf %30, %32 : vector<8x256xf32>
    %cst_32 = arith.constant 0.000000e+00 : bf16
    %34 = vector.broadcast %cst_32 : bf16 to vector<1x256xbf16>
    %c0_33 = arith.constant 0 : index
    %c0_34 = arith.constant 0 : index
    %35 = vector.load %arg32[%c0_33, %c0_34] : memref<10x256xbf16, #tpu.memory_space<vmem>>, vector<1x256xbf16>
    tpu.vector_store %arg32[%c0_33, %c0_34], %34 {strides = array<i32>} : memref<10x256xbf16, #tpu.memory_space<vmem>>, vector<1x256xbf16>,
    %c9 = arith.constant 9 : index
    %c0_35 = arith.constant 0 : index
    %36 = vector.load %arg32[%c9, %c0_35] : memref<10x256xbf16, #tpu.memory_space<vmem>>, vector<1x256xbf16>
    tpu.vector_store %arg32[%c9, %c0_35], %34 {strides = array<i32>} : memref<10x256xbf16, #tpu.memory_space<vmem>>, vector<1x256xbf16>,
    %37 = arith.truncf %33 : vector<8x256xf32> to vector<8x256xbf16>
    %c1_36 = arith.constant 1 : index
    %c0_37 = arith.constant 0 : index
    %38 = vector.load %arg32[%c1_36, %c0_37] : memref<10x256xbf16, #tpu.memory_space<vmem>>, vector<8x256xbf16>
    tpu.vector_store %arg32[%c1_36, %c0_37], %37 {strides = array<i32>} : memref<10x256xbf16, #tpu.memory_space<vmem>>, vector<8x256xbf16>,
    %c0_38 = arith.constant 0 : index
    %c0_39 = arith.constant 0 : index
    %39 = vector.load %arg32[%c0_38, %c0_39] : memref<10x256xbf16, #tpu.memory_space<vmem>>, vector<8x256xbf16>
    %c0_40 = arith.constant 0 : index
    %c0_41 = arith.constant 0 : index
    %c0_42 = arith.constant 0 : index
    %40 = vector.load %arg8[%c0_40, %c0_41, %c0_42] : memref<3x256x128xbf16, #tpu.memory_space<vmem>>, vector<1x256x128xbf16>
    %41 = vector.shape_cast %40 : vector<1x256x128xbf16> to vector<256x128xbf16>
    %cst_43 = arith.constant dense<0.000000e+00> : vector<8x128xf32>
    %42 = tpu.matmul %39, %41, %cst_43 {dimension_numbers = #tpu.dot_dimension_numbers<[1], [0], [0], [1], [0, 0, 1, 1], [], []>} : vector<8x256xbf16>, vector<256x128xbf16>, vector<8x128xf32> -> vector<8x128xf32>
    %c1_44 = arith.constant 1 : index
    %c0_45 = arith.constant 0 : index
    %43 = vector.load %arg32[%c1_44, %c0_45] : memref<10x256xbf16, #tpu.memory_space<vmem>>, vector<8x256xbf16>
    %c1_46 = arith.constant 1 : index
    %c0_47 = arith.constant 0 : index
    %c0_48 = arith.constant 0 : index
    %44 = vector.load %arg8[%c1_46, %c0_47, %c0_48] : memref<3x256x128xbf16, #tpu.memory_space<vmem>>, vector<1x256x128xbf16>
    %45 = vector.shape_cast %44 : vector<1x256x128xbf16> to vector<256x128xbf16>
    %cst_49 = arith.constant dense<0.000000e+00> : vector<8x128xf32>
    %46 = tpu.matmul %43, %45, %cst_49 {dimension_numbers = #tpu.dot_dimension_numbers<[1], [0], [0], [1], [0, 0, 1, 1], [], []>} : vector<8x256xbf16>, vector<256x128xbf16>, vector<8x128xf32> -> vector<8x128xf32>
    %47 = arith.addf %42, %46 : vector<8x128xf32>
    %c2_50 = arith.constant 2 : index
    %c0_51 = arith.constant 0 : index
    %48 = vector.load %arg32[%c2_50, %c0_51] : memref<10x256xbf16, #tpu.memory_space<vmem>>, vector<8x256xbf16>
    %c2_52 = arith.constant 2 : index
    %c0_53 = arith.constant 0 : index
    %c0_54 = arith.constant 0 : index
    %49 = vector.load %arg8[%c2_52, %c0_53, %c0_54] : memref<3x256x128xbf16, #tpu.memory_space<vmem>>, vector<1x256x128xbf16>
    %50 = vector.shape_cast %49 : vector<1x256x128xbf16> to vector<256x128xbf16>
    %cst_55 = arith.constant dense<0.000000e+00> : vector<8x128xf32>
    %51 = tpu.matmul %48, %50, %cst_55 {dimension_numbers = #tpu.dot_dimension_numbers<[1], [0], [0], [1], [0, 0, 1, 1], [], []>} : vector<8x256xbf16>, vector<256x128xbf16>, vector<8x128xf32> -> vector<8x128xf32>
    %52 = arith.addf %47, %51 : vector<8x128xf32>
    %c0_56 = arith.constant 0 : index
    %c0_57 = arith.constant 0 : index
    %53 = vector.load %arg9[%c0_56, %c0_57] : memref<1x128xf32, #tpu.memory_space<vmem>>, vector<1x128xf32>
    %54 = vector.broadcast %53 : vector<1x128xf32> to vector<8x128xf32>
    %55 = arith.addf %52, %54 : vector<8x128xf32>
    %cst_58 = arith.constant 0.000000e+00 : f32
    %56 = vector.broadcast %cst_58 : f32 to vector<8x128xf32>
    %57 = arith.maximumf %55, %56 : vector<8x128xf32>
    %58 = arith.truncf %57 : vector<8x128xf32> to vector<8x128xbf16>
    %c0_59 = arith.constant 0 : index
    %c0_60 = arith.constant 0 : index
    %59 = vector.load %arg10[%c0_59, %c0_60] : memref<4x8xbf16, #tpu.memory_space<vmem>>, vector<4x8xbf16>
    %cst_61 = arith.constant dense<0.000000e+00> : vector<4x128xf32>
    %60 = tpu.matmul %59, %58, %cst_61 {dimension_numbers = #tpu.dot_dimension_numbers<[1], [0], [0], [1], [0, 0, 1, 1], [], []>} : vector<4x8xbf16>, vector<8x128xbf16>, vector<4x128xf32> -> vector<4x128xf32>
    %c0_62 = arith.constant 0 : index
    %c0_63 = arith.constant 0 : index
    %61 = vector.load %arg11[%c0_62, %c0_63] : memref<4x8xbf16, #tpu.memory_space<vmem>>, vector<4x8xbf16>
    %cst_64 = arith.constant dense<0.000000e+00> : vector<4x128xf32>
    %62 = tpu.matmul %61, %58, %cst_64 {dimension_numbers = #tpu.dot_dimension_numbers<[1], [0], [0], [1], [0, 0, 1, 1], [], []>} : vector<4x8xbf16>, vector<8x128xbf16>, vector<4x128xf32> -> vector<4x128xf32>
    %63 = arith.maximumf %60, %62 : vector<4x128xf32>
    %64 = arith.truncf %63 : vector<4x128xf32> to vector<4x128xbf16>
    %c0_65 = arith.constant 0 : index
    %c0_66 = arith.constant 0 : index
    %65 = vector.load %arg12[%c0_65, %c0_66] : memref<128x64xbf16, #tpu.memory_space<vmem>>, vector<128x64xbf16>
    %cst_67 = arith.constant dense<0.000000e+00> : vector<4x64xf32>
    %66 = tpu.matmul %64, %65, %cst_67 {dimension_numbers = #tpu.dot_dimension_numbers<[1], [0], [0], [1], [0, 0, 1, 1], [], []>} : vector<4x128xbf16>, vector<128x64xbf16>, vector<4x64xf32> -> vector<4x64xf32>
    %c0_68 = arith.constant 0 : index
    %c0_69 = arith.constant 0 : index
    %67 = vector.load %arg13[%c0_68, %c0_69] : memref<128x64xbf16, #tpu.memory_space<vmem>>, vector<128x64xbf16>
    %cst_70 = arith.constant dense<0.000000e+00> : vector<4x64xf32>
    %68 = tpu.matmul %64, %67, %cst_70 {dimension_numbers = #tpu.dot_dimension_numbers<[1], [0], [0], [1], [0, 0, 1, 1], [], []>} : vector<4x128xbf16>, vector<128x64xbf16>, vector<4x64xf32> -> vector<4x64xf32>
    %69 = arith.maximumf %66, %68 : vector<4x64xf32>
    %cst_71 = arith.constant 0.000000e+00 : bf16
    %70 = vector.broadcast %cst_71 : bf16 to vector<1x64xbf16>
    %c0_72 = arith.constant 0 : index
    %c0_73 = arith.constant 0 : index
    %71 = vector.load %arg33[%c0_72, %c0_73] : memref<6x64xbf16, #tpu.memory_space<vmem>>, vector<1x64xbf16>
    tpu.vector_store %arg33[%c0_72, %c0_73], %70 {strides = array<i32>} : memref<6x64xbf16, #tpu.memory_space<vmem>>, vector<1x64xbf16>,
    %c5 = arith.constant 5 : index
    %c0_74 = arith.constant 0 : index
    %72 = vector.load %arg33[%c5, %c0_74] : memref<6x64xbf16, #tpu.memory_space<vmem>>, vector<1x64xbf16>
    tpu.vector_store %arg33[%c5, %c0_74], %70 {strides = array<i32>} : memref<6x64xbf16, #tpu.memory_space<vmem>>, vector<1x64xbf16>,
    %73 = arith.truncf %69 : vector<4x64xf32> to vector<4x64xbf16>
    %c1_75 = arith.constant 1 : index
    %c0_76 = arith.constant 0 : index
    %74 = vector.load %arg33[%c1_75, %c0_76] : memref<6x64xbf16, #tpu.memory_space<vmem>>, vector<4x64xbf16>
    tpu.vector_store %arg33[%c1_75, %c0_76], %73 {strides = array<i32>} : memref<6x64xbf16, #tpu.memory_space<vmem>>, vector<4x64xbf16>,
    %c0_77 = arith.constant 0 : index
    %c0_78 = arith.constant 0 : index
    %75 = vector.load %arg33[%c0_77, %c0_78] : memref<6x64xbf16, #tpu.memory_space<vmem>>, vector<4x64xbf16>
    %c0_79 = arith.constant 0 : index
    %c0_80 = arith.constant 0 : index
    %c0_81 = arith.constant 0 : index
    %76 = vector.load %arg14[%c0_79, %c0_80, %c0_81] : memref<3x64x32xbf16, #tpu.memory_space<vmem>>, vector<1x64x32xbf16>
    %77 = vector.shape_cast %76 : vector<1x64x32xbf16> to vector<64x32xbf16>
    %cst_82 = arith.constant dense<0.000000e+00> : vector<4x32xf32>
    %78 = tpu.matmul %75, %77, %cst_82 {dimension_numbers = #tpu.dot_dimension_numbers<[1], [0], [0], [1], [0, 0, 1, 1], [], []>} : vector<4x64xbf16>, vector<64x32xbf16>, vector<4x32xf32> -> vector<4x32xf32>
    %c1_83 = arith.constant 1 : index
    %c0_84 = arith.constant 0 : index
    %79 = vector.load %arg33[%c1_83, %c0_84] : memref<6x64xbf16, #tpu.memory_space<vmem>>, vector<4x64xbf16>
    %c1_85 = arith.constant 1 : index
    %c0_86 = arith.constant 0 : index
    %c0_87 = arith.constant 0 : index
    %80 = vector.load %arg14[%c1_85, %c0_86, %c0_87] : memref<3x64x32xbf16, #tpu.memory_space<vmem>>, vector<1x64x32xbf16>
    %81 = vector.shape_cast %80 : vector<1x64x32xbf16> to vector<64x32xbf16>
    %cst_88 = arith.constant dense<0.000000e+00> : vector<4x32xf32>
    %82 = tpu.matmul %79, %81, %cst_88 {dimension_numbers = #tpu.dot_dimension_numbers<[1], [0], [0], [1], [0, 0, 1, 1], [], []>} : vector<4x64xbf16>, vector<64x32xbf16>, vector<4x32xf32> -> vector<4x32xf32>
    %83 = arith.addf %78, %82 : vector<4x32xf32>
    %c2_89 = arith.constant 2 : index
    %c0_90 = arith.constant 0 : index
    %84 = vector.load %arg33[%c2_89, %c0_90] : memref<6x64xbf16, #tpu.memory_space<vmem>>, vector<4x64xbf16>
    %c2_91 = arith.constant 2 : index
    %c0_92 = arith.constant 0 : index
    %c0_93 = arith.constant 0 : index
    %85 = vector.load %arg14[%c2_91, %c0_92, %c0_93] : memref<3x64x32xbf16, #tpu.memory_space<vmem>>, vector<1x64x32xbf16>
    %86 = vector.shape_cast %85 : vector<1x64x32xbf16> to vector<64x32xbf16>
    %cst_94 = arith.constant dense<0.000000e+00> : vector<4x32xf32>
    %87 = tpu.matmul %84, %86, %cst_94 {dimension_numbers = #tpu.dot_dimension_numbers<[1], [0], [0], [1], [0, 0, 1, 1], [], []>} : vector<4x64xbf16>, vector<64x32xbf16>, vector<4x32xf32> -> vector<4x32xf32>
    %88 = arith.addf %83, %87 : vector<4x32xf32>
    %c0_95 = arith.constant 0 : index
    %c0_96 = arith.constant 0 : index
    %89 = vector.load %arg15[%c0_95, %c0_96] : memref<1x32xf32, #tpu.memory_space<vmem>>, vector<1x32xf32>
    %90 = vector.broadcast %89 : vector<1x32xf32> to vector<4x32xf32>
    %91 = arith.addf %88, %90 : vector<4x32xf32>
    %cst_97 = arith.constant 0.000000e+00 : f32
    %92 = vector.broadcast %cst_97 : f32 to vector<4x32xf32>
    %93 = arith.maximumf %91, %92 : vector<4x32xf32>
    %94 = arith.truncf %93 : vector<4x32xf32> to vector<4x32xbf16>
    %c0_98 = arith.constant 0 : index
    %c0_99 = arith.constant 0 : index
    %95 = vector.load %arg16[%c0_98, %c0_99] : memref<2x4xbf16, #tpu.memory_space<vmem>>, vector<2x4xbf16>
    %cst_100 = arith.constant dense<0.000000e+00> : vector<2x32xf32>
    %96 = tpu.matmul %95, %94, %cst_100 {dimension_numbers = #tpu.dot_dimension_numbers<[1], [0], [0], [1], [0, 0, 1, 1], [], []>} : vector<2x4xbf16>, vector<4x32xbf16>, vector<2x32xf32> -> vector<2x32xf32>
    %c0_101 = arith.constant 0 : index
    %c0_102 = arith.constant 0 : index
    %97 = vector.load %arg17[%c0_101, %c0_102] : memref<2x4xbf16, #tpu.memory_space<vmem>>, vector<2x4xbf16>
    %cst_103 = arith.constant dense<0.000000e+00> : vector<2x32xf32>
    %98 = tpu.matmul %97, %94, %cst_103 {dimension_numbers = #tpu.dot_dimension_numbers<[1], [0], [0], [1], [0, 0, 1, 1], [], []>} : vector<2x4xbf16>, vector<4x32xbf16>, vector<2x32xf32> -> vector<2x32xf32>
    %99 = arith.maximumf %96, %98 : vector<2x32xf32>
    %100 = arith.truncf %99 : vector<2x32xf32> to vector<2x32xbf16>
    %c0_104 = arith.constant 0 : index
    %c0_105 = arith.constant 0 : index
    %101 = vector.load %arg18[%c0_104, %c0_105] : memref<32x16xbf16, #tpu.memory_space<vmem>>, vector<32x16xbf16>
    %cst_106 = arith.constant dense<0.000000e+00> : vector<2x16xf32>
    %102 = tpu.matmul %100, %101, %cst_106 {dimension_numbers = #tpu.dot_dimension_numbers<[1], [0], [0], [1], [0, 0, 1, 1], [], []>} : vector<2x32xbf16>, vector<32x16xbf16>, vector<2x16xf32> -> vector<2x16xf32>
    %c0_107 = arith.constant 0 : index
    %c0_108 = arith.constant 0 : index
    %103 = vector.load %arg19[%c0_107, %c0_108] : memref<32x16xbf16, #tpu.memory_space<vmem>>, vector<32x16xbf16>
    %cst_109 = arith.constant dense<0.000000e+00> : vector<2x16xf32>
    %104 = tpu.matmul %100, %103, %cst_109 {dimension_numbers = #tpu.dot_dimension_numbers<[1], [0], [0], [1], [0, 0, 1, 1], [], []>} : vector<2x32xbf16>, vector<32x16xbf16>, vector<2x16xf32> -> vector<2x16xf32>
    %105 = arith.maximumf %102, %104 : vector<2x16xf32>
    %106 = arith.truncf %105 : vector<2x16xf32> to vector<2x16xbf16>
    %c0_110 = arith.constant 0 : index
    %c0_111 = arith.constant 0 : index
    %c0_112 = arith.constant 0 : index
    %107 = vector.load %arg21[%c0_110, %c0_111, %c0_112] : memref<3x5x2xbf16, #tpu.memory_space<vmem>>, vector<1x5x2xbf16>
    %108 = vector.shape_cast %107 : vector<1x5x2xbf16> to vector<5x2xbf16>
    %cst_113 = arith.constant dense<0.000000e+00> : vector<5x16xf32>
    %109 = tpu.matmul %108, %106, %cst_113 {dimension_numbers = #tpu.dot_dimension_numbers<[1], [0], [0], [1], [0, 0, 1, 1], [], []>} : vector<5x2xbf16>, vector<2x16xbf16>, vector<5x16xf32> -> vector<5x16xf32>
    %110 = arith.truncf %109 : vector<5x16xf32> to vector<5x16xbf16>
    %c0_114 = arith.constant 0 : index
    %c0_115 = arith.constant 0 : index
    %c0_116 = arith.constant 0 : index
    %111 = vector.load %arg20[%c0_114, %c0_115, %c0_116] : memref<3x16x40xbf16, #tpu.memory_space<vmem>>, vector<1x16x40xbf16>
    %112 = vector.shape_cast %111 : vector<1x16x40xbf16> to vector<16x40xbf16>
    %cst_117 = arith.constant dense<0.000000e+00> : vector<5x40xf32>
    %113 = tpu.matmul %110, %112, %cst_117 {dimension_numbers = #tpu.dot_dimension_numbers<[1], [0], [0], [1], [0, 0, 1, 1], [], []>} : vector<5x16xbf16>, vector<16x40xbf16>, vector<5x40xf32> -> vector<5x40xf32>
    %c1_118 = arith.constant 1 : index
    %c0_119 = arith.constant 0 : index
    %c0_120 = arith.constant 0 : index
    %114 = vector.load %arg21[%c1_118, %c0_119, %c0_120] : memref<3x5x2xbf16, #tpu.memory_space<vmem>>, vector<1x5x2xbf16>
    %115 = vector.shape_cast %114 : vector<1x5x2xbf16> to vector<5x2xbf16>
    %cst_121 = arith.constant dense<0.000000e+00> : vector<5x16xf32>
    %116 = tpu.matmul %115, %106, %cst_121 {dimension_numbers = #tpu.dot_dimension_numbers<[1], [0], [0], [1], [0, 0, 1, 1], [], []>} : vector<5x2xbf16>, vector<2x16xbf16>, vector<5x16xf32> -> vector<5x16xf32>
    %117 = arith.truncf %116 : vector<5x16xf32> to vector<5x16xbf16>
    %c1_122 = arith.constant 1 : index
    %c0_123 = arith.constant 0 : index
    %c0_124 = arith.constant 0 : index
    %118 = vector.load %arg20[%c1_122, %c0_123, %c0_124] : memref<3x16x40xbf16, #tpu.memory_space<vmem>>, vector<1x16x40xbf16>
    %119 = vector.shape_cast %118 : vector<1x16x40xbf16> to vector<16x40xbf16>
    %cst_125 = arith.constant dense<0.000000e+00> : vector<5x40xf32>
    %120 = tpu.matmul %117, %119, %cst_125 {dimension_numbers = #tpu.dot_dimension_numbers<[1], [0], [0], [1], [0, 0, 1, 1], [], []>} : vector<5x16xbf16>, vector<16x40xbf16>, vector<5x40xf32> -> vector<5x40xf32>
    %121 = arith.addf %113, %120 : vector<5x40xf32>
    %c2_126 = arith.constant 2 : index
    %c0_127 = arith.constant 0 : index
    %c0_128 = arith.constant 0 : index
    %122 = vector.load %arg21[%c2_126, %c0_127, %c0_128] : memref<3x5x2xbf16, #tpu.memory_space<vmem>>, vector<1x5x2xbf16>
    %123 = vector.shape_cast %122 : vector<1x5x2xbf16> to vector<5x2xbf16>
    %cst_129 = arith.constant dense<0.000000e+00> : vector<5x16xf32>
    %124 = tpu.matmul %123, %106, %cst_129 {dimension_numbers = #tpu.dot_dimension_numbers<[1], [0], [0], [1], [0, 0, 1, 1], [], []>} : vector<5x2xbf16>, vector<2x16xbf16>, vector<5x16xf32> -> vector<5x16xf32>
    %125 = arith.truncf %124 : vector<5x16xf32> to vector<5x16xbf16>
    %c2_130 = arith.constant 2 : index
    %c0_131 = arith.constant 0 : index
    %c0_132 = arith.constant 0 : index
    %126 = vector.load %arg20[%c2_130, %c0_131, %c0_132] : memref<3x16x40xbf16, #tpu.memory_space<vmem>>, vector<1x16x40xbf16>
    %127 = vector.shape_cast %126 : vector<1x16x40xbf16> to vector<16x40xbf16>
    %cst_133 = arith.constant dense<0.000000e+00> : vector<5x40xf32>
    %128 = tpu.matmul %125, %127, %cst_133 {dimension_numbers = #tpu.dot_dimension_numbers<[1], [0], [0], [1], [0, 0, 1, 1], [], []>} : vector<5x16xbf16>, vector<16x40xbf16>, vector<5x40xf32> -> vector<5x40xf32>
    %129 = arith.addf %121, %128 : vector<5x40xf32>
    %c0_134 = arith.constant 0 : index
    %c0_135 = arith.constant 0 : index
    %130 = vector.load %arg22[%c0_134, %c0_135] : memref<1x40xf32, #tpu.memory_space<vmem>>, vector<1x40xf32>
    %131 = vector.broadcast %130 : vector<1x40xf32> to vector<5x40xf32>
    %132 = arith.addf %129, %131 : vector<5x40xf32>
    %cst_136 = arith.constant 0.000000e+00 : f32
    %133 = vector.broadcast %cst_136 : f32 to vector<5x40xf32>
    %134 = arith.maximumf %132, %133 : vector<5x40xf32>
    %135 = arith.truncf %134 : vector<5x40xf32> to vector<5x40xbf16>
    %c0_137 = arith.constant 0 : index
    %c0_138 = arith.constant 0 : index
    %c0_139 = arith.constant 0 : index
    %136 = vector.load %arg24[%c0_137, %c0_138, %c0_139] : memref<2x10x5xbf16, #tpu.memory_space<vmem>>, vector<1x10x5xbf16>
    %137 = vector.shape_cast %136 : vector<1x10x5xbf16> to vector<10x5xbf16>
    %cst_140 = arith.constant dense<0.000000e+00> : vector<10x40xf32>
    %138 = tpu.matmul %137, %135, %cst_140 {dimension_numbers = #tpu.dot_dimension_numbers<[1], [0], [0], [1], [0, 0, 1, 1], [], []>} : vector<10x5xbf16>, vector<5x40xbf16>, vector<10x40xf32> -> vector<10x40xf32>
    %139 = arith.truncf %138 : vector<10x40xf32> to vector<10x40xbf16>
    %c0_141 = arith.constant 0 : index
    %c0_142 = arith.constant 0 : index
    %c0_143 = arith.constant 0 : index
    %140 = vector.load %arg23[%c0_141, %c0_142, %c0_143] : memref<2x40x160xbf16, #tpu.memory_space<vmem>>, vector<1x40x160xbf16>
    %141 = vector.shape_cast %140 : vector<1x40x160xbf16> to vector<40x160xbf16>
    %cst_144 = arith.constant dense<0.000000e+00> : vector<10x160xf32>
    %142 = tpu.matmul %139, %141, %cst_144 {dimension_numbers = #tpu.dot_dimension_numbers<[1], [0], [0], [1], [0, 0, 1, 1], [], []>} : vector<10x40xbf16>, vector<40x160xbf16>, vector<10x160xf32> -> vector<10x160xf32>
    %c1_145 = arith.constant 1 : index
    %c0_146 = arith.constant 0 : index
    %c0_147 = arith.constant 0 : index
    %143 = vector.load %arg24[%c1_145, %c0_146, %c0_147] : memref<2x10x5xbf16, #tpu.memory_space<vmem>>, vector<1x10x5xbf16>
    %144 = vector.shape_cast %143 : vector<1x10x5xbf16> to vector<10x5xbf16>
    %cst_148 = arith.constant dense<0.000000e+00> : vector<10x40xf32>
    %145 = tpu.matmul %144, %135, %cst_148 {dimension_numbers = #tpu.dot_dimension_numbers<[1], [0], [0], [1], [0, 0, 1, 1], [], []>} : vector<10x5xbf16>, vector<5x40xbf16>, vector<10x40xf32> -> vector<10x40xf32>
    %146 = arith.truncf %145 : vector<10x40xf32> to vector<10x40xbf16>
    %c1_149 = arith.constant 1 : index
    %c0_150 = arith.constant 0 : index
    %c0_151 = arith.constant 0 : index
    %147 = vector.load %arg23[%c1_149, %c0_150, %c0_151] : memref<2x40x160xbf16, #tpu.memory_space<vmem>>, vector<1x40x160xbf16>
    %148 = vector.shape_cast %147 : vector<1x40x160xbf16> to vector<40x160xbf16>
    %cst_152 = arith.constant dense<0.000000e+00> : vector<10x160xf32>
    %149 = tpu.matmul %146, %148, %cst_152 {dimension_numbers = #tpu.dot_dimension_numbers<[1], [0], [0], [1], [0, 0, 1, 1], [], []>} : vector<10x40xbf16>, vector<40x160xbf16>, vector<10x160xf32> -> vector<10x160xf32>
    %150 = arith.addf %142, %149 : vector<10x160xf32>
    %c0_153 = arith.constant 0 : index
    %c0_154 = arith.constant 0 : index
    %151 = vector.load %arg25[%c0_153, %c0_154] : memref<1x160xf32, #tpu.memory_space<vmem>>, vector<1x160xf32>
    %152 = vector.broadcast %151 : vector<1x160xf32> to vector<10x160xf32>
    %153 = arith.addf %150, %152 : vector<10x160xf32>
    %cst_155 = arith.constant 0.000000e+00 : f32
    %154 = vector.broadcast %cst_155 : f32 to vector<10x160xf32>
    %155 = arith.maximumf %153, %154 : vector<10x160xf32>
    %156 = arith.truncf %155 : vector<10x160xf32> to vector<10x160xbf16>
    %c0_156 = arith.constant 0 : index
    %c0_157 = arith.constant 0 : index
    %c0_158 = arith.constant 0 : index
    %157 = vector.load %arg27[%c0_156, %c0_157, %c0_158] : memref<2x20x10xbf16, #tpu.memory_space<vmem>>, vector<1x20x10xbf16>
    %158 = vector.shape_cast %157 : vector<1x20x10xbf16> to vector<20x10xbf16>
    %cst_159 = arith.constant dense<0.000000e+00> : vector<20x160xf32>
    %159 = tpu.matmul %158, %156, %cst_159 {dimension_numbers = #tpu.dot_dimension_numbers<[1], [0], [0], [1], [0, 0, 1, 1], [], []>} : vector<20x10xbf16>, vector<10x160xbf16>, vector<20x160xf32> -> vector<20x160xf32>
    %160 = arith.truncf %159 : vector<20x160xf32> to vector<20x160xbf16>
    %c0_160 = arith.constant 0 : index
    %c0_161 = arith.constant 0 : index
    %c0_162 = arith.constant 0 : index
    %161 = vector.load %arg26[%c0_160, %c0_161, %c0_162] : memref<2x160x640xbf16, #tpu.memory_space<vmem>>, vector<1x160x640xbf16>
    %162 = vector.shape_cast %161 : vector<1x160x640xbf16> to vector<160x640xbf16>
    %cst_163 = arith.constant dense<0.000000e+00> : vector<20x640xf32>
    %163 = tpu.matmul %160, %162, %cst_163 {dimension_numbers = #tpu.dot_dimension_numbers<[1], [0], [0], [1], [0, 0, 1, 1], [], []>} : vector<20x160xbf16>, vector<160x640xbf16>, vector<20x640xf32> -> vector<20x640xf32>
    %c1_164 = arith.constant 1 : index
    %c0_165 = arith.constant 0 : index
    %c0_166 = arith.constant 0 : index
    %164 = vector.load %arg27[%c1_164, %c0_165, %c0_166] : memref<2x20x10xbf16, #tpu.memory_space<vmem>>, vector<1x20x10xbf16>
    %165 = vector.shape_cast %164 : vector<1x20x10xbf16> to vector<20x10xbf16>
    %cst_167 = arith.constant dense<0.000000e+00> : vector<20x160xf32>
    %166 = tpu.matmul %165, %156, %cst_167 {dimension_numbers = #tpu.dot_dimension_numbers<[1], [0], [0], [1], [0, 0, 1, 1], [], []>} : vector<20x10xbf16>, vector<10x160xbf16>, vector<20x160xf32> -> vector<20x160xf32>
    %167 = arith.truncf %166 : vector<20x160xf32> to vector<20x160xbf16>
    %c1_168 = arith.constant 1 : index
    %c0_169 = arith.constant 0 : index
    %c0_170 = arith.constant 0 : index
    %168 = vector.load %arg26[%c1_168, %c0_169, %c0_170] : memref<2x160x640xbf16, #tpu.memory_space<vmem>>, vector<1x160x640xbf16>
    %169 = vector.shape_cast %168 : vector<1x160x640xbf16> to vector<160x640xbf16>
    %cst_171 = arith.constant dense<0.000000e+00> : vector<20x640xf32>
    %170 = tpu.matmul %167, %169, %cst_171 {dimension_numbers = #tpu.dot_dimension_numbers<[1], [0], [0], [1], [0, 0, 1, 1], [], []>} : vector<20x160xbf16>, vector<160x640xbf16>, vector<20x640xf32> -> vector<20x640xf32>
    %171 = arith.addf %163, %170 : vector<20x640xf32>
    %c0_172 = arith.constant 0 : index
    %c0_173 = arith.constant 0 : index
    %172 = vector.load %arg28[%c0_172, %c0_173] : memref<1x640xf32, #tpu.memory_space<vmem>>, vector<1x640xf32>
    %173 = vector.broadcast %172 : vector<1x640xf32> to vector<20x640xf32>
    %174 = arith.addf %171, %173 : vector<20x640xf32>
    %cst_174 = arith.constant 0.000000e+00 : f32
    %175 = vector.broadcast %cst_174 : f32 to vector<20x640xf32>
    %176 = arith.maximumf %174, %175 : vector<20x640xf32>
    %cst_175 = arith.constant 0.000000e+00 : bf16
    %177 = vector.broadcast %cst_175 : bf16 to vector<1x640xbf16>
    %c0_176 = arith.constant 0 : index
    %c0_177 = arith.constant 0 : index
    %178 = vector.load %arg34[%c0_176, %c0_177] : memref<22x640xbf16, #tpu.memory_space<vmem>>, vector<1x640xbf16>
    tpu.vector_store %arg34[%c0_176, %c0_177], %177 {strides = array<i32>} : memref<22x640xbf16, #tpu.memory_space<vmem>>, vector<1x640xbf16>,
    %c21 = arith.constant 21 : index
    %c0_178 = arith.constant 0 : index
    %179 = vector.load %arg34[%c21, %c0_178] : memref<22x640xbf16, #tpu.memory_space<vmem>>, vector<1x640xbf16>
    tpu.vector_store %arg34[%c21, %c0_178], %177 {strides = array<i32>} : memref<22x640xbf16, #tpu.memory_space<vmem>>, vector<1x640xbf16>,
    %180 = arith.truncf %176 : vector<20x640xf32> to vector<20x640xbf16>
    %c1_179 = arith.constant 1 : index
    %c0_180 = arith.constant 0 : index
    %181 = vector.load %arg34[%c1_179, %c0_180] : memref<22x640xbf16, #tpu.memory_space<vmem>>, vector<20x640xbf16>
    tpu.vector_store %arg34[%c1_179, %c0_180], %180 {strides = array<i32>} : memref<22x640xbf16, #tpu.memory_space<vmem>>, vector<20x640xbf16>,
    %c0_181 = arith.constant 0 : index
    %c0_182 = arith.constant 0 : index
    %182 = vector.load %arg34[%c0_181, %c0_182] : memref<22x640xbf16, #tpu.memory_space<vmem>>, vector<20x640xbf16>
    %c0_183 = arith.constant 0 : index
    %c0_184 = arith.constant 0 : index
    %c0_185 = arith.constant 0 : index
    %183 = vector.load %arg29[%c0_183, %c0_184, %c0_185] : memref<3x640x128xbf16, #tpu.memory_space<vmem>>, vector<1x640x128xbf16>
    %184 = vector.shape_cast %183 : vector<1x640x128xbf16> to vector<640x128xbf16>
    %cst_186 = arith.constant dense<0.000000e+00> : vector<20x128xf32>
    %185 = tpu.matmul %182, %184, %cst_186 {dimension_numbers = #tpu.dot_dimension_numbers<[1], [0], [0], [1], [0, 0, 1, 1], [], []>} : vector<20x640xbf16>, vector<640x128xbf16>, vector<20x128xf32> -> vector<20x128xf32>
    %c1_187 = arith.constant 1 : index
    %c0_188 = arith.constant 0 : index
    %186 = vector.load %arg34[%c1_187, %c0_188] : memref<22x640xbf16, #tpu.memory_space<vmem>>, vector<20x640xbf16>
    %c1_189 = arith.constant 1 : index
    %c0_190 = arith.constant 0 : index
    %c0_191 = arith.constant 0 : index
    %187 = vector.load %arg29[%c1_189, %c0_190, %c0_191] : memref<3x640x128xbf16, #tpu.memory_space<vmem>>, vector<1x640x128xbf16>
    %188 = vector.shape_cast %187 : vector<1x640x128xbf16> to vector<640x128xbf16>
    %cst_192 = arith.constant dense<0.000000e+00> : vector<20x128xf32>
    %189 = tpu.matmul %186, %188, %cst_192 {dimension_numbers = #tpu.dot_dimension_numbers<[1], [0], [0], [1], [0, 0, 1, 1], [], []>} : vector<20x640xbf16>, vector<640x128xbf16>, vector<20x128xf32> -> vector<20x128xf32>
    %190 = arith.addf %185, %189 : vector<20x128xf32>
    %c2_193 = arith.constant 2 : index
    %c0_194 = arith.constant 0 : index
    %191 = vector.load %arg34[%c2_193, %c0_194] : memref<22x640xbf16, #tpu.memory_space<vmem>>, vector<20x640xbf16>
    %c2_195 = arith.constant 2 : index
    %c0_196 = arith.constant 0 : index
    %c0_197 = arith.constant 0 : index
    %192 = vector.load %arg29[%c2_195, %c0_196, %c0_197] : memref<3x640x128xbf16, #tpu.memory_space<vmem>>, vector<1x640x128xbf16>
    %193 = vector.shape_cast %192 : vector<1x640x128xbf16> to vector<640x128xbf16>
    %cst_198 = arith.constant dense<0.000000e+00> : vector<20x128xf32>
    %194 = tpu.matmul %191, %193, %cst_198 {dimension_numbers = #tpu.dot_dimension_numbers<[1], [0], [0], [1], [0, 0, 1, 1], [], []>} : vector<20x640xbf16>, vector<640x128xbf16>, vector<20x128xf32> -> vector<20x128xf32>
    %195 = arith.addf %190, %194 : vector<20x128xf32>
    %c0_199 = arith.constant 0 : index
    %c0_200 = arith.constant 0 : index
    %196 = vector.load %arg30[%c0_199, %c0_200] : memref<1x128xf32, #tpu.memory_space<vmem>>, vector<1x128xf32>
    %197 = vector.broadcast %196 : vector<1x128xf32> to vector<20x128xf32>
    %198 = arith.addf %195, %197 : vector<20x128xf32>
    %cst_201 = arith.constant 0.000000e+00 : f32
    %199 = vector.broadcast %cst_201 : f32 to vector<20x128xf32>
    %200 = arith.subf %199, %198 : vector<20x128xf32>
    %201 = math.exp %200 : vector<20x128xf32>
    %cst_202 = arith.constant 1.000000e+00 : f32
    %202 = vector.broadcast %cst_202 : f32 to vector<20x128xf32>
    %203 = arith.addf %202, %201 : vector<20x128xf32>
    %cst_203 = arith.constant 1.000000e+00 : f32
    %204 = vector.broadcast %cst_203 : f32 to vector<20x128xf32>
    %205 = arith.divf %204, %203 : vector<20x128xf32>
    %c0_204 = arith.constant 0 : index
    %c0_205 = arith.constant 0 : index
    %c0_206 = arith.constant 0 : index
    %206 = vector.load %arg31[%c0_204, %c0_205, %c0_206] : memref<1x20x128xf32, #tpu.memory_space<vmem>>, vector<1x20x128xf32>
    %207 = vector.shape_cast %206 : vector<1x20x128xf32> to vector<20x128xf32>
    %208 = vector.shape_cast %205 : vector<20x128xf32> to vector<1x20x128xf32>
    tpu.vector_store %arg31[%c0_204, %c0_205, %c0_206], %208 {strides = array<i32>} : memref<1x20x128xf32, #tpu.memory_space<vmem>>, vector<1x20x128xf32>,
    return
  }
  func.func @transform_0(%arg0: i32) -> (i32, i32, i32) {
    %c0_i32 = arith.constant 0 : i32
    %c0_i32_0 = arith.constant 0 : i32
    %c0_i32_1 = arith.constant 0 : i32
    return %arg0, %c0_i32, %c0_i32_0 : i32, i32, i32
  }
  func.func @transform_1(%arg0: i32) -> (i32, i32, i32) {
    %c0_i32 = arith.constant 0 : i32
    %c0_i32_0 = arith.constant 0 : i32
    %c0_i32_1 = arith.constant 0 : i32
    %c0_i32_2 = arith.constant 0 : i32
    return %c0_i32, %c0_i32_0, %c0_i32_1 : i32, i32, i32
  }
  func.func @transform_2(%arg0: i32) -> (i32, i32) {
    %c0_i32 = arith.constant 0 : i32
    %c0_i32_0 = arith.constant 0 : i32
    %c0_i32_1 = arith.constant 0 : i32
    return %c0_i32, %c0_i32_0 : i32, i32
  }
  func.func @transform_3(%arg0: i32) -> (i32, i32) {
    %c0_i32 = arith.constant 0 : i32
    %c0_i32_0 = arith.constant 0 : i32
    %c0_i32_1 = arith.constant 0 : i32
    return %c0_i32, %c0_i32_0 : i32, i32
  }
  func.func @transform_4(%arg0: i32) -> (i32, i32) {
    %c0_i32 = arith.constant 0 : i32
    %c0_i32_0 = arith.constant 0 : i32
    %c0_i32_1 = arith.constant 0 : i32
    return %c0_i32, %c0_i32_0 : i32, i32
  }
  func.func @transform_5(%arg0: i32) -> (i32, i32) {
    %c0_i32 = arith.constant 0 : i32
    %c0_i32_0 = arith.constant 0 : i32
    %c0_i32_1 = arith.constant 0 : i32
    return %c0_i32, %c0_i32_0 : i32, i32
  }
  func.func @transform_6(%arg0: i32) -> (i32, i32) {
    %c0_i32 = arith.constant 0 : i32
    %c0_i32_0 = arith.constant 0 : i32
    %c0_i32_1 = arith.constant 0 : i32
    return %c0_i32, %c0_i32_0 : i32, i32
  }
  func.func @transform_7(%arg0: i32) -> (i32, i32, i32) {
    %c0_i32 = arith.constant 0 : i32
    %c0_i32_0 = arith.constant 0 : i32
    %c0_i32_1 = arith.constant 0 : i32
    %c0_i32_2 = arith.constant 0 : i32
    return %c0_i32, %c0_i32_0, %c0_i32_1 : i32, i32, i32
  }
  func.func @transform_8(%arg0: i32) -> (i32, i32) {
    %c0_i32 = arith.constant 0 : i32
    %c0_i32_0 = arith.constant 0 : i32
    %c0_i32_1 = arith.constant 0 : i32
    return %c0_i32, %c0_i32_0 : i32, i32
  }
  func.func @transform_9(%arg0: i32) -> (i32, i32) {
    %c0_i32 = arith.constant 0 : i32
    %c0_i32_0 = arith.constant 0 : i32
    %c0_i32_1 = arith.constant 0 : i32
    return %c0_i32, %c0_i32_0 : i32, i32
  }
  func.func @transform_10(%arg0: i32) -> (i32, i32) {
    %c0_i32 = arith.constant 0 : i32
    %c0_i32_0 = arith.constant 0 : i32
    %c0_i32_1 = arith.constant 0 : i32
    return %c0_i32, %c0_i32_0 : i32, i32
  }
  func.func @transform_11(%arg0: i32) -> (i32, i32) {
    %c0_i32 = arith.constant 0 : i32
    %c0_i32_0 = arith.constant 0 : i32
    %c0_i32_1 = arith.constant 0 : i32
    return %c0_i32, %c0_i32_0 : i32, i32
  }
  func.func @transform_12(%arg0: i32) -> (i32, i32) {
    %c0_i32 = arith.constant 0 : i32
    %c0_i32_0 = arith.constant 0 : i32
    %c0_i32_1 = arith.constant 0 : i32
    return %c0_i32, %c0_i32_0 : i32, i32
  }
  func.func @transform_13(%arg0: i32) -> (i32, i32, i32) {
    %c0_i32 = arith.constant 0 : i32
    %c0_i32_0 = arith.constant 0 : i32
    %c0_i32_1 = arith.constant 0 : i32
    %c0_i32_2 = arith.constant 0 : i32
    return %c0_i32, %c0_i32_0, %c0_i32_1 : i32, i32, i32
  }
  func.func @transform_14(%arg0: i32) -> (i32, i32) {
    %c0_i32 = arith.constant 0 : i32
    %c0_i32_0 = arith.constant 0 : i32
    %c0_i32_1 = arith.constant 0 : i32
    return %c0_i32, %c0_i32_0 : i32, i32
  }
  func.func @transform_15(%arg0: i32) -> (i32, i32) {
    %c0_i32 = arith.constant 0 : i32
    %c0_i32_0 = arith.constant 0 : i32
    %c0_i32_1 = arith.constant 0 : i32
    return %c0_i32, %c0_i32_0 : i32, i32
  }
  func.func @transform_16(%arg0: i32) -> (i32, i32) {
    %c0_i32 = arith.constant 0 : i32
    %c0_i32_0 = arith.constant 0 : i32
    %c0_i32_1 = arith.constant 0 : i32
    return %c0_i32, %c0_i32_0 : i32, i32
  }
  func.func @transform_17(%arg0: i32) -> (i32, i32) {
    %c0_i32 = arith.constant 0 : i32
    %c0_i32_0 = arith.constant 0 : i32
    %c0_i32_1 = arith.constant 0 : i32
    return %c0_i32, %c0_i32_0 : i32, i32
  }
  func.func @transform_18(%arg0: i32) -> (i32, i32) {
    %c0_i32 = arith.constant 0 : i32
    %c0_i32_0 = arith.constant 0 : i32
    %c0_i32_1 = arith.constant 0 : i32
    return %c0_i32, %c0_i32_0 : i32, i32
  }
  func.func @transform_19(%arg0: i32) -> (i32, i32, i32) {
    %c0_i32 = arith.constant 0 : i32
    %c0_i32_0 = arith.constant 0 : i32
    %c0_i32_1 = arith.constant 0 : i32
    %c0_i32_2 = arith.constant 0 : i32
    return %c0_i32, %c0_i32_0, %c0_i32_1 : i32, i32, i32
  }
  func.func @transform_20(%arg0: i32) -> (i32, i32, i32) {
    %c0_i32 = arith.constant 0 : i32
    %c0_i32_0 = arith.constant 0 : i32
    %c0_i32_1 = arith.constant 0 : i32
    %c0_i32_2 = arith.constant 0 : i32
    return %c0_i32, %c0_i32_0, %c0_i32_1 : i32, i32, i32
  }
  func.func @transform_21(%arg0: i32) -> (i32, i32) {
    %c0_i32 = arith.constant 0 : i32
    %c0_i32_0 = arith.constant 0 : i32
    %c0_i32_1 = arith.constant 0 : i32
    return %c0_i32, %c0_i32_0 : i32, i32
  }
  func.func @transform_22(%arg0: i32) -> (i32, i32, i32) {
    %c0_i32 = arith.constant 0 : i32
    %c0_i32_0 = arith.constant 0 : i32
    %c0_i32_1 = arith.constant 0 : i32
    %c0_i32_2 = arith.constant 0 : i32
    return %c0_i32, %c0_i32_0, %c0_i32_1 : i32, i32, i32
  }
  func.func @transform_23(%arg0: i32) -> (i32, i32, i32) {
    %c0_i32 = arith.constant 0 : i32
    %c0_i32_0 = arith.constant 0 : i32
    %c0_i32_1 = arith.constant 0 : i32
    %c0_i32_2 = arith.constant 0 : i32
    return %c0_i32, %c0_i32_0, %c0_i32_1 : i32, i32, i32
  }
  func.func @transform_24(%arg0: i32) -> (i32, i32) {
    %c0_i32 = arith.constant 0 : i32
    %c0_i32_0 = arith.constant 0 : i32
    %c0_i32_1 = arith.constant 0 : i32
    return %c0_i32, %c0_i32_0 : i32, i32
  }
  func.func @transform_25(%arg0: i32) -> (i32, i32, i32) {
    %c0_i32 = arith.constant 0 : i32
    %c0_i32_0 = arith.constant 0 : i32
    %c0_i32_1 = arith.constant 0 : i32
    %c0_i32_2 = arith.constant 0 : i32
    return %c0_i32, %c0_i32_0, %c0_i32_1 : i32, i32, i32
  }
  func.func @transform_26(%arg0: i32) -> (i32, i32, i32) {
    %c0_i32 = arith.constant 0 : i32
    %c0_i32_0 = arith.constant 0 : i32
    %c0_i32_1 = arith.constant 0 : i32
    %c0_i32_2 = arith.constant 0 : i32
    return %c0_i32, %c0_i32_0, %c0_i32_1 : i32, i32, i32
  }
  func.func @transform_27(%arg0: i32) -> (i32, i32) {
    %c0_i32 = arith.constant 0 : i32
    %c0_i32_0 = arith.constant 0 : i32
    %c0_i32_1 = arith.constant 0 : i32
    return %c0_i32, %c0_i32_0 : i32, i32
  }
  func.func @transform_28(%arg0: i32) -> (i32, i32, i32) {
    %c0_i32 = arith.constant 0 : i32
    %c0_i32_0 = arith.constant 0 : i32
    %c0_i32_1 = arith.constant 0 : i32
    %c0_i32_2 = arith.constant 0 : i32
    return %c0_i32, %c0_i32_0, %c0_i32_1 : i32, i32, i32
  }
  func.func @transform_29(%arg0: i32) -> (i32, i32) {
    %c0_i32 = arith.constant 0 : i32
    %c0_i32_0 = arith.constant 0 : i32
    %c0_i32_1 = arith.constant 0 : i32
    return %c0_i32, %c0_i32_0 : i32, i32
  }
  func.func @transform_30(%arg0: i32) -> (i32, i32, i32) {
    %c0_i32 = arith.constant 0 : i32
    %c0_i32_0 = arith.constant 0 : i32
    %c0_i32_1 = arith.constant 0 : i32
    return %arg0, %c0_i32, %c0_i32_0 : i32, i32, i32
  }
}

</mosaic_0001>

<llo_original>
// kernel: tile.30
$region0: #{tile.30}
  #allocation0 [shape = 's32[1]{0}', space=sflag, size = 0x4, scoped, tag = 'scoped memory for tile.30']
  %s0 = inlined_call_operand.vmem [shape: f32[32], index: 0, kind: input, shape index: {}]
  %s1 = inlined_call_operand.vmem [shape: f32[16,32], index: 1, kind: output, shape index: {}]
  // Predicated region
  $region2: #{tile.30} parent=0 // pred_check
    _
  $region3: #{tile.30} parent=0 // pred_check_branch
    %3 = sbr.rel (0) target = $region5
  $region4: #{tile.30} parent=0 // pred_region
    _
  $region5: #{tile.30} parent=0 // pred_fallthru
    _
  %v4 = vld [vmem:[%s0] ss:$0 sm:$0xff]
  %5 = vst [vmem:[%s1] sm:$0xff] %v4
  %s6 = scalar_lea.vmem %s1, 8
  %7 = vst [vmem:[%s6] sm:$0xff] %v4

// kernel: tile.31
$region0: #{tile.31}
  %s0 = inlined_call_operand.vmem [shape: f32[16,32], index: 0, kind: input, shape index: {}]
  %s1 = inlined_call_operand.vmem [shape: f32[1,512], index: 1, kind: output, shape index: {}]
  $region1: #{tile.31} parent=0
    #allocation0 [shape = 'u8[16384]{0}', space=vmem, size = 0x4000, scoped, tag = 'scoped mem for output reshape']
    %v2 = vld [vmem:[%s0] ss:$4 sm:$0xf]
    %vm3 = vcmask 261120
    %4 = vst.msk [vmem:[#allocation0] ss:$8 sm:$0xf] %vm3, %v2
    %s5 = scalar_lea.vmem %s0, 3
    %v6 = vld [vmem:[%s5] ss:$4 sm:$0xf]
    %7 = vrot.lane.b32.xlu0 %v6, 96
    %v8 = vpop.permute.xlu0 %7
    %vm9 = vcmask 1048320
    %10 = vst.msk [vmem:[#allocation0] ss:$8 sm:$0xf] %vm9, %v8
    %s11 = scalar_lea.vmem %s0, 2
    %v12 = vld [vmem:[%s11] ss:$4 sm:$0xf]
    %13 = vrot.lane.b32.xlu0 %v12, 64
    %v14 = vpop.permute.xlu0 %13
    %vm15 = vcmask 785920
    %16 = vst.msk [vmem:[#allocation0] ss:$8 sm:$0xf] %vm15, %v14
    %s17 = scalar_lea.vmem %s0, 1
    %v18 = vld [vmem:[%s17] ss:$4 sm:$0xf]
    %19 = vrot.lane.b32.xlu0 %v18, 32
    %v20 = vpop.permute.xlu0 %19
    %vm21 = vcmask 523520
    %22 = vst.msk [vmem:[#allocation0] ss:$8 sm:$0xf] %vm21, %v20
    %s24 = sshll.u32 1, 1
    %s25 = ssub.s32 %s24, 1
    %v27 = vld [vmem:[#allocation0] sm:%s25]
    %s28 = sshll.u32 1, 1
    %s29 = ssub.s32 %s28, 1
    %30 = vst [vmem:[%s1] sm:%s29] %v27
    %s31 = scalar_lea.vmem [#allocation0], 8
    %v32 = vld [vmem:[%s31] sm:%s25]
    %s33 = sshll.u32 1, 1
    %s34 = ssub.s32 %s33, 1
    %s35 = scalar_lea.vmem %s1, 1
    %36 = vst [vmem:[%s35] sm:%s34] %v32
    %s37 = scalar_lea.vmem [#allocation0], 16
    %v38 = vld [vmem:[%s37] sm:%s25]
    %s39 = sshll.u32 1, 1
    %s40 = ssub.s32 %s39, 1
    %s41 = smul.addr 1, 2
    %s42 = scalar_lea.vmem %s1, %s41
    %43 = vst [vmem:[%s42] sm:%s40] %v38
    %s44 = scalar_lea.vmem [#allocation0], 24
    %v45 = vld [vmem:[%s44] sm:%s25]
    %s46 = sshll.u32 1, 1
    %s47 = ssub.s32 %s46, 1
    %s48 = smul.addr 1, 3
    %s49 = scalar_lea.vmem %s1, %s48
    %50 = vst [vmem:[%s49] sm:%s47] %v45

// kernel: tile.34
$region0: #{tile.34}
  #allocation0 [shape = 's32[1]{0}', space=sflag, size = 0x4, scoped, tag = 'scoped memory for tile.34']
  %s0 = inlined_call_operand.vmem [shape: f32[16], index: 0, kind: input, shape index: {}]
  %s1 = inlined_call_operand.vmem [shape: f32[8,16], index: 1, kind: output, shape index: {}]
  // Predicated region
  $region2: #{tile.34} parent=0 // pred_check
    _
  $region3: #{tile.34} parent=0 // pred_check_branch
    %3 = sbr.rel (0) target = $region5
  $region4: #{tile.34} parent=0 // pred_region
    _
  $region5: #{tile.34} parent=0 // pred_fallthru
    _
  %v4 = vld [vmem:[%s0] ss:$0 sm:$0xff]
  %5 = vst [vmem:[%s1] sm:$0xff] %v4

// kernel: tile.35
$region0: #{tile.35}
  %s0 = inlined_call_operand.vmem [shape: f32[8,16], index: 0, kind: input, shape index: {}]
  %s1 = inlined_call_operand.vmem [shape: f32[1,128], index: 1, kind: output, shape index: {}]
  $region1: #{tile.35} parent=0
    #allocation0 [shape = 'u8[4096]{0}', space=vmem, size = 0x1000, scoped, tag = 'scoped mem for output reshape']
    %v2 = vld [vmem:[%s0] sm:$0x1]
    %vm3 = vcmask 130048
    %4 = vst.msk [vmem:[#allocation0] sm:$0x1] %vm3, %v2
    %s5 = scalar_lea.vmem %s0, 7
    %v6 = vld [vmem:[%s5] sm:$0x1]
    %7 = vrot.lane.b32.xlu0 %v6, 112
    %v8 = vpop.permute.xlu0 %7
    %vm9 = vcmask 1048448
    %10 = vst.msk [vmem:[#allocation0] sm:$0x1] %vm9, %v8
    %s11 = scalar_lea.vmem %s0, 6
    %v12 = vld [vmem:[%s11] sm:$0x1]
    %13 = vrot.lane.b32.xlu0 %v12, 96
    %v14 = vpop.permute.xlu0 %13
    %vm15 = vcmask 917248
    %16 = vst.msk [vmem:[#allocation0] sm:$0x1] %vm15, %v14
    %s17 = scalar_lea.vmem %s0, 5
    %v18 = vld [vmem:[%s17] sm:$0x1]
    %19 = vrot.lane.b32.xlu0 %v18, 80
    %v20 = vpop.permute.xlu0 %19
    %vm21 = vcmask 786048
    %22 = vst.msk [vmem:[#allocation0] sm:$0x1] %vm21, %v20
    %s23 = scalar_lea.vmem %s0, 4
    %v24 = vld [vmem:[%s23] sm:$0x1]
    %25 = vrot.lane.b32.xlu0 %v24, 64
    %v26 = vpop.permute.xlu0 %25
    %vm27 = vcmask 654848
    %28 = vst.msk [vmem:[#allocation0] sm:$0x1] %vm27, %v26
    %s29 = scalar_lea.vmem %s0, 3
    %v30 = vld [vmem:[%s29] sm:$0x1]
    %31 = vrot.lane.b32.xlu0 %v30, 48
    %v32 = vpop.permute.xlu0 %31
    %vm33 = vcmask 523648
    %34 = vst.msk [vmem:[#allocation0] sm:$0x1] %vm33, %v32
    %s35 = scalar_lea.vmem %s0, 2
    %v36 = vld [vmem:[%s35] sm:$0x1]
    %37 = vrot.lane.b32.xlu0 %v36, 32
    %v38 = vpop.permute.xlu0 %37
    %vm39 = vcmask 392448
    %40 = vst.msk [vmem:[#allocation0] sm:$0x1] %vm39, %v38
    %s41 = scalar_lea.vmem %s0, 1
    %v42 = vld [vmem:[%s41] sm:$0x1]
    %43 = vrot.lane.b32.xlu0 %v42, 16
    %v44 = vpop.permute.xlu0 %43
    %vm45 = vcmask 261248
    %46 = vst.msk [vmem:[#allocation0] sm:$0x1] %vm45, %v44
    %s48 = sshll.u32 1, 1
    %s49 = ssub.s32 %s48, 1
    %v51 = vld [vmem:[#allocation0] sm:%s49]
    %s52 = sshll.u32 1, 1
    %s53 = ssub.s32 %s52, 1
    %54 = vst [vmem:[%s1] sm:%s53] %v51

// kernel: tile.38
$region0: #{tile.38}
  #allocation0 [shape = 's32[1]{0}', space=sflag, size = 0x4, scoped, tag = 'scoped memory for tile.38']
  %s0 = inlined_call_operand.vmem [shape: f32[8], index: 0, kind: input, shape index: {}]
  %s1 = inlined_call_operand.vmem [shape: f32[4,8], index: 1, kind: output, shape index: {}]
  // Predicated region
  $region2: #{tile.38} parent=0 // pred_check
    _
  $region3: #{tile.38} parent=0 // pred_check_branch
    %3 = sbr.rel (0) target = $region5
  $region4: #{tile.38} parent=0 // pred_region
    _
  $region5: #{tile.38} parent=0 // pred_fallthru
    _
  %v4 = vld [vmem:[%s0] ss:$0 sm:$0xff]
  %5 = vst [vmem:[%s1] sm:$0xf] %v4

// kernel: tile.39
$region0: #{tile.39}
  %s0 = inlined_call_operand.vmem [shape: f32[4,8], index: 0, kind: input, shape index: {}]
  %s1 = inlined_call_operand.vmem [shape: f32[1,32], index: 1, kind: output, shape index: {}]
  $region1: #{tile.39} parent=0
    #allocation0 [shape = 'u8[4096]{0}', space=vmem, size = 0x1000, scoped, tag = 'scoped mem for output reshape']
    #allocation1 [shape = 'u8[4096]{0}', space=vmem, size = 0x1000, scoped, tag = 'scoped mem for input reshape']
    %s3 = sshll.u32 1, 4
    %s4 = ssub.s32 %s3, 1
    %v5 = vld [vmem:[%s0] sm:%s4]
    %6 = vst [vmem:[#allocation1] sm:%s4] %v5
    %v7 = vld [vmem:[#allocation1] sm:$0x1]
    %vm8 = vcmask 64512
    %9 = vst.msk [vmem:[#allocation0] sm:$0x1] %vm8, %v7
    %s10 = scalar_lea.vmem [#allocation1], 3
    %v11 = vld [vmem:[%s10] sm:$0x1]
    %12 = vrot.lane.b32.xlu0 %v11, 24
    %v13 = vpop.permute.xlu0 %12
    %vm14 = vcmask 261312
    %15 = vst.msk [vmem:[#allocation0] sm:$0x1] %vm14, %v13
    %s16 = scalar_lea.vmem [#allocation1], 2
    %v17 = vld [vmem:[%s16] sm:$0x1]
    %18 = vrot.lane.b32.xlu0 %v17, 16
    %v19 = vpop.permute.xlu0 %18
    %vm20 = vcmask 195712
    %21 = vst.msk [vmem:[#allocation0] sm:$0x1] %vm20, %v19
    %s22 = scalar_lea.vmem [#allocation1], 1
    %v23 = vld [vmem:[%s22] sm:$0x1]
    %24 = vrot.lane.b32.xlu0 %v23, 8
    %v25 = vpop.permute.xlu0 %24
    %vm26 = vcmask 130112
    %27 = vst.msk [vmem:[#allocation0] sm:$0x1] %vm26, %v25
    %s29 = sshll.u32 1, 1
    %s30 = ssub.s32 %s29, 1
    %v32 = vld [vmem:[#allocation0] sm:%s30]
    %s33 = sshll.u32 1, 1
    %s34 = ssub.s32 %s33, 1
    %35 = vst [vmem:[%s1] sm:%s34] %v32

// kernel: tile.42
$region0: #{tile.42}
  #allocation0 [shape = 's32[1]{0}', space=sflag, size = 0x4, scoped, tag = 'scoped memory for tile.42']
  %s0 = inlined_call_operand.vmem [shape: f32[8], index: 0, kind: input, shape index: {}]
  %s1 = inlined_call_operand.vmem [shape: f32[5,8], index: 1, kind: output, shape index: {}]
  // Predicated region
  $region2: #{tile.42} parent=0 // pred_check
    _
  $region3: #{tile.42} parent=0 // pred_check_branch
    %3 = sbr.rel (0) target = $region5
  $region4: #{tile.42} parent=0 // pred_region
    _
  $region5: #{tile.42} parent=0 // pred_fallthru
    _
  %v4 = vld [vmem:[%s0] ss:$0 sm:$0xff]
  %5 = vst [vmem:[%s1] sm:$0xff] %v4

// kernel: tile.43
$region0: #{tile.43}
  %s0 = inlined_call_operand.vmem [shape: f32[5,8], index: 0, kind: input, shape index: {}]
  %s1 = inlined_call_operand.vmem [shape: f32[1,40], index: 1, kind: output, shape index: {}]
  $region1: #{tile.43} parent=0
    #allocation0 [shape = 'u8[4096]{0}', space=vmem, size = 0x1000, scoped, tag = 'scoped mem for output reshape']
    %v2 = vld [vmem:[%s0] sm:$0x1]
    %vm3 = vcmask 64512
    %4 = vst.msk [vmem:[#allocation0] sm:$0x1] %vm3, %v2
    %s5 = scalar_lea.vmem %s0, 4
    %v6 = vld [vmem:[%s5] sm:$0x1]
    %7 = vrot.lane.b32.xlu0 %v6, 32
    %v8 = vpop.permute.xlu0 %7
    %vm9 = vcmask 326912
    %10 = vst.msk [vmem:[#allocation0] sm:$0x1] %vm9, %v8
    %s11 = scalar_lea.vmem %s0, 3
    %v12 = vld [vmem:[%s11] sm:$0x1]
    %13 = vrot.lane.b32.xlu0 %v12, 24
    %v14 = vpop.permute.xlu0 %13
    %vm15 = vcmask 261312
    %16 = vst.msk [vmem:[#allocation0] sm:$0x1] %vm15, %v14
    %s17 = scalar_lea.vmem %s0, 2
    %v18 = vld [vmem:[%s17] sm:$0x1]
    %19 = vrot.lane.b32.xlu0 %v18, 16
    %v20 = vpop.permute.xlu0 %19
    %vm21 = vcmask 195712
    %22 = vst.msk [vmem:[#allocation0] sm:$0x1] %vm21, %v20
    %s23 = scalar_lea.vmem %s0, 1
    %v24 = vld [vmem:[%s23] sm:$0x1]
    %25 = vrot.lane.b32.xlu0 %v24, 8
    %v26 = vpop.permute.xlu0 %25
    %vm27 = vcmask 130112
    %28 = vst.msk [vmem:[#allocation0] sm:$0x1] %vm27, %v26
    %s30 = sshll.u32 1, 1
    %s31 = ssub.s32 %s30, 1
    %v33 = vld [vmem:[#allocation0] sm:%s31]
    %s34 = sshll.u32 1, 1
    %s35 = ssub.s32 %s34, 1
    %36 = vst [vmem:[%s1] sm:%s35] %v33

// kernel: tile.46
$region0: #{tile.46}
  #allocation0 [shape = 's32[1]{0}', space=sflag, size = 0x4, scoped, tag = 'scoped memory for tile.46']
  %s0 = inlined_call_operand.vmem [shape: f32[16], index: 0, kind: input, shape index: {}]
  %s1 = inlined_call_operand.vmem [shape: f32[10,16], index: 1, kind: output, shape index: {}]
  // Predicated region
  $region2: #{tile.46} parent=0 // pred_check
    _
  $region3: #{tile.46} parent=0 // pred_check_branch
    %3 = sbr.rel (0) target = $region5
  $region4: #{tile.46} parent=0 // pred_region
    _
  $region5: #{tile.46} parent=0 // pred_fallthru
    _
  %v4 = vld [vmem:[%s0] ss:$0 sm:$0xff]
  %5 = vst [vmem:[%s1] sm:$0xff] %v4
  %s6 = scalar_lea.vmem %s1, 8
  %7 = vst [vmem:[%s6] sm:$0xff] %v4

// kernel: tile.47
$region0: #{tile.47}
  %s0 = inlined_call_operand.vmem [shape: f32[10,16], index: 0, kind: input, shape index: {}]
  %s1 = inlined_call_operand.vmem [shape: f32[1,160], index: 1, kind: output, shape index: {}]
  $region1: #{tile.47} parent=0
    #allocation0 [shape = 'u8[8192]{0}', space=vmem, size = 0x2000, scoped, tag = 'scoped mem for output reshape']
    %s2 = smov 3
    %v3 = vld [vmem:[%s0] ss:$8 sm:%s2]
    %vm4 = vcmask 130048
    %5 = vst.msk [vmem:[#allocation0] ss:$8 sm:$0x3] %vm4, %v3
    %s6 = scalar_lea.vmem %s0, 7
    %v7 = vld [vmem:[%s6] sm:$0x1]
    %8 = vrot.lane.b32.xlu0 %v7, 112
    %v9 = vpop.permute.xlu0 %8
    %vm10 = vcmask 1048448
    %11 = vst.msk [vmem:[#allocation0] sm:$0x1] %vm10, %v9
    %s12 = scalar_lea.vmem %s0, 6
    %v13 = vld [vmem:[%s12] sm:$0x1]
    %14 = vrot.lane.b32.xlu0 %v13, 96
    %v15 = vpop.permute.xlu0 %14
    %vm16 = vcmask 917248
    %17 = vst.msk [vmem:[#allocation0] sm:$0x1] %vm16, %v15
    %s18 = scalar_lea.vmem %s0, 5
    %v19 = vld [vmem:[%s18] sm:$0x1]
    %20 = vrot.lane.b32.xlu0 %v19, 80
    %v21 = vpop.permute.xlu0 %20
    %vm22 = vcmask 786048
    %23 = vst.msk [vmem:[#allocation0] sm:$0x1] %vm22, %v21
    %s24 = scalar_lea.vmem %s0, 4
    %v25 = vld [vmem:[%s24] sm:$0x1]
    %26 = vrot.lane.b32.xlu0 %v25, 64
    %v27 = vpop.permute.xlu0 %26
    %vm28 = vcmask 654848
    %29 = vst.msk [vmem:[#allocation0] sm:$0x1] %vm28, %v27
    %s30 = scalar_lea.vmem %s0, 3
    %v31 = vld [vmem:[%s30] sm:$0x1]
    %32 = vrot.lane.b32.xlu0 %v31, 48
    %v33 = vpop.permute.xlu0 %32
    %vm34 = vcmask 523648
    %35 = vst.msk [vmem:[#allocation0] sm:$0x1] %vm34, %v33
    %s36 = scalar_lea.vmem %s0, 2
    %v37 = vld [vmem:[%s36] sm:$0x1]
    %38 = vrot.lane.b32.xlu0 %v37, 32
    %v39 = vpop.permute.xlu0 %38
    %vm40 = vcmask 392448
    %41 = vst.msk [vmem:[#allocation0] sm:$0x1] %vm40, %v39
    %s42 = scalar_lea.vmem %s0, 1
    %s43 = smov 3
    %v44 = vld [vmem:[%s42] ss:$8 sm:%s43]
    %45 = vrot.lane.b32.xlu0 %v44, 16
    %v46 = vpop.permute.xlu0 %45
    %vm47 = vcmask 261248
    %48 = vst.msk [vmem:[#allocation0] ss:$8 sm:$0x3] %vm47, %v46
    %s50 = sshll.u32 1, 1
    %s51 = ssub.s32 %s50, 1
    %v53 = vld [vmem:[#allocation0] sm:%s51]
    %s54 = sshll.u32 1, 1
    %s55 = ssub.s32 %s54, 1
    %56 = vst [vmem:[%s1] sm:%s55] %v53
    %s57 = scalar_lea.vmem [#allocation0], 8
    %v58 = vld [vmem:[%s57] sm:%s51]
    %s59 = sshll.u32 1, 1
    %s60 = ssub.s32 %s59, 1
    %s61 = scalar_lea.vmem %s1, 1
    %62 = vst [vmem:[%s61] sm:%s60] %v58

// kernel: tile.50
$region0: #{tile.50}
  #allocation0 [shape = 's32[1]{0}', space=sflag, size = 0x4, scoped, tag = 'scoped memory for tile.50']
  %s0 = inlined_call_operand.vmem [shape: f32[32], index: 0, kind: input, shape index: {}]
  %s1 = inlined_call_operand.vmem [shape: f32[20,32], index: 1, kind: output, shape index: {}]
  // Predicated region
  $region2: #{tile.50} parent=0 // pred_check
    _
  $region3: #{tile.50} parent=0 // pred_check_branch
    %3 = sbr.rel (0) target = $region5
  $region4: #{tile.50} parent=0 // pred_region
    _
  $region5: #{tile.50} parent=0 // pred_fallthru
    _
  %v4 = vld [vmem:[%s0] ss:$0 sm:$0xff]
  %5 = vst [vmem:[%s1] sm:$0xff] %v4
  %s6 = scalar_lea.vmem %s1, 8
  %7 = vst [vmem:[%s6] sm:$0xff] %v4
  %s8 = scalar_lea.vmem %s1, 16
  %9 = vst [vmem:[%s8] sm:$0xff] %v4

// kernel: tile.51
$region0: #{tile.51}
  %s0 = inlined_call_operand.vmem [shape: f32[20,32], index: 0, kind: input, shape index: {}]
  %s1 = inlined_call_operand.vmem [shape: f32[1,640], index: 1, kind: output, shape index: {}]
  $region1: #{tile.51} parent=0
    #allocation0 [shape = 'u8[20480]{0}', space=vmem, size = 0x5000, scoped, tag = 'scoped mem for output reshape']
    %v2 = vld [vmem:[%s0] ss:$4 sm:$0x1f]
    %vm3 = vcmask 261120
    %4 = vst.msk [vmem:[#allocation0] ss:$8 sm:$0xf] %vm3, %v2
    %s5 = scalar_lea.vmem [#allocation0], 28
    %6 = vst.msk [vmem:[%s5] sm:$0x10] %vm3, %v2
    %s7 = scalar_lea.vmem %s0, 3
    %v8 = vld [vmem:[%s7] ss:$4 sm:$0x1f]
    %9 = vrot.lane.b32.xlu0 %v8, 96
    %v10 = vpop.permute.xlu0 %9
    %vm11 = vcmask 1048320
    %12 = vst.msk [vmem:[#allocation0] ss:$8 sm:$0xf] %vm11, %v10
    %s13 = scalar_lea.vmem [#allocation0], 28
    %14 = vst.msk [vmem:[%s13] sm:$0x10] %vm11, %v10
    %s15 = scalar_lea.vmem %s0, 2
    %v16 = vld [vmem:[%s15] ss:$4 sm:$0x1f]
    %17 = vrot.lane.b32.xlu0 %v16, 64
    %v18 = vpop.permute.xlu0 %17
    %vm19 = vcmask 785920
    %20 = vst.msk [vmem:[#allocation0] ss:$8 sm:$0xf] %vm19, %v18
    %s21 = scalar_lea.vmem [#allocation0], 28
    %22 = vst.msk [vmem:[%s21] sm:$0x10] %vm19, %v18
    %s23 = scalar_lea.vmem %s0, 1
    %v24 = vld [vmem:[%s23] ss:$4 sm:$0x1f]
    %25 = vrot.lane.b32.xlu0 %v24, 32
    %v26 = vpop.permute.xlu0 %25
    %vm27 = vcmask 523520
    %28 = vst.msk [vmem:[#allocation0] ss:$8 sm:$0xf] %vm27, %v26
    %s29 = scalar_lea.vmem [#allocation0], 28
    %30 = vst.msk [vmem:[%s29] sm:$0x10] %vm27, %v26
    %s32 = sshll.u32 1, 1
    %s33 = ssub.s32 %s32, 1
    %v35 = vld [vmem:[#allocation0] sm:%s33]
    %s36 = sshll.u32 1, 1
    %s37 = ssub.s32 %s36, 1
    %38 = vst [vmem:[%s1] sm:%s37] %v35
    %s39 = scalar_lea.vmem [#allocation0], 8
    %v40 = vld [vmem:[%s39] sm:%s33]
    %s41 = sshll.u32 1, 1
    %s42 = ssub.s32 %s41, 1
    %s43 = scalar_lea.vmem %s1, 1
    %44 = vst [vmem:[%s43] sm:%s42] %v40
    %s45 = scalar_lea.vmem [#allocation0], 16
    %v46 = vld [vmem:[%s45] sm:%s33]
    %s47 = sshll.u32 1, 1
    %s48 = ssub.s32 %s47, 1
    %s49 = smul.addr 1, 2
    %s50 = scalar_lea.vmem %s1, %s49
    %51 = vst [vmem:[%s50] sm:%s48] %v46
    %s52 = scalar_lea.vmem [#allocation0], 24
    %v53 = vld [vmem:[%s52] sm:%s33]
    %s54 = sshll.u32 1, 1
    %s55 = ssub.s32 %s54, 1
    %s56 = smul.addr 1, 3
    %s57 = scalar_lea.vmem %s1, %s56
    %58 = vst [vmem:[%s57] sm:%s55] %v53
    %s59 = scalar_lea.vmem [#allocation0], 32
    %v60 = vld [vmem:[%s59] sm:%s33]
    %s61 = sshll.u32 1, 1
    %s62 = ssub.s32 %s61, 1
    %s63 = smul.addr 1, 4
    %s64 = scalar_lea.vmem %s1, %s63
    %65 = vst [vmem:[%s64] sm:%s62] %v60

// kernel: tile.54
$region0: #{tile.54}
  #allocation0 [shape = 's32[1]{0}', space=sflag, size = 0x4, scoped, tag = 'scoped memory for tile.54']
  %s0 = inlined_call_operand.vmem [shape: f32[3], index: 0, kind: input, shape index: {}]
  %s1 = inlined_call_operand.vmem [shape: f32[20,3], index: 1, kind: output, shape index: {}]
  // Predicated region
  $region2: #{tile.54} parent=0 // pred_check
    _
  $region3: #{tile.54} parent=0 // pred_check_branch
    %3 = sbr.rel (0) target = $region5
  $region4: #{tile.54} parent=0 // pred_region
    _
  $region5: #{tile.54} parent=0 // pred_fallthru
    _
  %v4 = vld [vmem:[%s0] ss:$0 sm:$0xff]
  %5 = vst [vmem:[%s1] sm:$0xff] %v4
  %s6 = scalar_lea.vmem %s1, 8
  %7 = vst [vmem:[%s6] sm:$0xff] %v4
  %s8 = scalar_lea.vmem %s1, 16
  %9 = vst [vmem:[%s8] sm:$0xff] %v4

// kernel: tile.55
$region0: #{tile.55}
  %s0 = inlined_call_operand.vmem [shape: f32[20,3], index: 0, kind: input, shape index: {}]
  %s1 = inlined_call_operand.vmem [shape: f32[1,60], index: 1, kind: output, shape index: {}]
  $region1: #{tile.55} parent=0
    #allocation0 [shape = 'u8[4096]{0}', space=vmem, size = 0x1000, scoped, tag = 'scoped mem for output reshape']
    %v2 = vld [vmem:[%s0] sm:$0x1]
    %vm3 = vcmask 23552
    %4 = vst.msk [vmem:[#allocation0] sm:$0x1] %vm3, %v2
    %s5 = scalar_lea.vmem %s0, 19
    %v6 = vld [vmem:[%s5] sm:$0x1]
    %7 = vrot.lane.b32.xlu0 %v6, 57
    %v8 = vpop.permute.xlu0 %7
    %vm9 = vcmask 490952
    %10 = vst.msk [vmem:[#allocation0] sm:$0x1] %vm9, %v8
    %s11 = scalar_lea.vmem %s0, 18
    %v12 = vld [vmem:[%s11] sm:$0x1]
    %13 = vrot.lane.b32.xlu0 %v12, 54
    %v14 = vpop.permute.xlu0 %13
    %vm15 = vcmask 466352
    %16 = vst.msk [vmem:[#allocation0] sm:$0x1] %vm15, %v14
    %s17 = scalar_lea.vmem %s0, 17
    %v18 = vld [vmem:[%s17] sm:$0x1]
    %19 = vrot.lane.b32.xlu0 %v18, 51
    %v20 = vpop.permute.xlu0 %19
    %vm21 = vcmask 441752
    %22 = vst.msk [vmem:[#allocation0] sm:$0x1] %vm21, %v20
    %s23 = scalar_lea.vmem %s0, 16
    %v24 = vld [vmem:[%s23] sm:$0x1]
    %25 = vrot.lane.b32.xlu0 %v24, 48
    %v26 = vpop.permute.xlu0 %25
    %vm27 = vcmask 417152
    %28 = vst.msk [vmem:[#allocation0] sm:$0x1] %vm27, %v26
    %s29 = scalar_lea.vmem %s0, 15
    %v30 = vld [vmem:[%s29] sm:$0x1]
    %31 = vrot.lane.b32.xlu0 %v30, 45
    %v32 = vpop.permute.xlu0 %31
    %vm33 = vcmask 392552
    %34 = vst.msk [vmem:[#allocation0] sm:$0x1] %vm33, %v32
    %s35 = scalar_lea.vmem %s0, 14
    %v36 = vld [vmem:[%s35] sm:$0x1]
    %37 = vrot.lane.b32.xlu0 %v36, 42
    %v38 = vpop.permute.xlu0 %37
    %vm39 = vcmask 367952
    %40 = vst.msk [vmem:[#allocation0] sm:$0x1] %vm39, %v38
    %s41 = scalar_lea.vmem %s0, 13
    %v42 = vld [vmem:[%s41] sm:$0x1]
    %43 = vrot.lane.b32.xlu0 %v42, 39
    %v44 = vpop.permute.xlu0 %43
    %vm45 = vcmask 343352
    %46 = vst.msk [vmem:[#allocation0] sm:$0x1] %vm45, %v44
    %s47 = scalar_lea.vmem %s0, 12
    %v48 = vld [vmem:[%s47] sm:$0x1]
    %49 = vrot.lane.b32.xlu0 %v48, 36
    %v50 = vpop.permute.xlu0 %49
    %vm51 = vcmask 318752
    %52 = vst.msk [vmem:[#allocation0] sm:$0x1] %vm51, %v50
    %s53 = scalar_lea.vmem %s0, 11
    %v54 = vld [vmem:[%s53] sm:$0x1]
    %55 = vrot.lane.b32.xlu0 %v54, 33
    %v56 = vpop.permute.xlu0 %55
    %vm57 = vcmask 294152
    %58 = vst.msk [vmem:[#allocation0] sm:$0x1] %vm57, %v56
    %s59 = scalar_lea.vmem %s0, 10
    %v60 = vld [vmem:[%s59] sm:$0x1]
    %61 = vrot.lane.b32.xlu0 %v60, 30
    %v62 = vpop.permute.xlu0 %61
    %vm63 = vcmask 269552
    %64 = vst.msk [vmem:[#allocation0] sm:$0x1] %vm63, %v62
    %s65 = scalar_lea.vmem %s0, 9
    %v66 = vld [vmem:[%s65] sm:$0x1]
    %67 = vrot.lane.b32.xlu0 %v66, 27
    %v68 = vpop.permute.xlu0 %67
    %vm69 = vcmask 244952
    %70 = vst.msk [vmem:[#allocation0] sm:$0x1] %vm69, %v68
    %s71 = scalar_lea.vmem %s0, 8
    %v72 = vld [vmem:[%s71] sm:$0x1]
    %73 = vrot.lane.b32.xlu0 %v72, 24
    %v74 = vpop.permute.xlu0 %73
    %vm75 = vcmask 220352
    %76 = vst.msk [vmem:[#allocation0] sm:$0x1] %vm75, %v74
    %s77 = scalar_lea.vmem %s0, 7
    %v78 = vld [vmem:[%s77] sm:$0x1]
    %79 = vrot.lane.b32.xlu0 %v78, 21
    %v80 = vpop.permute.xlu0 %79
    %vm81 = vcmask 195752
    %82 = vst.msk [vmem:[#allocation0] sm:$0x1] %vm81, %v80
    %s83 = scalar_lea.vmem %s0, 6
    %v84 = vld [vmem:[%s83] sm:$0x1]
    %85 = vrot.lane.b32.xlu0 %v84, 18
    %v86 = vpop.permute.xlu0 %85
    %vm87 = vcmask 171152
    %88 = vst.msk [vmem:[#allocation0] sm:$0x1] %vm87, %v86
    %s89 = scalar_lea.vmem %s0, 5
    %v90 = vld [vmem:[%s89] sm:$0x1]
    %91 = vrot.lane.b32.xlu0 %v90, 15
    %v92 = vpop.permute.xlu0 %91
    %vm93 = vcmask 146552
    %94 = vst.msk [vmem:[#allocation0] sm:$0x1] %vm93, %v92
    %s95 = scalar_lea.vmem %s0, 4
    %v96 = vld [vmem:[%s95] sm:$0x1]
    %97 = vrot.lane.b32.xlu0 %v96, 12
    %v98 = vpop.permute.xlu0 %97
    %vm99 = vcmask 121952
    %100 = vst.msk [vmem:[#allocation0] sm:$0x1] %vm99, %v98
    %s101 = scalar_lea.vmem %s0, 3
    %v102 = vld [vmem:[%s101] sm:$0x1]
    %103 = vrot.lane.b32.xlu0 %v102, 9
    %v104 = vpop.permute.xlu0 %103
    %vm105 = vcmask 97352
    %106 = vst.msk [vmem:[#allocation0] sm:$0x1] %vm105, %v104
    %s107 = scalar_lea.vmem %s0, 2
    %v108 = vld [vmem:[%s107] sm:$0x1]
    %109 = vrot.lane.b32.xlu0 %v108, 6
    %v110 = vpop.permute.xlu0 %109
    %vm111 = vcmask 72752
    %112 = vst.msk [vmem:[#allocation0] sm:$0x1] %vm111, %v110
    %s113 = scalar_lea.vmem %s0, 1
    %v114 = vld [vmem:[%s113] sm:$0x1]
    %115 = vrot.lane.b32.xlu0 %v114, 3
    %v116 = vpop.permute.xlu0 %115
    %vm117 = vcmask 48152
    %118 = vst.msk [vmem:[#allocation0] sm:$0x1] %vm117, %v116
    %s120 = sshll.u32 1, 1
    %s121 = ssub.s32 %s120, 1
    %v123 = vld [vmem:[#allocation0] sm:%s121]
    %s124 = sshll.u32 1, 1
    %s125 = ssub.s32 %s124, 1
    %126 = vst [vmem:[%s1] sm:%s125] %v123

// kernel: _lambda_.1
$region0: #{_lambda_.1}
  #allocation0 [shape = 'u32[]', space=smem, size = 0x4, offset = 0x4, fixed_abs, tag = 'smem constant byte address 0x4 - core index']
  #allocation1 [shape = 'u32[144,128]{1,0:T(1,128)}', space=vmem, size = 0x12000, scoped, tag = 'internal scratch']
  #allocation2 [shape = 'bf16[10,256]{1,0:T(8,128)(2,1)}', space=vmem, size = 0x2000, scoped, tag = 'scratch operand']
  #allocation3 [shape = 'bf16[6,64]{1,0:T(8,128)(2,1)}', space=vmem, size = 0x800, scoped, tag = 'scratch operand']
  #allocation4 [shape = 'bf16[22,640]{1,0:T(8,128)(2,1)}', space=vmem, size = 0x7800, scoped, tag = 'scratch operand']
  %s0 = inlined_call_operand.smem [shape: u32[31], index: -1, kind: input, shape index: {}]
  %s1 = sld [smem:[%s0]]
  %s2 = scalar_lea.smem %s0, 1
  %s3 = sld [smem:[%s2]]
  %s4 = scalar_lea.smem %s0, 2
  %s5 = sld [smem:[%s4]]
  %s6 = scalar_lea.smem %s0, 3
  %s7 = sld [smem:[%s6]]
  %s8 = scalar_lea.smem %s0, 4
  %s9 = sld [smem:[%s8]]
  %s10 = scalar_lea.smem %s0, 5
  %s11 = sld [smem:[%s10]]
  %s12 = scalar_lea.smem %s0, 6
  %s13 = sld [smem:[%s12]]
  %s14 = scalar_lea.smem %s0, 7
  %s15 = sld [smem:[%s14]]
  %s16 = scalar_lea.smem %s0, 8
  %s17 = sld [smem:[%s16]]
  %s18 = scalar_lea.smem %s0, 9
  %s19 = sld [smem:[%s18]]
  %s20 = scalar_lea.smem %s0, 10
  %s21 = sld [smem:[%s20]]
  %s22 = scalar_lea.smem %s0, 11
  %s23 = sld [smem:[%s22]]
  %s24 = scalar_lea.smem %s0, 12
  %s25 = sld [smem:[%s24]]
  %s26 = scalar_lea.smem %s0, 13
  %s27 = sld [smem:[%s26]]
  %s28 = scalar_lea.smem %s0, 14
  %s29 = sld [smem:[%s28]]
  %s30 = scalar_lea.smem %s0, 15
  %s31 = sld [smem:[%s30]]
  %s32 = scalar_lea.smem %s0, 16
  %s33 = sld [smem:[%s32]]
  %s34 = scalar_lea.smem %s0, 17
  %s35 = sld [smem:[%s34]]
  %s36 = scalar_lea.smem %s0, 18
  %s37 = sld [smem:[%s36]]
  %s38 = scalar_lea.smem %s0, 19
  %s39 = sld [smem:[%s38]]
  %s40 = scalar_lea.smem %s0, 20
  %s41 = sld [smem:[%s40]]
  %s42 = scalar_lea.smem %s0, 21
  %s43 = sld [smem:[%s42]]
  %s44 = scalar_lea.smem %s0, 22
  %s45 = sld [smem:[%s44]]
  %s46 = scalar_lea.smem %s0, 23
  %s47 = sld [smem:[%s46]]
  %s48 = scalar_lea.smem %s0, 24
  %s49 = sld [smem:[%s48]]
  %s50 = scalar_lea.smem %s0, 25
  %s51 = sld [smem:[%s50]]
  %s52 = scalar_lea.smem %s0, 26
  %s53 = sld [smem:[%s52]]
  %s54 = scalar_lea.smem %s0, 27
  %s55 = sld [smem:[%s54]]
  %s56 = scalar_lea.smem %s0, 28
  %s57 = sld [smem:[%s56]]
  %s58 = scalar_lea.smem %s0, 29
  %s59 = sld [smem:[%s58]]
  %s60 = scalar_lea.smem %s0, 30
  %s61 = sld [smem:[%s60]]
  %s62 = sld [smem:[#allocation0]]
  $region153: #{_lambda_.1} parent=0
    _
  %s64 = ssub.s32 1, %s62
  %s65 = scalar_select 0, %s64, %s62
  loop: start=0, step=1, limit=4
  $region2: #{_lambda_.1} parent=0 // loop_pre_header
    _
  $region3: #{_lambda_.1} parent=0 // loop_header
    %s67 = sphi 0, %s71
    %p68 = scmp.ge.s32.totalorder %s67, 4
    %s77 = sphi 0, %s79
    %s80 = sphi 0, %s77
    %s81 = sphi 0, %s80
    %s97 = sphi 0, %s81
    %s101 = sphi 0, %s101
    %s103 = sphi 0, %s101
    %s104 = sphi 0, %s103
    %s118 = sphi 0, %s104
    %s122 = sphi 0, %s122
    %s124 = sphi 0, %s122
    %s125 = sphi 0, %s124
    %s139 = sphi 0, %s125
    %s143 = sphi 0, %s143
    %s145 = sphi 0, %s143
    %s146 = sphi 0, %s145
    %s160 = sphi 0, %s146
    %s164 = sphi 0, %s164
    %s166 = sphi 0, %s164
    %s167 = sphi 0, %s166
    %s181 = sphi 0, %s167
    %s185 = sphi 0, %s185
    %s187 = sphi 0, %s185
    %s188 = sphi 0, %s187
    %s202 = sphi 0, %s188
    %s206 = sphi 0, %s206
    %s208 = sphi 0, %s206
    %s209 = sphi 0, %s208
    %s223 = sphi 0, %s209
    %s227 = sphi 0, %s227
    %s229 = sphi 0, %s227
    %s230 = sphi 0, %s229
    %s244 = sphi 0, %s230
    %s248 = sphi 0, %s248
    %s250 = sphi 0, %s248
    %s251 = sphi 0, %s250
    %s265 = sphi 0, %s251
    %s269 = sphi 0, %s269
    %s271 = sphi 0, %s269
    %s272 = sphi 0, %s271
    %s286 = sphi 0, %s272
    %s290 = sphi 0, %s290
    %s292 = sphi 0, %s290
    %s293 = sphi 0, %s292
    %s307 = sphi 0, %s293
    %s311 = sphi 0, %s311
    %s313 = sphi 0, %s311
    %s314 = sphi 0, %s313
    %s328 = sphi 0, %s314
    %s332 = sphi 0, %s332
    %s334 = sphi 0, %s332
    %s335 = sphi 0, %s334
    %s349 = sphi 0, %s335
    %s353 = sphi 0, %s353
    %s355 = sphi 0, %s353
    %s356 = sphi 0, %s355
    %s370 = sphi 0, %s356
    %s374 = sphi 0, %s374
    %s376 = sphi 0, %s374
    %s377 = sphi 0, %s376
    %s391 = sphi 0, %s377
    %s395 = sphi 0, %s395
    %s397 = sphi 0, %s395
    %s398 = sphi 0, %s397
    %s412 = sphi 0, %s398
    %s416 = sphi 0, %s416
    %s418 = sphi 0, %s416
    %s419 = sphi 0, %s418
    %s433 = sphi 0, %s419
    %s437 = sphi 0, %s437
    %s439 = sphi 0, %s437
    %s440 = sphi 0, %s439
    %s454 = sphi 0, %s440
    %s458 = sphi 0, %s458
    %s460 = sphi 0, %s458
    %s461 = sphi 0, %s460
    %s475 = sphi 0, %s461
    %s479 = sphi 0, %s479
    %s481 = sphi 0, %s479
    %s482 = sphi 0, %s481
    %s496 = sphi 0, %s482
    %s500 = sphi 0, %s500
    %s502 = sphi 0, %s500
    %s503 = sphi 0, %s502
    %s517 = sphi 0, %s503
    %s521 = sphi 0, %s521
    %s523 = sphi 0, %s521
    %s524 = sphi 0, %s523
    %s538 = sphi 0, %s524
    %s542 = sphi 0, %s542
    %s544 = sphi 0, %s542
    %s545 = sphi 0, %s544
    %s559 = sphi 0, %s545
    %s563 = sphi 0, %s563
    %s565 = sphi 0, %s563
    %s566 = sphi 0, %s565
    %s580 = sphi 0, %s566
    %s584 = sphi 0, %s584
    %s586 = sphi 0, %s584
    %s587 = sphi 0, %s586
    %s601 = sphi 0, %s587
    %s605 = sphi 0, %s605
    %s607 = sphi 0, %s605
    %s608 = sphi 0, %s607
    %s622 = sphi 0, %s608
    %s626 = sphi 0, %s626
    %s628 = sphi 0, %s626
    %s629 = sphi 0, %s628
    %s643 = sphi 0, %s629
    %s647 = sphi 0, %s647
    %s649 = sphi 0, %s647
    %s650 = sphi 0, %s649
    %s664 = sphi 0, %s650
    %s668 = sphi 0, %s668
    %s670 = sphi 0, %s668
    %s671 = sphi 0, %s670
    %s685 = sphi 0, %s671
    %s689 = sphi 0, %s689
    %s691 = sphi 0, %s689
    %s692 = sphi 0, %s691
    %s706 = sphi 0, %s692
    %s712 = sphi 0, %s714
    %s715 = sphi 0, %s712
    %s716 = sphi 0, %s715
    %s732 = sphi 0, %s716
  $region4: #{_lambda_.1} parent=0 // loop_header_branch
    %70 = sbr.rel (%p68) target = $region8
  $region5: #{_lambda_.1} parent=0 // loop_body
    %s72 = ssub.s32 %s67, 1
    %s73 = ssub.s32 %s67, 2
    %s74 = sadd.s32 %s67, 1
    %s75 = ssub.s32 %s67, %s74
    %p76 = scmp.eq.s32.totalorder %s75, 0
    %s78 = sadd.s32 %s77, 1
    %s79 = scalar_select %p76, %s77, %s78
    %p82 = pneg %p76
    %p83 = scmp.eq.s32.totalorder %s67, 1
    %p84 = por %p82, %p83
    %p85 = scmp.ne.s32.totalorder %s77, %s80
    %p86 = scmp.eq.s32.totalorder %s67, 0
    %p87 = por %p85, %p86
    %p88 = scmp.ne.s32.totalorder %s77, %s80
    %p89 = scmp.eq.s32.totalorder %s72, 1
    %p90 = por %p88, %p89
    %p91 = scmp.ne.s32.totalorder %s80, %s81
    %p92 = scmp.eq.s32.totalorder %s72, 0
    %p93 = por %p91, %p92
    %p94 = scmp.ne.s32.totalorder %s80, %s81
    %p95 = scmp.eq.s32.totalorder %s73, 1
    %p96 = por %p94, %p95
    %p98 = scmp.ne.s32.totalorder %s81, %s97
    %p99 = scmp.eq.s32.totalorder %s73, 0
    %p100 = por %p98, %p99
    %s102 = sadd.s32 %s101, 1
    %p105 = scmp.eq.s32.totalorder %s67, 1
    %p106 = scmp.ne.s32.totalorder %s101, %s103
    %p107 = scmp.eq.s32.totalorder %s67, 0
    %p108 = por %p106, %p107
    %p109 = scmp.ne.s32.totalorder %s101, %s103
    %p110 = scmp.eq.s32.totalorder %s72, 1
    %p111 = por %p109, %p110
    %p112 = scmp.ne.s32.totalorder %s103, %s104
    %p113 = scmp.eq.s32.totalorder %s72, 0
    %p114 = por %p112, %p113
    %p115 = scmp.ne.s32.totalorder %s103, %s104
    %p116 = scmp.eq.s32.totalorder %s73, 1
    %p117 = por %p115, %p116
    %p119 = scmp.ne.s32.totalorder %s104, %s118
    %p120 = scmp.eq.s32.totalorder %s73, 0
    %p121 = por %p119, %p120
    %s123 = sadd.s32 %s122, 1
    %p126 = scmp.eq.s32.totalorder %s67, 1
    %p127 = scmp.ne.s32.totalorder %s122, %s124
    %p128 = scmp.eq.s32.totalorder %s67, 0
    %p129 = por %p127, %p128
    %p130 = scmp.ne.s32.totalorder %s122, %s124
    %p131 = scmp.eq.s32.totalorder %s72, 1
    %p132 = por %p130, %p131
    %p133 = scmp.ne.s32.totalorder %s124, %s125
    %p134 = scmp.eq.s32.totalorder %s72, 0
    %p135 = por %p133, %p134
    %p136 = scmp.ne.s32.totalorder %s124, %s125
    %p137 = scmp.eq.s32.totalorder %s73, 1
    %p138 = por %p136, %p137
    %p140 = scmp.ne.s32.totalorder %s125, %s139
    %p141 = scmp.eq.s32.totalorder %s73, 0
    %p142 = por %p140, %p141
    %s144 = sadd.s32 %s143, 1
    %p147 = scmp.eq.s32.totalorder %s67, 1
    %p148 = scmp.ne.s32.totalorder %s143, %s145
    %p149 = scmp.eq.s32.totalorder %s67, 0
    %p150 = por %p148, %p149
    %p151 = scmp.ne.s32.totalorder %s143, %s145
    %p152 = scmp.eq.s32.totalorder %s72, 1
    %p153 = por %p151, %p152
    %p154 = scmp.ne.s32.totalorder %s145, %s146
    %p155 = scmp.eq.s32.totalorder %s72, 0
    %p156 = por %p154, %p155
    %p157 = scmp.ne.s32.totalorder %s145, %s146
    %p158 = scmp.eq.s32.totalorder %s73, 1
    %p159 = por %p157, %p158
    %p161 = scmp.ne.s32.totalorder %s146, %s160
    %p162 = scmp.eq.s32.totalorder %s73, 0
    %p163 = por %p161, %p162
    %s165 = sadd.s32 %s164, 1
    %p168 = scmp.eq.s32.totalorder %s67, 1
    %p169 = scmp.ne.s32.totalorder %s164, %s166
    %p170 = scmp.eq.s32.totalorder %s67, 0
    %p171 = por %p169, %p170
    %p172 = scmp.ne.s32.totalorder %s164, %s166
    %p173 = scmp.eq.s32.totalorder %s72, 1
    %p174 = por %p172, %p173
    %p175 = scmp.ne.s32.totalorder %s166, %s167
    %p176 = scmp.eq.s32.totalorder %s72, 0
    %p177 = por %p175, %p176
    %p178 = scmp.ne.s32.totalorder %s166, %s167
    %p179 = scmp.eq.s32.totalorder %s73, 1
    %p180 = por %p178, %p179
    %p182 = scmp.ne.s32.totalorder %s167, %s181
    %p183 = scmp.eq.s32.totalorder %s73, 0
    %p184 = por %p182, %p183
    %s186 = sadd.s32 %s185, 1
    %p189 = scmp.eq.s32.totalorder %s67, 1
    %p190 = scmp.ne.s32.totalorder %s185, %s187
    %p191 = scmp.eq.s32.totalorder %s67, 0
    %p192 = por %p190, %p191
    %p193 = scmp.ne.s32.totalorder %s185, %s187
    %p194 = scmp.eq.s32.totalorder %s72, 1
    %p195 = por %p193, %p194
    %p196 = scmp.ne.s32.totalorder %s187, %s188
    %p197 = scmp.eq.s32.totalorder %s72, 0
    %p198 = por %p196, %p197
    %p199 = scmp.ne.s32.totalorder %s187, %s188
    %p200 = scmp.eq.s32.totalorder %s73, 1
    %p201 = por %p199, %p200
    %p203 = scmp.ne.s32.totalorder %s188, %s202
    %p204 = scmp.eq.s32.totalorder %s73, 0
    %p205 = por %p203, %p204
    %s207 = sadd.s32 %s206, 1
    %p210 = scmp.eq.s32.totalorder %s67, 1
    %p211 = scmp.ne.s32.totalorder %s206, %s208
    %p212 = scmp.eq.s32.totalorder %s67, 0
    %p213 = por %p211, %p212
    %p214 = scmp.ne.s32.totalorder %s206, %s208
    %p215 = scmp.eq.s32.totalorder %s72, 1
    %p216 = por %p214, %p215
    %p217 = scmp.ne.s32.totalorder %s208, %s209
    %p218 = scmp.eq.s32.totalorder %s72, 0
    %p219 = por %p217, %p218
    %p220 = scmp.ne.s32.totalorder %s208, %s209
    %p221 = scmp.eq.s32.totalorder %s73, 1
    %p222 = por %p220, %p221
    %p224 = scmp.ne.s32.totalorder %s209, %s223
    %p225 = scmp.eq.s32.totalorder %s73, 0
    %p226 = por %p224, %p225
    %s228 = sadd.s32 %s227, 1
    %p231 = scmp.eq.s32.totalorder %s67, 1
    %p232 = scmp.ne.s32.totalorder %s227, %s229
    %p233 = scmp.eq.s32.totalorder %s67, 0
    %p234 = por %p232, %p233
    %p235 = scmp.ne.s32.totalorder %s227, %s229
    %p236 = scmp.eq.s32.totalorder %s72, 1
    %p237 = por %p235, %p236
    %p238 = scmp.ne.s32.totalorder %s229, %s230
    %p239 = scmp.eq.s32.totalorder %s72, 0
    %p240 = por %p238, %p239
    %p241 = scmp.ne.s32.totalorder %s229, %s230
    %p242 = scmp.eq.s32.totalorder %s73, 1
    %p243 = por %p241, %p242
    %p245 = scmp.ne.s32.totalorder %s230, %s244
    %p246 = scmp.eq.s32.totalorder %s73, 0
    %p247 = por %p245, %p246
    %s249 = sadd.s32 %s248, 1
    %p252 = scmp.eq.s32.totalorder %s67, 1
    %p253 = scmp.ne.s32.totalorder %s248, %s250
    %p254 = scmp.eq.s32.totalorder %s67, 0
    %p255 = por %p253, %p254
    %p256 = scmp.ne.s32.totalorder %s248, %s250
    %p257 = scmp.eq.s32.totalorder %s72, 1
    %p258 = por %p256, %p257
    %p259 = scmp.ne.s32.totalorder %s250, %s251
    %p260 = scmp.eq.s32.totalorder %s72, 0
    %p261 = por %p259, %p260
    %p262 = scmp.ne.s32.totalorder %s250, %s251
    %p263 = scmp.eq.s32.totalorder %s73, 1
    %p264 = por %p262, %p263
    %p266 = scmp.ne.s32.totalorder %s251, %s265
    %p267 = scmp.eq.s32.totalorder %s73, 0
    %p268 = por %p266, %p267
    %s270 = sadd.s32 %s269, 1
    %p273 = scmp.eq.s32.totalorder %s67, 1
    %p274 = scmp.ne.s32.totalorder %s269, %s271
    %p275 = scmp.eq.s32.totalorder %s67, 0
    %p276 = por %p274, %p275
    %p277 = scmp.ne.s32.totalorder %s269, %s271
    %p278 = scmp.eq.s32.totalorder %s72, 1
    %p279 = por %p277, %p278
    %p280 = scmp.ne.s32.totalorder %s271, %s272
    %p281 = scmp.eq.s32.totalorder %s72, 0
    %p282 = por %p280, %p281
    %p283 = scmp.ne.s32.totalorder %s271, %s272
    %p284 = scmp.eq.s32.totalorder %s73, 1
    %p285 = por %p283, %p284
    %p287 = scmp.ne.s32.totalorder %s272, %s286
    %p288 = scmp.eq.s32.totalorder %s73, 0
    %p289 = por %p287, %p288
    %s291 = sadd.s32 %s290, 1
    %p294 = scmp.eq.s32.totalorder %s67, 1
    %p295 = scmp.ne.s32.totalorder %s290, %s292
    %p296 = scmp.eq.s32.totalorder %s67, 0
    %p297 = por %p295, %p296
    %p298 = scmp.ne.s32.totalorder %s290, %s292
    %p299 = scmp.eq.s32.totalorder %s72, 1
    %p300 = por %p298, %p299
    %p301 = scmp.ne.s32.totalorder %s292, %s293
    %p302 = scmp.eq.s32.totalorder %s72, 0
    %p303 = por %p301, %p302
    %p304 = scmp.ne.s32.totalorder %s292, %s293
    %p305 = scmp.eq.s32.totalorder %s73, 1
    %p306 = por %p304, %p305
    %p308 = scmp.ne.s32.totalorder %s293, %s307
    %p309 = scmp.eq.s32.totalorder %s73, 0
    %p310 = por %p308, %p309
    %s312 = sadd.s32 %s311, 1
    %p315 = scmp.eq.s32.totalorder %s67, 1
    %p316 = scmp.ne.s32.totalorder %s311, %s313
    %p317 = scmp.eq.s32.totalorder %s67, 0
    %p318 = por %p316, %p317
    %p319 = scmp.ne.s32.totalorder %s311, %s313
    %p320 = scmp.eq.s32.totalorder %s72, 1
    %p321 = por %p319, %p320
    %p322 = scmp.ne.s32.totalorder %s313, %s314
    %p323 = scmp.eq.s32.totalorder %s72, 0
    %p324 = por %p322, %p323
    %p325 = scmp.ne.s32.totalorder %s313, %s314
    %p326 = scmp.eq.s32.totalorder %s73, 1
    %p327 = por %p325, %p326
    %p329 = scmp.ne.s32.totalorder %s314, %s328
    %p330 = scmp.eq.s32.totalorder %s73, 0
    %p331 = por %p329, %p330
    %s333 = sadd.s32 %s332, 1
    %p336 = scmp.eq.s32.totalorder %s67, 1
    %p337 = scmp.ne.s32.totalorder %s332, %s334
    %p338 = scmp.eq.s32.totalorder %s67, 0
    %p339 = por %p337, %p338
    %p340 = scmp.ne.s32.totalorder %s332, %s334
    %p341 = scmp.eq.s32.totalorder %s72, 1
    %p342 = por %p340, %p341
    %p343 = scmp.ne.s32.totalorder %s334, %s335
    %p344 = scmp.eq.s32.totalorder %s72, 0
    %p345 = por %p343, %p344
    %p346 = scmp.ne.s32.totalorder %s334, %s335
    %p347 = scmp.eq.s32.totalorder %s73, 1
    %p348 = por %p346, %p347
    %p350 = scmp.ne.s32.totalorder %s335, %s349
    %p351 = scmp.eq.s32.totalorder %s73, 0
    %p352 = por %p350, %p351
    %s354 = sadd.s32 %s353, 1
    %p357 = scmp.eq.s32.totalorder %s67, 1
    %p358 = scmp.ne.s32.totalorder %s353, %s355
    %p359 = scmp.eq.s32.totalorder %s67, 0
    %p360 = por %p358, %p359
    %p361 = scmp.ne.s32.totalorder %s353, %s355
    %p362 = scmp.eq.s32.totalorder %s72, 1
    %p363 = por %p361, %p362
    %p364 = scmp.ne.s32.totalorder %s355, %s356
    %p365 = scmp.eq.s32.totalorder %s72, 0
    %p366 = por %p364, %p365
    %p367 = scmp.ne.s32.totalorder %s355, %s356
    %p368 = scmp.eq.s32.totalorder %s73, 1
    %p369 = por %p367, %p368
    %p371 = scmp.ne.s32.totalorder %s356, %s370
    %p372 = scmp.eq.s32.totalorder %s73, 0
    %p373 = por %p371, %p372
    %s375 = sadd.s32 %s374, 1
    %p378 = scmp.eq.s32.totalorder %s67, 1
    %p379 = scmp.ne.s32.totalorder %s374, %s376
    %p380 = scmp.eq.s32.totalorder %s67, 0
    %p381 = por %p379, %p380
    %p382 = scmp.ne.s32.totalorder %s374, %s376
    %p383 = scmp.eq.s32.totalorder %s72, 1
    %p384 = por %p382, %p383
    %p385 = scmp.ne.s32.totalorder %s376, %s377
    %p386 = scmp.eq.s32.totalorder %s72, 0
    %p387 = por %p385, %p386
    %p388 = scmp.ne.s32.totalorder %s376, %s377
    %p389 = scmp.eq.s32.totalorder %s73, 1
    %p390 = por %p388, %p389
    %p392 = scmp.ne.s32.totalorder %s377, %s391
    %p393 = scmp.eq.s32.totalorder %s73, 0
    %p394 = por %p392, %p393
    %s396 = sadd.s32 %s395, 1
    %p399 = scmp.eq.s32.totalorder %s67, 1
    %p400 = scmp.ne.s32.totalorder %s395, %s397
    %p401 = scmp.eq.s32.totalorder %s67, 0
    %p402 = por %p400, %p401
    %p403 = scmp.ne.s32.totalorder %s395, %s397
    %p404 = scmp.eq.s32.totalorder %s72, 1
    %p405 = por %p403, %p404
    %p406 = scmp.ne.s32.totalorder %s397, %s398
    %p407 = scmp.eq.s32.totalorder %s72, 0
    %p408 = por %p406, %p407
    %p409 = scmp.ne.s32.totalorder %s397, %s398
    %p410 = scmp.eq.s32.totalorder %s73, 1
    %p411 = por %p409, %p410
    %p413 = scmp.ne.s32.totalorder %s398, %s412
    %p414 = scmp.eq.s32.totalorder %s73, 0
    %p415 = por %p413, %p414
    %s417 = sadd.s32 %s416, 1
    %p420 = scmp.eq.s32.totalorder %s67, 1
    %p421 = scmp.ne.s32.totalorder %s416, %s418
    %p422 = scmp.eq.s32.totalorder %s67, 0
    %p423 = por %p421, %p422
    %p424 = scmp.ne.s32.totalorder %s416, %s418
    %p425 = scmp.eq.s32.totalorder %s72, 1
    %p426 = por %p424, %p425
    %p427 = scmp.ne.s32.totalorder %s418, %s419
    %p428 = scmp.eq.s32.totalorder %s72, 0
    %p429 = por %p427, %p428
    %p430 = scmp.ne.s32.totalorder %s418, %s419
    %p431 = scmp.eq.s32.totalorder %s73, 1
    %p432 = por %p430, %p431
    %p434 = scmp.ne.s32.totalorder %s419, %s433
    %p435 = scmp.eq.s32.totalorder %s73, 0
    %p436 = por %p434, %p435
    %s438 = sadd.s32 %s437, 1
    %p441 = scmp.eq.s32.totalorder %s67, 1
    %p442 = scmp.ne.s32.totalorder %s437, %s439
    %p443 = scmp.eq.s32.totalorder %s67, 0
    %p444 = por %p442, %p443
    %p445 = scmp.ne.s32.totalorder %s437, %s439
    %p446 = scmp.eq.s32.totalorder %s72, 1
    %p447 = por %p445, %p446
    %p448 = scmp.ne.s32.totalorder %s439, %s440
    %p449 = scmp.eq.s32.totalorder %s72, 0
    %p450 = por %p448, %p449
    %p451 = scmp.ne.s32.totalorder %s439, %s440
    %p452 = scmp.eq.s32.totalorder %s73, 1
    %p453 = por %p451, %p452
    %p455 = scmp.ne.s32.totalorder %s440, %s454
    %p456 = scmp.eq.s32.totalorder %s73, 0
    %p457 = por %p455, %p456
    %s459 = sadd.s32 %s458, 1
    %p462 = scmp.eq.s32.totalorder %s67, 1
    %p463 = scmp.ne.s32.totalorder %s458, %s460
    %p464 = scmp.eq.s32.totalorder %s67, 0
    %p465 = por %p463, %p464
    %p466 = scmp.ne.s32.totalorder %s458, %s460
    %p467 = scmp.eq.s32.totalorder %s72, 1
    %p468 = por %p466, %p467
    %p469 = scmp.ne.s32.totalorder %s460, %s461
    %p470 = scmp.eq.s32.totalorder %s72, 0
    %p471 = por %p469, %p470
    %p472 = scmp.ne.s32.totalorder %s460, %s461
    %p473 = scmp.eq.s32.totalorder %s73, 1
    %p474 = por %p472, %p473
    %p476 = scmp.ne.s32.totalorder %s461, %s475
    %p477 = scmp.eq.s32.totalorder %s73, 0
    %p478 = por %p476, %p477
    %s480 = sadd.s32 %s479, 1
    %p483 = scmp.eq.s32.totalorder %s67, 1
    %p484 = scmp.ne.s32.totalorder %s479, %s481
    %p485 = scmp.eq.s32.totalorder %s67, 0
    %p486 = por %p484, %p485
    %p487 = scmp.ne.s32.totalorder %s479, %s481
    %p488 = scmp.eq.s32.totalorder %s72, 1
    %p489 = por %p487, %p488
    %p490 = scmp.ne.s32.totalorder %s481, %s482
    %p491 = scmp.eq.s32.totalorder %s72, 0
    %p492 = por %p490, %p491
    %p493 = scmp.ne.s32.totalorder %s481, %s482
    %p494 = scmp.eq.s32.totalorder %s73, 1
    %p495 = por %p493, %p494
    %p497 = scmp.ne.s32.totalorder %s482, %s496
    %p498 = scmp.eq.s32.totalorder %s73, 0
    %p499 = por %p497, %p498
    %s501 = sadd.s32 %s500, 1
    %p504 = scmp.eq.s32.totalorder %s67, 1
    %p505 = scmp.ne.s32.totalorder %s500, %s502
    %p506 = scmp.eq.s32.totalorder %s67, 0
    %p507 = por %p505, %p506
    %p508 = scmp.ne.s32.totalorder %s500, %s502
    %p509 = scmp.eq.s32.totalorder %s72, 1
    %p510 = por %p508, %p509
    %p511 = scmp.ne.s32.totalorder %s502, %s503
    %p512 = scmp.eq.s32.totalorder %s72, 0
    %p513 = por %p511, %p512
    %p514 = scmp.ne.s32.totalorder %s502, %s503
    %p515 = scmp.eq.s32.totalorder %s73, 1
    %p516 = por %p514, %p515
    %p518 = scmp.ne.s32.totalorder %s503, %s517
    %p519 = scmp.eq.s32.totalorder %s73, 0
    %p520 = por %p518, %p519
    %s522 = sadd.s32 %s521, 1
    %p525 = scmp.eq.s32.totalorder %s67, 1
    %p526 = scmp.ne.s32.totalorder %s521, %s523
    %p527 = scmp.eq.s32.totalorder %s67, 0
    %p528 = por %p526, %p527
    %p529 = scmp.ne.s32.totalorder %s521, %s523
    %p530 = scmp.eq.s32.totalorder %s72, 1
    %p531 = por %p529, %p530
    %p532 = scmp.ne.s32.totalorder %s523, %s524
    %p533 = scmp.eq.s32.totalorder %s72, 0
    %p534 = por %p532, %p533
    %p535 = scmp.ne.s32.totalorder %s523, %s524
    %p536 = scmp.eq.s32.totalorder %s73, 1
    %p537 = por %p535, %p536
    %p539 = scmp.ne.s32.totalorder %s524, %s538
    %p540 = scmp.eq.s32.totalorder %s73, 0
    %p541 = por %p539, %p540
    %s543 = sadd.s32 %s542, 1
    %p546 = scmp.eq.s32.totalorder %s67, 1
    %p547 = scmp.ne.s32.totalorder %s542, %s544
    %p548 = scmp.eq.s32.totalorder %s67, 0
    %p549 = por %p547, %p548
    %p550 = scmp.ne.s32.totalorder %s542, %s544
    %p551 = scmp.eq.s32.totalorder %s72, 1
    %p552 = por %p550, %p551
    %p553 = scmp.ne.s32.totalorder %s544, %s545
    %p554 = scmp.eq.s32.totalorder %s72, 0
    %p555 = por %p553, %p554
    %p556 = scmp.ne.s32.totalorder %s544, %s545
    %p557 = scmp.eq.s32.totalorder %s73, 1
    %p558 = por %p556, %p557
    %p560 = scmp.ne.s32.totalorder %s545, %s559
    %p561 = scmp.eq.s32.totalorder %s73, 0
    %p562 = por %p560, %p561
    %s564 = sadd.s32 %s563, 1
    %p567 = scmp.eq.s32.totalorder %s67, 1
    %p568 = scmp.ne.s32.totalorder %s563, %s565
    %p569 = scmp.eq.s32.totalorder %s67, 0
    %p570 = por %p568, %p569
    %p571 = scmp.ne.s32.totalorder %s563, %s565
    %p572 = scmp.eq.s32.totalorder %s72, 1
    %p573 = por %p571, %p572
    %p574 = scmp.ne.s32.totalorder %s565, %s566
    %p575 = scmp.eq.s32.totalorder %s72, 0
    %p576 = por %p574, %p575
    %p577 = scmp.ne.s32.totalorder %s565, %s566
    %p578 = scmp.eq.s32.totalorder %s73, 1
    %p579 = por %p577, %p578
    %p581 = scmp.ne.s32.totalorder %s566, %s580
    %p582 = scmp.eq.s32.totalorder %s73, 0
    %p583 = por %p581, %p582
    %s585 = sadd.s32 %s584, 1
    %p588 = scmp.eq.s32.totalorder %s67, 1
    %p589 = scmp.ne.s32.totalorder %s584, %s586
    %p590 = scmp.eq.s32.totalorder %s67, 0
    %p591 = por %p589, %p590
    %p592 = scmp.ne.s32.totalorder %s584, %s586
    %p593 = scmp.eq.s32.totalorder %s72, 1
    %p594 = por %p592, %p593
    %p595 = scmp.ne.s32.totalorder %s586, %s587
    %p596 = scmp.eq.s32.totalorder %s72, 0
    %p597 = por %p595, %p596
    %p598 = scmp.ne.s32.totalorder %s586, %s587
    %p599 = scmp.eq.s32.totalorder %s73, 1
    %p600 = por %p598, %p599
    %p602 = scmp.ne.s32.totalorder %s587, %s601
    %p603 = scmp.eq.s32.totalorder %s73, 0
    %p604 = por %p602, %p603
    %s606 = sadd.s32 %s605, 1
    %p609 = scmp.eq.s32.totalorder %s67, 1
    %p610 = scmp.ne.s32.totalorder %s605, %s607
    %p611 = scmp.eq.s32.totalorder %s67, 0
    %p612 = por %p610, %p611
    %p613 = scmp.ne.s32.totalorder %s605, %s607
    %p614 = scmp.eq.s32.totalorder %s72, 1
    %p615 = por %p613, %p614
    %p616 = scmp.ne.s32.totalorder %s607, %s608
    %p617 = scmp.eq.s32.totalorder %s72, 0
    %p618 = por %p616, %p617
    %p619 = scmp.ne.s32.totalorder %s607, %s608
    %p620 = scmp.eq.s32.totalorder %s73, 1
    %p621 = por %p619, %p620
    %p623 = scmp.ne.s32.totalorder %s608, %s622
    %p624 = scmp.eq.s32.totalorder %s73, 0
    %p625 = por %p623, %p624
    %s627 = sadd.s32 %s626, 1
    %p630 = scmp.eq.s32.totalorder %s67, 1
    %p631 = scmp.ne.s32.totalorder %s626, %s628
    %p632 = scmp.eq.s32.totalorder %s67, 0
    %p633 = por %p631, %p632
    %p634 = scmp.ne.s32.totalorder %s626, %s628
    %p635 = scmp.eq.s32.totalorder %s72, 1
    %p636 = por %p634, %p635
    %p637 = scmp.ne.s32.totalorder %s628, %s629
    %p638 = scmp.eq.s32.totalorder %s72, 0
    %p639 = por %p637, %p638
    %p640 = scmp.ne.s32.totalorder %s628, %s629
    %p641 = scmp.eq.s32.totalorder %s73, 1
    %p642 = por %p640, %p641
    %p644 = scmp.ne.s32.totalorder %s629, %s643
    %p645 = scmp.eq.s32.totalorder %s73, 0
    %p646 = por %p644, %p645
    %s648 = sadd.s32 %s647, 1
    %p651 = scmp.eq.s32.totalorder %s67, 1
    %p652 = scmp.ne.s32.totalorder %s647, %s649
    %p653 = scmp.eq.s32.totalorder %s67, 0
    %p654 = por %p652, %p653
    %p655 = scmp.ne.s32.totalorder %s647, %s649
    %p656 = scmp.eq.s32.totalorder %s72, 1
    %p657 = por %p655, %p656
    %p658 = scmp.ne.s32.totalorder %s649, %s650
    %p659 = scmp.eq.s32.totalorder %s72, 0
    %p660 = por %p658, %p659
    %p661 = scmp.ne.s32.totalorder %s649, %s650
    %p662 = scmp.eq.s32.totalorder %s73, 1
    %p663 = por %p661, %p662
    %p665 = scmp.ne.s32.totalorder %s650, %s664
    %p666 = scmp.eq.s32.totalorder %s73, 0
    %p667 = por %p665, %p666
    %s669 = sadd.s32 %s668, 1
    %p672 = scmp.eq.s32.totalorder %s67, 1
    %p673 = scmp.ne.s32.totalorder %s668, %s670
    %p674 = scmp.eq.s32.totalorder %s67, 0
    %p675 = por %p673, %p674
    %p676 = scmp.ne.s32.totalorder %s668, %s670
    %p677 = scmp.eq.s32.totalorder %s72, 1
    %p678 = por %p676, %p677
    %p679 = scmp.ne.s32.totalorder %s670, %s671
    %p680 = scmp.eq.s32.totalorder %s72, 0
    %p681 = por %p679, %p680
    %p682 = scmp.ne.s32.totalorder %s670, %s671
    %p683 = scmp.eq.s32.totalorder %s73, 1
    %p684 = por %p682, %p683
    %p686 = scmp.ne.s32.totalorder %s671, %s685
    %p687 = scmp.eq.s32.totalorder %s73, 0
    %p688 = por %p686, %p687
    %s690 = sadd.s32 %s689, 1
    %p693 = scmp.eq.s32.totalorder %s67, 1
    %p694 = scmp.ne.s32.totalorder %s689, %s691
    %p695 = scmp.eq.s32.totalorder %s67, 0
    %p696 = por %p694, %p695
    %p697 = scmp.ne.s32.totalorder %s689, %s691
    %p698 = scmp.eq.s32.totalorder %s72, 1
    %p699 = por %p697, %p698
    %p700 = scmp.ne.s32.totalorder %s691, %s692
    %p701 = scmp.eq.s32.totalorder %s72, 0
    %p702 = por %p700, %p701
    %p703 = scmp.ne.s32.totalorder %s691, %s692
    %p704 = scmp.eq.s32.totalorder %s73, 1
    %p705 = por %p703, %p704
    %p707 = scmp.ne.s32.totalorder %s692, %s706
    %p708 = scmp.eq.s32.totalorder %s73, 0
    %p709 = por %p707, %p708
    %s710 = ssub.s32 %s67, %s74
    %p711 = scmp.eq.s32.totalorder %s710, 0
    %s713 = sadd.s32 %s712, 1
    %s714 = scalar_select %p711, %s712, %s713
    %p717 = pneg %p711
    %p718 = scmp.eq.s32.totalorder %s67, 1
    %p719 = por %p717, %p718
    %p720 = scmp.ne.s32.totalorder %s712, %s715
    %p721 = scmp.eq.s32.totalorder %s67, 0
    %p722 = por %p720, %p721
    %p723 = scmp.ne.s32.totalorder %s712, %s715
    %p724 = scmp.eq.s32.totalorder %s72, 1
    %p725 = por %p723, %p724
    %p726 = scmp.ne.s32.totalorder %s715, %s716
    %p727 = scmp.eq.s32.totalorder %s72, 0
    %p728 = por %p726, %p727
    %p729 = scmp.ne.s32.totalorder %s715, %s716
    %p730 = scmp.eq.s32.totalorder %s73, 1
    %p731 = por %p729, %p730
    %p733 = scmp.ne.s32.totalorder %s716, %s732
    %p734 = scmp.eq.s32.totalorder %s73, 0
    %p735 = por %p733, %p734
    %p736 = scmp.le.s32.totalorder 1, %s67
    %p737 = scmp.lt.s32.totalorder %s67, 3
    %p738 = pnand %p736, %p737
    %p739 = pneg %p738
    // Predicated region
    $region9: #{_lambda_.1} parent=5 // pred_check
      _
    $region10: #{_lambda_.1} parent=5 // pred_check_branch
      %741 = sbr.rel (%p738) target = $region12
    $region11: #{_lambda_.1} parent=5 // pred_region
      %s742 = ssub.s32 %s67, 1
      // Predicated region
      $region13: #{_lambda_.1} parent=11 // pred_check
        %p743 = pneg %p114
      $region14: #{_lambda_.1} parent=11 // pred_check_branch
        %745 = sbr.rel (%p743) target = $region16
      $region15: #{_lambda_.1} parent=11 // pred_region
        _
      $region16: #{_lambda_.1} parent=11 // pred_fallthru
        _
      // Predicated region
      $region17: #{_lambda_.1} parent=11 // pred_check
        %p746 = pneg %p135
      $region18: #{_lambda_.1} parent=11 // pred_check_branch
        %748 = sbr.rel (%p746) target = $region20
      $region19: #{_lambda_.1} parent=11 // pred_region
        _
      $region20: #{_lambda_.1} parent=11 // pred_fallthru
        _
      // Predicated region
      $region21: #{_lambda_.1} parent=11 // pred_check
        %p749 = pneg %p156
      $region22: #{_lambda_.1} parent=11 // pred_check_branch
        %751 = sbr.rel (%p749) target = $region24
      $region23: #{_lambda_.1} parent=11 // pred_region
        _
      $region24: #{_lambda_.1} parent=11 // pred_fallthru
        _
      // Predicated region
      $region25: #{_lambda_.1} parent=11 // pred_check
        %p752 = pneg %p177
      $region26: #{_lambda_.1} parent=11 // pred_check_branch
        %754 = sbr.rel (%p752) target = $region28
      $region27: #{_lambda_.1} parent=11 // pred_region
        _
      $region28: #{_lambda_.1} parent=11 // pred_fallthru
        _
      // Predicated region
      $region29: #{_lambda_.1} parent=11 // pred_check
        %p755 = pneg %p198
      $region30: #{_lambda_.1} parent=11 // pred_check_branch
        %757 = sbr.rel (%p755) target = $region32
      $region31: #{_lambda_.1} parent=11 // pred_region
        _
      $region32: #{_lambda_.1} parent=11 // pred_fallthru
        _
      // Predicated region
      $region33: #{_lambda_.1} parent=11 // pred_check
        %p758 = pneg %p219
      $region34: #{_lambda_.1} parent=11 // pred_check_branch
        %760 = sbr.rel (%p758) target = $region36
      $region35: #{_lambda_.1} parent=11 // pred_region
        _
      $region36: #{_lambda_.1} parent=11 // pred_fallthru
        _
      // Predicated region
      $region37: #{_lambda_.1} parent=11 // pred_check
        %p761 = pneg %p240
      $region38: #{_lambda_.1} parent=11 // pred_check_branch
        %763 = sbr.rel (%p761) target = $region40
      $region39: #{_lambda_.1} parent=11 // pred_region
        _
      $region40: #{_lambda_.1} parent=11 // pred_fallthru
        _
      // Predicated region
      $region41: #{_lambda_.1} parent=11 // pred_check
        %p764 = pneg %p261
      $region42: #{_lambda_.1} parent=11 // pred_check_branch
        %766 = sbr.rel (%p764) target = $region44
      $region43: #{_lambda_.1} parent=11 // pred_region
        _
      $region44: #{_lambda_.1} parent=11 // pred_fallthru
        _
      // Predicated region
      $region45: #{_lambda_.1} parent=11 // pred_check
        %p767 = pneg %p282
      $region46: #{_lambda_.1} parent=11 // pred_check_branch
        %769 = sbr.rel (%p767) target = $region48
      $region47: #{_lambda_.1} parent=11 // pred_region
        _
      $region48: #{_lambda_.1} parent=11 // pred_fallthru
        _
      // Predicated region
      $region49: #{_lambda_.1} parent=11 // pred_check
        %p770 = pneg %p303
      $region50: #{_lambda_.1} parent=11 // pred_check_branch
        %772 = sbr.rel (%p770) target = $region52
      $region51: #{_lambda_.1} parent=11 // pred_region
        _
      $region52: #{_lambda_.1} parent=11 // pred_fallthru
        _
      // Predicated region
      $region53: #{_lambda_.1} parent=11 // pred_check
        %p773 = pneg %p324
      $region54: #{_lambda_.1} parent=11 // pred_check_branch
        %775 = sbr.rel (%p773) target = $region56
      $region55: #{_lambda_.1} parent=11 // pred_region
        _
      $region56: #{_lambda_.1} parent=11 // pred_fallthru
        _
      // Predicated region
      $region57: #{_lambda_.1} parent=11 // pred_check
        %p776 = pneg %p345
      $region58: #{_lambda_.1} parent=11 // pred_check_branch
        %778 = sbr.rel (%p776) target = $region60
      $region59: #{_lambda_.1} parent=11 // pred_region
        _
      $region60: #{_lambda_.1} parent=11 // pred_fallthru
        _
      // Predicated region
      $region61: #{_lambda_.1} parent=11 // pred_check
        %p779 = pneg %p366
      $region62: #{_lambda_.1} parent=11 // pred_check_branch
        %781 = sbr.rel (%p779) target = $region64
      $region63: #{_lambda_.1} parent=11 // pred_region
        _
      $region64: #{_lambda_.1} parent=11 // pred_fallthru
        _
      // Predicated region
      $region65: #{_lambda_.1} parent=11 // pred_check
        %p782 = pneg %p387
      $region66: #{_lambda_.1} parent=11 // pred_check_branch
        %784 = sbr.rel (%p782) target = $region68
      $region67: #{_lambda_.1} parent=11 // pred_region
        _
      $region68: #{_lambda_.1} parent=11 // pred_fallthru
        _
      // Predicated region
      $region69: #{_lambda_.1} parent=11 // pred_check
        %p785 = pneg %p408
      $region70: #{_lambda_.1} parent=11 // pred_check_branch
        %787 = sbr.rel (%p785) target = $region72
      $region71: #{_lambda_.1} parent=11 // pred_region
        _
      $region72: #{_lambda_.1} parent=11 // pred_fallthru
        _
      // Predicated region
      $region73: #{_lambda_.1} parent=11 // pred_check
        %p788 = pneg %p429
      $region74: #{_lambda_.1} parent=11 // pred_check_branch
        %790 = sbr.rel (%p788) target = $region76
      $region75: #{_lambda_.1} parent=11 // pred_region
        _
      $region76: #{_lambda_.1} parent=11 // pred_fallthru
        _
      // Predicated region
      $region77: #{_lambda_.1} parent=11 // pred_check
        %p791 = pneg %p450
      $region78: #{_lambda_.1} parent=11 // pred_check_branch
        %793 = sbr.rel (%p791) target = $region80
      $region79: #{_lambda_.1} parent=11 // pred_region
        _
      $region80: #{_lambda_.1} parent=11 // pred_fallthru
        _
      // Predicated region
      $region81: #{_lambda_.1} parent=11 // pred_check
        %p794 = pneg %p471
      $region82: #{_lambda_.1} parent=11 // pred_check_branch
        %796 = sbr.rel (%p794) target = $region84
      $region83: #{_lambda_.1} parent=11 // pred_region
        _
      $region84: #{_lambda_.1} parent=11 // pred_fallthru
        _
      // Predicated region
      $region85: #{_lambda_.1} parent=11 // pred_check
        %p797 = pneg %p492
      $region86: #{_lambda_.1} parent=11 // pred_check_branch
        %799 = sbr.rel (%p797) target = $region88
      $region87: #{_lambda_.1} parent=11 // pred_region
        _
      $region88: #{_lambda_.1} parent=11 // pred_fallthru
        _
      // Predicated region
      $region89: #{_lambda_.1} parent=11 // pred_check
        %p800 = pneg %p513
      $region90: #{_lambda_.1} parent=11 // pred_check_branch
        %802 = sbr.rel (%p800) target = $region92
      $region91: #{_lambda_.1} parent=11 // pred_region
        _
      $region92: #{_lambda_.1} parent=11 // pred_fallthru
        _
      // Predicated region
      $region93: #{_lambda_.1} parent=11 // pred_check
        %p803 = pneg %p534
      $region94: #{_lambda_.1} parent=11 // pred_check_branch
        %805 = sbr.rel (%p803) target = $region96
      $region95: #{_lambda_.1} parent=11 // pred_region
        _
      $region96: #{_lambda_.1} parent=11 // pred_fallthru
        _
      // Predicated region
      $region97: #{_lambda_.1} parent=11 // pred_check
        %p806 = pneg %p555
      $region98: #{_lambda_.1} parent=11 // pred_check_branch
        %808 = sbr.rel (%p806) target = $region100
      $region99: #{_lambda_.1} parent=11 // pred_region
        _
      $region100: #{_lambda_.1} parent=11 // pred_fallthru
        _
      // Predicated region
      $region101: #{_lambda_.1} parent=11 // pred_check
        %p809 = pneg %p576
      $region102: #{_lambda_.1} parent=11 // pred_check_branch
        %811 = sbr.rel (%p809) target = $region104
      $region103: #{_lambda_.1} parent=11 // pred_region
        _
      $region104: #{_lambda_.1} parent=11 // pred_fallthru
        _
      // Predicated region
      $region105: #{_lambda_.1} parent=11 // pred_check
        %p812 = pneg %p597
      $region106: #{_lambda_.1} parent=11 // pred_check_branch
        %814 = sbr.rel (%p812) target = $region108
      $region107: #{_lambda_.1} parent=11 // pred_region
        _
      $region108: #{_lambda_.1} parent=11 // pred_fallthru
        _
      // Predicated region
      $region109: #{_lambda_.1} parent=11 // pred_check
        %p815 = pneg %p618
      $region110: #{_lambda_.1} parent=11 // pred_check_branch
        %817 = sbr.rel (%p815) target = $region112
      $region111: #{_lambda_.1} parent=11 // pred_region
        _
      $region112: #{_lambda_.1} parent=11 // pred_fallthru
        _
      // Predicated region
      $region113: #{_lambda_.1} parent=11 // pred_check
        %p818 = pneg %p639
      $region114: #{_lambda_.1} parent=11 // pred_check_branch
        %820 = sbr.rel (%p818) target = $region116
      $region115: #{_lambda_.1} parent=11 // pred_region
        _
      $region116: #{_lambda_.1} parent=11 // pred_fallthru
        _
      // Predicated region
      $region117: #{_lambda_.1} parent=11 // pred_check
        %p821 = pneg %p660
      $region118: #{_lambda_.1} parent=11 // pred_check_branch
        %823 = sbr.rel (%p821) target = $region120
      $region119: #{_lambda_.1} parent=11 // pred_region
        _
      $region120: #{_lambda_.1} parent=11 // pred_fallthru
        _
      // Predicated region
      $region121: #{_lambda_.1} parent=11 // pred_check
        %p824 = pneg %p681
      $region122: #{_lambda_.1} parent=11 // pred_check_branch
        %826 = sbr.rel (%p824) target = $region124
      $region123: #{_lambda_.1} parent=11 // pred_region
        _
      $region124: #{_lambda_.1} parent=11 // pred_fallthru
        _
      // Predicated region
      $region125: #{_lambda_.1} parent=11 // pred_check
        %p827 = pneg %p702
      $region126: #{_lambda_.1} parent=11 // pred_check_branch
        %829 = sbr.rel (%p827) target = $region128
      $region127: #{_lambda_.1} parent=11 // pred_region
        _
      $region128: #{_lambda_.1} parent=11 // pred_fallthru
        _
    $region12: #{_lambda_.1} parent=5 // pred_fallthru
      _
    %p830 = scmp.lt.s32.totalorder %s67, 2
    // Predicated region
    $region129: #{_lambda_.1} parent=5 // pred_check
      %p831 = pneg %p830
    $region130: #{_lambda_.1} parent=5 // pred_check_branch
      %833 = sbr.rel (%p831) target = $region132
    $region131: #{_lambda_.1} parent=5 // pred_region
      // Predicated region
      $region133: #{_lambda_.1} parent=131 // pred_check
        %p834 = pneg %p87
      $region134: #{_lambda_.1} parent=131 // pred_check_branch
        %836 = sbr.rel (%p834) target = $region136
      $region135: #{_lambda_.1} parent=131 // pred_region
        %p837 = scmp.lt.s32.totalorder %s67, 1
        %s838 = scalar_select %p837, %s67, 1
        %s839 = smul.addr %s838, 3
        %s840 = smul.addr %s839, 4
        %s841 = scalar_lea.vmem %s1, %s840
      $region136: #{_lambda_.1} parent=131 // pred_fallthru
        _
    $region132: #{_lambda_.1} parent=5 // pred_fallthru
      _
    %p842 = scmp.le.s32.totalorder 1, %s67
    %p843 = scmp.lt.s32.totalorder %s67, 3
    %p844 = pnand %p842, %p843
    %p845 = pneg %p844
    // Predicated region
    $region137: #{_lambda_.1} parent=5 // pred_check
      _
    $region138: #{_lambda_.1} parent=5 // pred_check_branch
      %847 = sbr.rel (%p844) target = $region140
    $region139: #{_lambda_.1} parent=5 // pred_region
      %s848 = ssub.s32 %s67, 1
      %p849 = scmp.lt.s32.totalorder %s72, 1
      %s850 = scalar_select %p849, %s72, 1
      %s851 = smul.addr %s850, 3
      %s852 = smul.addr %s851, 4
      %s853 = scalar_lea.vmem %s1, %s852
      %p854 = pneg %p93
      %p855 = pneg %p90
      %p856 = pneg %p114
      %p857 = pneg %p111
      %p858 = pneg %p135
      %p859 = pneg %p132
      %p860 = pneg %p156
      %p861 = pneg %p153
      %p862 = pneg %p177
      %p863 = pneg %p174
      %p864 = pneg %p198
      %p865 = pneg %p195
      %p866 = pneg %p219
      %p867 = pneg %p216
      %p868 = pneg %p240
      %p869 = pneg %p237
      %p870 = pneg %p261
      %p871 = pneg %p258
      %p872 = pneg %p282
      %p873 = pneg %p279
      %p874 = pneg %p303
      %p875 = pneg %p300
      %p876 = pneg %p324
      %p877 = pneg %p321
      %p878 = pneg %p345
      %p879 = pneg %p342
      %p880 = pneg %p366
      %p881 = pneg %p363
      %p882 = pneg %p387
      %p883 = pneg %p384
      %p884 = pneg %p408
      %p885 = pneg %p405
      %p886 = pneg %p429
      %p887 = pneg %p426
      %p888 = pneg %p450
      %p889 = pneg %p447
      %p890 = pneg %p471
      %p891 = pneg %p468
      %p892 = pneg %p492
      %p893 = pneg %p489
      %p894 = pneg %p513
      %p895 = pneg %p510
      %p896 = pneg %p534
      %p897 = pneg %p531
      %p898 = pneg %p555
      %p899 = pneg %p552
      %p900 = pneg %p576
      %p901 = pneg %p573
      %p902 = pneg %p597
      %p903 = pneg %p594
      %p904 = pneg %p618
      %p905 = pneg %p615
      %p906 = pneg %p639
      %p907 = pneg %p636
      %p908 = pneg %p660
      %p909 = pneg %p657
      %p910 = pneg %p681
      %p911 = pneg %p678
      %p912 = pneg %p702
      %p913 = pneg %p699
      %p914 = pneg %p728
      %p915 = pneg %p725
      %p916 = scmp.lt.s32.totalorder %s72, 1
      %s917 = scalar_select %p916, %s72, 1
      %s918 = smul.addr %s917, 3
      %s919 = smul.addr %s918, 8
      %s920 = scalar_lea.vmem %s61, %s919
      %p921 = scmp.lt.s32.totalorder %s72, 1
      %s922 = scalar_select %p921, %s72, 1
      %s923 = smul.addr %s922, 3
      %s924 = smul.addr %s923, 4
      %s925 = scalar_lea.vmem %s1, %s924
      %p926 = scmp.lt.s32.totalorder %s72, 1
      %s927 = scalar_select %p926, %s72, 1
      %s928 = smul.addr %s927, 3
      %s929 = smul.addr %s928, 8
      %s930 = scalar_lea.vmem %s61, %s929
      %v932 = vld [vmem:[%s925] sm:$0xf]
      %v933 = vld [vmem:[%s925 + $0x4] sm:$0xf]
      %v934 = vld [vmem:[%s3] sm:$0xff]
      %v935 = vld [vmem:[%s3 + $0x8] sm:$0xff]
      %v936 = vld [vmem:[%s3 + $0x10] sm:$0xff]
      %v937 = vld [vmem:[%s3 + $0x18] sm:$0xff]
      %v938 = vld [vmem:[%s3 + $0x20] sm:$0xff]
      %v939 = vld [vmem:[%s3 + $0x28] sm:$0xff]
      %v940 = vld [vmem:[%s3 + $0x30] sm:$0xff]
      %v941 = vld [vmem:[%s3 + $0x38] sm:$0xff]
      %v942 = vld [vmem:[%s3 + $0x40] sm:$0xff]
      %v943 = vld [vmem:[%s3 + $0x48] sm:$0xff]
      %v944 = vld [vmem:[%s3 + $0x50] sm:$0xff]
      %v945 = vld [vmem:[%s3 + $0x58] sm:$0xff]
      %v946 = vld [vmem:[%s925 + $0x8] sm:$0x1]
      %s947 = scalar_lea.vmem %s3, 96
      %v948 = vld [vmem:[%s947] sm:$0xff]
      %v949 = vld [vmem:[%s947 + $0x8] sm:$0xff]
      %v950 = vld [vmem:[%s947 + $0x10] sm:$0xff]
      %v951 = vld [vmem:[%s947 + $0x18] sm:$0xff]
      %v952 = vld [vmem:[%s947 + $0x20] sm:$0xff]
      %v953 = vld [vmem:[%s947 + $0x28] sm:$0xff]
      %v954 = vld [vmem:[%s947 + $0x30] sm:$0xff]
      %v955 = vld [vmem:[%s947 + $0x38] sm:$0xff]
      %v956 = vld [vmem:[%s947 + $0x40] sm:$0xff]
      %v957 = vld [vmem:[%s947 + $0x48] sm:$0xff]
      %v958 = vld [vmem:[%s947 + $0x50] sm:$0xff]
      %v959 = vld [vmem:[%s947 + $0x58] sm:$0xff]
      %v963 = vunpack.c.l.b16 %v932
      %v964 = vunpack.c.l.b16 %v933
      %v965 = vunpack.c.l.b16 %v946
      %v966 = vpack.c.b16 %v964, %v963
      %v967 = vpack.c.b16 %v965, %v965
      %vm968 = vsmask.f32 7424
      %v970 = vshrl.u32 %v966, 16
      %v972 = vshll.u32 %v966, 16
      %v974 = vrot.slane %v972, 1
      %v975 = vor.u32 %v970, %v974
      %v977 = vshll.u32 %v967, 16
      %v979 = vrot.slane %v977, 1
      %v980 = vsel %vm968, %v975, %v979
      %v993 = vunpack.c.l.b16 %v948
      %v994 = vunpack.c.h.b16 %v948
      %v995 = vunpack.c.l.b16 %v949
      %v996 = vunpack.c.h.b16 %v949
      %v997 = vunpack.c.l.b16 %v950
      %v998 = vunpack.c.h.b16 %v950
      %v999 = vunpack.c.l.b16 %v951
      %v1000 = vunpack.c.h.b16 %v951
      %v1001 = vunpack.c.l.b16 %v952
      %v1002 = vunpack.c.h.b16 %v952
      %v1003 = vunpack.c.l.b16 %v953
      %v1004 = vunpack.c.h.b16 %v953
      %v1005 = vunpack.c.l.b16 %v954
      %v1006 = vunpack.c.h.b16 %v954
      %v1007 = vunpack.c.l.b16 %v955
      %v1008 = vunpack.c.h.b16 %v955
      %v1009 = vunpack.c.l.b16 %v956
      %v1010 = vunpack.c.h.b16 %v956
      %v1011 = vunpack.c.l.b16 %v957
      %v1012 = vunpack.c.h.b16 %v957
      %v1013 = vunpack.c.l.b16 %v958
      %v1014 = vunpack.c.h.b16 %v958
      %v1015 = vunpack.c.l.b16 %v959
      %v1016 = vunpack.c.h.b16 %v959
      %v1017 = vpack.c.b16 %v997, %v993
      %v1018 = vpack.c.b16 %v998, %v994
      %v1019 = vpack.c.b16 %v999, %v995
      %v1020 = vpack.c.b16 %v1000, %v996
      %v1021 = vpack.c.b16 %v1005, %v1001
      %v1022 = vpack.c.b16 %v1006, %v1002
      %v1023 = vpack.c.b16 %v1007, %v1003
      %v1024 = vpack.c.b16 %v1008, %v1004
      %v1025 = vpack.c.b16 %v1013, %v1009
      %v1026 = vpack.c.b16 %v1014, %v1010
      %v1027 = vpack.c.b16 %v1015, %v1011
      %v1028 = vpack.c.b16 %v1016, %v1012
      %vm1041 = vcmask 392192
      %v1043 = vsel %vm1041, %v980, 0
      %1045 = vmatprep.subr.bf16.mxu0 0
      %1046 = vmatpush1.bf16.msra.mxu0 0
      %1047 = vmatprep.subr.bf16.mxu0 0
      %1048 = vmatpush1.bf16.msra.mxu0 0
      %1049 = vmatprep.subr.bf16.mxu0 0
      %1050 = vmatpush1.bf16.msra.mxu0 0
      %1051 = vmatprep.subr.bf16.mxu0 0
      %1052 = vmatpush1.bf16.msra.mxu0 0
      %1053 = vmatprep.subr.bf16.mxu0 0
      %1054 = vmatpush1.bf16.msra.mxu0 0
      %1055 = vmatprep.subr.bf16.mxu0 %v1026
      %1056 = vmatpush1.bf16.msra.mxu0 %v1025
      %1057 = vmatprep.subr.bf16.mxu0 %v1022
      %1058 = vmatpush1.bf16.msra.mxu0 %v1021
      %1059 = vmatprep.subr.bf16.mxu0 %v1018
      %1060 = vmatpush1.bf16.msra.mxu0 %v1017
      %1061 = vmatprep.subr.bf16.mxu0 0
      %1062 = vmatpush2.bf16.msra.mxu0 0
      %1063 = vmatprep.subr.bf16.mxu0 0
      %1064 = vmatpush2.bf16.msra.mxu0 0
      %1065 = vmatprep.subr.bf16.mxu0 0
      %1066 = vmatpush2.bf16.msra.mxu0 0
      %1067 = vmatprep.subr.bf16.mxu0 0
      %1068 = vmatpush2.bf16.msra.mxu0 0
      %1069 = vmatprep.subr.bf16.mxu0 0
      %1070 = vmatpush2.bf16.msra.mxu0 0
      %1071 = vmatprep.subr.bf16.mxu0 0
      %1072 = vmatpush2.bf16.msra.mxu0 0
      %1073 = vmatprep.subr.bf16.mxu0 0
      %1074 = vmatpush2.bf16.msra.mxu0 0
      %1075 = vmatprep.subr.bf16.mxu0 0
      %1076 = vmatpush2.bf16.msra.mxu0 0
      %1077 = vmatprep.mubr.bf16.mxu0 0
      %1078 = vmatmul.mubr.bf16.gmra.mxu0 %v1043
      %v1079 = vpop.f32.mrf.mxu0
      %v1080 = vadd.f32 0.0, %v1079
      %v1081 = vpop.f32.mrf.mxu0
      %v1082 = vadd.f32 0.0, %v1081
      %v1083 = vpop.f32.mrf.mxu0
      %v1084 = vadd.f32 0.0, %v1083
      %v1085 = vpop.f32.mrf.mxu0
      %v1086 = vadd.f32 0.0, %v1085
      %1087 = vdwg.mxu0
      %1088 = vmatprep.subr.bf16.mxu0 0
      %1089 = vmatpush1.bf16.msra.mxu0 0
      %1090 = vmatprep.subr.bf16.mxu0 0
      %1091 = vmatpush1.bf16.msra.mxu0 0
      %1092 = vmatprep.subr.bf16.mxu0 0
      %1093 = vmatpush1.bf16.msra.mxu0 0
      %1094 = vmatprep.subr.bf16.mxu0 0
      %1095 = vmatpush1.bf16.msra.mxu0 0
      %1096 = vmatprep.subr.bf16.mxu0 0
      %1097 = vmatpush1.bf16.msra.mxu0 0
      %1098 = vmatprep.subr.bf16.mxu0 %v1028
      %1099 = vmatpush1.bf16.msra.mxu0 %v1027
      %1100 = vmatprep.subr.bf16.mxu0 %v1024
      %1101 = vmatpush1.bf16.msra.mxu0 %v1023
      %1102 = vmatprep.subr.bf16.mxu0 %v1020
      %1103 = vmatpush1.bf16.msra.mxu0 %v1019
      %1104 = vmatprep.subr.bf16.mxu0 0
      %1105 = vmatpush2.bf16.msra.mxu0 0
      %1106 = vmatprep.subr.bf16.mxu0 0
      %1107 = vmatpush2.bf16.msra.mxu0 0
      %1108 = vmatprep.subr.bf16.mxu0 0
      %1109 = vmatpush2.bf16.msra.mxu0 0
      %1110 = vmatprep.subr.bf16.mxu0 0
      %1111 = vmatpush2.bf16.msra.mxu0 0
      %1112 = vmatprep.subr.bf16.mxu0 0
      %1113 = vmatpush2.bf16.msra.mxu0 0
      %1114 = vmatprep.subr.bf16.mxu0 0
      %1115 = vmatpush2.bf16.msra.mxu0 0
      %1116 = vmatprep.subr.bf16.mxu0 0
      %1117 = vmatpush2.bf16.msra.mxu0 0
      %1118 = vmatprep.subr.bf16.mxu0 0
      %1119 = vmatpush2.bf16.msra.mxu0 0
      %1120 = vmatprep.mubr.bf16.mxu0 0
      %1121 = vmatmul.mubr.bf16.gmra.mxu0 %v1043
      %v1122 = vpop.f32.mrf.mxu0
      %v1123 = vadd.f32 0.0, %v1122
      %v1124 = vpop.f32.mrf.mxu0
      %v1125 = vadd.f32 0.0, %v1124
      %v1126 = vpop.f32.mrf.mxu0
      %v1127 = vadd.f32 0.0, %v1126
      %v1128 = vpop.f32.mrf.mxu0
      %v1129 = vadd.f32 0.0, %v1128
      %1130 = vdwg.mxu0
      %v1143 = vunpack.c.l.b16 %v934
      %v1144 = vunpack.c.h.b16 %v934
      %v1145 = vunpack.c.l.b16 %v935
      %v1146 = vunpack.c.h.b16 %v935
      %v1147 = vunpack.c.l.b16 %v936
      %v1148 = vunpack.c.h.b16 %v936
      %v1149 = vunpack.c.l.b16 %v937
      %v1150 = vunpack.c.h.b16 %v937
      %v1151 = vunpack.c.l.b16 %v938
      %v1152 = vunpack.c.h.b16 %v938
      %v1153 = vunpack.c.l.b16 %v939
      %v1154 = vunpack.c.h.b16 %v939
      %v1155 = vunpack.c.l.b16 %v940
      %v1156 = vunpack.c.h.b16 %v940
      %v1157 = vunpack.c.l.b16 %v941
      %v1158 = vunpack.c.h.b16 %v941
      %v1159 = vunpack.c.l.b16 %v942
      %v1160 = vunpack.c.h.b16 %v942
      %v1161 = vunpack.c.l.b16 %v943
      %v1162 = vunpack.c.h.b16 %v943
      %v1163 = vunpack.c.l.b16 %v944
      %v1164 = vunpack.c.h.b16 %v944
      %v1165 = vunpack.c.l.b16 %v945
      %v1166 = vunpack.c.h.b16 %v945
      %v1167 = vpack.c.b16 %v1147, %v1143
      %v1168 = vpack.c.b16 %v1148, %v1144
      %v1169 = vpack.c.b16 %v1149, %v1145
      %v1170 = vpack.c.b16 %v1150, %v1146
      %v1171 = vpack.c.b16 %v1155, %v1151
      %v1172 = vpack.c.b16 %v1156, %v1152
      %v1173 = vpack.c.b16 %v1157, %v1153
      %v1174 = vpack.c.b16 %v1158, %v1154
      %v1175 = vpack.c.b16 %v1163, %v1159
      %v1176 = vpack.c.b16 %v1164, %v1160
      %v1177 = vpack.c.b16 %v1165, %v1161
      %v1178 = vpack.c.b16 %v1166, %v1162
      %v1191 = vsel %vm1041, %v966, 0
      %1193 = vmatprep.subr.bf16.mxu0 0
      %1194 = vmatpush1.bf16.msra.mxu0 0
      %1195 = vmatprep.subr.bf16.mxu0 0
      %1196 = vmatpush1.bf16.msra.mxu0 0
      %1197 = vmatprep.subr.bf16.mxu0 0
      %1198 = vmatpush1.bf16.msra.mxu0 0
      %1199 = vmatprep.subr.bf16.mxu0 0
      %1200 = vmatpush1.bf16.msra.mxu0 0
      %1201 = vmatprep.subr.bf16.mxu0 0
      %1202 = vmatpush1.bf16.msra.mxu0 0
      %1203 = vmatprep.subr.bf16.mxu0 %v1176
      %1204 = vmatpush1.bf16.msra.mxu0 %v1175
      %1205 = vmatprep.subr.bf16.mxu0 %v1172
      %1206 = vmatpush1.bf16.msra.mxu0 %v1171
      %1207 = vmatprep.subr.bf16.mxu0 %v1168
      %1208 = vmatpush1.bf16.msra.mxu0 %v1167
      %1209 = vmatprep.subr.bf16.mxu0 0
      %1210 = vmatpush2.bf16.msra.mxu0 0
      %1211 = vmatprep.subr.bf16.mxu0 0
      %1212 = vmatpush2.bf16.msra.mxu0 0
      %1213 = vmatprep.subr.bf16.mxu0 0
      %1214 = vmatpush2.bf16.msra.mxu0 0
      %1215 = vmatprep.subr.bf16.mxu0 0
      %1216 = vmatpush2.bf16.msra.mxu0 0
      %1217 = vmatprep.subr.bf16.mxu0 0
      %1218 = vmatpush2.bf16.msra.mxu0 0
      %1219 = vmatprep.subr.bf16.mxu0 0
      %1220 = vmatpush2.bf16.msra.mxu0 0
      %1221 = vmatprep.subr.bf16.mxu0 0
      %1222 = vmatpush2.bf16.msra.mxu0 0
      %1223 = vmatprep.subr.bf16.mxu0 0
      %1224 = vmatpush2.bf16.msra.mxu0 0
      %1225 = vmatprep.mubr.bf16.mxu0 0
      %1226 = vmatmul.mubr.bf16.gmra.mxu0 %v1191
      %v1227 = vpop.f32.mrf.mxu0
      %v1228 = vadd.f32 %v1080, %v1227
      %v1229 = vpop.f32.mrf.mxu0
      %v1230 = vadd.f32 %v1082, %v1229
      %v1231 = vpop.f32.mrf.mxu0
      %v1232 = vadd.f32 %v1084, %v1231
      %v1233 = vpop.f32.mrf.mxu0
      %v1234 = vadd.f32 %v1086, %v1233
      %1235 = vdwg.mxu0
      %1236 = vmatprep.subr.bf16.mxu0 0
      %1237 = vmatpush1.bf16.msra.mxu0 0
      %1238 = vmatprep.subr.bf16.mxu0 0
      %1239 = vmatpush1.bf16.msra.mxu0 0
      %1240 = vmatprep.subr.bf16.mxu0 0
      %1241 = vmatpush1.bf16.msra.mxu0 0
      %1242 = vmatprep.subr.bf16.mxu0 0
      %1243 = vmatpush1.bf16.msra.mxu0 0
      %1244 = vmatprep.subr.bf16.mxu0 0
      %1245 = vmatpush1.bf16.msra.mxu0 0
      %1246 = vmatprep.subr.bf16.mxu0 %v1178
      %1247 = vmatpush1.bf16.msra.mxu0 %v1177
      %1248 = vmatprep.subr.bf16.mxu0 %v1174
      %1249 = vmatpush1.bf16.msra.mxu0 %v1173
      %1250 = vmatprep.subr.bf16.mxu0 %v1170
      %1251 = vmatpush1.bf16.msra.mxu0 %v1169
      %1252 = vmatprep.subr.bf16.mxu0 0
      %1253 = vmatpush2.bf16.msra.mxu0 0
      %1254 = vmatprep.subr.bf16.mxu0 0
      %1255 = vmatpush2.bf16.msra.mxu0 0
      %1256 = vmatprep.subr.bf16.mxu0 0
      %1257 = vmatpush2.bf16.msra.mxu0 0
      %1258 = vmatprep.subr.bf16.mxu0 0
      %1259 = vmatpush2.bf16.msra.mxu0 0
      %1260 = vmatprep.subr.bf16.mxu0 0
      %1261 = vmatpush2.bf16.msra.mxu0 0
      %1262 = vmatprep.subr.bf16.mxu0 0
      %1263 = vmatpush2.bf16.msra.mxu0 0
      %1264 = vmatprep.subr.bf16.mxu0 0
      %1265 = vmatpush2.bf16.msra.mxu0 0
      %1266 = vmatprep.subr.bf16.mxu0 0
      %1267 = vmatpush2.bf16.msra.mxu0 0
      %1268 = vmatprep.mubr.bf16.mxu0 0
      %1269 = vmatmul.mubr.bf16.gmra.mxu0 %v1191
      %v1270 = vpop.f32.mrf.mxu0
      %v1271 = vadd.f32 %v1123, %v1270
      %v1272 = vpop.f32.mrf.mxu0
      %v1273 = vadd.f32 %v1125, %v1272
      %v1274 = vpop.f32.mrf.mxu0
      %v1275 = vadd.f32 %v1127, %v1274
      %v1276 = vpop.f32.mrf.mxu0
      %v1277 = vadd.f32 %v1129, %v1276
      %1278 = vdwg.mxu0
      %v1279 = vld [vmem:[%s925] sm:$0xe]
      %s1280 = scalar_lea.vmem %s3, 192
      %v1281 = vld [vmem:[%s1280] sm:$0xff]
      %v1282 = vld [vmem:[%s1280 + $0x8] sm:$0xff]
      %v1283 = vld [vmem:[%s1280 + $0x10] sm:$0xff]
      %v1284 = vld [vmem:[%s1280 + $0x18] sm:$0xff]
      %v1285 = vld [vmem:[%s1280 + $0x20] sm:$0xff]
      %v1286 = vld [vmem:[%s1280 + $0x28] sm:$0xff]
      %v1287 = vld [vmem:[%s1280 + $0x30] sm:$0xff]
      %v1288 = vld [vmem:[%s1280 + $0x38] sm:$0xff]
      %v1289 = vld [vmem:[%s1280 + $0x40] sm:$0xff]
      %v1290 = vld [vmem:[%s1280 + $0x48] sm:$0xff]
      %v1291 = vld [vmem:[%s1280 + $0x50] sm:$0xff]
      %v1292 = vld [vmem:[%s1280 + $0x58] sm:$0xff]
      %v1294 = vunpack.c.l.b16 %v1279
      %v1295 = vpack.c.b16 %v964, %v1294
      %vm1296 = vcmask 1046528
      %v1297 = vrot.slane %v1295, 1
      %v1298 = vrot.slane %v967, 1
      %v1299 = vsel %vm1296, %v1297, %v1298
      %v1312 = vunpack.c.l.b16 %v1281
      %v1313 = vunpack.c.h.b16 %v1281
      %v1314 = vunpack.c.l.b16 %v1282
      %v1315 = vunpack.c.h.b16 %v1282
      %v1316 = vunpack.c.l.b16 %v1283
      %v1317 = vunpack.c.h.b16 %v1283
      %v1318 = vunpack.c.l.b16 %v1284
      %v1319 = vunpack.c.h.b16 %v1284
      %v1320 = vunpack.c.l.b16 %v1285
      %v1321 = vunpack.c.h.b16 %v1285
      %v1322 = vunpack.c.l.b16 %v1286
      %v1323 = vunpack.c.h.b16 %v1286
      %v1324 = vunpack.c.l.b16 %v1287
      %v1325 = vunpack.c.h.b16 %v1287
      %v1326 = vunpack.c.l.b16 %v1288
      %v1327 = vunpack.c.h.b16 %v1288
      %v1328 = vunpack.c.l.b16 %v1289
      %v1329 = vunpack.c.h.b16 %v1289
      %v1330 = vunpack.c.l.b16 %v1290
      %v1331 = vunpack.c.h.b16 %v1290
      %v1332 = vunpack.c.l.b16 %v1291
      %v1333 = vunpack.c.h.b16 %v1291
      %v1334 = vunpack.c.l.b16 %v1292
      %v1335 = vunpack.c.h.b16 %v1292
      %v1336 = vpack.c.b16 %v1316, %v1312
      %v1337 = vpack.c.b16 %v1317, %v1313
      %v1338 = vpack.c.b16 %v1318, %v1314
      %v1339 = vpack.c.b16 %v1319, %v1315
      %v1340 = vpack.c.b16 %v1324, %v1320
      %v1341 = vpack.c.b16 %v1325, %v1321
      %v1342 = vpack.c.b16 %v1326, %v1322
      %v1343 = vpack.c.b16 %v1327, %v1323
      %v1344 = vpack.c.b16 %v1332, %v1328
      %v1345 = vpack.c.b16 %v1333, %v1329
      %v1346 = vpack.c.b16 %v1334, %v1330
      %v1347 = vpack.c.b16 %v1335, %v1331
      %v1361 = vsel %vm1041, %v1299, 0
      %1363 = vmatprep.subr.bf16.mxu0 0
      %1364 = vmatpush1.bf16.msra.mxu0 0
      %1365 = vmatprep.subr.bf16.mxu0 0
      %1366 = vmatpush1.bf16.msra.mxu0 0
      %1367 = vmatprep.subr.bf16.mxu0 0
      %1368 = vmatpush1.bf16.msra.mxu0 0
      %1369 = vmatprep.subr.bf16.mxu0 0
      %1370 = vmatpush1.bf16.msra.mxu0 0
      %1371 = vmatprep.subr.bf16.mxu0 0
      %1372 = vmatpush1.bf16.msra.mxu0 0
      %1373 = vmatprep.subr.bf16.mxu0 %v1345
      %1374 = vmatpush1.bf16.msra.mxu0 %v1344
      %1375 = vmatprep.subr.bf16.mxu0 %v1341
      %1376 = vmatpush1.bf16.msra.mxu0 %v1340
      %1377 = vmatprep.subr.bf16.mxu0 %v1337
      %1378 = vmatpush1.bf16.msra.mxu0 %v1336
      %1379 = vmatprep.subr.bf16.mxu0 0
      %1380 = vmatpush2.bf16.msra.mxu0 0
      %1381 = vmatprep.subr.bf16.mxu0 0
      %1382 = vmatpush2.bf16.msra.mxu0 0
      %1383 = vmatprep.subr.bf16.mxu0 0
      %1384 = vmatpush2.bf16.msra.mxu0 0
      %1385 = vmatprep.subr.bf16.mxu0 0
      %1386 = vmatpush2.bf16.msra.mxu0 0
      %1387 = vmatprep.subr.bf16.mxu0 0
      %1388 = vmatpush2.bf16.msra.mxu0 0
      %1389 = vmatprep.subr.bf16.mxu0 0
      %1390 = vmatpush2.bf16.msra.mxu0 0
      %1391 = vmatprep.subr.bf16.mxu0 0
      %1392 = vmatpush2.bf16.msra.mxu0 0
      %1393 = vmatprep.subr.bf16.mxu0 0
      %1394 = vmatpush2.bf16.msra.mxu0 0
      %1395 = vmatprep.mubr.bf16.mxu0 0
      %1396 = vmatmul.mubr.bf16.gmra.mxu0 %v1361
      %v1397 = vpop.f32.mrf.mxu0
      %v1398 = vadd.f32 0.0, %v1397
      %v1399 = vpop.f32.mrf.mxu0
      %v1400 = vadd.f32 0.0, %v1399
      %v1401 = vpop.f32.mrf.mxu0
      %v1402 = vadd.f32 0.0, %v1401
      %v1403 = vpop.f32.mrf.mxu0
      %v1404 = vadd.f32 0.0, %v1403
      %1405 = vdwg.mxu0
      %1406 = vmatprep.subr.bf16.mxu0 0
      %1407 = vmatpush1.bf16.msra.mxu0 0
      %1408 = vmatprep.subr.bf16.mxu0 0
      %1409 = vmatpush1.bf16.msra.mxu0 0
      %1410 = vmatprep.subr.bf16.mxu0 0
      %1411 = vmatpush1.bf16.msra.mxu0 0
      %1412 = vmatprep.subr.bf16.mxu0 0
      %1413 = vmatpush1.bf16.msra.mxu0 0
      %1414 = vmatprep.subr.bf16.mxu0 0
      %1415 = vmatpush1.bf16.msra.mxu0 0
      %1416 = vmatprep.subr.bf16.mxu0 %v1347
      %1417 = vmatpush1.bf16.msra.mxu0 %v1346
      %1418 = vmatprep.subr.bf16.mxu0 %v1343
      %1419 = vmatpush1.bf16.msra.mxu0 %v1342
      %1420 = vmatprep.subr.bf16.mxu0 %v1339
      %1421 = vmatpush1.bf16.msra.mxu0 %v1338
      %1422 = vmatprep.subr.bf16.mxu0 0
      %1423 = vmatpush2.bf16.msra.mxu0 0
      %1424 = vmatprep.subr.bf16.mxu0 0
      %1425 = vmatpush2.bf16.msra.mxu0 0
      %1426 = vmatprep.subr.bf16.mxu0 0
      %1427 = vmatpush2.bf16.msra.mxu0 0
      %1428 = vmatprep.subr.bf16.mxu0 0
      %1429 = vmatpush2.bf16.msra.mxu0 0
      %1430 = vmatprep.subr.bf16.mxu0 0
      %1431 = vmatpush2.bf16.msra.mxu0 0
      %1432 = vmatprep.subr.bf16.mxu0 0
      %1433 = vmatpush2.bf16.msra.mxu0 0
      %1434 = vmatprep.subr.bf16.mxu0 0
      %1435 = vmatpush2.bf16.msra.mxu0 0
      %1436 = vmatprep.subr.bf16.mxu0 0
      %1437 = vmatpush2.bf16.msra.mxu0 0
      %1438 = vmatprep.mubr.bf16.mxu0 0
      %1439 = vmatmul.mubr.bf16.gmra.mxu0 %v1361
      %v1440 = vpop.f32.mrf.mxu0
      %v1441 = vadd.f32 0.0, %v1440
      %v1442 = vpop.f32.mrf.mxu0
      %v1443 = vadd.f32 0.0, %v1442
      %v1444 = vpop.f32.mrf.mxu0
      %v1445 = vadd.f32 0.0, %v1444
      %v1446 = vpop.f32.mrf.mxu0
      %v1447 = vadd.f32 0.0, %v1446
      %1448 = vdwg.mxu0
      %v1449 = vadd.f32 %v1228, %v1398
      %v1450 = vadd.f32 %v1230, %v1400
      %v1451 = vadd.f32 %v1271, %v1441
      %v1452 = vadd.f32 %v1273, %v1443
      %v1453 = vadd.f32 %v1232, %v1402
      %v1454 = vadd.f32 %v1234, %v1404
      %v1455 = vadd.f32 %v1275, %v1445
      %v1456 = vadd.f32 %v1277, %v1447
      %v1457 = vld [vmem:[%s5] sm:$0xf]
      %v1459 = vlaneseq
      %v1460 = vshrl.u32 %v1459, 7
      %v1461 = vsub.s32 0, %v1460
      %v1462 = vrot.slane %v1457, %v1461
      %v1463 = vlaneseq
      %v1464 = vshrl.u32 %v1463, 7
      %v1465 = vsub.s32 1, %v1464
      %v1466 = vrot.slane %v1457, %v1465
      %v1467 = vlaneseq
      %v1468 = vshrl.u32 %v1467, 7
      %v1469 = vsub.s32 2, %v1468
      %v1470 = vrot.slane %v1457, %v1469
      %v1471 = vlaneseq
      %v1472 = vshrl.u32 %v1471, 7
      %v1473 = vsub.s32 3, %v1472
      %v1474 = vrot.slane %v1457, %v1473
      %v1479 = vadd.f32 %v1449, %v1462
      %v1480 = vadd.f32 %v1450, %v1466
      %v1481 = vadd.f32 %v1451, %v1470
      %v1482 = vadd.f32 %v1452, %v1474
      %v1483 = vadd.f32 %v1453, %v1462
      %v1484 = vadd.f32 %v1454, %v1466
      %v1485 = vadd.f32 %v1455, %v1470
      %v1486 = vadd.f32 %v1456, %v1474
      %v1487 = vmax.f32 %v1479, 0.0
      %v1488 = vmax.f32 %v1480, 0.0
      %v1489 = vmax.f32 %v1481, 0.0
      %v1490 = vmax.f32 %v1482, 0.0
      %v1491 = vmax.f32 %v1483, 0.0
      %v1492 = vmax.f32 %v1484, 0.0
      %v1493 = vmax.f32 %v1485, 0.0
      %v1494 = vmax.f32 %v1486, 0.0
      %v1495 = vpack.c.bf16 %v1491, %v1487
      %v1496 = vpack.c.bf16 %v1492, %v1488
      %v1497 = vpack.c.bf16 %v1493, %v1489
      %v1498 = vpack.c.bf16 %v1494, %v1490
      %v1499 = vld [vmem:[%s7] sm:$0xf]
      %vm1500 = vcmask 130048
      %v1502 = vsel %vm1500, %v1499, 0
      %1504 = vmatprep.subr.bf16.mxu0 0
      %1505 = vmatpush1.bf16.msra.mxu0 0
      %1506 = vmatprep.subr.bf16.mxu0 0
      %1507 = vmatpush1.bf16.msra.mxu0 0
      %1508 = vmatprep.subr.bf16.mxu0 0
      %1509 = vmatpush1.bf16.msra.mxu0 0
      %1510 = vmatprep.subr.bf16.mxu0 0
      %1511 = vmatpush1.bf16.msra.mxu0 0
      %1512 = vmatprep.subr.bf16.mxu0 0
      %1513 = vmatpush1.bf16.msra.mxu0 0
      %1514 = vmatprep.subr.bf16.mxu0 0
      %1515 = vmatpush1.bf16.msra.mxu0 0
      %1516 = vmatprep.subr.bf16.mxu0 0
      %1517 = vmatpush1.bf16.msra.mxu0 0
      %1518 = vmatprep.subr.bf16.mxu0 %v1496
      %1519 = vmatpush1.bf16.msra.mxu0 %v1495
      %1520 = vmatprep.subr.bf16.mxu0 0
      %1521 = vmatpush2.bf16.msra.mxu0 0
      %1522 = vmatprep.subr.bf16.mxu0 0
      %1523 = vmatpush2.bf16.msra.mxu0 0
      %1524 = vmatprep.subr.bf16.mxu0 0
      %1525 = vmatpush2.bf16.msra.mxu0 0
      %1526 = vmatprep.subr.bf16.mxu0 0
      %1527 = vmatpush2.bf16.msra.mxu0 0
      %1528 = vmatprep.subr.bf16.mxu0 0
      %1529 = vmatpush2.bf16.msra.mxu0 0
      %1530 = vmatprep.subr.bf16.mxu0 0
      %1531 = vmatpush2.bf16.msra.mxu0 0
      %1532 = vmatprep.subr.bf16.mxu0 0
      %1533 = vmatpush2.bf16.msra.mxu0 0
      %1534 = vmatprep.subr.bf16.mxu0 0
      %1535 = vmatpush2.bf16.msra.mxu0 0
      %1536 = vmatprep.mubr.bf16.mxu0 0
      %1537 = vmatmul.mubr.bf16.gmra.mxu0 %v1502
      %v1538 = vpop.f32.mrf.mxu0
      %v1539 = vadd.f32 0.0, %v1538
      %v1540 = vpop.f32.mrf.mxu0
      %v1541 = vadd.f32 0.0, %v1540
      %v1542 = vpop.f32.mrf.mxu0
      %v1543 = vpop.f32.mrf.mxu0
      %1544 = vdwg.mxu0
      %1545 = vmatprep.subr.bf16.mxu0 0
      %1546 = vmatpush1.bf16.msra.mxu0 0
      %1547 = vmatprep.subr.bf16.mxu0 0
      %1548 = vmatpush1.bf16.msra.mxu0 0
      %1549 = vmatprep.subr.bf16.mxu0 0
      %1550 = vmatpush1.bf16.msra.mxu0 0
      %1551 = vmatprep.subr.bf16.mxu0 0
      %1552 = vmatpush1.bf16.msra.mxu0 0
      %1553 = vmatprep.subr.bf16.mxu0 0
      %1554 = vmatpush1.bf16.msra.mxu0 0
      %1555 = vmatprep.subr.bf16.mxu0 0
      %1556 = vmatpush1.bf16.msra.mxu0 0
      %1557 = vmatprep.subr.bf16.mxu0 0
      %1558 = vmatpush1.bf16.msra.mxu0 0
      %1559 = vmatprep.subr.bf16.mxu0 %v1498
      %1560 = vmatpush1.bf16.msra.mxu0 %v1497
      %1561 = vmatprep.subr.bf16.mxu0 0
      %1562 = vmatpush2.bf16.msra.mxu0 0
      %1563 = vmatprep.subr.bf16.mxu0 0
      %1564 = vmatpush2.bf16.msra.mxu0 0
      %1565 = vmatprep.subr.bf16.mxu0 0
      %1566 = vmatpush2.bf16.msra.mxu0 0
      %1567 = vmatprep.subr.bf16.mxu0 0
      %1568 = vmatpush2.bf16.msra.mxu0 0
      %1569 = vmatprep.subr.bf16.mxu0 0
      %1570 = vmatpush2.bf16.msra.mxu0 0
      %1571 = vmatprep.subr.bf16.mxu0 0
      %1572 = vmatpush2.bf16.msra.mxu0 0
      %1573 = vmatprep.subr.bf16.mxu0 0
      %1574 = vmatpush2.bf16.msra.mxu0 0
      %1575 = vmatprep.subr.bf16.mxu0 0
      %1576 = vmatpush2.bf16.msra.mxu0 0
      %1577 = vmatprep.mubr.bf16.mxu0 0
      %1578 = vmatmul.mubr.bf16.gmra.mxu0 %v1502
      %v1579 = vpop.f32.mrf.mxu0
      %v1580 = vadd.f32 0.0, %v1579
      %v1581 = vpop.f32.mrf.mxu0
      %v1582 = vadd.f32 0.0, %v1581
      %v1583 = vpop.f32.mrf.mxu0
      %v1584 = vpop.f32.mrf.mxu0
      %1585 = vdwg.mxu0
      %v1586 = vld [vmem:[%s9] sm:$0xf]
      %v1588 = vsel %vm1500, %v1586, 0
      %1590 = vmatprep.subr.bf16.mxu0 0
      %1591 = vmatpush1.bf16.msra.mxu0 0
      %1592 = vmatprep.subr.bf16.mxu0 0
      %1593 = vmatpush1.bf16.msra.mxu0 0
      %1594 = vmatprep.subr.bf16.mxu0 0
      %1595 = vmatpush1.bf16.msra.mxu0 0
      %1596 = vmatprep.subr.bf16.mxu0 0
      %1597 = vmatpush1.bf16.msra.mxu0 0
      %1598 = vmatprep.subr.bf16.mxu0 0
      %1599 = vmatpush1.bf16.msra.mxu0 0
      %1600 = vmatprep.subr.bf16.mxu0 0
      %1601 = vmatpush1.bf16.msra.mxu0 0
      %1602 = vmatprep.subr.bf16.mxu0 0
      %1603 = vmatpush1.bf16.msra.mxu0 0
      %1604 = vmatprep.subr.bf16.mxu0 %v1496
      %1605 = vmatpush1.bf16.msra.mxu0 %v1495
      %1606 = vmatprep.subr.bf16.mxu0 0
      %1607 = vmatpush2.bf16.msra.mxu0 0
      %1608 = vmatprep.subr.bf16.mxu0 0
      %1609 = vmatpush2.bf16.msra.mxu0 0
      %1610 = vmatprep.subr.bf16.mxu0 0
      %1611 = vmatpush2.bf16.msra.mxu0 0
      %1612 = vmatprep.subr.bf16.mxu0 0
      %1613 = vmatpush2.bf16.msra.mxu0 0
      %1614 = vmatprep.subr.bf16.mxu0 0
      %1615 = vmatpush2.bf16.msra.mxu0 0
      %1616 = vmatprep.subr.bf16.mxu0 0
      %1617 = vmatpush2.bf16.msra.mxu0 0
      %1618 = vmatprep.subr.bf16.mxu0 0
      %1619 = vmatpush2.bf16.msra.mxu0 0
      %1620 = vmatprep.subr.bf16.mxu0 0
      %1621 = vmatpush2.bf16.msra.mxu0 0
      %1622 = vmatprep.mubr.bf16.mxu0 0
      %1623 = vmatmul.mubr.bf16.gmra.mxu0 %v1588
      %v1624 = vpop.f32.mrf.mxu0
      %v1625 = vadd.f32 0.0, %v1624
      %v1626 = vpop.f32.mrf.mxu0
      %v1627 = vadd.f32 0.0, %v1626
      %v1628 = vpop.f32.mrf.mxu0
      %v1629 = vpop.f32.mrf.mxu0
      %1630 = vdwg.mxu0
      %1631 = vmatprep.subr.bf16.mxu0 0
      %1632 = vmatpush1.bf16.msra.mxu0 0
      %1633 = vmatprep.subr.bf16.mxu0 0
      %1634 = vmatpush1.bf16.msra.mxu0 0
      %1635 = vmatprep.subr.bf16.mxu0 0
      %1636 = vmatpush1.bf16.msra.mxu0 0
      %1637 = vmatprep.subr.bf16.mxu0 0
      %1638 = vmatpush1.bf16.msra.mxu0 0
      %1639 = vmatprep.subr.bf16.mxu0 0
      %1640 = vmatpush1.bf16.msra.mxu0 0
      %1641 = vmatprep.subr.bf16.mxu0 0
      %1642 = vmatpush1.bf16.msra.mxu0 0
      %1643 = vmatprep.subr.bf16.mxu0 0
      %1644 = vmatpush1.bf16.msra.mxu0 0
      %1645 = vmatprep.subr.bf16.mxu0 %v1498
      %1646 = vmatpush1.bf16.msra.mxu0 %v1497
      %1647 = vmatprep.subr.bf16.mxu0 0
      %1648 = vmatpush2.bf16.msra.mxu0 0
      %1649 = vmatprep.subr.bf16.mxu0 0
      %1650 = vmatpush2.bf16.msra.mxu0 0
      %1651 = vmatprep.subr.bf16.mxu0 0
      %1652 = vmatpush2.bf16.msra.mxu0 0
      %1653 = vmatprep.subr.bf16.mxu0 0
      %1654 = vmatpush2.bf16.msra.mxu0 0
      %1655 = vmatprep.subr.bf16.mxu0 0
      %1656 = vmatpush2.bf16.msra.mxu0 0
      %1657 = vmatprep.subr.bf16.mxu0 0
      %1658 = vmatpush2.bf16.msra.mxu0 0
      %1659 = vmatprep.subr.bf16.mxu0 0
      %1660 = vmatpush2.bf16.msra.mxu0 0
      %1661 = vmatprep.subr.bf16.mxu0 0
      %1662 = vmatpush2.bf16.msra.mxu0 0
      %1663 = vmatprep.mubr.bf16.mxu0 0
      %1664 = vmatmul.mubr.bf16.gmra.mxu0 %v1588
      %v1665 = vpop.f32.mrf.mxu0
      %v1666 = vadd.f32 0.0, %v1665
      %v1667 = vpop.f32.mrf.mxu0
      %v1668 = vadd.f32 0.0, %v1667
      %v1669 = vpop.f32.mrf.mxu0
      %v1670 = vpop.f32.mrf.mxu0
      %1671 = vdwg.mxu0
      %v1672 = vmax.f32 %v1539, %v1625
      %v1673 = vmax.f32 %v1541, %v1627
      %v1674 = vmax.f32 %v1580, %v1666
      %v1675 = vmax.f32 %v1582, %v1668
      %v1676 = vpack.c.bf16 %v1672, %v1672
      %v1677 = vpack.c.bf16 %v1673, %v1673
      %v1678 = vpack.c.bf16 %v1674, %v1674
      %v1679 = vpack.c.bf16 %v1675, %v1675
      %v1680 = vld [vmem:[%s11] sm:$0xff]
      %v1681 = vld [vmem:[%s11 + $0x8] sm:$0xff]
      %v1682 = vld [vmem:[%s11 + $0x10] sm:$0xff]
      %v1683 = vld [vmem:[%s11 + $0x18] sm:$0xff]
      %v1684 = vld [vmem:[%s11 + $0x20] sm:$0xff]
      %v1685 = vld [vmem:[%s11 + $0x28] sm:$0xff]
      %v1686 = vld [vmem:[%s11 + $0x30] sm:$0xff]
      %v1687 = vld [vmem:[%s11 + $0x38] sm:$0xff]
      %v1688 = vld [vmem:[%s11 + $0x40] sm:$0xff]
      %v1689 = vld [vmem:[%s11 + $0x48] sm:$0xff]
      %v1690 = vld [vmem:[%s11 + $0x50] sm:$0xff]
      %v1691 = vld [vmem:[%s11 + $0x58] sm:$0xff]
      %v1692 = vld [vmem:[%s11 + $0x60] sm:$0xff]
      %v1693 = vld [vmem:[%s11 + $0x68] sm:$0xff]
      %v1694 = vld [vmem:[%s11 + $0x70] sm:$0xff]
      %v1695 = vld [vmem:[%s11 + $0x78] sm:$0xff]
      %v1696 = vld [vmem:[%s11 + $0x80] sm:$0xff]
      %v1697 = vld [vmem:[%s11 + $0x88] sm:$0xff]
      %v1698 = vld [vmem:[%s11 + $0x90] sm:$0xff]
      %v1699 = vld [vmem:[%s11 + $0x98] sm:$0xff]
      %v1700 = vld [vmem:[%s11 + $0xa0] sm:$0xff]
      %v1701 = vld [vmem:[%s11 + $0xa8] sm:$0xff]
      %v1702 = vld [vmem:[%s11 + $0xb0] sm:$0xff]
      %v1703 = vld [vmem:[%s11 + $0xb8] sm:$0xff]
      %v1704 = vld [vmem:[%s11 + $0xc0] sm:$0xff]
      %v1705 = vld [vmem:[%s11 + $0xc8] sm:$0xff]
      %v1706 = vld [vmem:[%s11 + $0xd0] sm:$0xff]
      %v1707 = vld [vmem:[%s11 + $0xd8] sm:$0xff]
      %v1708 = vld [vmem:[%s11 + $0xe0] sm:$0xff]
      %v1709 = vld [vmem:[%s11 + $0xe8] sm:$0xff]
      %v1710 = vld [vmem:[%s11 + $0xf0] sm:$0xff]
      %v1711 = vld [vmem:[%s11 + $0xf8] sm:$0xff]
      %v1712 = vld [vmem:[%s11 + $0x100] sm:$0xff]
      %v1713 = vld [vmem:[%s11 + $0x108] sm:$0xff]
      %v1714 = vld [vmem:[%s11 + $0x110] sm:$0xff]
      %v1715 = vld [vmem:[%s11 + $0x118] sm:$0xff]
      %v1716 = vld [vmem:[%s11 + $0x120] sm:$0xff]
      %v1717 = vld [vmem:[%s11 + $0x128] sm:$0xff]
      %v1718 = vld [vmem:[%s11 + $0x130] sm:$0xff]
      %v1719 = vld [vmem:[%s11 + $0x138] sm:$0xff]
      %v1720 = vld [vmem:[%s11 + $0x140] sm:$0xff]
      %v1721 = vld [vmem:[%s11 + $0x148] sm:$0xff]
      %v1722 = vld [vmem:[%s11 + $0x150] sm:$0xff]
      %v1723 = vld [vmem:[%s11 + $0x158] sm:$0xff]
      %v1724 = vld [vmem:[%s11 + $0x160] sm:$0xff]
      %v1725 = vld [vmem:[%s11 + $0x168] sm:$0xff]
      %v1726 = vld [vmem:[%s11 + $0x170] sm:$0xff]
      %v1727 = vld [vmem:[%s11 + $0x178] sm:$0xff]
      %v1728 = vld [vmem:[%s11 + $0x180] sm:$0xff]
      %v1729 = vld [vmem:[%s11 + $0x188] sm:$0xff]
      %v1730 = vld [vmem:[%s11 + $0x190] sm:$0xff]
      %v1731 = vld [vmem:[%s11 + $0x198] sm:$0xff]
      %v1732 = vld [vmem:[%s11 + $0x1a0] sm:$0xff]
      %v1733 = vld [vmem:[%s11 + $0x1a8] sm:$0xff]
      %v1734 = vld [vmem:[%s11 + $0x1b0] sm:$0xff]
      %v1735 = vld [vmem:[%s11 + $0x1b8] sm:$0xff]
      %v1736 = vld [vmem:[%s11 + $0x1c0] sm:$0xff]
      %v1737 = vld [vmem:[%s11 + $0x1c8] sm:$0xff]
      %v1738 = vld [vmem:[%s11 + $0x1d0] sm:$0xff]
      %v1739 = vld [vmem:[%s11 + $0x1d8] sm:$0xff]
      %v1740 = vld [vmem:[%s11 + $0x1e0] sm:$0xff]
      %v1741 = vld [vmem:[%s11 + $0x1e8] sm:$0xff]
      %v1742 = vld [vmem:[%s11 + $0x1f0] sm:$0xff]
      %v1743 = vld [vmem:[%s11 + $0x1f8] sm:$0xff]
      %v1808 = vunpack.c.l.b16 %v1680
      %v1809 = vunpack.c.h.b16 %v1680
      %v1810 = vunpack.c.l.b16 %v1681
      %v1811 = vunpack.c.h.b16 %v1681
      %v1812 = vunpack.c.l.b16 %v1682
      %v1813 = vunpack.c.h.b16 %v1682
      %v1814 = vunpack.c.l.b16 %v1683
      %v1815 = vunpack.c.h.b16 %v1683
      %v1816 = vunpack.c.l.b16 %v1684
      %v1817 = vunpack.c.h.b16 %v1684
      %v1818 = vunpack.c.l.b16 %v1685
      %v1819 = vunpack.c.h.b16 %v1685
      %v1820 = vunpack.c.l.b16 %v1686
      %v1821 = vunpack.c.h.b16 %v1686
      %v1822 = vunpack.c.l.b16 %v1687
      %v1823 = vunpack.c.h.b16 %v1687
      %v1824 = vunpack.c.l.b16 %v1688
      %v1825 = vunpack.c.h.b16 %v1688
      %v1826 = vunpack.c.l.b16 %v1689
      %v1827 = vunpack.c.h.b16 %v1689
      %v1828 = vunpack.c.l.b16 %v1690
      %v1829 = vunpack.c.h.b16 %v1690
      %v1830 = vunpack.c.l.b16 %v1691
      %v1831 = vunpack.c.h.b16 %v1691
      %v1832 = vunpack.c.l.b16 %v1692
      %v1833 = vunpack.c.h.b16 %v1692
      %v1834 = vunpack.c.l.b16 %v1693
      %v1835 = vunpack.c.h.b16 %v1693
      %v1836 = vunpack.c.l.b16 %v1694
      %v1837 = vunpack.c.h.b16 %v1694
      %v1838 = vunpack.c.l.b16 %v1695
      %v1839 = vunpack.c.h.b16 %v1695
      %v1840 = vunpack.c.l.b16 %v1696
      %v1841 = vunpack.c.h.b16 %v1696
      %v1842 = vunpack.c.l.b16 %v1697
      %v1843 = vunpack.c.h.b16 %v1697
      %v1844 = vunpack.c.l.b16 %v1698
      %v1845 = vunpack.c.h.b16 %v1698
      %v1846 = vunpack.c.l.b16 %v1699
      %v1847 = vunpack.c.h.b16 %v1699
      %v1848 = vunpack.c.l.b16 %v1700
      %v1849 = vunpack.c.h.b16 %v1700
      %v1850 = vunpack.c.l.b16 %v1701
      %v1851 = vunpack.c.h.b16 %v1701
      %v1852 = vunpack.c.l.b16 %v1702
      %v1853 = vunpack.c.h.b16 %v1702
      %v1854 = vunpack.c.l.b16 %v1703
      %v1855 = vunpack.c.h.b16 %v1703
      %v1856 = vunpack.c.l.b16 %v1704
      %v1857 = vunpack.c.h.b16 %v1704
      %v1858 = vunpack.c.l.b16 %v1705
      %v1859 = vunpack.c.h.b16 %v1705
      %v1860 = vunpack.c.l.b16 %v1706
      %v1861 = vunpack.c.h.b16 %v1706
      %v1862 = vunpack.c.l.b16 %v1707
      %v1863 = vunpack.c.h.b16 %v1707
      %v1864 = vunpack.c.l.b16 %v1708
      %v1865 = vunpack.c.h.b16 %v1708
      %v1866 = vunpack.c.l.b16 %v1709
      %v1867 = vunpack.c.h.b16 %v1709
      %v1868 = vunpack.c.l.b16 %v1710
      %v1869 = vunpack.c.h.b16 %v1710
      %v1870 = vunpack.c.l.b16 %v1711
      %v1871 = vunpack.c.h.b16 %v1711
      %v1872 = vunpack.c.l.b16 %v1712
      %v1873 = vunpack.c.h.b16 %v1712
      %v1874 = vunpack.c.l.b16 %v1713
      %v1875 = vunpack.c.h.b16 %v1713
      %v1876 = vunpack.c.l.b16 %v1714
      %v1877 = vunpack.c.h.b16 %v1714
      %v1878 = vunpack.c.l.b16 %v1715
      %v1879 = vunpack.c.h.b16 %v1715
      %v1880 = vunpack.c.l.b16 %v1716
      %v1881 = vunpack.c.h.b16 %v1716
      %v1882 = vunpack.c.l.b16 %v1717
      %v1883 = vunpack.c.h.b16 %v1717
      %v1884 = vunpack.c.l.b16 %v1718
      %v1885 = vunpack.c.h.b16 %v1718
      %v1886 = vunpack.c.l.b16 %v1719
      %v1887 = vunpack.c.h.b16 %v1719
      %v1888 = vunpack.c.l.b16 %v1720
      %v1889 = vunpack.c.h.b16 %v1720
      %v1890 = vunpack.c.l.b16 %v1721
      %v1891 = vunpack.c.h.b16 %v1721
      %v1892 = vunpack.c.l.b16 %v1722
      %v1893 = vunpack.c.h.b16 %v1722
      %v1894 = vunpack.c.l.b16 %v1723
      %v1895 = vunpack.c.h.b16 %v1723
      %v1896 = vunpack.c.l.b16 %v1724
      %v1897 = vunpack.c.h.b16 %v1724
      %v1898 = vunpack.c.l.b16 %v1725
      %v1899 = vunpack.c.h.b16 %v1725
      %v1900 = vunpack.c.l.b16 %v1726
      %v1901 = vunpack.c.h.b16 %v1726
      %v1902 = vunpack.c.l.b16 %v1727
      %v1903 = vunpack.c.h.b16 %v1727
      %v1904 = vunpack.c.l.b16 %v1728
      %v1905 = vunpack.c.h.b16 %v1728
      %v1906 = vunpack.c.l.b16 %v1729
      %v1907 = vunpack.c.h.b16 %v1729
      %v1908 = vunpack.c.l.b16 %v1730
      %v1909 = vunpack.c.h.b16 %v1730
      %v1910 = vunpack.c.l.b16 %v1731
      %v1911 = vunpack.c.h.b16 %v1731
      %v1912 = vunpack.c.l.b16 %v1732
      %v1913 = vunpack.c.h.b16 %v1732
      %v1914 = vunpack.c.l.b16 %v1733
      %v1915 = vunpack.c.h.b16 %v1733
      %v1916 = vunpack.c.l.b16 %v1734
      %v1917 = vunpack.c.h.b16 %v1734
      %v1918 = vunpack.c.l.b16 %v1735
      %v1919 = vunpack.c.h.b16 %v1735
      %v1920 = vunpack.c.l.b16 %v1736
      %v1921 = vunpack.c.h.b16 %v1736
      %v1922 = vunpack.c.l.b16 %v1737
      %v1923 = vunpack.c.h.b16 %v1737
      %v1924 = vunpack.c.l.b16 %v1738
      %v1925 = vunpack.c.h.b16 %v1738
      %v1926 = vunpack.c.l.b16 %v1739
      %v1927 = vunpack.c.h.b16 %v1739
      %v1928 = vunpack.c.l.b16 %v1740
      %v1929 = vunpack.c.h.b16 %v1740
      %v1930 = vunpack.c.l.b16 %v1741
      %v1931 = vunpack.c.h.b16 %v1741
      %v1932 = vunpack.c.l.b16 %v1742
      %v1933 = vunpack.c.h.b16 %v1742
      %v1934 = vunpack.c.l.b16 %v1743
      %v1935 = vunpack.c.h.b16 %v1743
      %v1936 = vpack.c.b16 %v1810, %v1808
      %v1937 = vpack.c.b16 %v1811, %v1809
      %v1938 = vpack.c.b16 %v1814, %v1812
      %v1939 = vpack.c.b16 %v1815, %v1813
      %v1940 = vpack.c.b16 %v1818, %v1816
      %v1941 = vpack.c.b16 %v1819, %v1817
      %v1942 = vpack.c.b16 %v1822, %v1820
      %v1943 = vpack.c.b16 %v1823, %v1821
      %v1944 = vpack.c.b16 %v1826, %v1824
      %v1945 = vpack.c.b16 %v1827, %v1825
      %v1946 = vpack.c.b16 %v1830, %v1828
      %v1947 = vpack.c.b16 %v1831, %v1829
      %v1948 = vpack.c.b16 %v1834, %v1832
      %v1949 = vpack.c.b16 %v1835, %v1833
      %v1950 = vpack.c.b16 %v1838, %v1836
      %v1951 = vpack.c.b16 %v1839, %v1837
      %v1952 = vpack.c.b16 %v1842, %v1840
      %v1953 = vpack.c.b16 %v1843, %v1841
      %v1954 = vpack.c.b16 %v1846, %v1844
      %v1955 = vpack.c.b16 %v1847, %v1845
      %v1956 = vpack.c.b16 %v1850, %v1848
      %v1957 = vpack.c.b16 %v1851, %v1849
      %v1958 = vpack.c.b16 %v1854, %v1852
      %v1959 = vpack.c.b16 %v1855, %v1853
      %v1960 = vpack.c.b16 %v1858, %v1856
      %v1961 = vpack.c.b16 %v1859, %v1857
      %v1962 = vpack.c.b16 %v1862, %v1860
      %v1963 = vpack.c.b16 %v1863, %v1861
      %v1964 = vpack.c.b16 %v1866, %v1864
      %v1965 = vpack.c.b16 %v1867, %v1865
      %v1966 = vpack.c.b16 %v1870, %v1868
      %v1967 = vpack.c.b16 %v1871, %v1869
      %v1968 = vpack.c.b16 %v1874, %v1872
      %v1969 = vpack.c.b16 %v1875, %v1873
      %v1970 = vpack.c.b16 %v1878, %v1876
      %v1971 = vpack.c.b16 %v1879, %v1877
      %v1972 = vpack.c.b16 %v1882, %v1880
      %v1973 = vpack.c.b16 %v1883, %v1881
      %v1974 = vpack.c.b16 %v1886, %v1884
      %v1975 = vpack.c.b16 %v1887, %v1885
      %v1976 = vpack.c.b16 %v1890, %v1888
      %v1977 = vpack.c.b16 %v1891, %v1889
      %v1978 = vpack.c.b16 %v1894, %v1892
      %v1979 = vpack.c.b16 %v1895, %v1893
      %v1980 = vpack.c.b16 %v1898, %v1896
      %v1981 = vpack.c.b16 %v1899, %v1897
      %v1982 = vpack.c.b16 %v1902, %v1900
      %v1983 = vpack.c.b16 %v1903, %v1901
      %v1984 = vpack.c.b16 %v1906, %v1904
      %v1985 = vpack.c.b16 %v1907, %v1905
      %v1986 = vpack.c.b16 %v1910, %v1908
      %v1987 = vpack.c.b16 %v1911, %v1909
      %v1988 = vpack.c.b16 %v1914, %v1912
      %v1989 = vpack.c.b16 %v1915, %v1913
      %v1990 = vpack.c.b16 %v1918, %v1916
      %v1991 = vpack.c.b16 %v1919, %v1917
      %v1992 = vpack.c.b16 %v1922, %v1920
      %v1993 = vpack.c.b16 %v1923, %v1921
      %v1994 = vpack.c.b16 %v1926, %v1924
      %v1995 = vpack.c.b16 %v1927, %v1925
      %v1996 = vpack.c.b16 %v1930, %v1928
      %v1997 = vpack.c.b16 %v1931, %v1929
      %v1998 = vpack.c.b16 %v1934, %v1932
      %v1999 = vpack.c.b16 %v1935, %v1933
      %2064 = vmatprep.subr.bf16.mxu0 %v1951
      %2065 = vmatpush1.bf16.msra.mxu0 %v1950
      %2066 = vmatprep.subr.bf16.mxu0 %v1949
      %2067 = vmatpush1.bf16.msra.mxu0 %v1948
      %2068 = vmatprep.subr.bf16.mxu0 %v1947
      %2069 = vmatpush1.bf16.msra.mxu0 %v1946
      %2070 = vmatprep.subr.bf16.mxu0 %v1945
      %2071 = vmatpush1.bf16.msra.mxu0 %v1944
      %2072 = vmatprep.subr.bf16.mxu0 %v1943
      %2073 = vmatpush1.bf16.msra.mxu0 %v1942
      %2074 = vmatprep.subr.bf16.mxu0 %v1941
      %2075 = vmatpush1.bf16.msra.mxu0 %v1940
      %2076 = vmatprep.subr.bf16.mxu0 %v1939
      %2077 = vmatpush1.bf16.msra.mxu0 %v1938
      %2078 = vmatprep.subr.bf16.mxu0 %v1937
      %2079 = vmatpush1.bf16.msra.mxu0 %v1936
      %2080 = vmatprep.subr.bf16.mxu0 %v1967
      %2081 = vmatpush2.bf16.msra.mxu0 %v1966
      %2082 = vmatprep.subr.bf16.mxu0 %v1965
      %2083 = vmatpush2.bf16.msra.mxu0 %v1964
      %2084 = vmatprep.subr.bf16.mxu0 %v1963
      %2085 = vmatpush2.bf16.msra.mxu0 %v1962
      %2086 = vmatprep.subr.bf16.mxu0 %v1961
      %2087 = vmatpush2.bf16.msra.mxu0 %v1960
      %2088 = vmatprep.subr.bf16.mxu0 %v1959
      %2089 = vmatpush2.bf16.msra.mxu0 %v1958
      %2090 = vmatprep.subr.bf16.mxu0 %v1957
      %2091 = vmatpush2.bf16.msra.mxu0 %v1956
      %2092 = vmatprep.subr.bf16.mxu0 %v1955
      %2093 = vmatpush2.bf16.msra.mxu0 %v1954
      %2094 = vmatprep.subr.bf16.mxu0 %v1953
      %2095 = vmatpush2.bf16.msra.mxu0 %v1952
      %2096 = vmatprep.mubr.bf16.mxu0 %v1677
      %2097 = vmatmul.mubr.bf16.gmra.mxu0 %v1676
      %v2098 = vpop.f32.mrf.mxu0
      %v2099 = vadd.f32 0.0, %v2098
      %v2100 = vpop.f32.mrf.mxu0
      %v2101 = vadd.f32 0.0, %v2100
      %v2102 = vpop.f32.mrf.mxu0
      %v2103 = vpop.f32.mrf.mxu0
      %2104 = vdwg.mxu0
      %2105 = vmatprep.subr.bf16.mxu0 %v1983
      %2106 = vmatpush1.bf16.msra.mxu0 %v1982
      %2107 = vmatprep.subr.bf16.mxu0 %v1981
      %2108 = vmatpush1.bf16.msra.mxu0 %v1980
      %2109 = vmatprep.subr.bf16.mxu0 %v1979
      %2110 = vmatpush1.bf16.msra.mxu0 %v1978
      %2111 = vmatprep.subr.bf16.mxu0 %v1977
      %2112 = vmatpush1.bf16.msra.mxu0 %v1976
      %2113 = vmatprep.subr.bf16.mxu0 %v1975
      %2114 = vmatpush1.bf16.msra.mxu0 %v1974
      %2115 = vmatprep.subr.bf16.mxu0 %v1973
      %2116 = vmatpush1.bf16.msra.mxu0 %v1972
      %2117 = vmatprep.subr.bf16.mxu0 %v1971
      %2118 = vmatpush1.bf16.msra.mxu0 %v1970
      %2119 = vmatprep.subr.bf16.mxu0 %v1969
      %2120 = vmatpush1.bf16.msra.mxu0 %v1968
      %2121 = vmatprep.subr.bf16.mxu0 %v1999
      %2122 = vmatpush2.bf16.msra.mxu0 %v1998
      %2123 = vmatprep.subr.bf16.mxu0 %v1997
      %2124 = vmatpush2.bf16.msra.mxu0 %v1996
      %2125 = vmatprep.subr.bf16.mxu0 %v1995
      %2126 = vmatpush2.bf16.msra.mxu0 %v1994
      %2127 = vmatprep.subr.bf16.mxu0 %v1993
      %2128 = vmatpush2.bf16.msra.mxu0 %v1992
      %2129 = vmatprep.subr.bf16.mxu0 %v1991
      %2130 = vmatpush2.bf16.msra.mxu0 %v1990
      %2131 = vmatprep.subr.bf16.mxu0 %v1989
      %2132 = vmatpush2.bf16.msra.mxu0 %v1988
      %2133 = vmatprep.subr.bf16.mxu0 %v1987
      %2134 = vmatpush2.bf16.msra.mxu0 %v1986
      %2135 = vmatprep.subr.bf16.mxu0 %v1985
      %2136 = vmatpush2.bf16.msra.mxu0 %v1984
      %2137 = vmatprep.mubr.bf16.mxu0 %v1679
      %2138 = vmatmul.mubr.bf16.gmra.mxu0 %v1678
      %v2139 = vpop.f32.mrf.mxu0
      %v2140 = vadd.f32 %v2099, %v2139
      %v2141 = vpop.f32.mrf.mxu0
      %v2142 = vadd.f32 %v2101, %v2141
      %v2143 = vpop.f32.mrf.mxu0
      %v2144 = vpop.f32.mrf.mxu0
      %2145 = vdwg.mxu0
      %v2146 = vld [vmem:[%s13] sm:$0xff]
      %v2147 = vld [vmem:[%s13 + $0x8] sm:$0xff]
      %v2148 = vld [vmem:[%s13 + $0x10] sm:$0xff]
      %v2149 = vld [vmem:[%s13 + $0x18] sm:$0xff]
      %v2150 = vld [vmem:[%s13 + $0x20] sm:$0xff]
      %v2151 = vld [vmem:[%s13 + $0x28] sm:$0xff]
      %v2152 = vld [vmem:[%s13 + $0x30] sm:$0xff]
      %v2153 = vld [vmem:[%s13 + $0x38] sm:$0xff]
      %v2154 = vld [vmem:[%s13 + $0x40] sm:$0xff]
      %v2155 = vld [vmem:[%s13 + $0x48] sm:$0xff]
      %v2156 = vld [vmem:[%s13 + $0x50] sm:$0xff]
      %v2157 = vld [vmem:[%s13 + $0x58] sm:$0xff]
      %v2158 = vld [vmem:[%s13 + $0x60] sm:$0xff]
      %v2159 = vld [vmem:[%s13 + $0x68] sm:$0xff]
      %v2160 = vld [vmem:[%s13 + $0x70] sm:$0xff]
      %v2161 = vld [vmem:[%s13 + $0x78] sm:$0xff]
      %v2162 = vld [vmem:[%s13 + $0x80] sm:$0xff]
      %v2163 = vld [vmem:[%s13 + $0x88] sm:$0xff]
      %v2164 = vld [vmem:[%s13 + $0x90] sm:$0xff]
      %v2165 = vld [vmem:[%s13 + $0x98] sm:$0xff]
      %v2166 = vld [vmem:[%s13 + $0xa0] sm:$0xff]
      %v2167 = vld [vmem:[%s13 + $0xa8] sm:$0xff]
      %v2168 = vld [vmem:[%s13 + $0xb0] sm:$0xff]
      %v2169 = vld [vmem:[%s13 + $0xb8] sm:$0xff]
      %v2170 = vld [vmem:[%s13 + $0xc0] sm:$0xff]
      %v2171 = vld [vmem:[%s13 + $0xc8] sm:$0xff]
      %v2172 = vld [vmem:[%s13 + $0xd0] sm:$0xff]
      %v2173 = vld [vmem:[%s13 + $0xd8] sm:$0xff]
      %v2174 = vld [vmem:[%s13 + $0xe0] sm:$0xff]
      %v2175 = vld [vmem:[%s13 + $0xe8] sm:$0xff]
      %v2176 = vld [vmem:[%s13 + $0xf0] sm:$0xff]
      %v2177 = vld [vmem:[%s13 + $0xf8] sm:$0xff]
      %v2178 = vld [vmem:[%s13 + $0x100] sm:$0xff]
      %v2179 = vld [vmem:[%s13 + $0x108] sm:$0xff]
      %v2180 = vld [vmem:[%s13 + $0x110] sm:$0xff]
      %v2181 = vld [vmem:[%s13 + $0x118] sm:$0xff]
      %v2182 = vld [vmem:[%s13 + $0x120] sm:$0xff]
      %v2183 = vld [vmem:[%s13 + $0x128] sm:$0xff]
      %v2184 = vld [vmem:[%s13 + $0x130] sm:$0xff]
      %v2185 = vld [vmem:[%s13 + $0x138] sm:$0xff]
      %v2186 = vld [vmem:[%s13 + $0x140] sm:$0xff]
      %v2187 = vld [vmem:[%s13 + $0x148] sm:$0xff]
      %v2188 = vld [vmem:[%s13 + $0x150] sm:$0xff]
      %v2189 = vld [vmem:[%s13 + $0x158] sm:$0xff]
      %v2190 = vld [vmem:[%s13 + $0x160] sm:$0xff]
      %v2191 = vld [vmem:[%s13 + $0x168] sm:$0xff]
      %v2192 = vld [vmem:[%s13 + $0x170] sm:$0xff]
      %v2193 = vld [vmem:[%s13 + $0x178] sm:$0xff]
      %v2194 = vld [vmem:[%s13 + $0x180] sm:$0xff]
      %v2195 = vld [vmem:[%s13 + $0x188] sm:$0xff]
      %v2196 = vld [vmem:[%s13 + $0x190] sm:$0xff]
      %v2197 = vld [vmem:[%s13 + $0x198] sm:$0xff]
      %v2198 = vld [vmem:[%s13 + $0x1a0] sm:$0xff]
      %v2199 = vld [vmem:[%s13 + $0x1a8] sm:$0xff]
      %v2200 = vld [vmem:[%s13 + $0x1b0] sm:$0xff]
      %v2201 = vld [vmem:[%s13 + $0x1b8] sm:$0xff]
      %v2202 = vld [vmem:[%s13 + $0x1c0] sm:$0xff]
      %v2203 = vld [vmem:[%s13 + $0x1c8] sm:$0xff]
      %v2204 = vld [vmem:[%s13 + $0x1d0] sm:$0xff]
      %v2205 = vld [vmem:[%s13 + $0x1d8] sm:$0xff]
      %v2206 = vld [vmem:[%s13 + $0x1e0] sm:$0xff]
      %v2207 = vld [vmem:[%s13 + $0x1e8] sm:$0xff]
      %v2208 = vld [vmem:[%s13 + $0x1f0] sm:$0xff]
      %v2209 = vld [vmem:[%s13 + $0x1f8] sm:$0xff]
      %v2274 = vunpack.c.l.b16 %v2146
      %v2275 = vunpack.c.h.b16 %v2146
      %v2276 = vunpack.c.l.b16 %v2147
      %v2277 = vunpack.c.h.b16 %v2147
      %v2278 = vunpack.c.l.b16 %v2148
      %v2279 = vunpack.c.h.b16 %v2148
      %v2280 = vunpack.c.l.b16 %v2149
      %v2281 = vunpack.c.h.b16 %v2149
      %v2282 = vunpack.c.l.b16 %v2150
      %v2283 = vunpack.c.h.b16 %v2150
      %v2284 = vunpack.c.l.b16 %v2151
      %v2285 = vunpack.c.h.b16 %v2151
      %v2286 = vunpack.c.l.b16 %v2152
      %v2287 = vunpack.c.h.b16 %v2152
      %v2288 = vunpack.c.l.b16 %v2153
      %v2289 = vunpack.c.h.b16 %v2153
      %v2290 = vunpack.c.l.b16 %v2154
      %v2291 = vunpack.c.h.b16 %v2154
      %v2292 = vunpack.c.l.b16 %v2155
      %v2293 = vunpack.c.h.b16 %v2155
      %v2294 = vunpack.c.l.b16 %v2156
      %v2295 = vunpack.c.h.b16 %v2156
      %v2296 = vunpack.c.l.b16 %v2157
      %v2297 = vunpack.c.h.b16 %v2157
      %v2298 = vunpack.c.l.b16 %v2158
      %v2299 = vunpack.c.h.b16 %v2158
      %v2300 = vunpack.c.l.b16 %v2159
      %v2301 = vunpack.c.h.b16 %v2159
      %v2302 = vunpack.c.l.b16 %v2160
      %v2303 = vunpack.c.h.b16 %v2160
      %v2304 = vunpack.c.l.b16 %v2161
      %v2305 = vunpack.c.h.b16 %v2161
      %v2306 = vunpack.c.l.b16 %v2162
      %v2307 = vunpack.c.h.b16 %v2162
      %v2308 = vunpack.c.l.b16 %v2163
      %v2309 = vunpack.c.h.b16 %v2163
      %v2310 = vunpack.c.l.b16 %v2164
      %v2311 = vunpack.c.h.b16 %v2164
      %v2312 = vunpack.c.l.b16 %v2165
      %v2313 = vunpack.c.h.b16 %v2165
      %v2314 = vunpack.c.l.b16 %v2166
      %v2315 = vunpack.c.h.b16 %v2166
      %v2316 = vunpack.c.l.b16 %v2167
      %v2317 = vunpack.c.h.b16 %v2167
      %v2318 = vunpack.c.l.b16 %v2168
      %v2319 = vunpack.c.h.b16 %v2168
      %v2320 = vunpack.c.l.b16 %v2169
      %v2321 = vunpack.c.h.b16 %v2169
      %v2322 = vunpack.c.l.b16 %v2170
      %v2323 = vunpack.c.h.b16 %v2170
      %v2324 = vunpack.c.l.b16 %v2171
      %v2325 = vunpack.c.h.b16 %v2171
      %v2326 = vunpack.c.l.b16 %v2172
      %v2327 = vunpack.c.h.b16 %v2172
      %v2328 = vunpack.c.l.b16 %v2173
      %v2329 = vunpack.c.h.b16 %v2173
      %v2330 = vunpack.c.l.b16 %v2174
      %v2331 = vunpack.c.h.b16 %v2174
      %v2332 = vunpack.c.l.b16 %v2175
      %v2333 = vunpack.c.h.b16 %v2175
      %v2334 = vunpack.c.l.b16 %v2176
      %v2335 = vunpack.c.h.b16 %v2176
      %v2336 = vunpack.c.l.b16 %v2177
      %v2337 = vunpack.c.h.b16 %v2177
      %v2338 = vunpack.c.l.b16 %v2178
      %v2339 = vunpack.c.h.b16 %v2178
      %v2340 = vunpack.c.l.b16 %v2179
      %v2341 = vunpack.c.h.b16 %v2179
      %v2342 = vunpack.c.l.b16 %v2180
      %v2343 = vunpack.c.h.b16 %v2180
      %v2344 = vunpack.c.l.b16 %v2181
      %v2345 = vunpack.c.h.b16 %v2181
      %v2346 = vunpack.c.l.b16 %v2182
      %v2347 = vunpack.c.h.b16 %v2182
      %v2348 = vunpack.c.l.b16 %v2183
      %v2349 = vunpack.c.h.b16 %v2183
      %v2350 = vunpack.c.l.b16 %v2184
      %v2351 = vunpack.c.h.b16 %v2184
      %v2352 = vunpack.c.l.b16 %v2185
      %v2353 = vunpack.c.h.b16 %v2185
      %v2354 = vunpack.c.l.b16 %v2186
      %v2355 = vunpack.c.h.b16 %v2186
      %v2356 = vunpack.c.l.b16 %v2187
      %v2357 = vunpack.c.h.b16 %v2187
      %v2358 = vunpack.c.l.b16 %v2188
      %v2359 = vunpack.c.h.b16 %v2188
      %v2360 = vunpack.c.l.b16 %v2189
      %v2361 = vunpack.c.h.b16 %v2189
      %v2362 = vunpack.c.l.b16 %v2190
      %v2363 = vunpack.c.h.b16 %v2190
      %v2364 = vunpack.c.l.b16 %v2191
      %v2365 = vunpack.c.h.b16 %v2191
      %v2366 = vunpack.c.l.b16 %v2192
      %v2367 = vunpack.c.h.b16 %v2192
      %v2368 = vunpack.c.l.b16 %v2193
      %v2369 = vunpack.c.h.b16 %v2193
      %v2370 = vunpack.c.l.b16 %v2194
      %v2371 = vunpack.c.h.b16 %v2194
      %v2372 = vunpack.c.l.b16 %v2195
      %v2373 = vunpack.c.h.b16 %v2195
      %v2374 = vunpack.c.l.b16 %v2196
      %v2375 = vunpack.c.h.b16 %v2196
      %v2376 = vunpack.c.l.b16 %v2197
      %v2377 = vunpack.c.h.b16 %v2197
      %v2378 = vunpack.c.l.b16 %v2198
      %v2379 = vunpack.c.h.b16 %v2198
      %v2380 = vunpack.c.l.b16 %v2199
      %v2381 = vunpack.c.h.b16 %v2199
      %v2382 = vunpack.c.l.b16 %v2200
      %v2383 = vunpack.c.h.b16 %v2200
      %v2384 = vunpack.c.l.b16 %v2201
      %v2385 = vunpack.c.h.b16 %v2201
      %v2386 = vunpack.c.l.b16 %v2202
      %v2387 = vunpack.c.h.b16 %v2202
      %v2388 = vunpack.c.l.b16 %v2203
      %v2389 = vunpack.c.h.b16 %v2203
      %v2390 = vunpack.c.l.b16 %v2204
      %v2391 = vunpack.c.h.b16 %v2204
      %v2392 = vunpack.c.l.b16 %v2205
      %v2393 = vunpack.c.h.b16 %v2205
      %v2394 = vunpack.c.l.b16 %v2206
      %v2395 = vunpack.c.h.b16 %v2206
      %v2396 = vunpack.c.l.b16 %v2207
      %v2397 = vunpack.c.h.b16 %v2207
      %v2398 = vunpack.c.l.b16 %v2208
      %v2399 = vunpack.c.h.b16 %v2208
      %v2400 = vunpack.c.l.b16 %v2209
      %v2401 = vunpack.c.h.b16 %v2209
      %v2402 = vpack.c.b16 %v2276, %v2274
      %v2403 = vpack.c.b16 %v2277, %v2275
      %v2404 = vpack.c.b16 %v2280, %v2278
      %v2405 = vpack.c.b16 %v2281, %v2279
      %v2406 = vpack.c.b16 %v2284, %v2282
      %v2407 = vpack.c.b16 %v2285, %v2283
      %v2408 = vpack.c.b16 %v2288, %v2286
      %v2409 = vpack.c.b16 %v2289, %v2287
      %v2410 = vpack.c.b16 %v2292, %v2290
      %v2411 = vpack.c.b16 %v2293, %v2291
      %v2412 = vpack.c.b16 %v2296, %v2294
      %v2413 = vpack.c.b16 %v2297, %v2295
      %v2414 = vpack.c.b16 %v2300, %v2298
      %v2415 = vpack.c.b16 %v2301, %v2299
      %v2416 = vpack.c.b16 %v2304, %v2302
      %v2417 = vpack.c.b16 %v2305, %v2303
      %v2418 = vpack.c.b16 %v2308, %v2306
      %v2419 = vpack.c.b16 %v2309, %v2307
      %v2420 = vpack.c.b16 %v2312, %v2310
      %v2421 = vpack.c.b16 %v2313, %v2311
      %v2422 = vpack.c.b16 %v2316, %v2314
      %v2423 = vpack.c.b16 %v2317, %v2315
      %v2424 = vpack.c.b16 %v2320, %v2318
      %v2425 = vpack.c.b16 %v2321, %v2319
      %v2426 = vpack.c.b16 %v2324, %v2322
      %v2427 = vpack.c.b16 %v2325, %v2323
      %v2428 = vpack.c.b16 %v2328, %v2326
      %v2429 = vpack.c.b16 %v2329, %v2327
      %v2430 = vpack.c.b16 %v2332, %v2330
      %v2431 = vpack.c.b16 %v2333, %v2331
      %v2432 = vpack.c.b16 %v2336, %v2334
      %v2433 = vpack.c.b16 %v2337, %v2335
      %v2434 = vpack.c.b16 %v2340, %v2338
      %v2435 = vpack.c.b16 %v2341, %v2339
      %v2436 = vpack.c.b16 %v2344, %v2342
      %v2437 = vpack.c.b16 %v2345, %v2343
      %v2438 = vpack.c.b16 %v2348, %v2346
      %v2439 = vpack.c.b16 %v2349, %v2347
      %v2440 = vpack.c.b16 %v2352, %v2350
      %v2441 = vpack.c.b16 %v2353, %v2351
      %v2442 = vpack.c.b16 %v2356, %v2354
      %v2443 = vpack.c.b16 %v2357, %v2355
      %v2444 = vpack.c.b16 %v2360, %v2358
      %v2445 = vpack.c.b16 %v2361, %v2359
      %v2446 = vpack.c.b16 %v2364, %v2362
      %v2447 = vpack.c.b16 %v2365, %v2363
      %v2448 = vpack.c.b16 %v2368, %v2366
      %v2449 = vpack.c.b16 %v2369, %v2367
      %v2450 = vpack.c.b16 %v2372, %v2370
      %v2451 = vpack.c.b16 %v2373, %v2371
      %v2452 = vpack.c.b16 %v2376, %v2374
      %v2453 = vpack.c.b16 %v2377, %v2375
      %v2454 = vpack.c.b16 %v2380, %v2378
      %v2455 = vpack.c.b16 %v2381, %v2379
      %v2456 = vpack.c.b16 %v2384, %v2382
      %v2457 = vpack.c.b16 %v2385, %v2383
      %v2458 = vpack.c.b16 %v2388, %v2386
      %v2459 = vpack.c.b16 %v2389, %v2387
      %v2460 = vpack.c.b16 %v2392, %v2390
      %v2461 = vpack.c.b16 %v2393, %v2391
      %v2462 = vpack.c.b16 %v2396, %v2394
      %v2463 = vpack.c.b16 %v2397, %v2395
      %v2464 = vpack.c.b16 %v2400, %v2398
      %v2465 = vpack.c.b16 %v2401, %v2399
      %2530 = vmatprep.subr.bf16.mxu0 %v2417
      %2531 = vmatpush1.bf16.msra.mxu0 %v2416
      %2532 = vmatprep.subr.bf16.mxu0 %v2415
      %2533 = vmatpush1.bf16.msra.mxu0 %v2414
      %2534 = vmatprep.subr.bf16.mxu0 %v2413
      %2535 = vmatpush1.bf16.msra.mxu0 %v2412
      %2536 = vmatprep.subr.bf16.mxu0 %v2411
      %2537 = vmatpush1.bf16.msra.mxu0 %v2410
      %2538 = vmatprep.subr.bf16.mxu0 %v2409
      %2539 = vmatpush1.bf16.msra.mxu0 %v2408
      %2540 = vmatprep.subr.bf16.mxu0 %v2407
      %2541 = vmatpush1.bf16.msra.mxu0 %v2406
      %2542 = vmatprep.subr.bf16.mxu0 %v2405
      %2543 = vmatpush1.bf16.msra.mxu0 %v2404
      %2544 = vmatprep.subr.bf16.mxu0 %v2403
      %2545 = vmatpush1.bf16.msra.mxu0 %v2402
      %2546 = vmatprep.subr.bf16.mxu0 %v2433
      %2547 = vmatpush2.bf16.msra.mxu0 %v2432
      %2548 = vmatprep.subr.bf16.mxu0 %v2431
      %2549 = vmatpush2.bf16.msra.mxu0 %v2430
      %2550 = vmatprep.subr.bf16.mxu0 %v2429
      %2551 = vmatpush2.bf16.msra.mxu0 %v2428
      %2552 = vmatprep.subr.bf16.mxu0 %v2427
      %2553 = vmatpush2.bf16.msra.mxu0 %v2426
      %2554 = vmatprep.subr.bf16.mxu0 %v2425
      %2555 = vmatpush2.bf16.msra.mxu0 %v2424
      %2556 = vmatprep.subr.bf16.mxu0 %v2423
      %2557 = vmatpush2.bf16.msra.mxu0 %v2422
      %2558 = vmatprep.subr.bf16.mxu0 %v2421
      %2559 = vmatpush2.bf16.msra.mxu0 %v2420
      %2560 = vmatprep.subr.bf16.mxu0 %v2419
      %2561 = vmatpush2.bf16.msra.mxu0 %v2418
      %2562 = vmatprep.mubr.bf16.mxu0 %v1677
      %2563 = vmatmul.mubr.bf16.gmra.mxu0 %v1676
      %v2564 = vpop.f32.mrf.mxu0
      %v2565 = vadd.f32 0.0, %v2564
      %v2566 = vpop.f32.mrf.mxu0
      %v2567 = vadd.f32 0.0, %v2566
      %v2568 = vpop.f32.mrf.mxu0
      %v2569 = vpop.f32.mrf.mxu0
      %2570 = vdwg.mxu0
      %2571 = vmatprep.subr.bf16.mxu0 %v2449
      %2572 = vmatpush1.bf16.msra.mxu0 %v2448
      %2573 = vmatprep.subr.bf16.mxu0 %v2447
      %2574 = vmatpush1.bf16.msra.mxu0 %v2446
      %2575 = vmatprep.subr.bf16.mxu0 %v2445
      %2576 = vmatpush1.bf16.msra.mxu0 %v2444
      %2577 = vmatprep.subr.bf16.mxu0 %v2443
      %2578 = vmatpush1.bf16.msra.mxu0 %v2442
      %2579 = vmatprep.subr.bf16.mxu0 %v2441
      %2580 = vmatpush1.bf16.msra.mxu0 %v2440
      %2581 = vmatprep.subr.bf16.mxu0 %v2439
      %2582 = vmatpush1.bf16.msra.mxu0 %v2438
      %2583 = vmatprep.subr.bf16.mxu0 %v2437
      %2584 = vmatpush1.bf16.msra.mxu0 %v2436
      %2585 = vmatprep.subr.bf16.mxu0 %v2435
      %2586 = vmatpush1.bf16.msra.mxu0 %v2434
      %2587 = vmatprep.subr.bf16.mxu0 %v2465
      %2588 = vmatpush2.bf16.msra.mxu0 %v2464
      %2589 = vmatprep.subr.bf16.mxu0 %v2463
      %2590 = vmatpush2.bf16.msra.mxu0 %v2462
      %2591 = vmatprep.subr.bf16.mxu0 %v2461
      %2592 = vmatpush2.bf16.msra.mxu0 %v2460
      %2593 = vmatprep.subr.bf16.mxu0 %v2459
      %2594 = vmatpush2.bf16.msra.mxu0 %v2458
      %2595 = vmatprep.subr.bf16.mxu0 %v2457
      %2596 = vmatpush2.bf16.msra.mxu0 %v2456
      %2597 = vmatprep.subr.bf16.mxu0 %v2455
      %2598 = vmatpush2.bf16.msra.mxu0 %v2454
      %2599 = vmatprep.subr.bf16.mxu0 %v2453
      %2600 = vmatpush2.bf16.msra.mxu0 %v2452
      %2601 = vmatprep.subr.bf16.mxu0 %v2451
      %2602 = vmatpush2.bf16.msra.mxu0 %v2450
      %2603 = vmatprep.mubr.bf16.mxu0 %v1679
      %2604 = vmatmul.mubr.bf16.gmra.mxu0 %v1678
      %v2605 = vpop.f32.mrf.mxu0
      %v2606 = vadd.f32 %v2565, %v2605
      %v2607 = vpop.f32.mrf.mxu0
      %v2608 = vadd.f32 %v2567, %v2607
      %v2609 = vpop.f32.mrf.mxu0
      %v2610 = vpop.f32.mrf.mxu0
      %2611 = vdwg.mxu0
      %v2612 = vmax.f32 %v2140, %v2606
      %v2613 = vmax.f32 %v2142, %v2608
      %vm2614 = vcmask 1040384
      %vm2615 = vsmask.f32 256
      %vm2616 = vmand %vm2614, %vm2615
      %vm2617 = vcmask 1044484
      %vm2618 = vsmask.f32 4352
      %vm2619 = vmand %vm2617, %vm2618
      %vm2620 = vmor %vm2619, %vm2616
      %v2621 = vld [vmem:[#allocation2] sm:$0x11]
      %v2622 = vsel %vm2620, 0, %v2621
      %2623 = vst [vmem:[#allocation2] sm:$0x11] %v2622
      %vm2624 = vsmask.f32 7938
      %vm2625 = vmand %vm2614, %vm2624
      %vm2626 = vsmask.f32 7954
      %vm2627 = vmand %vm2617, %vm2626
      %vm2628 = vmor %vm2627, %vm2625
      %v2629 = vld [vmem:[#allocation2 + $0x8] sm:$0x11]
      %v2630 = vsel %vm2628, 0, %v2629
      %2631 = vst [vmem:[#allocation2 + $0x8] sm:$0x11] %v2630
      %v2632 = vpack.c.bf16 %v2612, %v2612
      %v2633 = vpack.c.bf16 %v2613, %v2613
      %v2636 = vunpack.c.l.b16 %v2632
      %v2637 = vunpack.c.l.b16 %v2633
      %v2638 = vpack.c.b16 %v2637, %v2636
      %v2640 = vshrl.u32 %v2638, 16
      %v2642 = vrot.slane %v2640, 7
      %v2643 = vshll.u32 %v2638, 16
      %v2645 = vor.u32 %v2642, %v2643
      %v2646 = vrot.slane %v2642, 4
      %vm2649 = vcmask 1043456
      %vm2650 = vmand %vm2649, %vm2624
      %vm2651 = vcmask 1047556
      %vm2652 = vmand %vm2651, %vm2626
      %vm2653 = vmor %vm2652, %vm2650
      %v2654 = vld [vmem:[#allocation2] sm:$0xff]
      %v2655 = vsel %vm2653, %v2645, %v2654
      %2656 = vst [vmem:[#allocation2] sm:$0xff] %v2655
      %v2657 = vld [vmem:[#allocation2 + $0x8] sm:$0x11]
      %v2658 = vsel %vm2620, %v2646, %v2657
      %2659 = vst [vmem:[#allocation2 + $0x8] sm:$0x11] %v2658
      %v2660 = vld [vmem:[#allocation2] sm:$0xff]
      %v2661 = vld [vmem:[%s15] sm:$0xf]
      %v2662 = vld [vmem:[%s15 + $0x4] sm:$0xf]
      %v2663 = vld [vmem:[%s15 + $0x8] sm:$0xf]
      %v2664 = vld [vmem:[%s15 + $0xc] sm:$0xf]
      %v2665 = vld [vmem:[%s15 + $0x10] sm:$0xf]
      %v2666 = vld [vmem:[%s15 + $0x14] sm:$0xf]
      %v2667 = vld [vmem:[%s15 + $0x18] sm:$0xf]
      %v2668 = vld [vmem:[%s15 + $0x1c] sm:$0xf]
      %v2669 = vld [vmem:[%s15 + $0x20] sm:$0xf]
      %v2670 = vld [vmem:[%s15 + $0x24] sm:$0xf]
      %v2671 = vld [vmem:[%s15 + $0x28] sm:$0xf]
      %v2672 = vld [vmem:[%s15 + $0x2c] sm:$0xf]
      %v2673 = vld [vmem:[%s15 + $0x30] sm:$0xf]
      %v2674 = vld [vmem:[%s15 + $0x34] sm:$0xf]
      %v2675 = vld [vmem:[%s15 + $0x38] sm:$0xf]
      %v2676 = vld [vmem:[%s15 + $0x3c] sm:$0xf]
      %v2677 = vld [vmem:[%s15 + $0x40] sm:$0xf]
      %v2678 = vld [vmem:[%s15 + $0x44] sm:$0xf]
      %v2679 = vld [vmem:[%s15 + $0x48] sm:$0xf]
      %v2680 = vld [vmem:[%s15 + $0x4c] sm:$0xf]
      %v2681 = vld [vmem:[%s15 + $0x50] sm:$0xf]
      %v2682 = vld [vmem:[%s15 + $0x54] sm:$0xf]
      %v2683 = vld [vmem:[%s15 + $0x58] sm:$0xf]
      %v2684 = vld [vmem:[%s15 + $0x5c] sm:$0xf]
      %v2685 = vld [vmem:[%s15 + $0x60] sm:$0xf]
      %v2686 = vld [vmem:[%s15 + $0x64] sm:$0xf]
      %v2687 = vld [vmem:[%s15 + $0x68] sm:$0xf]
      %v2688 = vld [vmem:[%s15 + $0x6c] sm:$0xf]
      %v2689 = vld [vmem:[%s15 + $0x70] sm:$0xf]
      %v2690 = vld [vmem:[%s15 + $0x74] sm:$0xf]
      %v2691 = vld [vmem:[%s15 + $0x78] sm:$0xf]
      %v2692 = vld [vmem:[%s15 + $0x7c] sm:$0xf]
      %v2693 = vld [vmem:[#allocation2 + $0x8] sm:$0x11]
      %s2694 = scalar_lea.vmem %s15, 128
      %v2695 = vld [vmem:[%s2694] sm:$0xf]
      %v2696 = vld [vmem:[%s2694 + $0x4] sm:$0xf]
      %v2697 = vld [vmem:[%s2694 + $0x8] sm:$0xf]
      %v2698 = vld [vmem:[%s2694 + $0xc] sm:$0xf]
      %v2699 = vld [vmem:[%s2694 + $0x10] sm:$0xf]
      %v2700 = vld [vmem:[%s2694 + $0x14] sm:$0xf]
      %v2701 = vld [vmem:[%s2694 + $0x18] sm:$0xf]
      %v2702 = vld [vmem:[%s2694 + $0x1c] sm:$0xf]
      %v2703 = vld [vmem:[%s2694 + $0x20] sm:$0xf]
      %v2704 = vld [vmem:[%s2694 + $0x24] sm:$0xf]
      %v2705 = vld [vmem:[%s2694 + $0x28] sm:$0xf]
      %v2706 = vld [vmem:[%s2694 + $0x2c] sm:$0xf]
      %v2707 = vld [vmem:[%s2694 + $0x30] sm:$0xf]
      %v2708 = vld [vmem:[%s2694 + $0x34] sm:$0xf]
      %v2709 = vld [vmem:[%s2694 + $0x38] sm:$0xf]
      %v2710 = vld [vmem:[%s2694 + $0x3c] sm:$0xf]
      %v2711 = vld [vmem:[%s2694 + $0x40] sm:$0xf]
      %v2712 = vld [vmem:[%s2694 + $0x44] sm:$0xf]
      %v2713 = vld [vmem:[%s2694 + $0x48] sm:$0xf]
      %v2714 = vld [vmem:[%s2694 + $0x4c] sm:$0xf]
      %v2715 = vld [vmem:[%s2694 + $0x50] sm:$0xf]
      %v2716 = vld [vmem:[%s2694 + $0x54] sm:$0xf]
      %v2717 = vld [vmem:[%s2694 + $0x58] sm:$0xf]
      %v2718 = vld [vmem:[%s2694 + $0x5c] sm:$0xf]
      %v2719 = vld [vmem:[%s2694 + $0x60] sm:$0xf]
      %v2720 = vld [vmem:[%s2694 + $0x64] sm:$0xf]
      %v2721 = vld [vmem:[%s2694 + $0x68] sm:$0xf]
      %v2722 = vld [vmem:[%s2694 + $0x6c] sm:$0xf]
      %v2723 = vld [vmem:[%s2694 + $0x70] sm:$0xf]
      %v2724 = vld [vmem:[%s2694 + $0x74] sm:$0xf]
      %v2725 = vld [vmem:[%s2694 + $0x78] sm:$0xf]
      %v2726 = vld [vmem:[%s2694 + $0x7c] sm:$0xf]
      %v2729 = vunpack.c.l.b16 %v2660
      %v2730 = vunpack.c.h.b16 %v2660
      %v2731 = vunpack.c.l.b16 %v2693
      %v2732 = vunpack.c.h.b16 %v2693
      %v2733 = vpack.c.b16 %v2731, %v2729
      %v2734 = vpack.c.b16 %v2732, %v2730
      %v2736 = vshrl.u32 %v2733, 16
      %v2738 = vshll.u32 %v2733, 16
      %v2740 = vrot.slane %v2738, 1
      %v2741 = vor.u32 %v2736, %v2740
      %v2743 = vshrl.u32 %v2734, 16
      %v2745 = vshll.u32 %v2734, 16
      %v2747 = vrot.slane %v2745, 1
      %v2748 = vor.u32 %v2743, %v2747
      %v2783 = vunpack.c.l.b16 %v2695
      %v2784 = vunpack.c.l.b16 %v2696
      %v2785 = vunpack.c.l.b16 %v2697
      %v2786 = vunpack.c.l.b16 %v2698
      %v2787 = vunpack.c.l.b16 %v2699
      %v2788 = vunpack.c.l.b16 %v2700
      %v2789 = vunpack.c.l.b16 %v2701
      %v2790 = vunpack.c.l.b16 %v2702
      %v2791 = vunpack.c.l.b16 %v2703
      %v2792 = vunpack.c.l.b16 %v2704
      %v2793 = vunpack.c.l.b16 %v2705
      %v2794 = vunpack.c.l.b16 %v2706
      %v2795 = vunpack.c.l.b16 %v2707
      %v2796 = vunpack.c.l.b16 %v2708
      %v2797 = vunpack.c.l.b16 %v2709
      %v2798 = vunpack.c.l.b16 %v2710
      %v2799 = vunpack.c.l.b16 %v2711
      %v2800 = vunpack.c.l.b16 %v2712
      %v2801 = vunpack.c.l.b16 %v2713
      %v2802 = vunpack.c.l.b16 %v2714
      %v2803 = vunpack.c.l.b16 %v2715
      %v2804 = vunpack.c.l.b16 %v2716
      %v2805 = vunpack.c.l.b16 %v2717
      %v2806 = vunpack.c.l.b16 %v2718
      %v2807 = vunpack.c.l.b16 %v2719
      %v2808 = vunpack.c.l.b16 %v2720
      %v2809 = vunpack.c.l.b16 %v2721
      %v2810 = vunpack.c.l.b16 %v2722
      %v2811 = vunpack.c.l.b16 %v2723
      %v2812 = vunpack.c.l.b16 %v2724
      %v2813 = vunpack.c.l.b16 %v2725
      %v2814 = vunpack.c.l.b16 %v2726
      %v2815 = vpack.c.b16 %v2784, %v2783
      %v2816 = vpack.c.b16 %v2786, %v2785
      %v2817 = vpack.c.b16 %v2788, %v2787
      %v2818 = vpack.c.b16 %v2790, %v2789
      %v2819 = vpack.c.b16 %v2792, %v2791
      %v2820 = vpack.c.b16 %v2794, %v2793
      %v2821 = vpack.c.b16 %v2796, %v2795
      %v2822 = vpack.c.b16 %v2798, %v2797
      %v2823 = vpack.c.b16 %v2800, %v2799
      %v2824 = vpack.c.b16 %v2802, %v2801
      %v2825 = vpack.c.b16 %v2804, %v2803
      %v2826 = vpack.c.b16 %v2806, %v2805
      %v2827 = vpack.c.b16 %v2808, %v2807
      %v2828 = vpack.c.b16 %v2810, %v2809
      %v2829 = vpack.c.b16 %v2812, %v2811
      %v2830 = vpack.c.b16 %v2814, %v2813
      %2847 = vmatprep.subr.bf16.mxu0 0
      %2848 = vmatpush1.bf16.msra.mxu0 %v2822
      %2849 = vmatprep.subr.bf16.mxu0 0
      %2850 = vmatpush1.bf16.msra.mxu0 %v2821
      %2851 = vmatprep.subr.bf16.mxu0 0
      %2852 = vmatpush1.bf16.msra.mxu0 %v2820
      %2853 = vmatprep.subr.bf16.mxu0 0
      %2854 = vmatpush1.bf16.msra.mxu0 %v2819
      %2855 = vmatprep.subr.bf16.mxu0 0
      %2856 = vmatpush1.bf16.msra.mxu0 %v2818
      %2857 = vmatprep.subr.bf16.mxu0 0
      %2858 = vmatpush1.bf16.msra.mxu0 %v2817
      %2859 = vmatprep.subr.bf16.mxu0 0
      %2860 = vmatpush1.bf16.msra.mxu0 %v2816
      %2861 = vmatprep.subr.bf16.mxu0 0
      %2862 = vmatpush1.bf16.msra.mxu0 %v2815
      %2863 = vmatprep.subr.bf16.mxu0 0
      %2864 = vmatpush2.bf16.msra.mxu0 %v2830
      %2865 = vmatprep.subr.bf16.mxu0 0
      %2866 = vmatpush2.bf16.msra.mxu0 %v2829
      %2867 = vmatprep.subr.bf16.mxu0 0
      %2868 = vmatpush2.bf16.msra.mxu0 %v2828
      %2869 = vmatprep.subr.bf16.mxu0 0
      %2870 = vmatpush2.bf16.msra.mxu0 %v2827
      %2871 = vmatprep.subr.bf16.mxu0 0
      %2872 = vmatpush2.bf16.msra.mxu0 %v2826
      %2873 = vmatprep.subr.bf16.mxu0 0
      %2874 = vmatpush2.bf16.msra.mxu0 %v2825
      %2875 = vmatprep.subr.bf16.mxu0 0
      %2876 = vmatpush2.bf16.msra.mxu0 %v2824
      %2877 = vmatprep.subr.bf16.mxu0 0
      %2878 = vmatpush2.bf16.msra.mxu0 %v2823
      %2879 = vmatprep.mubr.bf16.mxu0 %v2748
      %2880 = vmatmul.mubr.bf16.gmra.mxu0 %v2741
      %v2881 = vpop.f32.mrf.mxu0
      %v2882 = vadd.f32 0.0, %v2881
      %v2883 = vpop.f32.mrf.mxu0
      %v2884 = vpop.f32.mrf.mxu0
      %v2885 = vpop.f32.mrf.mxu0
      %2886 = vdwg.mxu0
      %v2887 = vpack.c.b16 %v2729, %v2729
      %v2888 = vpack.c.b16 %v2730, %v2730
      %v2923 = vunpack.c.l.b16 %v2661
      %v2924 = vunpack.c.l.b16 %v2662
      %v2925 = vunpack.c.l.b16 %v2663
      %v2926 = vunpack.c.l.b16 %v2664
      %v2927 = vunpack.c.l.b16 %v2665
      %v2928 = vunpack.c.l.b16 %v2666
      %v2929 = vunpack.c.l.b16 %v2667
      %v2930 = vunpack.c.l.b16 %v2668
      %v2931 = vunpack.c.l.b16 %v2669
      %v2932 = vunpack.c.l.b16 %v2670
      %v2933 = vunpack.c.l.b16 %v2671
      %v2934 = vunpack.c.l.b16 %v2672
      %v2935 = vunpack.c.l.b16 %v2673
      %v2936 = vunpack.c.l.b16 %v2674
      %v2937 = vunpack.c.l.b16 %v2675
      %v2938 = vunpack.c.l.b16 %v2676
      %v2939 = vunpack.c.l.b16 %v2677
      %v2940 = vunpack.c.l.b16 %v2678
      %v2941 = vunpack.c.l.b16 %v2679
      %v2942 = vunpack.c.l.b16 %v2680
      %v2943 = vunpack.c.l.b16 %v2681
      %v2944 = vunpack.c.l.b16 %v2682
      %v2945 = vunpack.c.l.b16 %v2683
      %v2946 = vunpack.c.l.b16 %v2684
      %v2947 = vunpack.c.l.b16 %v2685
      %v2948 = vunpack.c.l.b16 %v2686
      %v2949 = vunpack.c.l.b16 %v2687
      %v2950 = vunpack.c.l.b16 %v2688
      %v2951 = vunpack.c.l.b16 %v2689
      %v2952 = vunpack.c.l.b16 %v2690
      %v2953 = vunpack.c.l.b16 %v2691
      %v2954 = vunpack.c.l.b16 %v2692
      %v2955 = vpack.c.b16 %v2924, %v2923
      %v2956 = vpack.c.b16 %v2926, %v2925
      %v2957 = vpack.c.b16 %v2928, %v2927
      %v2958 = vpack.c.b16 %v2930, %v2929
      %v2959 = vpack.c.b16 %v2932, %v2931
      %v2960 = vpack.c.b16 %v2934, %v2933
      %v2961 = vpack.c.b16 %v2936, %v2935
      %v2962 = vpack.c.b16 %v2938, %v2937
      %v2963 = vpack.c.b16 %v2940, %v2939
      %v2964 = vpack.c.b16 %v2942, %v2941
      %v2965 = vpack.c.b16 %v2944, %v2943
      %v2966 = vpack.c.b16 %v2946, %v2945
      %v2967 = vpack.c.b16 %v2948, %v2947
      %v2968 = vpack.c.b16 %v2950, %v2949
      %v2969 = vpack.c.b16 %v2952, %v2951
      %v2970 = vpack.c.b16 %v2954, %v2953
      %2987 = vmatprep.subr.bf16.mxu0 0
      %2988 = vmatpush1.bf16.msra.mxu0 %v2962
      %2989 = vmatprep.subr.bf16.mxu0 0
      %2990 = vmatpush1.bf16.msra.mxu0 %v2961
      %2991 = vmatprep.subr.bf16.mxu0 0
      %2992 = vmatpush1.bf16.msra.mxu0 %v2960
      %2993 = vmatprep.subr.bf16.mxu0 0
      %2994 = vmatpush1.bf16.msra.mxu0 %v2959
      %2995 = vmatprep.subr.bf16.mxu0 0
      %2996 = vmatpush1.bf16.msra.mxu0 %v2958
      %2997 = vmatprep.subr.bf16.mxu0 0
      %2998 = vmatpush1.bf16.msra.mxu0 %v2957
      %2999 = vmatprep.subr.bf16.mxu0 0
      %3000 = vmatpush1.bf16.msra.mxu0 %v2956
      %3001 = vmatprep.subr.bf16.mxu0 0
      %3002 = vmatpush1.bf16.msra.mxu0 %v2955
      %3003 = vmatprep.subr.bf16.mxu0 0
      %3004 = vmatpush2.bf16.msra.mxu0 %v2970
      %3005 = vmatprep.subr.bf16.mxu0 0
      %3006 = vmatpush2.bf16.msra.mxu0 %v2969
      %3007 = vmatprep.subr.bf16.mxu0 0
      %3008 = vmatpush2.bf16.msra.mxu0 %v2968
      %3009 = vmatprep.subr.bf16.mxu0 0
      %3010 = vmatpush2.bf16.msra.mxu0 %v2967
      %3011 = vmatprep.subr.bf16.mxu0 0
      %3012 = vmatpush2.bf16.msra.mxu0 %v2966
      %3013 = vmatprep.subr.bf16.mxu0 0
      %3014 = vmatpush2.bf16.msra.mxu0 %v2965
      %3015 = vmatprep.subr.bf16.mxu0 0
      %3016 = vmatpush2.bf16.msra.mxu0 %v2964
      %3017 = vmatprep.subr.bf16.mxu0 0
      %3018 = vmatpush2.bf16.msra.mxu0 %v2963
      %3019 = vmatprep.mubr.bf16.mxu0 %v2888
      %3020 = vmatmul.mubr.bf16.gmra.mxu0 %v2887
      %v3021 = vpop.f32.mrf.mxu0
      %v3022 = vadd.f32 %v2882, %v3021
      %v3023 = vpop.f32.mrf.mxu0
      %v3024 = vpop.f32.mrf.mxu0
      %v3025 = vpop.f32.mrf.mxu0
      %3026 = vdwg.mxu0
      %v3027 = vld [vmem:[#allocation2] sm:$0xee]
      %s3028 = scalar_lea.vmem %s15, 256
      %v3029 = vld [vmem:[%s3028] sm:$0xf]
      %v3030 = vld [vmem:[%s3028 + $0x4] sm:$0xf]
      %v3031 = vld [vmem:[%s3028 + $0x8] sm:$0xf]
      %v3032 = vld [vmem:[%s3028 + $0xc] sm:$0xf]
      %v3033 = vld [vmem:[%s3028 + $0x10] sm:$0xf]
      %v3034 = vld [vmem:[%s3028 + $0x14] sm:$0xf]
      %v3035 = vld [vmem:[%s3028 + $0x18] sm:$0xf]
      %v3036 = vld [vmem:[%s3028 + $0x1c] sm:$0xf]
      %v3037 = vld [vmem:[%s3028 + $0x20] sm:$0xf]
      %v3038 = vld [vmem:[%s3028 + $0x24] sm:$0xf]
      %v3039 = vld [vmem:[%s3028 + $0x28] sm:$0xf]
      %v3040 = vld [vmem:[%s3028 + $0x2c] sm:$0xf]
      %v3041 = vld [vmem:[%s3028 + $0x30] sm:$0xf]
      %v3042 = vld [vmem:[%s3028 + $0x34] sm:$0xf]
      %v3043 = vld [vmem:[%s3028 + $0x38] sm:$0xf]
      %v3044 = vld [vmem:[%s3028 + $0x3c] sm:$0xf]
      %v3045 = vld [vmem:[%s3028 + $0x40] sm:$0xf]
      %v3046 = vld [vmem:[%s3028 + $0x44] sm:$0xf]
      %v3047 = vld [vmem:[%s3028 + $0x48] sm:$0xf]
      %v3048 = vld [vmem:[%s3028 + $0x4c] sm:$0xf]
      %v3049 = vld [vmem:[%s3028 + $0x50] sm:$0xf]
      %v3050 = vld [vmem:[%s3028 + $0x54] sm:$0xf]
      %v3051 = vld [vmem:[%s3028 + $0x58] sm:$0xf]
      %v3052 = vld [vmem:[%s3028 + $0x5c] sm:$0xf]
      %v3053 = vld [vmem:[%s3028 + $0x60] sm:$0xf]
      %v3054 = vld [vmem:[%s3028 + $0x64] sm:$0xf]
      %v3055 = vld [vmem:[%s3028 + $0x68] sm:$0xf]
      %v3056 = vld [vmem:[%s3028 + $0x6c] sm:$0xf]
      %v3057 = vld [vmem:[%s3028 + $0x70] sm:$0xf]
      %v3058 = vld [vmem:[%s3028 + $0x74] sm:$0xf]
      %v3059 = vld [vmem:[%s3028 + $0x78] sm:$0xf]
      %v3060 = vld [vmem:[%s3028 + $0x7c] sm:$0xf]
      %v3062 = vunpack.c.l.b16 %v3027
      %v3063 = vunpack.c.h.b16 %v3027
      %v3064 = vpack.c.b16 %v2731, %v3062
      %v3065 = vpack.c.b16 %v2732, %v3063
      %v3066 = vrot.slane %v3064, 1
      %v3067 = vrot.slane %v3065, 1
      %v3102 = vunpack.c.l.b16 %v3029
      %v3103 = vunpack.c.l.b16 %v3030
      %v3104 = vunpack.c.l.b16 %v3031
      %v3105 = vunpack.c.l.b16 %v3032
      %v3106 = vunpack.c.l.b16 %v3033
      %v3107 = vunpack.c.l.b16 %v3034
      %v3108 = vunpack.c.l.b16 %v3035
      %v3109 = vunpack.c.l.b16 %v3036
      %v3110 = vunpack.c.l.b16 %v3037
      %v3111 = vunpack.c.l.b16 %v3038
      %v3112 = vunpack.c.l.b16 %v3039
      %v3113 = vunpack.c.l.b16 %v3040
      %v3114 = vunpack.c.l.b16 %v3041
      %v3115 = vunpack.c.l.b16 %v3042
      %v3116 = vunpack.c.l.b16 %v3043
      %v3117 = vunpack.c.l.b16 %v3044
      %v3118 = vunpack.c.l.b16 %v3045
      %v3119 = vunpack.c.l.b16 %v3046
      %v3120 = vunpack.c.l.b16 %v3047
      %v3121 = vunpack.c.l.b16 %v3048
      %v3122 = vunpack.c.l.b16 %v3049
      %v3123 = vunpack.c.l.b16 %v3050
      %v3124 = vunpack.c.l.b16 %v3051
      %v3125 = vunpack.c.l.b16 %v3052
      %v3126 = vunpack.c.l.b16 %v3053
      %v3127 = vunpack.c.l.b16 %v3054
      %v3128 = vunpack.c.l.b16 %v3055
      %v3129 = vunpack.c.l.b16 %v3056
      %v3130 = vunpack.c.l.b16 %v3057
      %v3131 = vunpack.c.l.b16 %v3058
      %v3132 = vunpack.c.l.b16 %v3059
      %v3133 = vunpack.c.l.b16 %v3060
      %v3134 = vpack.c.b16 %v3103, %v3102
      %v3135 = vpack.c.b16 %v3105, %v3104
      %v3136 = vpack.c.b16 %v3107, %v3106
      %v3137 = vpack.c.b16 %v3109, %v3108
      %v3138 = vpack.c.b16 %v3111, %v3110
      %v3139 = vpack.c.b16 %v3113, %v3112
      %v3140 = vpack.c.b16 %v3115, %v3114
      %v3141 = vpack.c.b16 %v3117, %v3116
      %v3142 = vpack.c.b16 %v3119, %v3118
      %v3143 = vpack.c.b16 %v3121, %v3120
      %v3144 = vpack.c.b16 %v3123, %v3122
      %v3145 = vpack.c.b16 %v3125, %v3124
      %v3146 = vpack.c.b16 %v3127, %v3126
      %v3147 = vpack.c.b16 %v3129, %v3128
      %v3148 = vpack.c.b16 %v3131, %v3130
      %v3149 = vpack.c.b16 %v3133, %v3132
      %3166 = vmatprep.subr.bf16.mxu0 0
      %3167 = vmatpush1.bf16.msra.mxu0 %v3141
      %3168 = vmatprep.subr.bf16.mxu0 0
      %3169 = vmatpush1.bf16.msra.mxu0 %v3140
      %3170 = vmatprep.subr.bf16.mxu0 0
      %3171 = vmatpush1.bf16.msra.mxu0 %v3139
      %3172 = vmatprep.subr.bf16.mxu0 0
      %3173 = vmatpush1.bf16.msra.mxu0 %v3138
      %3174 = vmatprep.subr.bf16.mxu0 0
      %3175 = vmatpush1.bf16.msra.mxu0 %v3137
      %3176 = vmatprep.subr.bf16.mxu0 0
      %3177 = vmatpush1.bf16.msra.mxu0 %v3136
      %3178 = vmatprep.subr.bf16.mxu0 0
      %3179 = vmatpush1.bf16.msra.mxu0 %v3135
      %3180 = vmatprep.subr.bf16.mxu0 0
      %3181 = vmatpush1.bf16.msra.mxu0 %v3134
      %3182 = vmatprep.subr.bf16.mxu0 0
      %3183 = vmatpush2.bf16.msra.mxu0 %v3149
      %3184 = vmatprep.subr.bf16.mxu0 0
      %3185 = vmatpush2.bf16.msra.mxu0 %v3148
      %3186 = vmatprep.subr.bf16.mxu0 0
      %3187 = vmatpush2.bf16.msra.mxu0 %v3147
      %3188 = vmatprep.subr.bf16.mxu0 0
      %3189 = vmatpush2.bf16.msra.mxu0 %v3146
      %3190 = vmatprep.subr.bf16.mxu0 0
      %3191 = vmatpush2.bf16.msra.mxu0 %v3145
      %3192 = vmatprep.subr.bf16.mxu0 0
      %3193 = vmatpush2.bf16.msra.mxu0 %v3144
      %3194 = vmatprep.subr.bf16.mxu0 0
      %3195 = vmatpush2.bf16.msra.mxu0 %v3143
      %3196 = vmatprep.subr.bf16.mxu0 0
      %3197 = vmatpush2.bf16.msra.mxu0 %v3142
      %3198 = vmatprep.mubr.bf16.mxu0 %v3067
      %3199 = vmatmul.mubr.bf16.gmra.mxu0 %v3066
      %v3200 = vpop.f32.mrf.mxu0
      %v3201 = vadd.f32 0.0, %v3200
      %v3202 = vpop.f32.mrf.mxu0
      %v3203 = vpop.f32.mrf.mxu0
      %v3204 = vpop.f32.mrf.mxu0
      %3205 = vdwg.mxu0
      %v3206 = vadd.f32 %v3022, %v3201
      %v3207 = vld [vmem:[%s17] sm:$0x1]
      %v3209 = vlaneseq
      %v3210 = vshrl.u32 %v3209, 7
      %v3211 = vsub.s32 0, %v3210
      %v3212 = vrot.slane %v3207, %v3211
      %v3214 = vadd.f32 %v3206, %v3212
      %v3215 = vmax.f32 %v3214, 0.0
      %v3216 = vpack.c.bf16 %v3215, %v3215
      %v3217 = vld [vmem:[%s19] sm:$0x3]
      %vm3218 = vcmask 64512
      %v3220 = vsel %vm3218, %v3217, 0
      %vm3222 = vcmask 1043456
      %v3224 = vsel %vm3222, %v3216, 0
      %3226 = vmatprep.subr.bf16.mxu0 0
      %3227 = vmatpush1.bf16.msra.mxu0 0
      %3228 = vmatprep.subr.bf16.mxu0 0
      %3229 = vmatpush1.bf16.msra.mxu0 0
      %3230 = vmatprep.subr.bf16.mxu0 0
      %3231 = vmatpush1.bf16.msra.mxu0 0
      %3232 = vmatprep.subr.bf16.mxu0 0
      %3233 = vmatpush1.bf16.msra.mxu0 0
      %3234 = vmatprep.subr.bf16.mxu0 0
      %3235 = vmatpush1.bf16.msra.mxu0 0
      %3236 = vmatprep.subr.bf16.mxu0 0
      %3237 = vmatpush1.bf16.msra.mxu0 0
      %3238 = vmatprep.subr.bf16.mxu0 0
      %3239 = vmatpush1.bf16.msra.mxu0 0
      %3240 = vmatprep.subr.bf16.mxu0 0
      %3241 = vmatpush1.bf16.msra.mxu0 %v3224
      %3242 = vmatprep.subr.bf16.mxu0 0
      %3243 = vmatpush2.bf16.msra.mxu0 0
      %3244 = vmatprep.subr.bf16.mxu0 0
      %3245 = vmatpush2.bf16.msra.mxu0 0
      %3246 = vmatprep.subr.bf16.mxu0 0
      %3247 = vmatpush2.bf16.msra.mxu0 0
      %3248 = vmatprep.subr.bf16.mxu0 0
      %3249 = vmatpush2.bf16.msra.mxu0 0
      %3250 = vmatprep.subr.bf16.mxu0 0
      %3251 = vmatpush2.bf16.msra.mxu0 0
      %3252 = vmatprep.subr.bf16.mxu0 0
      %3253 = vmatpush2.bf16.msra.mxu0 0
      %3254 = vmatprep.subr.bf16.mxu0 0
      %3255 = vmatpush2.bf16.msra.mxu0 0
      %3256 = vmatprep.subr.bf16.mxu0 0
      %3257 = vmatpush2.bf16.msra.mxu0 0
      %3258 = vmatprep.mubr.bf16.mxu0 0
      %3259 = vmatmul.mubr.bf16.gmra.mxu0 %v3220
      %v3260 = vpop.f32.mrf.mxu0
      %v3261 = vadd.f32 0.0, %v3260
      %v3262 = vpop.f32.mrf.mxu0
      %v3263 = vpop.f32.mrf.mxu0
      %v3264 = vpop.f32.mrf.mxu0
      %3265 = vdwg.mxu0
      %v3266 = vld [vmem:[%s21] sm:$0x3]
      %v3268 = vsel %vm3218, %v3266, 0
      %3270 = vmatprep.subr.bf16.mxu0 0
      %3271 = vmatpush1.bf16.msra.mxu0 0
      %3272 = vmatprep.subr.bf16.mxu0 0
      %3273 = vmatpush1.bf16.msra.mxu0 0
      %3274 = vmatprep.subr.bf16.mxu0 0
      %3275 = vmatpush1.bf16.msra.mxu0 0
      %3276 = vmatprep.subr.bf16.mxu0 0
      %3277 = vmatpush1.bf16.msra.mxu0 0
      %3278 = vmatprep.subr.bf16.mxu0 0
      %3279 = vmatpush1.bf16.msra.mxu0 0
      %3280 = vmatprep.subr.bf16.mxu0 0
      %3281 = vmatpush1.bf16.msra.mxu0 0
      %3282 = vmatprep.subr.bf16.mxu0 0
      %3283 = vmatpush1.bf16.msra.mxu0 0
      %3284 = vmatprep.subr.bf16.mxu0 0
      %3285 = vmatpush1.bf16.msra.mxu0 %v3224
      %3286 = vmatprep.subr.bf16.mxu0 0
      %3287 = vmatpush2.bf16.msra.mxu0 0
      %3288 = vmatprep.subr.bf16.mxu0 0
      %3289 = vmatpush2.bf16.msra.mxu0 0
      %3290 = vmatprep.subr.bf16.mxu0 0
      %3291 = vmatpush2.bf16.msra.mxu0 0
      %3292 = vmatprep.subr.bf16.mxu0 0
      %3293 = vmatpush2.bf16.msra.mxu0 0
      %3294 = vmatprep.subr.bf16.mxu0 0
      %3295 = vmatpush2.bf16.msra.mxu0 0
      %3296 = vmatprep.subr.bf16.mxu0 0
      %3297 = vmatpush2.bf16.msra.mxu0 0
      %3298 = vmatprep.subr.bf16.mxu0 0
      %3299 = vmatpush2.bf16.msra.mxu0 0
      %3300 = vmatprep.subr.bf16.mxu0 0
      %3301 = vmatpush2.bf16.msra.mxu0 0
      %3302 = vmatprep.mubr.bf16.mxu0 0
      %3303 = vmatmul.mubr.bf16.gmra.mxu0 %v3268
      %v3304 = vpop.f32.mrf.mxu0
      %v3305 = vadd.f32 0.0, %v3304
      %v3306 = vpop.f32.mrf.mxu0
      %v3307 = vpop.f32.mrf.mxu0
      %v3308 = vpop.f32.mrf.mxu0
      %3309 = vdwg.mxu0
      %v3310 = vmax.f32 %v3261, %v3305
      %v3311 = vpack.c.bf16 %v3310, %v3310
      %v3312 = vld [vmem:[%s23] sm:$0xf]
      %v3313 = vld [vmem:[%s23 + $0x4] sm:$0xf]
      %v3314 = vld [vmem:[%s23 + $0x8] sm:$0xf]
      %v3315 = vld [vmem:[%s23 + $0xc] sm:$0xf]
      %v3316 = vld [vmem:[%s23 + $0x10] sm:$0xf]
      %v3317 = vld [vmem:[%s23 + $0x14] sm:$0xf]
      %v3318 = vld [vmem:[%s23 + $0x18] sm:$0xf]
      %v3319 = vld [vmem:[%s23 + $0x1c] sm:$0xf]
      %v3320 = vld [vmem:[%s23 + $0x20] sm:$0xf]
      %v3321 = vld [vmem:[%s23 + $0x24] sm:$0xf]
      %v3322 = vld [vmem:[%s23 + $0x28] sm:$0xf]
      %v3323 = vld [vmem:[%s23 + $0x2c] sm:$0xf]
      %v3324 = vld [vmem:[%s23 + $0x30] sm:$0xf]
      %v3325 = vld [vmem:[%s23 + $0x34] sm:$0xf]
      %v3326 = vld [vmem:[%s23 + $0x38] sm:$0xf]
      %v3327 = vld [vmem:[%s23 + $0x3c] sm:$0xf]
      %v3344 = vunpack.c.l.b16 %v3312
      %v3345 = vunpack.c.l.b16 %v3313
      %v3346 = vunpack.c.l.b16 %v3314
      %v3347 = vunpack.c.l.b16 %v3315
      %v3348 = vunpack.c.l.b16 %v3316
      %v3349 = vunpack.c.l.b16 %v3317
      %v3350 = vunpack.c.l.b16 %v3318
      %v3351 = vunpack.c.l.b16 %v3319
      %v3352 = vunpack.c.l.b16 %v3320
      %v3353 = vunpack.c.l.b16 %v3321
      %v3354 = vunpack.c.l.b16 %v3322
      %v3355 = vunpack.c.l.b16 %v3323
      %v3356 = vunpack.c.l.b16 %v3324
      %v3357 = vunpack.c.l.b16 %v3325
      %v3358 = vunpack.c.l.b16 %v3326
      %v3359 = vunpack.c.l.b16 %v3327
      %v3360 = vpack.c.b16 %v3345, %v3344
      %v3361 = vpack.c.b16 %v3347, %v3346
      %v3362 = vpack.c.b16 %v3349, %v3348
      %v3363 = vpack.c.b16 %v3351, %v3350
      %v3364 = vpack.c.b16 %v3353, %v3352
      %v3365 = vpack.c.b16 %v3355, %v3354
      %v3366 = vpack.c.b16 %v3357, %v3356
      %v3367 = vpack.c.b16 %v3359, %v3358
      %3376 = vmatprep.subr.bf16.mxu0 0
      %3377 = vmatpush1.bf16.msra.mxu0 %v3367
      %3378 = vmatprep.subr.bf16.mxu0 0
      %3379 = vmatpush1.bf16.msra.mxu0 %v3366
      %3380 = vmatprep.subr.bf16.mxu0 0
      %3381 = vmatpush1.bf16.msra.mxu0 %v3365
      %3382 = vmatprep.subr.bf16.mxu0 0
      %3383 = vmatpush1.bf16.msra.mxu0 %v3364
      %3384 = vmatprep.subr.bf16.mxu0 0
      %3385 = vmatpush1.bf16.msra.mxu0 %v3363
      %3386 = vmatprep.subr.bf16.mxu0 0
      %3387 = vmatpush1.bf16.msra.mxu0 %v3362
      %3388 = vmatprep.subr.bf16.mxu0 0
      %3389 = vmatpush1.bf16.msra.mxu0 %v3361
      %3390 = vmatprep.subr.bf16.mxu0 0
      %3391 = vmatpush1.bf16.msra.mxu0 %v3360
      %3392 = vmatprep.subr.bf16.mxu0 0
      %3393 = vmatpush2.bf16.msra.mxu0 0
      %3394 = vmatprep.subr.bf16.mxu0 0
      %3395 = vmatpush2.bf16.msra.mxu0 0
      %3396 = vmatprep.subr.bf16.mxu0 0
      %3397 = vmatpush2.bf16.msra.mxu0 0
      %3398 = vmatprep.subr.bf16.mxu0 0
      %3399 = vmatpush2.bf16.msra.mxu0 0
      %3400 = vmatprep.subr.bf16.mxu0 0
      %3401 = vmatpush2.bf16.msra.mxu0 0
      %3402 = vmatprep.subr.bf16.mxu0 0
      %3403 = vmatpush2.bf16.msra.mxu0 0
      %3404 = vmatprep.subr.bf16.mxu0 0
      %3405 = vmatpush2.bf16.msra.mxu0 0
      %3406 = vmatprep.subr.bf16.mxu0 0
      %3407 = vmatpush2.bf16.msra.mxu0 0
      %3408 = vmatprep.mubr.bf16.mxu0 0
      %3409 = vmatmul.mubr.bf16.gmra.mxu0 %v3311
      %v3410 = vpop.f32.mrf.mxu0
      %v3411 = vadd.f32 0.0, %v3410
      %v3412 = vpop.f32.mrf.mxu0
      %v3413 = vpop.f32.mrf.mxu0
      %v3414 = vpop.f32.mrf.mxu0
      %3415 = vdwg.mxu0
      %v3416 = vld [vmem:[%s25] sm:$0xf]
      %v3417 = vld [vmem:[%s25 + $0x4] sm:$0xf]
      %v3418 = vld [vmem:[%s25 + $0x8] sm:$0xf]
      %v3419 = vld [vmem:[%s25 + $0xc] sm:$0xf]
      %v3420 = vld [vmem:[%s25 + $0x10] sm:$0xf]
      %v3421 = vld [vmem:[%s25 + $0x14] sm:$0xf]
      %v3422 = vld [vmem:[%s25 + $0x18] sm:$0xf]
      %v3423 = vld [vmem:[%s25 + $0x1c] sm:$0xf]
      %v3424 = vld [vmem:[%s25 + $0x20] sm:$0xf]
      %v3425 = vld [vmem:[%s25 + $0x24] sm:$0xf]
      %v3426 = vld [vmem:[%s25 + $0x28] sm:$0xf]
      %v3427 = vld [vmem:[%s25 + $0x2c] sm:$0xf]
      %v3428 = vld [vmem:[%s25 + $0x30] sm:$0xf]
      %v3429 = vld [vmem:[%s25 + $0x34] sm:$0xf]
      %v3430 = vld [vmem:[%s25 + $0x38] sm:$0xf]
      %v3431 = vld [vmem:[%s25 + $0x3c] sm:$0xf]
      %v3448 = vunpack.c.l.b16 %v3416
      %v3449 = vunpack.c.l.b16 %v3417
      %v3450 = vunpack.c.l.b16 %v3418
      %v3451 = vunpack.c.l.b16 %v3419
      %v3452 = vunpack.c.l.b16 %v3420
      %v3453 = vunpack.c.l.b16 %v3421
      %v3454 = vunpack.c.l.b16 %v3422
      %v3455 = vunpack.c.l.b16 %v3423
      %v3456 = vunpack.c.l.b16 %v3424
      %v3457 = vunpack.c.l.b16 %v3425
      %v3458 = vunpack.c.l.b16 %v3426
      %v3459 = vunpack.c.l.b16 %v3427
      %v3460 = vunpack.c.l.b16 %v3428
      %v3461 = vunpack.c.l.b16 %v3429
      %v3462 = vunpack.c.l.b16 %v3430
      %v3463 = vunpack.c.l.b16 %v3431
      %v3464 = vpack.c.b16 %v3449, %v3448
      %v3465 = vpack.c.b16 %v3451, %v3450
      %v3466 = vpack.c.b16 %v3453, %v3452
      %v3467 = vpack.c.b16 %v3455, %v3454
      %v3468 = vpack.c.b16 %v3457, %v3456
      %v3469 = vpack.c.b16 %v3459, %v3458
      %v3470 = vpack.c.b16 %v3461, %v3460
      %v3471 = vpack.c.b16 %v3463, %v3462
      %3480 = vmatprep.subr.bf16.mxu0 0
      %3481 = vmatpush1.bf16.msra.mxu0 %v3471
      %3482 = vmatprep.subr.bf16.mxu0 0
      %3483 = vmatpush1.bf16.msra.mxu0 %v3470
      %3484 = vmatprep.subr.bf16.mxu0 0
      %3485 = vmatpush1.bf16.msra.mxu0 %v3469
      %3486 = vmatprep.subr.bf16.mxu0 0
      %3487 = vmatpush1.bf16.msra.mxu0 %v3468
      %3488 = vmatprep.subr.bf16.mxu0 0
      %3489 = vmatpush1.bf16.msra.mxu0 %v3467
      %3490 = vmatprep.subr.bf16.mxu0 0
      %3491 = vmatpush1.bf16.msra.mxu0 %v3466
      %3492 = vmatprep.subr.bf16.mxu0 0
      %3493 = vmatpush1.bf16.msra.mxu0 %v3465
      %3494 = vmatprep.subr.bf16.mxu0 0
      %3495 = vmatpush1.bf16.msra.mxu0 %v3464
      %3496 = vmatprep.subr.bf16.mxu0 0
      %3497 = vmatpush2.bf16.msra.mxu0 0
      %3498 = vmatprep.subr.bf16.mxu0 0
      %3499 = vmatpush2.bf16.msra.mxu0 0
      %3500 = vmatprep.subr.bf16.mxu0 0
      %3501 = vmatpush2.bf16.msra.mxu0 0
      %3502 = vmatprep.subr.bf16.mxu0 0
      %3503 = vmatpush2.bf16.msra.mxu0 0
      %3504 = vmatprep.subr.bf16.mxu0 0
      %3505 = vmatpush2.bf16.msra.mxu0 0
      %3506 = vmatprep.subr.bf16.mxu0 0
      %3507 = vmatpush2.bf16.msra.mxu0 0
      %3508 = vmatprep.subr.bf16.mxu0 0
      %3509 = vmatpush2.bf16.msra.mxu0 0
      %3510 = vmatprep.subr.bf16.mxu0 0
      %3511 = vmatpush2.bf16.msra.mxu0 0
      %3512 = vmatprep.mubr.bf16.mxu0 0
      %3513 = vmatmul.mubr.bf16.gmra.mxu0 %v3311
      %v3514 = vpop.f32.mrf.mxu0
      %v3515 = vadd.f32 0.0, %v3514
      %v3516 = vpop.f32.mrf.mxu0
      %v3517 = vpop.f32.mrf.mxu0
      %v3518 = vpop.f32.mrf.mxu0
      %3519 = vdwg.mxu0
      %v3520 = vmax.f32 %v3411, %v3515
      %vm3521 = vcmask 516096
      %vm3522 = vmand %vm3521, %vm2615
      %v3523 = vld [vmem:[#allocation3] sm:$0x1]
      %v3524 = vsel %vm3522, 0, %v3523
      %3525 = vst [vmem:[#allocation3] sm:$0x1] %v3524
      %vm3526 = vcmask 518146
      %vm3527 = vsmask.f32 7946
      %vm3528 = vmand %vm3526, %vm3527
      %v3529 = vld [vmem:[#allocation3] sm:$0x4]
      %v3530 = vsel %vm3528, 0, %v3529
      %3531 = vst [vmem:[#allocation3] sm:$0x4] %v3530
      %v3532 = vpack.c.bf16 %v3520, %v3520
      %v3534 = vunpack.c.l.b16 %v3532
      %v3535 = vpack.c.b16 %v3534, %v3534
      %v3537 = vshrl.u32 %v3535, 16
      %v3539 = vrot.slane %v3537, 7
      %v3540 = vshll.u32 %v3535, 16
      %v3542 = vor.u32 %v3539, %v3540
      %vm3544 = vcmask 518144
      %vm3545 = vsmask.f32 2306
      %vm3546 = vmand %vm3544, %vm3545
      %v3547 = vld [vmem:[#allocation3] sm:$0x7]
      %v3548 = vsel %vm3546, %v3542, %v3547
      %3549 = vst [vmem:[#allocation3] sm:$0x7] %v3548
      %v3550 = vld [vmem:[#allocation3] sm:$0x3]
      %v3551 = vld [vmem:[%s27] sm:$0xf]
      %v3552 = vld [vmem:[%s27 + $0x4] sm:$0xf]
      %v3553 = vld [vmem:[%s27 + $0x8] sm:$0xf]
      %v3554 = vld [vmem:[%s27 + $0xc] sm:$0xf]
      %v3555 = vld [vmem:[%s27 + $0x10] sm:$0xf]
      %v3556 = vld [vmem:[%s27 + $0x14] sm:$0xf]
      %v3557 = vld [vmem:[%s27 + $0x18] sm:$0xf]
      %v3558 = vld [vmem:[%s27 + $0x1c] sm:$0xf]
      %v3559 = vld [vmem:[#allocation3] sm:$0x7]
      %s3560 = scalar_lea.vmem %s27, 32
      %v3561 = vld [vmem:[%s3560] sm:$0xf]
      %v3562 = vld [vmem:[%s3560 + $0x4] sm:$0xf]
      %v3563 = vld [vmem:[%s3560 + $0x8] sm:$0xf]
      %v3564 = vld [vmem:[%s3560 + $0xc] sm:$0xf]
      %v3565 = vld [vmem:[%s3560 + $0x10] sm:$0xf]
      %v3566 = vld [vmem:[%s3560 + $0x14] sm:$0xf]
      %v3567 = vld [vmem:[%s3560 + $0x18] sm:$0xf]
      %v3568 = vld [vmem:[%s3560 + $0x1c] sm:$0xf]
      %v3570 = vunpack.c.l.b16 %v3559
      %v3571 = vpack.c.b16 %v3570, %v3570
      %v3573 = vshrl.u32 %v3571, 16
      %v3575 = vshll.u32 %v3571, 16
      %v3577 = vrot.slane %v3575, 1
      %v3578 = vor.u32 %v3573, %v3577
      %v3587 = vunpack.c.l.b16 %v3561
      %v3588 = vunpack.c.l.b16 %v3562
      %v3589 = vunpack.c.l.b16 %v3563
      %v3590 = vunpack.c.l.b16 %v3564
      %v3591 = vunpack.c.l.b16 %v3565
      %v3592 = vunpack.c.l.b16 %v3566
      %v3593 = vunpack.c.l.b16 %v3567
      %v3594 = vunpack.c.l.b16 %v3568
      %v3595 = vpack.c.b16 %v3588, %v3587
      %v3596 = vpack.c.b16 %v3590, %v3589
      %v3597 = vpack.c.b16 %v3592, %v3591
      %v3598 = vpack.c.b16 %v3594, %v3593
      %vm3603 = vcmask 523264
      %v3605 = vsel %vm3603, %v3578, 0
      %3607 = vmatprep.subr.bf16.mxu0 0
      %3608 = vmatpush1.bf16.msra.mxu0 0
      %3609 = vmatprep.subr.bf16.mxu0 0
      %3610 = vmatpush1.bf16.msra.mxu0 0
      %3611 = vmatprep.subr.bf16.mxu0 0
      %3612 = vmatpush1.bf16.msra.mxu0 0
      %3613 = vmatprep.subr.bf16.mxu0 0
      %3614 = vmatpush1.bf16.msra.mxu0 0
      %3615 = vmatprep.subr.bf16.mxu0 0
      %3616 = vmatpush1.bf16.msra.mxu0 %v3598
      %3617 = vmatprep.subr.bf16.mxu0 0
      %3618 = vmatpush1.bf16.msra.mxu0 %v3597
      %3619 = vmatprep.subr.bf16.mxu0 0
      %3620 = vmatpush1.bf16.msra.mxu0 %v3596
      %3621 = vmatprep.subr.bf16.mxu0 0
      %3622 = vmatpush1.bf16.msra.mxu0 %v3595
      %3623 = vmatprep.subr.bf16.mxu0 0
      %3624 = vmatpush2.bf16.msra.mxu0 0
      %3625 = vmatprep.subr.bf16.mxu0 0
      %3626 = vmatpush2.bf16.msra.mxu0 0
      %3627 = vmatprep.subr.bf16.mxu0 0
      %3628 = vmatpush2.bf16.msra.mxu0 0
      %3629 = vmatprep.subr.bf16.mxu0 0
      %3630 = vmatpush2.bf16.msra.mxu0 0
      %3631 = vmatprep.subr.bf16.mxu0 0
      %3632 = vmatpush2.bf16.msra.mxu0 0
      %3633 = vmatprep.subr.bf16.mxu0 0
      %3634 = vmatpush2.bf16.msra.mxu0 0
      %3635 = vmatprep.subr.bf16.mxu0 0
      %3636 = vmatpush2.bf16.msra.mxu0 0
      %3637 = vmatprep.subr.bf16.mxu0 0
      %3638 = vmatpush2.bf16.msra.mxu0 0
      %3639 = vmatprep.mubr.bf16.mxu0 0
      %3640 = vmatmul.mubr.bf16.gmra.mxu0 %v3605
      %v3641 = vpop.f32.mrf.mxu0
      %v3642 = vadd.f32 0.0, %v3641
      %v3643 = vpop.f32.mrf.mxu0
      %v3644 = vpop.f32.mrf.mxu0
      %v3645 = vpop.f32.mrf.mxu0
      %3646 = vdwg.mxu0
      %v3655 = vunpack.c.l.b16 %v3551
      %v3656 = vunpack.c.l.b16 %v3552
      %v3657 = vunpack.c.l.b16 %v3553
      %v3658 = vunpack.c.l.b16 %v3554
      %v3659 = vunpack.c.l.b16 %v3555
      %v3660 = vunpack.c.l.b16 %v3556
      %v3661 = vunpack.c.l.b16 %v3557
      %v3662 = vunpack.c.l.b16 %v3558
      %v3663 = vpack.c.b16 %v3656, %v3655
      %v3664 = vpack.c.b16 %v3658, %v3657
      %v3665 = vpack.c.b16 %v3660, %v3659
      %v3666 = vpack.c.b16 %v3662, %v3661
      %v3672 = vsel %vm3603, %v3550, 0
      %3674 = vmatprep.subr.bf16.mxu0 0
      %3675 = vmatpush1.bf16.msra.mxu0 0
      %3676 = vmatprep.subr.bf16.mxu0 0
      %3677 = vmatpush1.bf16.msra.mxu0 0
      %3678 = vmatprep.subr.bf16.mxu0 0
      %3679 = vmatpush1.bf16.msra.mxu0 0
      %3680 = vmatprep.subr.bf16.mxu0 0
      %3681 = vmatpush1.bf16.msra.mxu0 0
      %3682 = vmatprep.subr.bf16.mxu0 0
      %3683 = vmatpush1.bf16.msra.mxu0 %v3666
      %3684 = vmatprep.subr.bf16.mxu0 0
      %3685 = vmatpush1.bf16.msra.mxu0 %v3665
      %3686 = vmatprep.subr.bf16.mxu0 0
      %3687 = vmatpush1.bf16.msra.mxu0 %v3664
      %3688 = vmatprep.subr.bf16.mxu0 0
      %3689 = vmatpush1.bf16.msra.mxu0 %v3663
      %3690 = vmatprep.subr.bf16.mxu0 0
      %3691 = vmatpush2.bf16.msra.mxu0 0
      %3692 = vmatprep.subr.bf16.mxu0 0
      %3693 = vmatpush2.bf16.msra.mxu0 0
      %3694 = vmatprep.subr.bf16.mxu0 0
      %3695 = vmatpush2.bf16.msra.mxu0 0
      %3696 = vmatprep.subr.bf16.mxu0 0
      %3697 = vmatpush2.bf16.msra.mxu0 0
      %3698 = vmatprep.subr.bf16.mxu0 0
      %3699 = vmatpush2.bf16.msra.mxu0 0
      %3700 = vmatprep.subr.bf16.mxu0 0
      %3701 = vmatpush2.bf16.msra.mxu0 0
      %3702 = vmatprep.subr.bf16.mxu0 0
      %3703 = vmatpush2.bf16.msra.mxu0 0
      %3704 = vmatprep.subr.bf16.mxu0 0
      %3705 = vmatpush2.bf16.msra.mxu0 0
      %3706 = vmatprep.mubr.bf16.mxu0 0
      %3707 = vmatmul.mubr.bf16.gmra.mxu0 %v3672
      %v3708 = vpop.f32.mrf.mxu0
      %v3709 = vadd.f32 %v3642, %v3708
      %v3710 = vpop.f32.mrf.mxu0
      %v3711 = vpop.f32.mrf.mxu0
      %v3712 = vpop.f32.mrf.mxu0
      %3713 = vdwg.mxu0
      %v3714 = vld [vmem:[#allocation3] sm:$0x6]
      %s3715 = scalar_lea.vmem %s27, 64
      %v3716 = vld [vmem:[%s3715] sm:$0xf]
      %v3717 = vld [vmem:[%s3715 + $0x4] sm:$0xf]
      %v3718 = vld [vmem:[%s3715 + $0x8] sm:$0xf]
      %v3719 = vld [vmem:[%s3715 + $0xc] sm:$0xf]
      %v3720 = vld [vmem:[%s3715 + $0x10] sm:$0xf]
      %v3721 = vld [vmem:[%s3715 + $0x14] sm:$0xf]
      %v3722 = vld [vmem:[%s3715 + $0x18] sm:$0xf]
      %v3723 = vld [vmem:[%s3715 + $0x1c] sm:$0xf]
      %v3725 = vunpack.c.l.b16 %v3714
      %v3726 = vpack.c.b16 %v3725, %v3725
      %v3727 = vrot.slane %v3726, 1
      %v3736 = vunpack.c.l.b16 %v3716
      %v3737 = vunpack.c.l.b16 %v3717
      %v3738 = vunpack.c.l.b16 %v3718
      %v3739 = vunpack.c.l.b16 %v3719
      %v3740 = vunpack.c.l.b16 %v3720
      %v3741 = vunpack.c.l.b16 %v3721
      %v3742 = vunpack.c.l.b16 %v3722
      %v3743 = vunpack.c.l.b16 %v3723
      %v3744 = vpack.c.b16 %v3737, %v3736
      %v3745 = vpack.c.b16 %v3739, %v3738
      %v3746 = vpack.c.b16 %v3741, %v3740
      %v3747 = vpack.c.b16 %v3743, %v3742
      %v3753 = vsel %vm3603, %v3727, 0
      %3755 = vmatprep.subr.bf16.mxu0 0
      %3756 = vmatpush1.bf16.msra.mxu0 0
      %3757 = vmatprep.subr.bf16.mxu0 0
      %3758 = vmatpush1.bf16.msra.mxu0 0
      %3759 = vmatprep.subr.bf16.mxu0 0
      %3760 = vmatpush1.bf16.msra.mxu0 0
      %3761 = vmatprep.subr.bf16.mxu0 0
      %3762 = vmatpush1.bf16.msra.mxu0 0
      %3763 = vmatprep.subr.bf16.mxu0 0
      %3764 = vmatpush1.bf16.msra.mxu0 %v3747
      %3765 = vmatprep.subr.bf16.mxu0 0
      %3766 = vmatpush1.bf16.msra.mxu0 %v3746
      %3767 = vmatprep.subr.bf16.mxu0 0
      %3768 = vmatpush1.bf16.msra.mxu0 %v3745
      %3769 = vmatprep.subr.bf16.mxu0 0
      %3770 = vmatpush1.bf16.msra.mxu0 %v3744
      %3771 = vmatprep.subr.bf16.mxu0 0
      %3772 = vmatpush2.bf16.msra.mxu0 0
      %3773 = vmatprep.subr.bf16.mxu0 0
      %3774 = vmatpush2.bf16.msra.mxu0 0
      %3775 = vmatprep.subr.bf16.mxu0 0
      %3776 = vmatpush2.bf16.msra.mxu0 0
      %3777 = vmatprep.subr.bf16.mxu0 0
      %3778 = vmatpush2.bf16.msra.mxu0 0
      %3779 = vmatprep.subr.bf16.mxu0 0
      %3780 = vmatpush2.bf16.msra.mxu0 0
      %3781 = vmatprep.subr.bf16.mxu0 0
      %3782 = vmatpush2.bf16.msra.mxu0 0
      %3783 = vmatprep.subr.bf16.mxu0 0
      %3784 = vmatpush2.bf16.msra.mxu0 0
      %3785 = vmatprep.subr.bf16.mxu0 0
      %3786 = vmatpush2.bf16.msra.mxu0 0
      %3787 = vmatprep.mubr.bf16.mxu0 0
      %3788 = vmatmul.mubr.bf16.gmra.mxu0 %v3753
      %v3789 = vpop.f32.mrf.mxu0
      %v3790 = vadd.f32 0.0, %v3789
      %v3791 = vpop.f32.mrf.mxu0
      %v3792 = vpop.f32.mrf.mxu0
      %v3793 = vpop.f32.mrf.mxu0
      %3794 = vdwg.mxu0
      %v3795 = vadd.f32 %v3709, %v3790
      %v3796 = vld [vmem:[%s29] sm:$0x1]
      %v3798 = vlaneseq
      %v3799 = vshrl.u32 %v3798, 7
      %v3800 = vsub.s32 0, %v3799
      %v3801 = vrot.slane %v3796, %v3800
      %v3803 = vadd.f32 %v3795, %v3801
      %v3804 = vmax.f32 %v3803, 0.0
      %v3805 = vpack.c.bf16 %v3804, %v3804
      %v3806 = vld [vmem:[%s31] sm:$0x1]
      %vm3807 = vcmask 31744
      %v3809 = vsel %vm3807, %v3806, 0
      %vm3811 = vcmask 1041408
      %v3813 = vsel %vm3811, %v3805, 0
      %3815 = vmatprep.subr.bf16.mxu0 0
      %3816 = vmatpush1.bf16.msra.mxu0 0
      %3817 = vmatprep.subr.bf16.mxu0 0
      %3818 = vmatpush1.bf16.msra.mxu0 0
      %3819 = vmatprep.subr.bf16.mxu0 0
      %3820 = vmatpush1.bf16.msra.mxu0 0
      %3821 = vmatprep.subr.bf16.mxu0 0
      %3822 = vmatpush1.bf16.msra.mxu0 0
      %3823 = vmatprep.subr.bf16.mxu0 0
      %3824 = vmatpush1.bf16.msra.mxu0 0
      %3825 = vmatprep.subr.bf16.mxu0 0
      %3826 = vmatpush1.bf16.msra.mxu0 0
      %3827 = vmatprep.subr.bf16.mxu0 0
      %3828 = vmatpush1.bf16.msra.mxu0 0
      %3829 = vmatprep.subr.bf16.mxu0 0
      %3830 = vmatpush1.bf16.msra.mxu0 %v3813
      %3831 = vmatprep.subr.bf16.mxu0 0
      %3832 = vmatpush2.bf16.msra.mxu0 0
      %3833 = vmatprep.subr.bf16.mxu0 0
      %3834 = vmatpush2.bf16.msra.mxu0 0
      %3835 = vmatprep.subr.bf16.mxu0 0
      %3836 = vmatpush2.bf16.msra.mxu0 0
      %3837 = vmatprep.subr.bf16.mxu0 0
      %3838 = vmatpush2.bf16.msra.mxu0 0
      %3839 = vmatprep.subr.bf16.mxu0 0
      %3840 = vmatpush2.bf16.msra.mxu0 0
      %3841 = vmatprep.subr.bf16.mxu0 0
      %3842 = vmatpush2.bf16.msra.mxu0 0
      %3843 = vmatprep.subr.bf16.mxu0 0
      %3844 = vmatpush2.bf16.msra.mxu0 0
      %3845 = vmatprep.subr.bf16.mxu0 0
      %3846 = vmatpush2.bf16.msra.mxu0 0
      %3847 = vmatprep.mubr.bf16.mxu0 0
      %3848 = vmatmul.mubr.bf16.gmra.mxu0 %v3809
      %v3849 = vpop.f32.mrf.mxu0
      %v3850 = vadd.f32 0.0, %v3849
      %v3851 = vpop.f32.mrf.mxu0
      %v3852 = vpop.f32.mrf.mxu0
      %v3853 = vpop.f32.mrf.mxu0
      %3854 = vdwg.mxu0
      %v3855 = vld [vmem:[%s33] sm:$0x1]
      %v3857 = vsel %vm3807, %v3855, 0
      %3859 = vmatprep.subr.bf16.mxu0 0
      %3860 = vmatpush1.bf16.msra.mxu0 0
      %3861 = vmatprep.subr.bf16.mxu0 0
      %3862 = vmatpush1.bf16.msra.mxu0 0
      %3863 = vmatprep.subr.bf16.mxu0 0
      %3864 = vmatpush1.bf16.msra.mxu0 0
      %3865 = vmatprep.subr.bf16.mxu0 0
      %3866 = vmatpush1.bf16.msra.mxu0 0
      %3867 = vmatprep.subr.bf16.mxu0 0
      %3868 = vmatpush1.bf16.msra.mxu0 0
      %3869 = vmatprep.subr.bf16.mxu0 0
      %3870 = vmatpush1.bf16.msra.mxu0 0
      %3871 = vmatprep.subr.bf16.mxu0 0
      %3872 = vmatpush1.bf16.msra.mxu0 0
      %3873 = vmatprep.subr.bf16.mxu0 0
      %3874 = vmatpush1.bf16.msra.mxu0 %v3813
      %3875 = vmatprep.subr.bf16.mxu0 0
      %3876 = vmatpush2.bf16.msra.mxu0 0
      %3877 = vmatprep.subr.bf16.mxu0 0
      %3878 = vmatpush2.bf16.msra.mxu0 0
      %3879 = vmatprep.subr.bf16.mxu0 0
      %3880 = vmatpush2.bf16.msra.mxu0 0
      %3881 = vmatprep.subr.bf16.mxu0 0
      %3882 = vmatpush2.bf16.msra.mxu0 0
      %3883 = vmatprep.subr.bf16.mxu0 0
      %3884 = vmatpush2.bf16.msra.mxu0 0
      %3885 = vmatprep.subr.bf16.mxu0 0
      %3886 = vmatpush2.bf16.msra.mxu0 0
      %3887 = vmatprep.subr.bf16.mxu0 0
      %3888 = vmatpush2.bf16.msra.mxu0 0
      %3889 = vmatprep.subr.bf16.mxu0 0
      %3890 = vmatpush2.bf16.msra.mxu0 0
      %3891 = vmatprep.mubr.bf16.mxu0 0
      %3892 = vmatmul.mubr.bf16.gmra.mxu0 %v3857
      %v3893 = vpop.f32.mrf.mxu0
      %v3894 = vadd.f32 0.0, %v3893
      %v3895 = vpop.f32.mrf.mxu0
      %v3896 = vpop.f32.mrf.mxu0
      %v3897 = vpop.f32.mrf.mxu0
      %3898 = vdwg.mxu0
      %v3899 = vmax.f32 %v3850, %v3894
      %v3900 = vpack.c.bf16 %v3899, %v3899
      %v3901 = vld [vmem:[%s35] sm:$0xf]
      %v3902 = vld [vmem:[%s35 + $0x4] sm:$0xf]
      %v3903 = vld [vmem:[%s35 + $0x8] sm:$0xf]
      %v3904 = vld [vmem:[%s35 + $0xc] sm:$0xf]
      %v3909 = vunpack.c.l.b16 %v3901
      %v3910 = vunpack.c.l.b16 %v3902
      %v3911 = vunpack.c.l.b16 %v3903
      %v3912 = vunpack.c.l.b16 %v3904
      %v3913 = vpack.c.b16 %v3910, %v3909
      %v3914 = vpack.c.b16 %v3912, %v3911
      %vm3917 = vcmask 261120
      %v3919 = vsel %vm3917, %v3900, 0
      %3921 = vmatprep.subr.bf16.mxu0 0
      %3922 = vmatpush1.bf16.msra.mxu0 0
      %3923 = vmatprep.subr.bf16.mxu0 0
      %3924 = vmatpush1.bf16.msra.mxu0 0
      %3925 = vmatprep.subr.bf16.mxu0 0
      %3926 = vmatpush1.bf16.msra.mxu0 0
      %3927 = vmatprep.subr.bf16.mxu0 0
      %3928 = vmatpush1.bf16.msra.mxu0 0
      %3929 = vmatprep.subr.bf16.mxu0 0
      %3930 = vmatpush1.bf16.msra.mxu0 0
      %3931 = vmatprep.subr.bf16.mxu0 0
      %3932 = vmatpush1.bf16.msra.mxu0 0
      %3933 = vmatprep.subr.bf16.mxu0 0
      %3934 = vmatpush1.bf16.msra.mxu0 %v3914
      %3935 = vmatprep.subr.bf16.mxu0 0
      %3936 = vmatpush1.bf16.msra.mxu0 %v3913
      %3937 = vmatprep.subr.bf16.mxu0 0
      %3938 = vmatpush2.bf16.msra.mxu0 0
      %3939 = vmatprep.subr.bf16.mxu0 0
      %3940 = vmatpush2.bf16.msra.mxu0 0
      %3941 = vmatprep.subr.bf16.mxu0 0
      %3942 = vmatpush2.bf16.msra.mxu0 0
      %3943 = vmatprep.subr.bf16.mxu0 0
      %3944 = vmatpush2.bf16.msra.mxu0 0
      %3945 = vmatprep.subr.bf16.mxu0 0
      %3946 = vmatpush2.bf16.msra.mxu0 0
      %3947 = vmatprep.subr.bf16.mxu0 0
      %3948 = vmatpush2.bf16.msra.mxu0 0
      %3949 = vmatprep.subr.bf16.mxu0 0
      %3950 = vmatpush2.bf16.msra.mxu0 0
      %3951 = vmatprep.subr.bf16.mxu0 0
      %3952 = vmatpush2.bf16.msra.mxu0 0
      %3953 = vmatprep.mubr.bf16.mxu0 0
      %3954 = vmatmul.mubr.bf16.gmra.mxu0 %v3919
      %v3955 = vpop.f32.mrf.mxu0
      %v3956 = vadd.f32 0.0, %v3955
      %v3957 = vpop.f32.mrf.mxu0
      %v3958 = vpop.f32.mrf.mxu0
      %v3959 = vpop.f32.mrf.mxu0
      %3960 = vdwg.mxu0
      %v3961 = vld [vmem:[%s37] sm:$0xf]
      %v3962 = vld [vmem:[%s37 + $0x4] sm:$0xf]
      %v3963 = vld [vmem:[%s37 + $0x8] sm:$0xf]
      %v3964 = vld [vmem:[%s37 + $0xc] sm:$0xf]
      %v3969 = vunpack.c.l.b16 %v3961
      %v3970 = vunpack.c.l.b16 %v3962
      %v3971 = vunpack.c.l.b16 %v3963
      %v3972 = vunpack.c.l.b16 %v3964
      %v3973 = vpack.c.b16 %v3970, %v3969
      %v3974 = vpack.c.b16 %v3972, %v3971
      %3977 = vmatprep.subr.bf16.mxu0 0
      %3978 = vmatpush1.bf16.msra.mxu0 0
      %3979 = vmatprep.subr.bf16.mxu0 0
      %3980 = vmatpush1.bf16.msra.mxu0 0
      %3981 = vmatprep.subr.bf16.mxu0 0
      %3982 = vmatpush1.bf16.msra.mxu0 0
      %3983 = vmatprep.subr.bf16.mxu0 0
      %3984 = vmatpush1.bf16.msra.mxu0 0
      %3985 = vmatprep.subr.bf16.mxu0 0
      %3986 = vmatpush1.bf16.msra.mxu0 0
      %3987 = vmatprep.subr.bf16.mxu0 0
      %3988 = vmatpush1.bf16.msra.mxu0 0
      %3989 = vmatprep.subr.bf16.mxu0 0
      %3990 = vmatpush1.bf16.msra.mxu0 %v3974
      %3991 = vmatprep.subr.bf16.mxu0 0
      %3992 = vmatpush1.bf16.msra.mxu0 %v3973
      %3993 = vmatprep.subr.bf16.mxu0 0
      %3994 = vmatpush2.bf16.msra.mxu0 0
      %3995 = vmatprep.subr.bf16.mxu0 0
      %3996 = vmatpush2.bf16.msra.mxu0 0
      %3997 = vmatprep.subr.bf16.mxu0 0
      %3998 = vmatpush2.bf16.msra.mxu0 0
      %3999 = vmatprep.subr.bf16.mxu0 0
      %4000 = vmatpush2.bf16.msra.mxu0 0
      %4001 = vmatprep.subr.bf16.mxu0 0
      %4002 = vmatpush2.bf16.msra.mxu0 0
      %4003 = vmatprep.subr.bf16.mxu0 0
      %4004 = vmatpush2.bf16.msra.mxu0 0
      %4005 = vmatprep.subr.bf16.mxu0 0
      %4006 = vmatpush2.bf16.msra.mxu0 0
      %4007 = vmatprep.subr.bf16.mxu0 0
      %4008 = vmatpush2.bf16.msra.mxu0 0
      %4009 = vmatprep.mubr.bf16.mxu0 0
      %4010 = vmatmul.mubr.bf16.gmra.mxu0 %v3919
      %v4011 = vpop.f32.mrf.mxu0
      %v4012 = vadd.f32 0.0, %v4011
      %v4013 = vpop.f32.mrf.mxu0
      %v4014 = vpop.f32.mrf.mxu0
      %v4015 = vpop.f32.mrf.mxu0
      %4016 = vdwg.mxu0
      %v4017 = vmax.f32 %v3956, %v4012
      %v4018 = vpack.c.bf16 %v4017, %v4017
      %v4019 = vld [vmem:[%s41] sm:$0x7]
      %vm4020 = vcmask 15360
      %v4022 = vsel %vm4020, %v4019, 0
      %vm4024 = vcmask 1040384
      %v4026 = vsel %vm4024, %v4018, 0
      %4028 = vmatprep.subr.bf16.mxu0 0
      %4029 = vmatpush1.bf16.msra.mxu0 0
      %4030 = vmatprep.subr.bf16.mxu0 0
      %4031 = vmatpush1.bf16.msra.mxu0 0
      %4032 = vmatprep.subr.bf16.mxu0 0
      %4033 = vmatpush1.bf16.msra.mxu0 0
      %4034 = vmatprep.subr.bf16.mxu0 0
      %4035 = vmatpush1.bf16.msra.mxu0 0
      %4036 = vmatprep.subr.bf16.mxu0 0
      %4037 = vmatpush1.bf16.msra.mxu0 0
      %4038 = vmatprep.subr.bf16.mxu0 0
      %4039 = vmatpush1.bf16.msra.mxu0 0
      %4040 = vmatprep.subr.bf16.mxu0 0
      %4041 = vmatpush1.bf16.msra.mxu0 0
      %4042 = vmatprep.subr.bf16.mxu0 0
      %4043 = vmatpush1.bf16.msra.mxu0 %v4026
      %4044 = vmatprep.subr.bf16.mxu0 0
      %4045 = vmatpush2.bf16.msra.mxu0 0
      %4046 = vmatprep.subr.bf16.mxu0 0
      %4047 = vmatpush2.bf16.msra.mxu0 0
      %4048 = vmatprep.subr.bf16.mxu0 0
      %4049 = vmatpush2.bf16.msra.mxu0 0
      %4050 = vmatprep.subr.bf16.mxu0 0
      %4051 = vmatpush2.bf16.msra.mxu0 0
      %4052 = vmatprep.subr.bf16.mxu0 0
      %4053 = vmatpush2.bf16.msra.mxu0 0
      %4054 = vmatprep.subr.bf16.mxu0 0
      %4055 = vmatpush2.bf16.msra.mxu0 0
      %4056 = vmatprep.subr.bf16.mxu0 0
      %4057 = vmatpush2.bf16.msra.mxu0 0
      %4058 = vmatprep.subr.bf16.mxu0 0
      %4059 = vmatpush2.bf16.msra.mxu0 0
      %4060 = vmatprep.mubr.bf16.mxu0 0
      %4061 = vmatmul.mubr.bf16.gmra.mxu0 %v4022
      %v4062 = vpop.f32.mrf.mxu0
      %v4063 = vadd.f32 0.0, %v4062
      %v4064 = vpop.f32.mrf.mxu0
      %v4065 = vpop.f32.mrf.mxu0
      %v4066 = vpop.f32.mrf.mxu0
      %4067 = vdwg.mxu0
      %v4068 = vpack.c.bf16 %v4063, %v4063
      %v4069 = vld [vmem:[%s39] sm:$0xf]
      %v4070 = vld [vmem:[%s39 + $0x4] sm:$0xf]
      %s4071 = scalar_lea.vmem %s41, 4
      %v4072 = vld [vmem:[%s4071] sm:$0x7]
      %v4074 = vsel %vm4020, %v4072, 0
      %4076 = vmatprep.subr.bf16.mxu0 0
      %4077 = vmatpush1.bf16.msra.mxu0 0
      %4078 = vmatprep.subr.bf16.mxu0 0
      %4079 = vmatpush1.bf16.msra.mxu0 0
      %4080 = vmatprep.subr.bf16.mxu0 0
      %4081 = vmatpush1.bf16.msra.mxu0 0
      %4082 = vmatprep.subr.bf16.mxu0 0
      %4083 = vmatpush1.bf16.msra.mxu0 0
      %4084 = vmatprep.subr.bf16.mxu0 0
      %4085 = vmatpush1.bf16.msra.mxu0 0
      %4086 = vmatprep.subr.bf16.mxu0 0
      %4087 = vmatpush1.bf16.msra.mxu0 0
      %4088 = vmatprep.subr.bf16.mxu0 0
      %4089 = vmatpush1.bf16.msra.mxu0 0
      %4090 = vmatprep.subr.bf16.mxu0 0
      %4091 = vmatpush1.bf16.msra.mxu0 %v4026
      %4092 = vmatprep.subr.bf16.mxu0 0
      %4093 = vmatpush2.bf16.msra.mxu0 0
      %4094 = vmatprep.subr.bf16.mxu0 0
      %4095 = vmatpush2.bf16.msra.mxu0 0
      %4096 = vmatprep.subr.bf16.mxu0 0
      %4097 = vmatpush2.bf16.msra.mxu0 0
      %4098 = vmatprep.subr.bf16.mxu0 0
      %4099 = vmatpush2.bf16.msra.mxu0 0
      %4100 = vmatprep.subr.bf16.mxu0 0
      %4101 = vmatpush2.bf16.msra.mxu0 0
      %4102 = vmatprep.subr.bf16.mxu0 0
      %4103 = vmatpush2.bf16.msra.mxu0 0
      %4104 = vmatprep.subr.bf16.mxu0 0
      %4105 = vmatpush2.bf16.msra.mxu0 0
      %4106 = vmatprep.subr.bf16.mxu0 0
      %4107 = vmatpush2.bf16.msra.mxu0 0
      %4108 = vmatprep.mubr.bf16.mxu0 0
      %4109 = vmatmul.mubr.bf16.gmra.mxu0 %v4074
      %v4110 = vpop.f32.mrf.mxu0
      %v4111 = vadd.f32 0.0, %v4110
      %v4112 = vpop.f32.mrf.mxu0
      %v4113 = vpop.f32.mrf.mxu0
      %v4114 = vpop.f32.mrf.mxu0
      %4115 = vdwg.mxu0
      %v4116 = vpack.c.bf16 %v4111, %v4111
      %s4117 = scalar_lea.vmem %s39, 8
      %v4118 = vld [vmem:[%s4117] sm:$0xf]
      %v4119 = vld [vmem:[%s4117 + $0x4] sm:$0xf]
      %v4122 = vunpack.c.l.b16 %v4118
      %v4123 = vunpack.c.l.b16 %v4119
      %v4124 = vpack.c.b16 %v4123, %v4122
      %v4127 = vsel %vm1500, %v4116, 0
      %4129 = vmatprep.subr.bf16.mxu0 0
      %4130 = vmatpush1.bf16.msra.mxu0 0
      %4131 = vmatprep.subr.bf16.mxu0 0
      %4132 = vmatpush1.bf16.msra.mxu0 0
      %4133 = vmatprep.subr.bf16.mxu0 0
      %4134 = vmatpush1.bf16.msra.mxu0 0
      %4135 = vmatprep.subr.bf16.mxu0 0
      %4136 = vmatpush1.bf16.msra.mxu0 0
      %4137 = vmatprep.subr.bf16.mxu0 0
      %4138 = vmatpush1.bf16.msra.mxu0 0
      %4139 = vmatprep.subr.bf16.mxu0 0
      %4140 = vmatpush1.bf16.msra.mxu0 0
      %4141 = vmatprep.subr.bf16.mxu0 0
      %4142 = vmatpush1.bf16.msra.mxu0 0
      %4143 = vmatprep.subr.bf16.mxu0 0
      %4144 = vmatpush1.bf16.msra.mxu0 %v4124
      %4145 = vmatprep.subr.bf16.mxu0 0
      %4146 = vmatpush2.bf16.msra.mxu0 0
      %4147 = vmatprep.subr.bf16.mxu0 0
      %4148 = vmatpush2.bf16.msra.mxu0 0
      %4149 = vmatprep.subr.bf16.mxu0 0
      %4150 = vmatpush2.bf16.msra.mxu0 0
      %4151 = vmatprep.subr.bf16.mxu0 0
      %4152 = vmatpush2.bf16.msra.mxu0 0
      %4153 = vmatprep.subr.bf16.mxu0 0
      %4154 = vmatpush2.bf16.msra.mxu0 0
      %4155 = vmatprep.subr.bf16.mxu0 0
      %4156 = vmatpush2.bf16.msra.mxu0 0
      %4157 = vmatprep.subr.bf16.mxu0 0
      %4158 = vmatpush2.bf16.msra.mxu0 0
      %4159 = vmatprep.subr.bf16.mxu0 0
      %4160 = vmatpush2.bf16.msra.mxu0 0
      %4161 = vmatprep.mubr.bf16.mxu0 0
      %4162 = vmatmul.mubr.bf16.gmra.mxu0 %v4127
      %v4163 = vpop.f32.mrf.mxu0
      %v4164 = vadd.f32 0.0, %v4163
      %v4165 = vpop.f32.mrf.mxu0
      %v4166 = vpop.f32.mrf.mxu0
      %v4167 = vpop.f32.mrf.mxu0
      %4168 = vdwg.mxu0
      %v4171 = vunpack.c.l.b16 %v4069
      %v4172 = vunpack.c.l.b16 %v4070
      %v4173 = vpack.c.b16 %v4172, %v4171
      %v4176 = vsel %vm1500, %v4068, 0
      %4178 = vmatprep.subr.bf16.mxu0 0
      %4179 = vmatpush1.bf16.msra.mxu0 0
      %4180 = vmatprep.subr.bf16.mxu0 0
      %4181 = vmatpush1.bf16.msra.mxu0 0
      %4182 = vmatprep.subr.bf16.mxu0 0
      %4183 = vmatpush1.bf16.msra.mxu0 0
      %4184 = vmatprep.subr.bf16.mxu0 0
      %4185 = vmatpush1.bf16.msra.mxu0 0
      %4186 = vmatprep.subr.bf16.mxu0 0
      %4187 = vmatpush1.bf16.msra.mxu0 0
      %4188 = vmatprep.subr.bf16.mxu0 0
      %4189 = vmatpush1.bf16.msra.mxu0 0
      %4190 = vmatprep.subr.bf16.mxu0 0
      %4191 = vmatpush1.bf16.msra.mxu0 0
      %4192 = vmatprep.subr.bf16.mxu0 0
      %4193 = vmatpush1.bf16.msra.mxu0 %v4173
      %4194 = vmatprep.subr.bf16.mxu0 0
      %4195 = vmatpush2.bf16.msra.mxu0 0
      %4196 = vmatprep.subr.bf16.mxu0 0
      %4197 = vmatpush2.bf16.msra.mxu0 0
      %4198 = vmatprep.subr.bf16.mxu0 0
      %4199 = vmatpush2.bf16.msra.mxu0 0
      %4200 = vmatprep.subr.bf16.mxu0 0
      %4201 = vmatpush2.bf16.msra.mxu0 0
      %4202 = vmatprep.subr.bf16.mxu0 0
      %4203 = vmatpush2.bf16.msra.mxu0 0
      %4204 = vmatprep.subr.bf16.mxu0 0
      %4205 = vmatpush2.bf16.msra.mxu0 0
      %4206 = vmatprep.subr.bf16.mxu0 0
      %4207 = vmatpush2.bf16.msra.mxu0 0
      %4208 = vmatprep.subr.bf16.mxu0 0
      %4209 = vmatpush2.bf16.msra.mxu0 0
      %4210 = vmatprep.mubr.bf16.mxu0 0
      %4211 = vmatmul.mubr.bf16.gmra.mxu0 %v4176
      %v4212 = vpop.f32.mrf.mxu0
      %v4213 = vadd.f32 %v4164, %v4212
      %v4214 = vpop.f32.mrf.mxu0
      %v4215 = vpop.f32.mrf.mxu0
      %v4216 = vpop.f32.mrf.mxu0
      %4217 = vdwg.mxu0
      %s4218 = scalar_lea.vmem %s41, 8
      %v4219 = vld [vmem:[%s4218] sm:$0x7]
      %v4221 = vsel %vm4020, %v4219, 0
      %4223 = vmatprep.subr.bf16.mxu0 0
      %4224 = vmatpush1.bf16.msra.mxu0 0
      %4225 = vmatprep.subr.bf16.mxu0 0
      %4226 = vmatpush1.bf16.msra.mxu0 0
      %4227 = vmatprep.subr.bf16.mxu0 0
      %4228 = vmatpush1.bf16.msra.mxu0 0
      %4229 = vmatprep.subr.bf16.mxu0 0
      %4230 = vmatpush1.bf16.msra.mxu0 0
      %4231 = vmatprep.subr.bf16.mxu0 0
      %4232 = vmatpush1.bf16.msra.mxu0 0
      %4233 = vmatprep.subr.bf16.mxu0 0
      %4234 = vmatpush1.bf16.msra.mxu0 0
      %4235 = vmatprep.subr.bf16.mxu0 0
      %4236 = vmatpush1.bf16.msra.mxu0 0
      %4237 = vmatprep.subr.bf16.mxu0 0
      %4238 = vmatpush1.bf16.msra.mxu0 %v4026
      %4239 = vmatprep.subr.bf16.mxu0 0
      %4240 = vmatpush2.bf16.msra.mxu0 0
      %4241 = vmatprep.subr.bf16.mxu0 0
      %4242 = vmatpush2.bf16.msra.mxu0 0
      %4243 = vmatprep.subr.bf16.mxu0 0
      %4244 = vmatpush2.bf16.msra.mxu0 0
      %4245 = vmatprep.subr.bf16.mxu0 0
      %4246 = vmatpush2.bf16.msra.mxu0 0
      %4247 = vmatprep.subr.bf16.mxu0 0
      %4248 = vmatpush2.bf16.msra.mxu0 0
      %4249 = vmatprep.subr.bf16.mxu0 0
      %4250 = vmatpush2.bf16.msra.mxu0 0
      %4251 = vmatprep.subr.bf16.mxu0 0
      %4252 = vmatpush2.bf16.msra.mxu0 0
      %4253 = vmatprep.subr.bf16.mxu0 0
      %4254 = vmatpush2.bf16.msra.mxu0 0
      %4255 = vmatprep.mubr.bf16.mxu0 0
      %4256 = vmatmul.mubr.bf16.gmra.mxu0 %v4221
      %v4257 = vpop.f32.mrf.mxu0
      %v4258 = vadd.f32 0.0, %v4257
      %v4259 = vpop.f32.mrf.mxu0
      %v4260 = vpop.f32.mrf.mxu0
      %v4261 = vpop.f32.mrf.mxu0
      %4262 = vdwg.mxu0
      %v4263 = vpack.c.bf16 %v4258, %v4258
      %s4264 = scalar_lea.vmem %s39, 16
      %v4265 = vld [vmem:[%s4264] sm:$0xf]
      %v4266 = vld [vmem:[%s4264 + $0x4] sm:$0xf]
      %v4269 = vunpack.c.l.b16 %v4265
      %v4270 = vunpack.c.l.b16 %v4266
      %v4271 = vpack.c.b16 %v4270, %v4269
      %v4274 = vsel %vm1500, %v4263, 0
      %4276 = vmatprep.subr.bf16.mxu0 0
      %4277 = vmatpush1.bf16.msra.mxu0 0
      %4278 = vmatprep.subr.bf16.mxu0 0
      %4279 = vmatpush1.bf16.msra.mxu0 0
      %4280 = vmatprep.subr.bf16.mxu0 0
      %4281 = vmatpush1.bf16.msra.mxu0 0
      %4282 = vmatprep.subr.bf16.mxu0 0
      %4283 = vmatpush1.bf16.msra.mxu0 0
      %4284 = vmatprep.subr.bf16.mxu0 0
      %4285 = vmatpush1.bf16.msra.mxu0 0
      %4286 = vmatprep.subr.bf16.mxu0 0
      %4287 = vmatpush1.bf16.msra.mxu0 0
      %4288 = vmatprep.subr.bf16.mxu0 0
      %4289 = vmatpush1.bf16.msra.mxu0 0
      %4290 = vmatprep.subr.bf16.mxu0 0
      %4291 = vmatpush1.bf16.msra.mxu0 %v4271
      %4292 = vmatprep.subr.bf16.mxu0 0
      %4293 = vmatpush2.bf16.msra.mxu0 0
      %4294 = vmatprep.subr.bf16.mxu0 0
      %4295 = vmatpush2.bf16.msra.mxu0 0
      %4296 = vmatprep.subr.bf16.mxu0 0
      %4297 = vmatpush2.bf16.msra.mxu0 0
      %4298 = vmatprep.subr.bf16.mxu0 0
      %4299 = vmatpush2.bf16.msra.mxu0 0
      %4300 = vmatprep.subr.bf16.mxu0 0
      %4301 = vmatpush2.bf16.msra.mxu0 0
      %4302 = vmatprep.subr.bf16.mxu0 0
      %4303 = vmatpush2.bf16.msra.mxu0 0
      %4304 = vmatprep.subr.bf16.mxu0 0
      %4305 = vmatpush2.bf16.msra.mxu0 0
      %4306 = vmatprep.subr.bf16.mxu0 0
      %4307 = vmatpush2.bf16.msra.mxu0 0
      %4308 = vmatprep.mubr.bf16.mxu0 0
      %4309 = vmatmul.mubr.bf16.gmra.mxu0 %v4274
      %v4310 = vpop.f32.mrf.mxu0
      %v4311 = vadd.f32 0.0, %v4310
      %v4312 = vpop.f32.mrf.mxu0
      %v4313 = vpop.f32.mrf.mxu0
      %v4314 = vpop.f32.mrf.mxu0
      %4315 = vdwg.mxu0
      %v4316 = vadd.f32 %v4213, %v4311
      %v4317 = vld [vmem:[%s43] sm:$0x1]
      %v4319 = vlaneseq
      %v4320 = vshrl.u32 %v4319, 7
      %v4321 = vsub.s32 0, %v4320
      %v4322 = vrot.slane %v4317, %v4321
      %v4324 = vadd.f32 %v4316, %v4322
      %v4325 = vmax.f32 %v4324, 0.0
      %v4326 = vpack.c.bf16 %v4325, %v4325
      %v4327 = vld [vmem:[%s47] sm:$0xf]
      %v4328 = vld [vmem:[%s47 + $0x4] sm:$0x1]
      %v4331 = vunpack.c.l.b16 %v4327
      %v4332 = vunpack.c.l.b16 %v4328
      %v4333 = vpack.c.b16 %v4332, %v4331
      %vm4334 = vcmask 39936
      %v4336 = vsel %vm4334, %v4333, 0
      %vm4338 = vcmask 1042432
      %v4339 = vsel %vm3811, 4294967295, 65535
      %v4340 = vsel %vm4338, %v4339, 0
      %v4342 = vand.u32 %v4326, %v4340
      %4344 = vmatprep.subr.bf16.mxu0 0
      %4345 = vmatpush1.bf16.msra.mxu0 0
      %4346 = vmatprep.subr.bf16.mxu0 0
      %4347 = vmatpush1.bf16.msra.mxu0 0
      %4348 = vmatprep.subr.bf16.mxu0 0
      %4349 = vmatpush1.bf16.msra.mxu0 0
      %4350 = vmatprep.subr.bf16.mxu0 0
      %4351 = vmatpush1.bf16.msra.mxu0 0
      %4352 = vmatprep.subr.bf16.mxu0 0
      %4353 = vmatpush1.bf16.msra.mxu0 0
      %4354 = vmatprep.subr.bf16.mxu0 0
      %4355 = vmatpush1.bf16.msra.mxu0 0
      %4356 = vmatprep.subr.bf16.mxu0 0
      %4357 = vmatpush1.bf16.msra.mxu0 0
      %4358 = vmatprep.subr.bf16.mxu0 0
      %4359 = vmatpush1.bf16.msra.mxu0 %v4342
      %4360 = vmatprep.subr.bf16.mxu0 0
      %4361 = vmatpush2.bf16.msra.mxu0 0
      %4362 = vmatprep.subr.bf16.mxu0 0
      %4363 = vmatpush2.bf16.msra.mxu0 0
      %4364 = vmatprep.subr.bf16.mxu0 0
      %4365 = vmatpush2.bf16.msra.mxu0 0
      %4366 = vmatprep.subr.bf16.mxu0 0
      %4367 = vmatpush2.bf16.msra.mxu0 0
      %4368 = vmatprep.subr.bf16.mxu0 0
      %4369 = vmatpush2.bf16.msra.mxu0 0
      %4370 = vmatprep.subr.bf16.mxu0 0
      %4371 = vmatpush2.bf16.msra.mxu0 0
      %4372 = vmatprep.subr.bf16.mxu0 0
      %4373 = vmatpush2.bf16.msra.mxu0 0
      %4374 = vmatprep.subr.bf16.mxu0 0
      %4375 = vmatpush2.bf16.msra.mxu0 0
      %4376 = vmatprep.mubr.bf16.mxu0 0
      %4377 = vmatmul.mubr.bf16.gmra.mxu0 %v4336
      %v4378 = vpop.f32.mrf.mxu0
      %v4379 = vadd.f32 0.0, %v4378
      %v4380 = vpop.f32.mrf.mxu0
      %v4381 = vpop.f32.mrf.mxu0
      %v4382 = vadd.f32 0.0, %v4381
      %v4383 = vpop.f32.mrf.mxu0
      %4384 = vdwg.mxu0
      %v4385 = vpack.c.bf16 %v4382, %v4379
      %v4386 = vld [vmem:[%s45] sm:$0xff]
      %v4387 = vld [vmem:[%s45 + $0x8] sm:$0xff]
      %v4388 = vld [vmem:[%s45 + $0x10] sm:$0xff]
      %v4389 = vld [vmem:[%s45 + $0x18] sm:$0xff]
      %v4390 = vld [vmem:[%s45 + $0x20] sm:$0xff]
      %s4391 = scalar_lea.vmem %s47, 8
      %v4392 = vld [vmem:[%s4391] sm:$0xf]
      %v4393 = vld [vmem:[%s4391 + $0x4] sm:$0x1]
      %v4396 = vunpack.c.l.b16 %v4392
      %v4397 = vunpack.c.l.b16 %v4393
      %v4398 = vpack.c.b16 %v4397, %v4396
      %v4400 = vsel %vm4334, %v4398, 0
      %4402 = vmatprep.subr.bf16.mxu0 0
      %4403 = vmatpush1.bf16.msra.mxu0 0
      %4404 = vmatprep.subr.bf16.mxu0 0
      %4405 = vmatpush1.bf16.msra.mxu0 0
      %4406 = vmatprep.subr.bf16.mxu0 0
      %4407 = vmatpush1.bf16.msra.mxu0 0
      %4408 = vmatprep.subr.bf16.mxu0 0
      %4409 = vmatpush1.bf16.msra.mxu0 0
      %4410 = vmatprep.subr.bf16.mxu0 0
      %4411 = vmatpush1.bf16.msra.mxu0 0
      %4412 = vmatprep.subr.bf16.mxu0 0
      %4413 = vmatpush1.bf16.msra.mxu0 0
      %4414 = vmatprep.subr.bf16.mxu0 0
      %4415 = vmatpush1.bf16.msra.mxu0 0
      %4416 = vmatprep.subr.bf16.mxu0 0
      %4417 = vmatpush1.bf16.msra.mxu0 %v4342
      %4418 = vmatprep.subr.bf16.mxu0 0
      %4419 = vmatpush2.bf16.msra.mxu0 0
      %4420 = vmatprep.subr.bf16.mxu0 0
      %4421 = vmatpush2.bf16.msra.mxu0 0
      %4422 = vmatprep.subr.bf16.mxu0 0
      %4423 = vmatpush2.bf16.msra.mxu0 0
      %4424 = vmatprep.subr.bf16.mxu0 0
      %4425 = vmatpush2.bf16.msra.mxu0 0
      %4426 = vmatprep.subr.bf16.mxu0 0
      %4427 = vmatpush2.bf16.msra.mxu0 0
      %4428 = vmatprep.subr.bf16.mxu0 0
      %4429 = vmatpush2.bf16.msra.mxu0 0
      %4430 = vmatprep.subr.bf16.mxu0 0
      %4431 = vmatpush2.bf16.msra.mxu0 0
      %4432 = vmatprep.subr.bf16.mxu0 0
      %4433 = vmatpush2.bf16.msra.mxu0 0
      %4434 = vmatprep.mubr.bf16.mxu0 0
      %4435 = vmatmul.mubr.bf16.gmra.mxu0 %v4400
      %v4436 = vpop.f32.mrf.mxu0
      %v4437 = vadd.f32 0.0, %v4436
      %v4438 = vpop.f32.mrf.mxu0
      %v4439 = vpop.f32.mrf.mxu0
      %v4440 = vadd.f32 0.0, %v4439
      %v4441 = vpop.f32.mrf.mxu0
      %4442 = vdwg.mxu0
      %v4443 = vpack.c.bf16 %v4440, %v4437
      %s4444 = scalar_lea.vmem %s45, 40
      %v4445 = vld [vmem:[%s4444] sm:$0xff]
      %v4446 = vld [vmem:[%s4444 + $0x8] sm:$0xff]
      %v4447 = vld [vmem:[%s4444 + $0x10] sm:$0xff]
      %v4448 = vld [vmem:[%s4444 + $0x18] sm:$0xff]
      %v4449 = vld [vmem:[%s4444 + $0x20] sm:$0xff]
      %v4455 = vunpack.c.l.b16 %v4445
      %v4456 = vunpack.c.h.b16 %v4445
      %v4457 = vunpack.c.l.b16 %v4446
      %v4458 = vunpack.c.h.b16 %v4446
      %v4459 = vunpack.c.l.b16 %v4447
      %v4460 = vunpack.c.h.b16 %v4447
      %v4461 = vunpack.c.l.b16 %v4448
      %v4462 = vunpack.c.h.b16 %v4448
      %v4463 = vunpack.c.l.b16 %v4449
      %v4464 = vunpack.c.h.b16 %v4449
      %v4465 = vpack.c.b16 %v4457, %v4455
      %v4466 = vpack.c.b16 %v4458, %v4456
      %v4467 = vpack.c.b16 %v4461, %v4459
      %v4468 = vpack.c.b16 %v4462, %v4460
      %v4469 = vpack.c.b16 %v4463, %v4463
      %v4470 = vpack.c.b16 %v4464, %v4464
      %vm4475 = vcmask 326656
      %v4477 = vsel %vm4475, %v4443, 0
      %v4480 = vsel %vm3222, %v4469, 0
      %v4483 = vsel %vm3222, %v4470, 0
      %4485 = vmatprep.subr.bf16.mxu0 0
      %4486 = vmatpush1.bf16.msra.mxu0 0
      %4487 = vmatprep.subr.bf16.mxu0 0
      %4488 = vmatpush1.bf16.msra.mxu0 0
      %4489 = vmatprep.subr.bf16.mxu0 0
      %4490 = vmatpush1.bf16.msra.mxu0 0
      %4491 = vmatprep.subr.bf16.mxu0 0
      %4492 = vmatpush1.bf16.msra.mxu0 0
      %4493 = vmatprep.subr.bf16.mxu0 0
      %4494 = vmatpush1.bf16.msra.mxu0 0
      %4495 = vmatprep.subr.bf16.mxu0 %v4483
      %4496 = vmatpush1.bf16.msra.mxu0 %v4480
      %4497 = vmatprep.subr.bf16.mxu0 %v4468
      %4498 = vmatpush1.bf16.msra.mxu0 %v4467
      %4499 = vmatprep.subr.bf16.mxu0 %v4466
      %4500 = vmatpush1.bf16.msra.mxu0 %v4465
      %4501 = vmatprep.subr.bf16.mxu0 0
      %4502 = vmatpush2.bf16.msra.mxu0 0
      %4503 = vmatprep.subr.bf16.mxu0 0
      %4504 = vmatpush2.bf16.msra.mxu0 0
      %4505 = vmatprep.subr.bf16.mxu0 0
      %4506 = vmatpush2.bf16.msra.mxu0 0
      %4507 = vmatprep.subr.bf16.mxu0 0
      %4508 = vmatpush2.bf16.msra.mxu0 0
      %4509 = vmatprep.subr.bf16.mxu0 0
      %4510 = vmatpush2.bf16.msra.mxu0 0
      %4511 = vmatprep.subr.bf16.mxu0 0
      %4512 = vmatpush2.bf16.msra.mxu0 0
      %4513 = vmatprep.subr.bf16.mxu0 0
      %4514 = vmatpush2.bf16.msra.mxu0 0
      %4515 = vmatprep.subr.bf16.mxu0 0
      %4516 = vmatpush2.bf16.msra.mxu0 0
      %4517 = vmatprep.mubr.bf16.mxu0 0
      %4518 = vmatmul.mubr.bf16.gmra.mxu0 %v4477
      %v4519 = vpop.f32.mrf.mxu0
      %v4520 = vadd.f32 0.0, %v4519
      %v4521 = vpop.f32.mrf.mxu0
      %v4522 = vadd.f32 0.0, %v4521
      %v4523 = vpop.f32.mrf.mxu0
      %v4524 = vadd.f32 0.0, %v4523
      %v4525 = vpop.f32.mrf.mxu0
      %v4526 = vadd.f32 0.0, %v4525
      %4527 = vdwg.mxu0
      %v4533 = vunpack.c.l.b16 %v4386
      %v4534 = vunpack.c.h.b16 %v4386
      %v4535 = vunpack.c.l.b16 %v4387
      %v4536 = vunpack.c.h.b16 %v4387
      %v4537 = vunpack.c.l.b16 %v4388
      %v4538 = vunpack.c.h.b16 %v4388
      %v4539 = vunpack.c.l.b16 %v4389
      %v4540 = vunpack.c.h.b16 %v4389
      %v4541 = vunpack.c.l.b16 %v4390
      %v4542 = vunpack.c.h.b16 %v4390
      %v4543 = vpack.c.b16 %v4535, %v4533
      %v4544 = vpack.c.b16 %v4536, %v4534
      %v4545 = vpack.c.b16 %v4539, %v4537
      %v4546 = vpack.c.b16 %v4540, %v4538
      %v4547 = vpack.c.b16 %v4541, %v4541
      %v4548 = vpack.c.b16 %v4542, %v4542
      %v4554 = vsel %vm4475, %v4385, 0
      %v4557 = vsel %vm3222, %v4547, 0
      %v4560 = vsel %vm3222, %v4548, 0
      %4562 = vmatprep.subr.bf16.mxu0 0
      %4563 = vmatpush1.bf16.msra.mxu0 0
      %4564 = vmatprep.subr.bf16.mxu0 0
      %4565 = vmatpush1.bf16.msra.mxu0 0
      %4566 = vmatprep.subr.bf16.mxu0 0
      %4567 = vmatpush1.bf16.msra.mxu0 0
      %4568 = vmatprep.subr.bf16.mxu0 0
      %4569 = vmatpush1.bf16.msra.mxu0 0
      %4570 = vmatprep.subr.bf16.mxu0 0
      %4571 = vmatpush1.bf16.msra.mxu0 0
      %4572 = vmatprep.subr.bf16.mxu0 %v4560
      %4573 = vmatpush1.bf16.msra.mxu0 %v4557
      %4574 = vmatprep.subr.bf16.mxu0 %v4546
      %4575 = vmatpush1.bf16.msra.mxu0 %v4545
      %4576 = vmatprep.subr.bf16.mxu0 %v4544
      %4577 = vmatpush1.bf16.msra.mxu0 %v4543
      %4578 = vmatprep.subr.bf16.mxu0 0
      %4579 = vmatpush2.bf16.msra.mxu0 0
      %4580 = vmatprep.subr.bf16.mxu0 0
      %4581 = vmatpush2.bf16.msra.mxu0 0
      %4582 = vmatprep.subr.bf16.mxu0 0
      %4583 = vmatpush2.bf16.msra.mxu0 0
      %4584 = vmatprep.subr.bf16.mxu0 0
      %4585 = vmatpush2.bf16.msra.mxu0 0
      %4586 = vmatprep.subr.bf16.mxu0 0
      %4587 = vmatpush2.bf16.msra.mxu0 0
      %4588 = vmatprep.subr.bf16.mxu0 0
      %4589 = vmatpush2.bf16.msra.mxu0 0
      %4590 = vmatprep.subr.bf16.mxu0 0
      %4591 = vmatpush2.bf16.msra.mxu0 0
      %4592 = vmatprep.subr.bf16.mxu0 0
      %4593 = vmatpush2.bf16.msra.mxu0 0
      %4594 = vmatprep.mubr.bf16.mxu0 0
      %4595 = vmatmul.mubr.bf16.gmra.mxu0 %v4554
      %v4596 = vpop.f32.mrf.mxu0
      %v4597 = vadd.f32 %v4520, %v4596
      %v4598 = vpop.f32.mrf.mxu0
      %v4599 = vadd.f32 %v4522, %v4598
      %v4600 = vpop.f32.mrf.mxu0
      %v4601 = vadd.f32 %v4524, %v4600
      %v4602 = vpop.f32.mrf.mxu0
      %v4603 = vadd.f32 %v4526, %v4602
      %4604 = vdwg.mxu0
      %v4605 = vld [vmem:[%s49] sm:$0x3]
      %v4607 = vlaneseq
      %v4608 = vshrl.u32 %v4607, 7
      %v4609 = vsub.s32 0, %v4608
      %v4610 = vrot.slane %v4605, %v4609
      %v4611 = vlaneseq
      %v4612 = vshrl.u32 %v4611, 7
      %v4613 = vsub.s32 1, %v4612
      %v4614 = vrot.slane %v4605, %v4613
      %v4617 = vadd.f32 %v4597, %v4610
      %v4618 = vadd.f32 %v4599, %v4614
      %v4619 = vadd.f32 %v4601, %v4610
      %v4620 = vadd.f32 %v4603, %v4614
      %v4621 = vmax.f32 %v4617, 0.0
      %v4622 = vmax.f32 %v4618, 0.0
      %v4623 = vmax.f32 %v4619, 0.0
      %v4624 = vmax.f32 %v4620, 0.0
      %v4625 = vpack.c.bf16 %v4623, %v4621
      %v4626 = vpack.c.bf16 %v4624, %v4622
      %v4627 = vld [vmem:[%s53] sm:$0xf]
      %v4628 = vld [vmem:[%s53 + $0x4] sm:$0xf]
      %v4629 = vld [vmem:[%s53 + $0x8] sm:$0x3]
      %v4633 = vunpack.c.l.b16 %v4627
      %v4634 = vunpack.c.l.b16 %v4628
      %v4635 = vunpack.c.l.b16 %v4629
      %v4636 = vpack.c.b16 %v4634, %v4633
      %v4637 = vpack.c.b16 %v4635, %v4635
      %vm4638 = vcmask 80896
      %v4640 = vsel %vm4638, %v4636, 0
      %v4643 = vsel %vm4638, %v4637, 0
      %vm4645 = vcmask 1044480
      %v4647 = vsel %vm4645, %v4625, 0
      %v4650 = vsel %vm4645, %v4626, 0
      %4652 = vmatprep.subr.bf16.mxu0 0
      %4653 = vmatpush1.bf16.msra.mxu0 0
      %4654 = vmatprep.subr.bf16.mxu0 0
      %4655 = vmatpush1.bf16.msra.mxu0 0
      %4656 = vmatprep.subr.bf16.mxu0 0
      %4657 = vmatpush1.bf16.msra.mxu0 0
      %4658 = vmatprep.subr.bf16.mxu0 0
      %4659 = vmatpush1.bf16.msra.mxu0 0
      %4660 = vmatprep.subr.bf16.mxu0 0
      %4661 = vmatpush1.bf16.msra.mxu0 0
      %4662 = vmatprep.subr.bf16.mxu0 0
      %4663 = vmatpush1.bf16.msra.mxu0 0
      %4664 = vmatprep.subr.bf16.mxu0 0
      %4665 = vmatpush1.bf16.msra.mxu0 0
      %4666 = vmatprep.subr.bf16.mxu0 %v4650
      %4667 = vmatpush1.bf16.msra.mxu0 %v4647
      %4668 = vmatprep.subr.bf16.mxu0 0
      %4669 = vmatpush2.bf16.msra.mxu0 0
      %4670 = vmatprep.subr.bf16.mxu0 0
      %4671 = vmatpush2.bf16.msra.mxu0 0
      %4672 = vmatprep.subr.bf16.mxu0 0
      %4673 = vmatpush2.bf16.msra.mxu0 0
      %4674 = vmatprep.subr.bf16.mxu0 0
      %4675 = vmatpush2.bf16.msra.mxu0 0
      %4676 = vmatprep.subr.bf16.mxu0 0
      %4677 = vmatpush2.bf16.msra.mxu0 0
      %4678 = vmatprep.subr.bf16.mxu0 0
      %4679 = vmatpush2.bf16.msra.mxu0 0
      %4680 = vmatprep.subr.bf16.mxu0 0
      %4681 = vmatpush2.bf16.msra.mxu0 0
      %4682 = vmatprep.subr.bf16.mxu0 0
      %4683 = vmatpush2.bf16.msra.mxu0 0
      %4684 = vmatprep.mubr.bf16.mxu0 0
      %4685 = vmatmul.mubr.bf16.gmra.mxu0 %v4640
      %v4686 = vpop.f32.mrf.mxu0
      %v4687 = vadd.f32 0.0, %v4686
      %v4688 = vpop.f32.mrf.mxu0
      %v4689 = vadd.f32 0.0, %v4688
      %v4690 = vpop.f32.mrf.mxu0
      %v4691 = vadd.f32 0.0, %v4690
      %v4692 = vpop.f32.mrf.mxu0
      %v4693 = vadd.f32 0.0, %v4692
      %4694 = vmatprep.mubr.bf16.mxu0 0
      %4695 = vmatmul.mubr.bf16.gmra.mxu0 %v4643
      %v4696 = vpop.f32.mrf.mxu0
      %v4697 = vadd.f32 0.0, %v4696
      %v4698 = vpop.f32.mrf.mxu0
      %v4699 = vadd.f32 0.0, %v4698
      %v4700 = vpop.f32.mrf.mxu0
      %v4701 = vpop.f32.mrf.mxu0
      %4702 = vdwg.mxu0
      %v4703 = vpack.c.bf16 %v4691, %v4687
      %v4704 = vpack.c.bf16 %v4693, %v4689
      %v4705 = vpack.c.bf16 %v4697, %v4697
      %v4706 = vpack.c.bf16 %v4699, %v4699
      %v4707 = vld [vmem:[%s51] sm:$0xff]
      %v4708 = vld [vmem:[%s51 + $0x8] sm:$0xff]
      %v4709 = vld [vmem:[%s51 + $0x10] sm:$0xf]
      %v4710 = vld [vmem:[%s51 + $0x14] sm:$0xff]
      %v4711 = vld [vmem:[%s51 + $0x1c] sm:$0xff]
      %v4712 = vld [vmem:[%s51 + $0x24] sm:$0xf]
      %v4713 = vld [vmem:[%s51 + $0x28] sm:$0xff]
      %v4714 = vld [vmem:[%s51 + $0x30] sm:$0xff]
      %v4715 = vld [vmem:[%s51 + $0x38] sm:$0xf]
      %v4716 = vld [vmem:[%s51 + $0x3c] sm:$0xff]
      %v4717 = vld [vmem:[%s51 + $0x44] sm:$0xff]
      %v4718 = vld [vmem:[%s51 + $0x4c] sm:$0xf]
      %v4719 = vld [vmem:[%s51 + $0x50] sm:$0xff]
      %v4720 = vld [vmem:[%s51 + $0x58] sm:$0xff]
      %v4721 = vld [vmem:[%s51 + $0x60] sm:$0xf]
      %v4722 = vld [vmem:[%s51 + $0x64] sm:$0xff]
      %v4723 = vld [vmem:[%s51 + $0x6c] sm:$0xff]
      %v4724 = vld [vmem:[%s51 + $0x74] sm:$0xf]
      %v4725 = vld [vmem:[%s51 + $0x78] sm:$0xff]
      %v4726 = vld [vmem:[%s51 + $0x80] sm:$0xff]
      %v4727 = vld [vmem:[%s51 + $0x88] sm:$0xf]
      %v4728 = vld [vmem:[%s51 + $0x8c] sm:$0xff]
      %v4729 = vld [vmem:[%s51 + $0x94] sm:$0xff]
      %v4730 = vld [vmem:[%s51 + $0x9c] sm:$0xf]
      %v4731 = vld [vmem:[%s51 + $0xa0] sm:$0xff]
      %v4732 = vld [vmem:[%s51 + $0xa8] sm:$0xff]
      %v4733 = vld [vmem:[%s51 + $0xb0] sm:$0xf]
      %v4734 = vld [vmem:[%s51 + $0xb4] sm:$0xff]
      %v4735 = vld [vmem:[%s51 + $0xbc] sm:$0xff]
      %v4736 = vld [vmem:[%s51 + $0xc4] sm:$0xf]
      %v4737 = vld [vmem:[%s51 + $0xc8] sm:$0xff]
      %v4738 = vld [vmem:[%s51 + $0xd0] sm:$0xff]
      %v4739 = vld [vmem:[%s51 + $0xd8] sm:$0xf]
      %v4740 = vld [vmem:[%s51 + $0xdc] sm:$0xff]
      %v4741 = vld [vmem:[%s51 + $0xe4] sm:$0xff]
      %v4742 = vld [vmem:[%s51 + $0xec] sm:$0xf]
      %v4743 = vld [vmem:[%s51 + $0xf0] sm:$0xff]
      %v4744 = vld [vmem:[%s51 + $0xf8] sm:$0xff]
      %v4745 = vld [vmem:[%s51 + $0x100] sm:$0xf]
      %v4746 = vld [vmem:[%s51 + $0x104] sm:$0xff]
      %v4747 = vld [vmem:[%s51 + $0x10c] sm:$0xff]
      %v4748 = vld [vmem:[%s51 + $0x114] sm:$0xf]
      %v4749 = vld [vmem:[%s51 + $0x118] sm:$0xff]
      %v4750 = vld [vmem:[%s51 + $0x120] sm:$0xff]
      %v4751 = vld [vmem:[%s51 + $0x128] sm:$0xf]
      %v4752 = vld [vmem:[%s51 + $0x12c] sm:$0xff]
      %v4753 = vld [vmem:[%s51 + $0x134] sm:$0xff]
      %v4754 = vld [vmem:[%s51 + $0x13c] sm:$0xf]
      %v4755 = vld [vmem:[%s51 + $0x140] sm:$0xff]
      %v4756 = vld [vmem:[%s51 + $0x148] sm:$0xff]
      %v4757 = vld [vmem:[%s51 + $0x150] sm:$0xf]
      %v4758 = vld [vmem:[%s51 + $0x154] sm:$0xff]
      %v4759 = vld [vmem:[%s51 + $0x15c] sm:$0xff]
      %v4760 = vld [vmem:[%s51 + $0x164] sm:$0xf]
      %v4761 = vld [vmem:[%s51 + $0x168] sm:$0xff]
      %v4762 = vld [vmem:[%s51 + $0x170] sm:$0xff]
      %v4763 = vld [vmem:[%s51 + $0x178] sm:$0xf]
      %v4764 = vld [vmem:[%s51 + $0x17c] sm:$0xff]
      %v4765 = vld [vmem:[%s51 + $0x184] sm:$0xff]
      %v4766 = vld [vmem:[%s51 + $0x18c] sm:$0xf]
      %s4767 = scalar_lea.vmem %s53, 12
      %v4768 = vld [vmem:[%s4767] sm:$0xf]
      %v4769 = vld [vmem:[%s4767 + $0x4] sm:$0xf]
      %v4770 = vld [vmem:[%s4767 + $0x8] sm:$0x3]
      %v4774 = vunpack.c.l.b16 %v4768
      %v4775 = vunpack.c.l.b16 %v4769
      %v4776 = vunpack.c.l.b16 %v4770
      %v4777 = vpack.c.b16 %v4775, %v4774
      %v4778 = vpack.c.b16 %v4776, %v4776
      %v4780 = vsel %vm4638, %v4777, 0
      %v4783 = vsel %vm4638, %v4778, 0
      %4785 = vmatprep.subr.bf16.mxu0 0
      %4786 = vmatpush1.bf16.msra.mxu0 0
      %4787 = vmatprep.subr.bf16.mxu0 0
      %4788 = vmatpush1.bf16.msra.mxu0 0
      %4789 = vmatprep.subr.bf16.mxu0 0
      %4790 = vmatpush1.bf16.msra.mxu0 0
      %4791 = vmatprep.subr.bf16.mxu0 0
      %4792 = vmatpush1.bf16.msra.mxu0 0
      %4793 = vmatprep.subr.bf16.mxu0 0
      %4794 = vmatpush1.bf16.msra.mxu0 0
      %4795 = vmatprep.subr.bf16.mxu0 0
      %4796 = vmatpush1.bf16.msra.mxu0 0
      %4797 = vmatprep.subr.bf16.mxu0 0
      %4798 = vmatpush1.bf16.msra.mxu0 0
      %4799 = vmatprep.subr.bf16.mxu0 %v4650
      %4800 = vmatpush1.bf16.msra.mxu0 %v4647
      %4801 = vmatprep.subr.bf16.mxu0 0
      %4802 = vmatpush2.bf16.msra.mxu0 0
      %4803 = vmatprep.subr.bf16.mxu0 0
      %4804 = vmatpush2.bf16.msra.mxu0 0
      %4805 = vmatprep.subr.bf16.mxu0 0
      %4806 = vmatpush2.bf16.msra.mxu0 0
      %4807 = vmatprep.subr.bf16.mxu0 0
      %4808 = vmatpush2.bf16.msra.mxu0 0
      %4809 = vmatprep.subr.bf16.mxu0 0
      %4810 = vmatpush2.bf16.msra.mxu0 0
      %4811 = vmatprep.subr.bf16.mxu0 0
      %4812 = vmatpush2.bf16.msra.mxu0 0
      %4813 = vmatprep.subr.bf16.mxu0 0
      %4814 = vmatpush2.bf16.msra.mxu0 0
      %4815 = vmatprep.subr.bf16.mxu0 0
      %4816 = vmatpush2.bf16.msra.mxu0 0
      %4817 = vmatprep.mubr.bf16.mxu0 0
      %4818 = vmatmul.mubr.bf16.gmra.mxu0 %v4780
      %v4819 = vpop.f32.mrf.mxu0
      %v4820 = vadd.f32 0.0, %v4819
      %v4821 = vpop.f32.mrf.mxu0
      %v4822 = vadd.f32 0.0, %v4821
      %v4823 = vpop.f32.mrf.mxu0
      %v4824 = vadd.f32 0.0, %v4823
      %v4825 = vpop.f32.mrf.mxu0
      %v4826 = vadd.f32 0.0, %v4825
      %4827 = vmatprep.mubr.bf16.mxu0 0
      %4828 = vmatmul.mubr.bf16.gmra.mxu0 %v4783
      %v4829 = vpop.f32.mrf.mxu0
      %v4830 = vadd.f32 0.0, %v4829
      %v4831 = vpop.f32.mrf.mxu0
      %v4832 = vadd.f32 0.0, %v4831
      %v4833 = vpop.f32.mrf.mxu0
      %v4834 = vpop.f32.mrf.mxu0
      %4835 = vdwg.mxu0
      %v4836 = vpack.c.bf16 %v4824, %v4820
      %v4837 = vpack.c.bf16 %v4826, %v4822
      %v4838 = vpack.c.bf16 %v4830, %v4830
      %v4839 = vpack.c.bf16 %v4832, %v4832
      %s4840 = scalar_lea.vmem %s51, 400
      %v4841 = vld [vmem:[%s4840] sm:$0xff]
      %v4842 = vld [vmem:[%s4840 + $0x8] sm:$0xff]
      %v4843 = vld [vmem:[%s4840 + $0x10] sm:$0xf]
      %v4844 = vld [vmem:[%s4840 + $0x14] sm:$0xff]
      %v4845 = vld [vmem:[%s4840 + $0x1c] sm:$0xff]
      %v4846 = vld [vmem:[%s4840 + $0x24] sm:$0xf]
      %v4847 = vld [vmem:[%s4840 + $0x28] sm:$0xff]
      %v4848 = vld [vmem:[%s4840 + $0x30] sm:$0xff]
      %v4849 = vld [vmem:[%s4840 + $0x38] sm:$0xf]
      %v4850 = vld [vmem:[%s4840 + $0x3c] sm:$0xff]
      %v4851 = vld [vmem:[%s4840 + $0x44] sm:$0xff]
      %v4852 = vld [vmem:[%s4840 + $0x4c] sm:$0xf]
      %v4853 = vld [vmem:[%s4840 + $0x50] sm:$0xff]
      %v4854 = vld [vmem:[%s4840 + $0x58] sm:$0xff]
      %v4855 = vld [vmem:[%s4840 + $0x60] sm:$0xf]
      %v4856 = vld [vmem:[%s4840 + $0x64] sm:$0xff]
      %v4857 = vld [vmem:[%s4840 + $0x6c] sm:$0xff]
      %v4858 = vld [vmem:[%s4840 + $0x74] sm:$0xf]
      %v4859 = vld [vmem:[%s4840 + $0x78] sm:$0xff]
      %v4860 = vld [vmem:[%s4840 + $0x80] sm:$0xff]
      %v4861 = vld [vmem:[%s4840 + $0x88] sm:$0xf]
      %v4862 = vld [vmem:[%s4840 + $0x8c] sm:$0xff]
      %v4863 = vld [vmem:[%s4840 + $0x94] sm:$0xff]
      %v4864 = vld [vmem:[%s4840 + $0x9c] sm:$0xf]
      %v4865 = vld [vmem:[%s4840 + $0xa0] sm:$0xff]
      %v4866 = vld [vmem:[%s4840 + $0xa8] sm:$0xff]
      %v4867 = vld [vmem:[%s4840 + $0xb0] sm:$0xf]
      %v4868 = vld [vmem:[%s4840 + $0xb4] sm:$0xff]
      %v4869 = vld [vmem:[%s4840 + $0xbc] sm:$0xff]
      %v4870 = vld [vmem:[%s4840 + $0xc4] sm:$0xf]
      %v4871 = vld [vmem:[%s4840 + $0xc8] sm:$0xff]
      %v4872 = vld [vmem:[%s4840 + $0xd0] sm:$0xff]
      %v4873 = vld [vmem:[%s4840 + $0xd8] sm:$0xf]
      %v4874 = vld [vmem:[%s4840 + $0xdc] sm:$0xff]
      %v4875 = vld [vmem:[%s4840 + $0xe4] sm:$0xff]
      %v4876 = vld [vmem:[%s4840 + $0xec] sm:$0xf]
      %v4877 = vld [vmem:[%s4840 + $0xf0] sm:$0xff]
      %v4878 = vld [vmem:[%s4840 + $0xf8] sm:$0xff]
      %v4879 = vld [vmem:[%s4840 + $0x100] sm:$0xf]
      %v4880 = vld [vmem:[%s4840 + $0x104] sm:$0xff]
      %v4881 = vld [vmem:[%s4840 + $0x10c] sm:$0xff]
      %v4882 = vld [vmem:[%s4840 + $0x114] sm:$0xf]
      %v4883 = vld [vmem:[%s4840 + $0x118] sm:$0xff]
      %v4884 = vld [vmem:[%s4840 + $0x120] sm:$0xff]
      %v4885 = vld [vmem:[%s4840 + $0x128] sm:$0xf]
      %v4886 = vld [vmem:[%s4840 + $0x12c] sm:$0xff]
      %v4887 = vld [vmem:[%s4840 + $0x134] sm:$0xff]
      %v4888 = vld [vmem:[%s4840 + $0x13c] sm:$0xf]
      %v4889 = vld [vmem:[%s4840 + $0x140] sm:$0xff]
      %v4890 = vld [vmem:[%s4840 + $0x148] sm:$0xff]
      %v4891 = vld [vmem:[%s4840 + $0x150] sm:$0xf]
      %v4892 = vld [vmem:[%s4840 + $0x154] sm:$0xff]
      %v4893 = vld [vmem:[%s4840 + $0x15c] sm:$0xff]
      %v4894 = vld [vmem:[%s4840 + $0x164] sm:$0xf]
      %v4895 = vld [vmem:[%s4840 + $0x168] sm:$0xff]
      %v4896 = vld [vmem:[%s4840 + $0x170] sm:$0xff]
      %v4897 = vld [vmem:[%s4840 + $0x178] sm:$0xf]
      %v4898 = vld [vmem:[%s4840 + $0x17c] sm:$0xff]
      %v4899 = vld [vmem:[%s4840 + $0x184] sm:$0xff]
      %v4900 = vld [vmem:[%s4840 + $0x18c] sm:$0xf]
      %v4961 = vunpack.c.l.b16 %v4841
      %v4962 = vunpack.c.h.b16 %v4841
      %v4963 = vunpack.c.l.b16 %v4842
      %v4964 = vunpack.c.h.b16 %v4842
      %v4965 = vunpack.c.l.b16 %v4843
      %v4966 = vunpack.c.l.b16 %v4844
      %v4967 = vunpack.c.h.b16 %v4844
      %v4968 = vunpack.c.l.b16 %v4845
      %v4969 = vunpack.c.h.b16 %v4845
      %v4970 = vunpack.c.l.b16 %v4846
      %v4971 = vunpack.c.l.b16 %v4847
      %v4972 = vunpack.c.h.b16 %v4847
      %v4973 = vunpack.c.l.b16 %v4848
      %v4974 = vunpack.c.h.b16 %v4848
      %v4975 = vunpack.c.l.b16 %v4849
      %v4976 = vunpack.c.l.b16 %v4850
      %v4977 = vunpack.c.h.b16 %v4850
      %v4978 = vunpack.c.l.b16 %v4851
      %v4979 = vunpack.c.h.b16 %v4851
      %v4980 = vunpack.c.l.b16 %v4852
      %v4981 = vunpack.c.l.b16 %v4853
      %v4982 = vunpack.c.h.b16 %v4853
      %v4983 = vunpack.c.l.b16 %v4854
      %v4984 = vunpack.c.h.b16 %v4854
      %v4985 = vunpack.c.l.b16 %v4855
      %v4986 = vunpack.c.l.b16 %v4856
      %v4987 = vunpack.c.h.b16 %v4856
      %v4988 = vunpack.c.l.b16 %v4857
      %v4989 = vunpack.c.h.b16 %v4857
      %v4990 = vunpack.c.l.b16 %v4858
      %v4991 = vunpack.c.l.b16 %v4859
      %v4992 = vunpack.c.h.b16 %v4859
      %v4993 = vunpack.c.l.b16 %v4860
      %v4994 = vunpack.c.h.b16 %v4860
      %v4995 = vunpack.c.l.b16 %v4861
      %v4996 = vunpack.c.l.b16 %v4862
      %v4997 = vunpack.c.h.b16 %v4862
      %v4998 = vunpack.c.l.b16 %v4863
      %v4999 = vunpack.c.h.b16 %v4863
      %v5000 = vunpack.c.l.b16 %v4864
      %v5001 = vunpack.c.l.b16 %v4865
      %v5002 = vunpack.c.h.b16 %v4865
      %v5003 = vunpack.c.l.b16 %v4866
      %v5004 = vunpack.c.h.b16 %v4866
      %v5005 = vunpack.c.l.b16 %v4867
      %v5006 = vunpack.c.l.b16 %v4868
      %v5007 = vunpack.c.h.b16 %v4868
      %v5008 = vunpack.c.l.b16 %v4869
      %v5009 = vunpack.c.h.b16 %v4869
      %v5010 = vunpack.c.l.b16 %v4870
      %v5011 = vunpack.c.l.b16 %v4871
      %v5012 = vunpack.c.h.b16 %v4871
      %v5013 = vunpack.c.l.b16 %v4872
      %v5014 = vunpack.c.h.b16 %v4872
      %v5015 = vunpack.c.l.b16 %v4873
      %v5016 = vunpack.c.l.b16 %v4874
      %v5017 = vunpack.c.h.b16 %v4874
      %v5018 = vunpack.c.l.b16 %v4875
      %v5019 = vunpack.c.h.b16 %v4875
      %v5020 = vunpack.c.l.b16 %v4876
      %v5021 = vunpack.c.l.b16 %v4877
      %v5022 = vunpack.c.h.b16 %v4877
      %v5023 = vunpack.c.l.b16 %v4878
      %v5024 = vunpack.c.h.b16 %v4878
      %v5025 = vunpack.c.l.b16 %v4879
      %v5026 = vunpack.c.l.b16 %v4880
      %v5027 = vunpack.c.h.b16 %v4880
      %v5028 = vunpack.c.l.b16 %v4881
      %v5029 = vunpack.c.h.b16 %v4881
      %v5030 = vunpack.c.l.b16 %v4882
      %v5031 = vunpack.c.l.b16 %v4883
      %v5032 = vunpack.c.h.b16 %v4883
      %v5033 = vunpack.c.l.b16 %v4884
      %v5034 = vunpack.c.h.b16 %v4884
      %v5035 = vunpack.c.l.b16 %v4885
      %v5036 = vunpack.c.l.b16 %v4886
      %v5037 = vunpack.c.h.b16 %v4886
      %v5038 = vunpack.c.l.b16 %v4887
      %v5039 = vunpack.c.h.b16 %v4887
      %v5040 = vunpack.c.l.b16 %v4888
      %v5041 = vunpack.c.l.b16 %v4889
      %v5042 = vunpack.c.h.b16 %v4889
      %v5043 = vunpack.c.l.b16 %v4890
      %v5044 = vunpack.c.h.b16 %v4890
      %v5045 = vunpack.c.l.b16 %v4891
      %v5046 = vunpack.c.l.b16 %v4892
      %v5047 = vunpack.c.h.b16 %v4892
      %v5048 = vunpack.c.l.b16 %v4893
      %v5049 = vunpack.c.h.b16 %v4893
      %v5050 = vunpack.c.l.b16 %v4894
      %v5051 = vunpack.c.l.b16 %v4895
      %v5052 = vunpack.c.h.b16 %v4895
      %v5053 = vunpack.c.l.b16 %v4896
      %v5054 = vunpack.c.h.b16 %v4896
      %v5055 = vunpack.c.l.b16 %v4897
      %v5056 = vunpack.c.l.b16 %v4898
      %v5057 = vunpack.c.h.b16 %v4898
      %v5058 = vunpack.c.l.b16 %v4899
      %v5059 = vunpack.c.h.b16 %v4899
      %v5060 = vunpack.c.l.b16 %v4900
      %v5061 = vpack.c.b16 %v4966, %v4961
      %v5062 = vpack.c.b16 %v4967, %v4962
      %v5063 = vpack.c.b16 %v4968, %v4963
      %v5064 = vpack.c.b16 %v4969, %v4964
      %v5065 = vpack.c.b16 %v4970, %v4965
      %v5066 = vpack.c.b16 %v4976, %v4971
      %v5067 = vpack.c.b16 %v4977, %v4972
      %v5068 = vpack.c.b16 %v4978, %v4973
      %v5069 = vpack.c.b16 %v4979, %v4974
      %v5070 = vpack.c.b16 %v4980, %v4975
      %v5071 = vpack.c.b16 %v4986, %v4981
      %v5072 = vpack.c.b16 %v4987, %v4982
      %v5073 = vpack.c.b16 %v4988, %v4983
      %v5074 = vpack.c.b16 %v4989, %v4984
      %v5075 = vpack.c.b16 %v4990, %v4985
      %v5076 = vpack.c.b16 %v4996, %v4991
      %v5077 = vpack.c.b16 %v4997, %v4992
      %v5078 = vpack.c.b16 %v4998, %v4993
      %v5079 = vpack.c.b16 %v4999, %v4994
      %v5080 = vpack.c.b16 %v5000, %v4995
      %v5081 = vpack.c.b16 %v5006, %v5001
      %v5082 = vpack.c.b16 %v5007, %v5002
      %v5083 = vpack.c.b16 %v5008, %v5003
      %v5084 = vpack.c.b16 %v5009, %v5004
      %v5085 = vpack.c.b16 %v5010, %v5005
      %v5086 = vpack.c.b16 %v5016, %v5011
      %v5087 = vpack.c.b16 %v5017, %v5012
      %v5088 = vpack.c.b16 %v5018, %v5013
      %v5089 = vpack.c.b16 %v5019, %v5014
      %v5090 = vpack.c.b16 %v5020, %v5015
      %v5091 = vpack.c.b16 %v5026, %v5021
      %v5092 = vpack.c.b16 %v5027, %v5022
      %v5093 = vpack.c.b16 %v5028, %v5023
      %v5094 = vpack.c.b16 %v5029, %v5024
      %v5095 = vpack.c.b16 %v5030, %v5025
      %v5096 = vpack.c.b16 %v5036, %v5031
      %v5097 = vpack.c.b16 %v5037, %v5032
      %v5098 = vpack.c.b16 %v5038, %v5033
      %v5099 = vpack.c.b16 %v5039, %v5034
      %v5100 = vpack.c.b16 %v5040, %v5035
      %v5101 = vpack.c.b16 %v5046, %v5041
      %v5102 = vpack.c.b16 %v5047, %v5042
      %v5103 = vpack.c.b16 %v5048, %v5043
      %v5104 = vpack.c.b16 %v5049, %v5044
      %v5105 = vpack.c.b16 %v5050, %v5045
      %v5106 = vpack.c.b16 %v5056, %v5051
      %v5107 = vpack.c.b16 %v5057, %v5052
      %v5108 = vpack.c.b16 %v5058, %v5053
      %v5109 = vpack.c.b16 %v5059, %v5054
      %v5110 = vpack.c.b16 %v5060, %v5055
      %v5162 = vsel %vm3917, %v4837, 0
      %v5165 = vsel %vm3917, %v4839, 0
      %5167 = vmatprep.subr.bf16.mxu0 %v5097
      %5168 = vmatpush1.bf16.msra.mxu0 %v5096
      %5169 = vmatprep.subr.bf16.mxu0 %v5092
      %5170 = vmatpush1.bf16.msra.mxu0 %v5091
      %5171 = vmatprep.subr.bf16.mxu0 %v5087
      %5172 = vmatpush1.bf16.msra.mxu0 %v5086
      %5173 = vmatprep.subr.bf16.mxu0 %v5082
      %5174 = vmatpush1.bf16.msra.mxu0 %v5081
      %5175 = vmatprep.subr.bf16.mxu0 %v5077
      %5176 = vmatpush1.bf16.msra.mxu0 %v5076
      %5177 = vmatprep.subr.bf16.mxu0 %v5072
      %5178 = vmatpush1.bf16.msra.mxu0 %v5071
      %5179 = vmatprep.subr.bf16.mxu0 %v5067
      %5180 = vmatpush1.bf16.msra.mxu0 %v5066
      %5181 = vmatprep.subr.bf16.mxu0 %v5062
      %5182 = vmatpush1.bf16.msra.mxu0 %v5061
      %5183 = vmatprep.subr.bf16.mxu0 0
      %5184 = vmatpush2.bf16.msra.mxu0 0
      %5185 = vmatprep.subr.bf16.mxu0 0
      %5186 = vmatpush2.bf16.msra.mxu0 0
      %5187 = vmatprep.subr.bf16.mxu0 0
      %5188 = vmatpush2.bf16.msra.mxu0 0
      %5189 = vmatprep.subr.bf16.mxu0 0
      %5190 = vmatpush2.bf16.msra.mxu0 0
      %5191 = vmatprep.subr.bf16.mxu0 0
      %5192 = vmatpush2.bf16.msra.mxu0 0
      %5193 = vmatprep.subr.bf16.mxu0 0
      %5194 = vmatpush2.bf16.msra.mxu0 0
      %5195 = vmatprep.subr.bf16.mxu0 %v5107
      %5196 = vmatpush2.bf16.msra.mxu0 %v5106
      %5197 = vmatprep.subr.bf16.mxu0 %v5102
      %5198 = vmatpush2.bf16.msra.mxu0 %v5101
      %5199 = vmatprep.mubr.bf16.mxu0 %v5162
      %5200 = vmatmul.mubr.bf16.gmra.mxu0 %v4836
      %v5201 = vpop.f32.mrf.mxu0
      %v5202 = vadd.f32 0.0, %v5201
      %v5203 = vpop.f32.mrf.mxu0
      %v5204 = vadd.f32 0.0, %v5203
      %v5205 = vpop.f32.mrf.mxu0
      %v5206 = vadd.f32 0.0, %v5205
      %v5207 = vpop.f32.mrf.mxu0
      %v5208 = vadd.f32 0.0, %v5207
      %5209 = vmatprep.mubr.bf16.mxu0 %v5165
      %5210 = vmatmul.mubr.bf16.gmra.mxu0 %v4838
      %v5211 = vpop.f32.mrf.mxu0
      %v5212 = vadd.f32 0.0, %v5211
      %v5213 = vpop.f32.mrf.mxu0
      %v5214 = vadd.f32 0.0, %v5213
      %v5215 = vpop.f32.mrf.mxu0
      %v5216 = vpop.f32.mrf.mxu0
      %5217 = vdwg.mxu0
      %5218 = vmatprep.subr.bf16.mxu0 %v5099
      %5219 = vmatpush1.bf16.msra.mxu0 %v5098
      %5220 = vmatprep.subr.bf16.mxu0 %v5094
      %5221 = vmatpush1.bf16.msra.mxu0 %v5093
      %5222 = vmatprep.subr.bf16.mxu0 %v5089
      %5223 = vmatpush1.bf16.msra.mxu0 %v5088
      %5224 = vmatprep.subr.bf16.mxu0 %v5084
      %5225 = vmatpush1.bf16.msra.mxu0 %v5083
      %5226 = vmatprep.subr.bf16.mxu0 %v5079
      %5227 = vmatpush1.bf16.msra.mxu0 %v5078
      %5228 = vmatprep.subr.bf16.mxu0 %v5074
      %5229 = vmatpush1.bf16.msra.mxu0 %v5073
      %5230 = vmatprep.subr.bf16.mxu0 %v5069
      %5231 = vmatpush1.bf16.msra.mxu0 %v5068
      %5232 = vmatprep.subr.bf16.mxu0 %v5064
      %5233 = vmatpush1.bf16.msra.mxu0 %v5063
      %5234 = vmatprep.subr.bf16.mxu0 0
      %5235 = vmatpush2.bf16.msra.mxu0 0
      %5236 = vmatprep.subr.bf16.mxu0 0
      %5237 = vmatpush2.bf16.msra.mxu0 0
      %5238 = vmatprep.subr.bf16.mxu0 0
      %5239 = vmatpush2.bf16.msra.mxu0 0
      %5240 = vmatprep.subr.bf16.mxu0 0
      %5241 = vmatpush2.bf16.msra.mxu0 0
      %5242 = vmatprep.subr.bf16.mxu0 0
      %5243 = vmatpush2.bf16.msra.mxu0 0
      %5244 = vmatprep.subr.bf16.mxu0 0
      %5245 = vmatpush2.bf16.msra.mxu0 0
      %5246 = vmatprep.subr.bf16.mxu0 %v5109
      %5247 = vmatpush2.bf16.msra.mxu0 %v5108
      %5248 = vmatprep.subr.bf16.mxu0 %v5104
      %5249 = vmatpush2.bf16.msra.mxu0 %v5103
      %5250 = vmatprep.mubr.bf16.mxu0 %v5162
      %5251 = vmatmul.mubr.bf16.gmra.mxu0 %v4836
      %v5252 = vpop.f32.mrf.mxu0
      %v5253 = vadd.f32 0.0, %v5252
      %v5254 = vpop.f32.mrf.mxu0
      %v5255 = vadd.f32 0.0, %v5254
      %v5256 = vpop.f32.mrf.mxu0
      %v5257 = vadd.f32 0.0, %v5256
      %v5258 = vpop.f32.mrf.mxu0
      %v5259 = vadd.f32 0.0, %v5258
      %5260 = vmatprep.mubr.bf16.mxu0 %v5165
      %5261 = vmatmul.mubr.bf16.gmra.mxu0 %v4838
      %v5262 = vpop.f32.mrf.mxu0
      %v5263 = vadd.f32 0.0, %v5262
      %v5264 = vpop.f32.mrf.mxu0
      %v5265 = vadd.f32 0.0, %v5264
      %v5266 = vpop.f32.mrf.mxu0
      %v5267 = vpop.f32.mrf.mxu0
      %5268 = vdwg.mxu0
      %5269 = vmatprep.subr.bf16.mxu0 0
      %5270 = vmatpush1.bf16.msra.mxu0 %v5100
      %5271 = vmatprep.subr.bf16.mxu0 0
      %5272 = vmatpush1.bf16.msra.mxu0 %v5095
      %5273 = vmatprep.subr.bf16.mxu0 0
      %5274 = vmatpush1.bf16.msra.mxu0 %v5090
      %5275 = vmatprep.subr.bf16.mxu0 0
      %5276 = vmatpush1.bf16.msra.mxu0 %v5085
      %5277 = vmatprep.subr.bf16.mxu0 0
      %5278 = vmatpush1.bf16.msra.mxu0 %v5080
      %5279 = vmatprep.subr.bf16.mxu0 0
      %5280 = vmatpush1.bf16.msra.mxu0 %v5075
      %5281 = vmatprep.subr.bf16.mxu0 0
      %5282 = vmatpush1.bf16.msra.mxu0 %v5070
      %5283 = vmatprep.subr.bf16.mxu0 0
      %5284 = vmatpush1.bf16.msra.mxu0 %v5065
      %5285 = vmatprep.subr.bf16.mxu0 0
      %5286 = vmatpush2.bf16.msra.mxu0 0
      %5287 = vmatprep.subr.bf16.mxu0 0
      %5288 = vmatpush2.bf16.msra.mxu0 0
      %5289 = vmatprep.subr.bf16.mxu0 0
      %5290 = vmatpush2.bf16.msra.mxu0 0
      %5291 = vmatprep.subr.bf16.mxu0 0
      %5292 = vmatpush2.bf16.msra.mxu0 0
      %5293 = vmatprep.subr.bf16.mxu0 0
      %5294 = vmatpush2.bf16.msra.mxu0 0
      %5295 = vmatprep.subr.bf16.mxu0 0
      %5296 = vmatpush2.bf16.msra.mxu0 0
      %5297 = vmatprep.subr.bf16.mxu0 0
      %5298 = vmatpush2.bf16.msra.mxu0 %v5110
      %5299 = vmatprep.subr.bf16.mxu0 0
      %5300 = vmatpush2.bf16.msra.mxu0 %v5105
      %5301 = vmatprep.mubr.bf16.mxu0 %v5162
      %5302 = vmatmul.mubr.bf16.gmra.mxu0 %v4836
      %v5303 = vpop.f32.mrf.mxu0
      %v5304 = vadd.f32 0.0, %v5303
      %v5305 = vpop.f32.mrf.mxu0
      %v5306 = vpop.f32.mrf.mxu0
      %v5307 = vadd.f32 0.0, %v5306
      %v5308 = vpop.f32.mrf.mxu0
      %5309 = vmatprep.mubr.bf16.mxu0 %v5165
      %5310 = vmatmul.mubr.bf16.gmra.mxu0 %v4838
      %v5311 = vpop.f32.mrf.mxu0
      %v5312 = vadd.f32 0.0, %v5311
      %v5313 = vpop.f32.mrf.mxu0
      %v5314 = vpop.f32.mrf.mxu0
      %v5315 = vpop.f32.mrf.mxu0
      %5316 = vdwg.mxu0
      %v5377 = vunpack.c.l.b16 %v4707
      %v5378 = vunpack.c.h.b16 %v4707
      %v5379 = vunpack.c.l.b16 %v4708
      %v5380 = vunpack.c.h.b16 %v4708
      %v5381 = vunpack.c.l.b16 %v4709
      %v5382 = vunpack.c.l.b16 %v4710
      %v5383 = vunpack.c.h.b16 %v4710
      %v5384 = vunpack.c.l.b16 %v4711
      %v5385 = vunpack.c.h.b16 %v4711
      %v5386 = vunpack.c.l.b16 %v4712
      %v5387 = vunpack.c.l.b16 %v4713
      %v5388 = vunpack.c.h.b16 %v4713
      %v5389 = vunpack.c.l.b16 %v4714
      %v5390 = vunpack.c.h.b16 %v4714
      %v5391 = vunpack.c.l.b16 %v4715
      %v5392 = vunpack.c.l.b16 %v4716
      %v5393 = vunpack.c.h.b16 %v4716
      %v5394 = vunpack.c.l.b16 %v4717
      %v5395 = vunpack.c.h.b16 %v4717
      %v5396 = vunpack.c.l.b16 %v4718
      %v5397 = vunpack.c.l.b16 %v4719
      %v5398 = vunpack.c.h.b16 %v4719
      %v5399 = vunpack.c.l.b16 %v4720
      %v5400 = vunpack.c.h.b16 %v4720
      %v5401 = vunpack.c.l.b16 %v4721
      %v5402 = vunpack.c.l.b16 %v4722
      %v5403 = vunpack.c.h.b16 %v4722
      %v5404 = vunpack.c.l.b16 %v4723
      %v5405 = vunpack.c.h.b16 %v4723
      %v5406 = vunpack.c.l.b16 %v4724
      %v5407 = vunpack.c.l.b16 %v4725
      %v5408 = vunpack.c.h.b16 %v4725
      %v5409 = vunpack.c.l.b16 %v4726
      %v5410 = vunpack.c.h.b16 %v4726
      %v5411 = vunpack.c.l.b16 %v4727
      %v5412 = vunpack.c.l.b16 %v4728
      %v5413 = vunpack.c.h.b16 %v4728
      %v5414 = vunpack.c.l.b16 %v4729
      %v5415 = vunpack.c.h.b16 %v4729
      %v5416 = vunpack.c.l.b16 %v4730
      %v5417 = vunpack.c.l.b16 %v4731
      %v5418 = vunpack.c.h.b16 %v4731
      %v5419 = vunpack.c.l.b16 %v4732
      %v5420 = vunpack.c.h.b16 %v4732
      %v5421 = vunpack.c.l.b16 %v4733
      %v5422 = vunpack.c.l.b16 %v4734
      %v5423 = vunpack.c.h.b16 %v4734
      %v5424 = vunpack.c.l.b16 %v4735
      %v5425 = vunpack.c.h.b16 %v4735
      %v5426 = vunpack.c.l.b16 %v4736
      %v5427 = vunpack.c.l.b16 %v4737
      %v5428 = vunpack.c.h.b16 %v4737
      %v5429 = vunpack.c.l.b16 %v4738
      %v5430 = vunpack.c.h.b16 %v4738
      %v5431 = vunpack.c.l.b16 %v4739
      %v5432 = vunpack.c.l.b16 %v4740
      %v5433 = vunpack.c.h.b16 %v4740
      %v5434 = vunpack.c.l.b16 %v4741
      %v5435 = vunpack.c.h.b16 %v4741
      %v5436 = vunpack.c.l.b16 %v4742
      %v5437 = vunpack.c.l.b16 %v4743
      %v5438 = vunpack.c.h.b16 %v4743
      %v5439 = vunpack.c.l.b16 %v4744
      %v5440 = vunpack.c.h.b16 %v4744
      %v5441 = vunpack.c.l.b16 %v4745
      %v5442 = vunpack.c.l.b16 %v4746
      %v5443 = vunpack.c.h.b16 %v4746
      %v5444 = vunpack.c.l.b16 %v4747
      %v5445 = vunpack.c.h.b16 %v4747
      %v5446 = vunpack.c.l.b16 %v4748
      %v5447 = vunpack.c.l.b16 %v4749
      %v5448 = vunpack.c.h.b16 %v4749
      %v5449 = vunpack.c.l.b16 %v4750
      %v5450 = vunpack.c.h.b16 %v4750
      %v5451 = vunpack.c.l.b16 %v4751
      %v5452 = vunpack.c.l.b16 %v4752
      %v5453 = vunpack.c.h.b16 %v4752
      %v5454 = vunpack.c.l.b16 %v4753
      %v5455 = vunpack.c.h.b16 %v4753
      %v5456 = vunpack.c.l.b16 %v4754
      %v5457 = vunpack.c.l.b16 %v4755
      %v5458 = vunpack.c.h.b16 %v4755
      %v5459 = vunpack.c.l.b16 %v4756
      %v5460 = vunpack.c.h.b16 %v4756
      %v5461 = vunpack.c.l.b16 %v4757
      %v5462 = vunpack.c.l.b16 %v4758
      %v5463 = vunpack.c.h.b16 %v4758
      %v5464 = vunpack.c.l.b16 %v4759
      %v5465 = vunpack.c.h.b16 %v4759
      %v5466 = vunpack.c.l.b16 %v4760
      %v5467 = vunpack.c.l.b16 %v4761
      %v5468 = vunpack.c.h.b16 %v4761
      %v5469 = vunpack.c.l.b16 %v4762
      %v5470 = vunpack.c.h.b16 %v4762
      %v5471 = vunpack.c.l.b16 %v4763
      %v5472 = vunpack.c.l.b16 %v4764
      %v5473 = vunpack.c.h.b16 %v4764
      %v5474 = vunpack.c.l.b16 %v4765
      %v5475 = vunpack.c.h.b16 %v4765
      %v5476 = vunpack.c.l.b16 %v4766
      %v5477 = vpack.c.b16 %v5382, %v5377
      %v5478 = vpack.c.b16 %v5383, %v5378
      %v5479 = vpack.c.b16 %v5384, %v5379
      %v5480 = vpack.c.b16 %v5385, %v5380
      %v5481 = vpack.c.b16 %v5386, %v5381
      %v5482 = vpack.c.b16 %v5392, %v5387
      %v5483 = vpack.c.b16 %v5393, %v5388
      %v5484 = vpack.c.b16 %v5394, %v5389
      %v5485 = vpack.c.b16 %v5395, %v5390
      %v5486 = vpack.c.b16 %v5396, %v5391
      %v5487 = vpack.c.b16 %v5402, %v5397
      %v5488 = vpack.c.b16 %v5403, %v5398
      %v5489 = vpack.c.b16 %v5404, %v5399
      %v5490 = vpack.c.b16 %v5405, %v5400
      %v5491 = vpack.c.b16 %v5406, %v5401
      %v5492 = vpack.c.b16 %v5412, %v5407
      %v5493 = vpack.c.b16 %v5413, %v5408
      %v5494 = vpack.c.b16 %v5414, %v5409
      %v5495 = vpack.c.b16 %v5415, %v5410
      %v5496 = vpack.c.b16 %v5416, %v5411
      %v5497 = vpack.c.b16 %v5422, %v5417
      %v5498 = vpack.c.b16 %v5423, %v5418
      %v5499 = vpack.c.b16 %v5424, %v5419
      %v5500 = vpack.c.b16 %v5425, %v5420
      %v5501 = vpack.c.b16 %v5426, %v5421
      %v5502 = vpack.c.b16 %v5432, %v5427
      %v5503 = vpack.c.b16 %v5433, %v5428
      %v5504 = vpack.c.b16 %v5434, %v5429
      %v5505 = vpack.c.b16 %v5435, %v5430
      %v5506 = vpack.c.b16 %v5436, %v5431
      %v5507 = vpack.c.b16 %v5442, %v5437
      %v5508 = vpack.c.b16 %v5443, %v5438
      %v5509 = vpack.c.b16 %v5444, %v5439
      %v5510 = vpack.c.b16 %v5445, %v5440
      %v5511 = vpack.c.b16 %v5446, %v5441
      %v5512 = vpack.c.b16 %v5452, %v5447
      %v5513 = vpack.c.b16 %v5453, %v5448
      %v5514 = vpack.c.b16 %v5454, %v5449
      %v5515 = vpack.c.b16 %v5455, %v5450
      %v5516 = vpack.c.b16 %v5456, %v5451
      %v5517 = vpack.c.b16 %v5462, %v5457
      %v5518 = vpack.c.b16 %v5463, %v5458
      %v5519 = vpack.c.b16 %v5464, %v5459
      %v5520 = vpack.c.b16 %v5465, %v5460
      %v5521 = vpack.c.b16 %v5466, %v5461
      %v5522 = vpack.c.b16 %v5472, %v5467
      %v5523 = vpack.c.b16 %v5473, %v5468
      %v5524 = vpack.c.b16 %v5474, %v5469
      %v5525 = vpack.c.b16 %v5475, %v5470
      %v5526 = vpack.c.b16 %v5476, %v5471
      %v5578 = vsel %vm3917, %v4704, 0
      %v5581 = vsel %vm3917, %v4706, 0
      %5583 = vmatprep.subr.bf16.mxu0 %v5513
      %5584 = vmatpush1.bf16.msra.mxu0 %v5512
      %5585 = vmatprep.subr.bf16.mxu0 %v5508
      %5586 = vmatpush1.bf16.msra.mxu0 %v5507
      %5587 = vmatprep.subr.bf16.mxu0 %v5503
      %5588 = vmatpush1.bf16.msra.mxu0 %v5502
      %5589 = vmatprep.subr.bf16.mxu0 %v5498
      %5590 = vmatpush1.bf16.msra.mxu0 %v5497
      %5591 = vmatprep.subr.bf16.mxu0 %v5493
      %5592 = vmatpush1.bf16.msra.mxu0 %v5492
      %5593 = vmatprep.subr.bf16.mxu0 %v5488
      %5594 = vmatpush1.bf16.msra.mxu0 %v5487
      %5595 = vmatprep.subr.bf16.mxu0 %v5483
      %5596 = vmatpush1.bf16.msra.mxu0 %v5482
      %5597 = vmatprep.subr.bf16.mxu0 %v5478
      %5598 = vmatpush1.bf16.msra.mxu0 %v5477
      %5599 = vmatprep.subr.bf16.mxu0 0
      %5600 = vmatpush2.bf16.msra.mxu0 0
      %5601 = vmatprep.subr.bf16.mxu0 0
      %5602 = vmatpush2.bf16.msra.mxu0 0
      %5603 = vmatprep.subr.bf16.mxu0 0
      %5604 = vmatpush2.bf16.msra.mxu0 0
      %5605 = vmatprep.subr.bf16.mxu0 0
      %5606 = vmatpush2.bf16.msra.mxu0 0
      %5607 = vmatprep.subr.bf16.mxu0 0
      %5608 = vmatpush2.bf16.msra.mxu0 0
      %5609 = vmatprep.subr.bf16.mxu0 0
      %5610 = vmatpush2.bf16.msra.mxu0 0
      %5611 = vmatprep.subr.bf16.mxu0 %v5523
      %5612 = vmatpush2.bf16.msra.mxu0 %v5522
      %5613 = vmatprep.subr.bf16.mxu0 %v5518
      %5614 = vmatpush2.bf16.msra.mxu0 %v5517
      %5615 = vmatprep.mubr.bf16.mxu0 %v5578
      %5616 = vmatmul.mubr.bf16.gmra.mxu0 %v4703
      %v5617 = vpop.f32.mrf.mxu0
      %v5618 = vadd.f32 %v5202, %v5617
      %v5619 = vpop.f32.mrf.mxu0
      %v5620 = vadd.f32 %v5204, %v5619
      %v5621 = vpop.f32.mrf.mxu0
      %v5622 = vadd.f32 %v5206, %v5621
      %v5623 = vpop.f32.mrf.mxu0
      %v5624 = vadd.f32 %v5208, %v5623
      %5625 = vmatprep.mubr.bf16.mxu0 %v5581
      %5626 = vmatmul.mubr.bf16.gmra.mxu0 %v4705
      %v5627 = vpop.f32.mrf.mxu0
      %v5628 = vadd.f32 %v5212, %v5627
      %v5629 = vpop.f32.mrf.mxu0
      %v5630 = vadd.f32 %v5214, %v5629
      %v5631 = vpop.f32.mrf.mxu0
      %v5632 = vpop.f32.mrf.mxu0
      %5633 = vdwg.mxu0
      %5634 = vmatprep.subr.bf16.mxu0 %v5515
      %5635 = vmatpush1.bf16.msra.mxu0 %v5514
      %5636 = vmatprep.subr.bf16.mxu0 %v5510
      %5637 = vmatpush1.bf16.msra.mxu0 %v5509
      %5638 = vmatprep.subr.bf16.mxu0 %v5505
      %5639 = vmatpush1.bf16.msra.mxu0 %v5504
      %5640 = vmatprep.subr.bf16.mxu0 %v5500
      %5641 = vmatpush1.bf16.msra.mxu0 %v5499
      %5642 = vmatprep.subr.bf16.mxu0 %v5495
      %5643 = vmatpush1.bf16.msra.mxu0 %v5494
      %5644 = vmatprep.subr.bf16.mxu0 %v5490
      %5645 = vmatpush1.bf16.msra.mxu0 %v5489
      %5646 = vmatprep.subr.bf16.mxu0 %v5485
      %5647 = vmatpush1.bf16.msra.mxu0 %v5484
      %5648 = vmatprep.subr.bf16.mxu0 %v5480
      %5649 = vmatpush1.bf16.msra.mxu0 %v5479
      %5650 = vmatprep.subr.bf16.mxu0 0
      %5651 = vmatpush2.bf16.msra.mxu0 0
      %5652 = vmatprep.subr.bf16.mxu0 0
      %5653 = vmatpush2.bf16.msra.mxu0 0
      %5654 = vmatprep.subr.bf16.mxu0 0
      %5655 = vmatpush2.bf16.msra.mxu0 0
      %5656 = vmatprep.subr.bf16.mxu0 0
      %5657 = vmatpush2.bf16.msra.mxu0 0
      %5658 = vmatprep.subr.bf16.mxu0 0
      %5659 = vmatpush2.bf16.msra.mxu0 0
      %5660 = vmatprep.subr.bf16.mxu0 0
      %5661 = vmatpush2.bf16.msra.mxu0 0
      %5662 = vmatprep.subr.bf16.mxu0 %v5525
      %5663 = vmatpush2.bf16.msra.mxu0 %v5524
      %5664 = vmatprep.subr.bf16.mxu0 %v5520
      %5665 = vmatpush2.bf16.msra.mxu0 %v5519
      %5666 = vmatprep.mubr.bf16.mxu0 %v5578
      %5667 = vmatmul.mubr.bf16.gmra.mxu0 %v4703
      %v5668 = vpop.f32.mrf.mxu0
      %v5669 = vadd.f32 %v5253, %v5668
      %v5670 = vpop.f32.mrf.mxu0
      %v5671 = vadd.f32 %v5255, %v5670
      %v5672 = vpop.f32.mrf.mxu0
      %v5673 = vadd.f32 %v5257, %v5672
      %v5674 = vpop.f32.mrf.mxu0
      %v5675 = vadd.f32 %v5259, %v5674
      %5676 = vmatprep.mubr.bf16.mxu0 %v5581
      %5677 = vmatmul.mubr.bf16.gmra.mxu0 %v4705
      %v5678 = vpop.f32.mrf.mxu0
      %v5679 = vadd.f32 %v5263, %v5678
      %v5680 = vpop.f32.mrf.mxu0
      %v5681 = vadd.f32 %v5265, %v5680
      %v5682 = vpop.f32.mrf.mxu0
      %v5683 = vpop.f32.mrf.mxu0
      %5684 = vdwg.mxu0
      %5685 = vmatprep.subr.bf16.mxu0 0
      %5686 = vmatpush1.bf16.msra.mxu0 %v5516
      %5687 = vmatprep.subr.bf16.mxu0 0
      %5688 = vmatpush1.bf16.msra.mxu0 %v5511
      %5689 = vmatprep.subr.bf16.mxu0 0
      %5690 = vmatpush1.bf16.msra.mxu0 %v5506
      %5691 = vmatprep.subr.bf16.mxu0 0
      %5692 = vmatpush1.bf16.msra.mxu0 %v5501
      %5693 = vmatprep.subr.bf16.mxu0 0
      %5694 = vmatpush1.bf16.msra.mxu0 %v5496
      %5695 = vmatprep.subr.bf16.mxu0 0
      %5696 = vmatpush1.bf16.msra.mxu0 %v5491
      %5697 = vmatprep.subr.bf16.mxu0 0
      %5698 = vmatpush1.bf16.msra.mxu0 %v5486
      %5699 = vmatprep.subr.bf16.mxu0 0
      %5700 = vmatpush1.bf16.msra.mxu0 %v5481
      %5701 = vmatprep.subr.bf16.mxu0 0
      %5702 = vmatpush2.bf16.msra.mxu0 0
      %5703 = vmatprep.subr.bf16.mxu0 0
      %5704 = vmatpush2.bf16.msra.mxu0 0
      %5705 = vmatprep.subr.bf16.mxu0 0
      %5706 = vmatpush2.bf16.msra.mxu0 0
      %5707 = vmatprep.subr.bf16.mxu0 0
      %5708 = vmatpush2.bf16.msra.mxu0 0
      %5709 = vmatprep.subr.bf16.mxu0 0
      %5710 = vmatpush2.bf16.msra.mxu0 0
      %5711 = vmatprep.subr.bf16.mxu0 0
      %5712 = vmatpush2.bf16.msra.mxu0 0
      %5713 = vmatprep.subr.bf16.mxu0 0
      %5714 = vmatpush2.bf16.msra.mxu0 %v5526
      %5715 = vmatprep.subr.bf16.mxu0 0
      %5716 = vmatpush2.bf16.msra.mxu0 %v5521
      %5717 = vmatprep.mubr.bf16.mxu0 %v5578
      %5718 = vmatmul.mubr.bf16.gmra.mxu0 %v4703
      %v5719 = vpop.f32.mrf.mxu0
      %v5720 = vadd.f32 %v5304, %v5719
      %v5721 = vpop.f32.mrf.mxu0
      %v5722 = vpop.f32.mrf.mxu0
      %v5723 = vadd.f32 %v5307, %v5722
      %v5724 = vpop.f32.mrf.mxu0
      %5725 = vmatprep.mubr.bf16.mxu0 %v5581
      %5726 = vmatmul.mubr.bf16.gmra.mxu0 %v4705
      %v5727 = vpop.f32.mrf.mxu0
      %v5728 = vadd.f32 %v5312, %v5727
      %v5729 = vpop.f32.mrf.mxu0
      %v5730 = vpop.f32.mrf.mxu0
      %v5731 = vpop.f32.mrf.mxu0
      %5732 = vdwg.mxu0
      %v5733 = vld [vmem:[%s55] sm:$0x1f]
      %v5735 = vlaneseq
      %v5736 = vshrl.u32 %v5735, 7
      %v5737 = vsub.s32 0, %v5736
      %v5738 = vrot.slane %v5733, %v5737
      %v5739 = vlaneseq
      %v5740 = vshrl.u32 %v5739, 7
      %v5741 = vsub.s32 1, %v5740
      %v5742 = vrot.slane %v5733, %v5741
      %v5743 = vlaneseq
      %v5744 = vshrl.u32 %v5743, 7
      %v5745 = vsub.s32 2, %v5744
      %v5746 = vrot.slane %v5733, %v5745
      %v5747 = vlaneseq
      %v5748 = vshrl.u32 %v5747, 7
      %v5749 = vsub.s32 3, %v5748
      %v5750 = vrot.slane %v5733, %v5749
      %v5751 = vlaneseq
      %v5752 = vshrl.u32 %v5751, 7
      %v5753 = vsub.s32 4, %v5752
      %v5754 = vrot.slane %v5733, %v5753
      %v5760 = vadd.f32 %v5618, %v5738
      %v5761 = vadd.f32 %v5620, %v5742
      %v5762 = vadd.f32 %v5669, %v5746
      %v5763 = vadd.f32 %v5671, %v5750
      %v5764 = vadd.f32 %v5720, %v5754
      %v5765 = vadd.f32 %v5622, %v5738
      %v5766 = vadd.f32 %v5624, %v5742
      %v5767 = vadd.f32 %v5673, %v5746
      %v5768 = vadd.f32 %v5675, %v5750
      %v5769 = vadd.f32 %v5723, %v5754
      %v5770 = vadd.f32 %v5628, %v5738
      %v5771 = vadd.f32 %v5630, %v5742
      %v5772 = vadd.f32 %v5679, %v5746
      %v5773 = vadd.f32 %v5681, %v5750
      %v5774 = vadd.f32 %v5728, %v5754
      %v5775 = vmax.f32 %v5760, 0.0
      %v5776 = vmax.f32 %v5761, 0.0
      %v5777 = vmax.f32 %v5762, 0.0
      %v5778 = vmax.f32 %v5763, 0.0
      %v5779 = vmax.f32 %v5764, 0.0
      %v5780 = vmax.f32 %v5765, 0.0
      %v5781 = vmax.f32 %v5766, 0.0
      %v5782 = vmax.f32 %v5767, 0.0
      %v5783 = vmax.f32 %v5768, 0.0
      %v5784 = vmax.f32 %v5769, 0.0
      %v5785 = vmax.f32 %v5770, 0.0
      %v5786 = vmax.f32 %v5771, 0.0
      %v5787 = vmax.f32 %v5772, 0.0
      %v5788 = vmax.f32 %v5773, 0.0
      %v5789 = vmax.f32 %v5774, 0.0
      %v5790 = vld [vmem:[#allocation4] sm:$0x11]
      %v5791 = vsel %vm2620, 0, %v5790
      %5792 = vst [vmem:[#allocation4] sm:$0x11] %v5791
      %v5793 = vld [vmem:[#allocation4 + $0x8] sm:$0x11]
      %v5794 = vsel %vm2620, 0, %v5793
      %5795 = vst [vmem:[#allocation4 + $0x8] sm:$0x11] %v5794
      %v5796 = vld [vmem:[#allocation4 + $0x10] sm:$0x1]
      %v5797 = vsel %vm2616, 0, %v5796
      %5798 = vst [vmem:[#allocation4 + $0x10] sm:$0x1] %v5797
      %vm5799 = vcmask 1042434
      %vm5800 = vmand %vm5799, %vm3527
      %vm5801 = vcmask 1046534
      %vm5802 = vsmask.f32 7962
      %vm5803 = vmand %vm5801, %vm5802
      %vm5804 = vmor %vm5803, %vm5800
      %v5805 = vld [vmem:[#allocation4 + $0x28] sm:$0x44]
      %v5806 = vsel %vm5804, 0, %v5805
      %5807 = vst [vmem:[#allocation4 + $0x28] sm:$0x44] %v5806
      %v5808 = vld [vmem:[#allocation4 + $0x30] sm:$0x44]
      %v5809 = vsel %vm5804, 0, %v5808
      %5810 = vst [vmem:[#allocation4 + $0x30] sm:$0x44] %v5809
      %v5811 = vld [vmem:[#allocation4 + $0x38] sm:$0x4]
      %v5812 = vsel %vm5800, 0, %v5811
      %5813 = vst [vmem:[#allocation4 + $0x38] sm:$0x4] %v5812
      %v5814 = vpack.c.bf16 %v5780, %v5775
      %v5815 = vpack.c.bf16 %v5781, %v5776
      %v5816 = vpack.c.bf16 %v5782, %v5777
      %v5817 = vpack.c.bf16 %v5783, %v5778
      %v5818 = vpack.c.bf16 %v5784, %v5779
      %v5819 = vpack.c.bf16 %v5785, %v5785
      %v5820 = vpack.c.bf16 %v5786, %v5786
      %v5821 = vpack.c.bf16 %v5787, %v5787
      %v5822 = vpack.c.bf16 %v5788, %v5788
      %v5823 = vpack.c.bf16 %v5789, %v5789
      %v5834 = vunpack.c.l.b16 %v5814
      %v5835 = vunpack.c.l.b16 %v5815
      %v5836 = vunpack.c.l.b16 %v5816
      %v5837 = vunpack.c.l.b16 %v5817
      %v5838 = vunpack.c.l.b16 %v5818
      %v5839 = vunpack.c.h.b16 %v5814
      %v5840 = vunpack.c.h.b16 %v5815
      %v5841 = vunpack.c.h.b16 %v5816
      %v5842 = vunpack.c.h.b16 %v5817
      %v5843 = vunpack.c.h.b16 %v5818
      %v5844 = vunpack.c.l.b16 %v5819
      %v5845 = vunpack.c.l.b16 %v5820
      %v5846 = vunpack.c.l.b16 %v5821
      %v5847 = vunpack.c.l.b16 %v5822
      %v5848 = vunpack.c.l.b16 %v5823
      %v5849 = vpack.c.b16 %v5835, %v5834
      %v5850 = vpack.c.b16 %v5837, %v5836
      %v5851 = vpack.c.b16 %v5838, %v5838
      %v5852 = vpack.c.b16 %v5840, %v5839
      %v5853 = vpack.c.b16 %v5842, %v5841
      %v5854 = vpack.c.b16 %v5843, %v5843
      %v5855 = vpack.c.b16 %v5845, %v5844
      %v5856 = vpack.c.b16 %v5847, %v5846
      %v5857 = vpack.c.b16 %v5848, %v5848
      %vm5858 = vsmask.f32 4368
      %vm5859 = vmor %vm2615, %vm5858
      %v5861 = vshrl.u32 %v5849, 16
      %v5863 = vrot.slane %v5861, 7
      %v5864 = vshll.u32 %v5849, 16
      %v5866 = vor.u32 %v5863, %v5864
      %v5868 = vshrl.u32 %v5850, 16
      %v5870 = vrot.slane %v5868, 7
      %v5871 = vshll.u32 %v5850, 16
      %v5873 = vor.u32 %v5870, %v5871
      %v5875 = vshrl.u32 %v5851, 16
      %v5877 = vrot.slane %v5875, 7
      %v5878 = vshll.u32 %v5851, 16
      %v5880 = vor.u32 %v5877, %v5878
      %v5881 = vrot.slane %v5863, 4
      %v5883 = vshrl.u32 %v5852, 16
      %v5885 = vrot.slane %v5883, 7
      %v5886 = vshll.u32 %v5852, 16
      %v5888 = vor.u32 %v5885, %v5886
      %v5889 = vsel %vm5859, %v5881, %v5888
      %v5890 = vrot.slane %v5870, 4
      %v5892 = vshrl.u32 %v5853, 16
      %v5894 = vrot.slane %v5892, 7
      %v5895 = vshll.u32 %v5853, 16
      %v5897 = vor.u32 %v5894, %v5895
      %v5898 = vsel %vm5859, %v5890, %v5897
      %v5899 = vrot.slane %v5877, 4
      %v5901 = vshrl.u32 %v5854, 16
      %v5903 = vrot.slane %v5901, 7
      %v5904 = vshll.u32 %v5854, 16
      %v5906 = vor.u32 %v5903, %v5904
      %v5907 = vsel %vm5859, %v5899, %v5906
      %v5908 = vrot.slane %v5885, 4
      %v5910 = vshrl.u32 %v5855, 16
      %v5912 = vrot.slane %v5910, 7
      %v5913 = vshll.u32 %v5855, 16
      %v5915 = vor.u32 %v5912, %v5913
      %v5916 = vsel %vm5859, %v5908, %v5915
      %v5917 = vrot.slane %v5894, 4
      %v5919 = vshrl.u32 %v5856, 16
      %v5921 = vrot.slane %v5919, 7
      %v5922 = vshll.u32 %v5856, 16
      %v5924 = vor.u32 %v5921, %v5922
      %v5925 = vsel %vm5859, %v5917, %v5924
      %v5926 = vrot.slane %v5903, 4
      %v5928 = vshrl.u32 %v5857, 16
      %v5930 = vrot.slane %v5928, 7
      %v5931 = vshll.u32 %v5857, 16
      %v5933 = vor.u32 %v5930, %v5931
      %v5934 = vsel %vm5859, %v5926, %v5933
      %v5944 = vld [vmem:[#allocation4] sm:$0xff]
      %v5945 = vsel %vm2653, %v5866, %v5944
      %5946 = vst [vmem:[#allocation4] sm:$0xff] %v5945
      %v5947 = vld [vmem:[#allocation4 + $0x8] sm:$0xff]
      %v5948 = vsel %vm2653, %v5873, %v5947
      %5949 = vst [vmem:[#allocation4 + $0x8] sm:$0xff] %v5948
      %v5950 = vld [vmem:[#allocation4 + $0x10] sm:$0xf]
      %v5951 = vsel %vm2650, %v5880, %v5950
      %5952 = vst [vmem:[#allocation4 + $0x10] sm:$0xf] %v5951
      %5953 = vst [vmem:[#allocation4 + $0x14] sm:$0xff] %v5889
      %5954 = vst [vmem:[#allocation4 + $0x1c] sm:$0xff] %v5898
      %5955 = vst [vmem:[#allocation4 + $0x24] sm:$0xf] %v5907
      %vm5956 = vcmask 1042432
      %vm5957 = vsmask.f32 2304
      %vm5958 = vmand %vm5956, %vm5957
      %vm5959 = vcmask 1046532
      %vm5960 = vsmask.f32 6400
      %vm5961 = vmand %vm5959, %vm5960
      %vm5962 = vmor %vm5961, %vm5958
      %v5963 = vld [vmem:[#allocation4 + $0x28] sm:$0x77]
      %v5964 = vsel %vm5962, %v5916, %v5963
      %5965 = vst [vmem:[#allocation4 + $0x28] sm:$0x77] %v5964
      %v5966 = vld [vmem:[#allocation4 + $0x30] sm:$0x77]
      %v5967 = vsel %vm5962, %v5925, %v5966
      %5968 = vst [vmem:[#allocation4 + $0x30] sm:$0x77] %v5967
      %v5969 = vld [vmem:[#allocation4 + $0x38] sm:$0x7]
      %v5970 = vsel %vm5958, %v5934, %v5969
      %5971 = vst [vmem:[#allocation4 + $0x38] sm:$0x7] %v5970
      %v5972 = vld [vmem:[#allocation4] sm:$0xff]
      %v5973 = vld [vmem:[#allocation4 + $0x8] sm:$0xff]
      %v5974 = vld [vmem:[#allocation4 + $0x10] sm:$0xf]
      %v5975 = vld [vmem:[#allocation4 + $0x14] sm:$0xff]
      %v5976 = vld [vmem:[#allocation4 + $0x1c] sm:$0xff]
      %v5977 = vld [vmem:[#allocation4 + $0x24] sm:$0xf]
      %v5978 = vld [vmem:[#allocation4 + $0x28] sm:$0x33]
      %v5979 = vld [vmem:[#allocation4 + $0x30] sm:$0x33]
      %v5980 = vld [vmem:[#allocation4 + $0x38] sm:$0x3]
      %v5981 = vld [vmem:[%s57] sm:$0xf]
      %v5982 = vld [vmem:[%s57 + $0x4] sm:$0xf]
      %v5983 = vld [vmem:[%s57 + $0x8] sm:$0xf]
      %v5984 = vld [vmem:[%s57 + $0xc] sm:$0xf]
      %v5985 = vld [vmem:[%s57 + $0x10] sm:$0xf]
      %v5986 = vld [vmem:[%s57 + $0x14] sm:$0xf]
      %v5987 = vld [vmem:[%s57 + $0x18] sm:$0xf]
      %v5988 = vld [vmem:[%s57 + $0x1c] sm:$0xf]
      %v5989 = vld [vmem:[%s57 + $0x20] sm:$0xf]
      %v5990 = vld [vmem:[%s57 + $0x24] sm:$0xf]
      %v5991 = vld [vmem:[%s57 + $0x28] sm:$0xf]
      %v5992 = vld [vmem:[%s57 + $0x2c] sm:$0xf]
      %v5993 = vld [vmem:[%s57 + $0x30] sm:$0xf]
      %v5994 = vld [vmem:[%s57 + $0x34] sm:$0xf]
      %v5995 = vld [vmem:[%s57 + $0x38] sm:$0xf]
      %v5996 = vld [vmem:[%s57 + $0x3c] sm:$0xf]
      %v5997 = vld [vmem:[%s57 + $0x40] sm:$0xf]
      %v5998 = vld [vmem:[%s57 + $0x44] sm:$0xf]
      %v5999 = vld [vmem:[%s57 + $0x48] sm:$0xf]
      %v6000 = vld [vmem:[%s57 + $0x4c] sm:$0xf]
      %v6001 = vld [vmem:[%s57 + $0x50] sm:$0xf]
      %v6002 = vld [vmem:[%s57 + $0x54] sm:$0xf]
      %v6003 = vld [vmem:[%s57 + $0x58] sm:$0xf]
      %v6004 = vld [vmem:[%s57 + $0x5c] sm:$0xf]
      %v6005 = vld [vmem:[%s57 + $0x60] sm:$0xf]
      %v6006 = vld [vmem:[%s57 + $0x64] sm:$0xf]
      %v6007 = vld [vmem:[%s57 + $0x68] sm:$0xf]
      %v6008 = vld [vmem:[%s57 + $0x6c] sm:$0xf]
      %v6009 = vld [vmem:[%s57 + $0x70] sm:$0xf]
      %v6010 = vld [vmem:[%s57 + $0x74] sm:$0xf]
      %v6011 = vld [vmem:[%s57 + $0x78] sm:$0xf]
      %v6012 = vld [vmem:[%s57 + $0x7c] sm:$0xf]
      %v6013 = vld [vmem:[%s57 + $0x80] sm:$0xf]
      %v6014 = vld [vmem:[%s57 + $0x84] sm:$0xf]
      %v6015 = vld [vmem:[%s57 + $0x88] sm:$0xf]
      %v6016 = vld [vmem:[%s57 + $0x8c] sm:$0xf]
      %v6017 = vld [vmem:[%s57 + $0x90] sm:$0xf]
      %v6018 = vld [vmem:[%s57 + $0x94] sm:$0xf]
      %v6019 = vld [vmem:[%s57 + $0x98] sm:$0xf]
      %v6020 = vld [vmem:[%s57 + $0x9c] sm:$0xf]
      %v6021 = vld [vmem:[%s57 + $0xa0] sm:$0xf]
      %v6022 = vld [vmem:[%s57 + $0xa4] sm:$0xf]
      %v6023 = vld [vmem:[%s57 + $0xa8] sm:$0xf]
      %v6024 = vld [vmem:[%s57 + $0xac] sm:$0xf]
      %v6025 = vld [vmem:[%s57 + $0xb0] sm:$0xf]
      %v6026 = vld [vmem:[%s57 + $0xb4] sm:$0xf]
      %v6027 = vld [vmem:[%s57 + $0xb8] sm:$0xf]
      %v6028 = vld [vmem:[%s57 + $0xbc] sm:$0xf]
      %v6029 = vld [vmem:[%s57 + $0xc0] sm:$0xf]
      %v6030 = vld [vmem:[%s57 + $0xc4] sm:$0xf]
      %v6031 = vld [vmem:[%s57 + $0xc8] sm:$0xf]
      %v6032 = vld [vmem:[%s57 + $0xcc] sm:$0xf]
      %v6033 = vld [vmem:[%s57 + $0xd0] sm:$0xf]
      %v6034 = vld [vmem:[%s57 + $0xd4] sm:$0xf]
      %v6035 = vld [vmem:[%s57 + $0xd8] sm:$0xf]
      %v6036 = vld [vmem:[%s57 + $0xdc] sm:$0xf]
      %v6037 = vld [vmem:[%s57 + $0xe0] sm:$0xf]
      %v6038 = vld [vmem:[%s57 + $0xe4] sm:$0xf]
      %v6039 = vld [vmem:[%s57 + $0xe8] sm:$0xf]
      %v6040 = vld [vmem:[%s57 + $0xec] sm:$0xf]
      %v6041 = vld [vmem:[%s57 + $0xf0] sm:$0xf]
      %v6042 = vld [vmem:[%s57 + $0xf4] sm:$0xf]
      %v6043 = vld [vmem:[%s57 + $0xf8] sm:$0xf]
      %v6044 = vld [vmem:[%s57 + $0xfc] sm:$0xf]
      %v6045 = vld [vmem:[%s57 + $0x100] sm:$0xf]
      %v6046 = vld [vmem:[%s57 + $0x104] sm:$0xf]
      %v6047 = vld [vmem:[%s57 + $0x108] sm:$0xf]
      %v6048 = vld [vmem:[%s57 + $0x10c] sm:$0xf]
      %v6049 = vld [vmem:[%s57 + $0x110] sm:$0xf]
      %v6050 = vld [vmem:[%s57 + $0x114] sm:$0xf]
      %v6051 = vld [vmem:[%s57 + $0x118] sm:$0xf]
      %v6052 = vld [vmem:[%s57 + $0x11c] sm:$0xf]
      %v6053 = vld [vmem:[%s57 + $0x120] sm:$0xf]
      %v6054 = vld [vmem:[%s57 + $0x124] sm:$0xf]
      %v6055 = vld [vmem:[%s57 + $0x128] sm:$0xf]
      %v6056 = vld [vmem:[%s57 + $0x12c] sm:$0xf]
      %v6057 = vld [vmem:[%s57 + $0x130] sm:$0xf]
      %v6058 = vld [vmem:[%s57 + $0x134] sm:$0xf]
      %v6059 = vld [vmem:[%s57 + $0x138] sm:$0xf]
      %v6060 = vld [vmem:[%s57 + $0x13c] sm:$0xf]
      %v6061 = vld [vmem:[#allocation4 + $0x28] sm:$0x77]
      %v6062 = vld [vmem:[#allocation4 + $0x30] sm:$0x77]
      %v6063 = vld [vmem:[#allocation4 + $0x38] sm:$0x7]
      %s6064 = scalar_lea.vmem %s57, 320
      %v6065 = vld [vmem:[%s6064] sm:$0xf]
      %v6066 = vld [vmem:[%s6064 + $0x4] sm:$0xf]
      %v6067 = vld [vmem:[%s6064 + $0x8] sm:$0xf]
      %v6068 = vld [vmem:[%s6064 + $0xc] sm:$0xf]
      %v6069 = vld [vmem:[%s6064 + $0x10] sm:$0xf]
      %v6070 = vld [vmem:[%s6064 + $0x14] sm:$0xf]
      %v6071 = vld [vmem:[%s6064 + $0x18] sm:$0xf]
      %v6072 = vld [vmem:[%s6064 + $0x1c] sm:$0xf]
      %v6073 = vld [vmem:[%s6064 + $0x20] sm:$0xf]
      %v6074 = vld [vmem:[%s6064 + $0x24] sm:$0xf]
      %v6075 = vld [vmem:[%s6064 + $0x28] sm:$0xf]
      %v6076 = vld [vmem:[%s6064 + $0x2c] sm:$0xf]
      %v6077 = vld [vmem:[%s6064 + $0x30] sm:$0xf]
      %v6078 = vld [vmem:[%s6064 + $0x34] sm:$0xf]
      %v6079 = vld [vmem:[%s6064 + $0x38] sm:$0xf]
      %v6080 = vld [vmem:[%s6064 + $0x3c] sm:$0xf]
      %v6081 = vld [vmem:[%s6064 + $0x40] sm:$0xf]
      %v6082 = vld [vmem:[%s6064 + $0x44] sm:$0xf]
      %v6083 = vld [vmem:[%s6064 + $0x48] sm:$0xf]
      %v6084 = vld [vmem:[%s6064 + $0x4c] sm:$0xf]
      %v6085 = vld [vmem:[%s6064 + $0x50] sm:$0xf]
      %v6086 = vld [vmem:[%s6064 + $0x54] sm:$0xf]
      %v6087 = vld [vmem:[%s6064 + $0x58] sm:$0xf]
      %v6088 = vld [vmem:[%s6064 + $0x5c] sm:$0xf]
      %v6089 = vld [vmem:[%s6064 + $0x60] sm:$0xf]
      %v6090 = vld [vmem:[%s6064 + $0x64] sm:$0xf]
      %v6091 = vld [vmem:[%s6064 + $0x68] sm:$0xf]
      %v6092 = vld [vmem:[%s6064 + $0x6c] sm:$0xf]
      %v6093 = vld [vmem:[%s6064 + $0x70] sm:$0xf]
      %v6094 = vld [vmem:[%s6064 + $0x74] sm:$0xf]
      %v6095 = vld [vmem:[%s6064 + $0x78] sm:$0xf]
      %v6096 = vld [vmem:[%s6064 + $0x7c] sm:$0xf]
      %v6097 = vld [vmem:[%s6064 + $0x80] sm:$0xf]
      %v6098 = vld [vmem:[%s6064 + $0x84] sm:$0xf]
      %v6099 = vld [vmem:[%s6064 + $0x88] sm:$0xf]
      %v6100 = vld [vmem:[%s6064 + $0x8c] sm:$0xf]
      %v6101 = vld [vmem:[%s6064 + $0x90] sm:$0xf]
      %v6102 = vld [vmem:[%s6064 + $0x94] sm:$0xf]
      %v6103 = vld [vmem:[%s6064 + $0x98] sm:$0xf]
      %v6104 = vld [vmem:[%s6064 + $0x9c] sm:$0xf]
      %v6105 = vld [vmem:[%s6064 + $0xa0] sm:$0xf]
      %v6106 = vld [vmem:[%s6064 + $0xa4] sm:$0xf]
      %v6107 = vld [vmem:[%s6064 + $0xa8] sm:$0xf]
      %v6108 = vld [vmem:[%s6064 + $0xac] sm:$0xf]
      %v6109 = vld [vmem:[%s6064 + $0xb0] sm:$0xf]
      %v6110 = vld [vmem:[%s6064 + $0xb4] sm:$0xf]
      %v6111 = vld [vmem:[%s6064 + $0xb8] sm:$0xf]
      %v6112 = vld [vmem:[%s6064 + $0xbc] sm:$0xf]
      %v6113 = vld [vmem:[%s6064 + $0xc0] sm:$0xf]
      %v6114 = vld [vmem:[%s6064 + $0xc4] sm:$0xf]
      %v6115 = vld [vmem:[%s6064 + $0xc8] sm:$0xf]
      %v6116 = vld [vmem:[%s6064 + $0xcc] sm:$0xf]
      %v6117 = vld [vmem:[%s6064 + $0xd0] sm:$0xf]
      %v6118 = vld [vmem:[%s6064 + $0xd4] sm:$0xf]
      %v6119 = vld [vmem:[%s6064 + $0xd8] sm:$0xf]
      %v6120 = vld [vmem:[%s6064 + $0xdc] sm:$0xf]
      %v6121 = vld [vmem:[%s6064 + $0xe0] sm:$0xf]
      %v6122 = vld [vmem:[%s6064 + $0xe4] sm:$0xf]
      %v6123 = vld [vmem:[%s6064 + $0xe8] sm:$0xf]
      %v6124 = vld [vmem:[%s6064 + $0xec] sm:$0xf]
      %v6125 = vld [vmem:[%s6064 + $0xf0] sm:$0xf]
      %v6126 = vld [vmem:[%s6064 + $0xf4] sm:$0xf]
      %v6127 = vld [vmem:[%s6064 + $0xf8] sm:$0xf]
      %v6128 = vld [vmem:[%s6064 + $0xfc] sm:$0xf]
      %v6129 = vld [vmem:[%s6064 + $0x100] sm:$0xf]
      %v6130 = vld [vmem:[%s6064 + $0x104] sm:$0xf]
      %v6131 = vld [vmem:[%s6064 + $0x108] sm:$0xf]
      %v6132 = vld [vmem:[%s6064 + $0x10c] sm:$0xf]
      %v6133 = vld [vmem:[%s6064 + $0x110] sm:$0xf]
      %v6134 = vld [vmem:[%s6064 + $0x114] sm:$0xf]
      %v6135 = vld [vmem:[%s6064 + $0x118] sm:$0xf]
      %v6136 = vld [vmem:[%s6064 + $0x11c] sm:$0xf]
      %v6137 = vld [vmem:[%s6064 + $0x120] sm:$0xf]
      %v6138 = vld [vmem:[%s6064 + $0x124] sm:$0xf]
      %v6139 = vld [vmem:[%s6064 + $0x128] sm:$0xf]
      %v6140 = vld [vmem:[%s6064 + $0x12c] sm:$0xf]
      %v6141 = vld [vmem:[%s6064 + $0x130] sm:$0xf]
      %v6142 = vld [vmem:[%s6064 + $0x134] sm:$0xf]
      %v6143 = vld [vmem:[%s6064 + $0x138] sm:$0xf]
      %v6144 = vld [vmem:[%s6064 + $0x13c] sm:$0xf]
      %v6154 = vunpack.c.l.b16 %v5972
      %v6155 = vunpack.c.h.b16 %v5972
      %v6156 = vunpack.c.l.b16 %v5973
      %v6157 = vunpack.c.h.b16 %v5973
      %v6158 = vunpack.c.l.b16 %v5974
      %v6159 = vunpack.c.l.b16 %v5975
      %v6160 = vunpack.c.h.b16 %v5975
      %v6161 = vunpack.c.l.b16 %v5976
      %v6162 = vunpack.c.h.b16 %v5976
      %v6163 = vunpack.c.l.b16 %v5977
      %v6164 = vunpack.c.l.b16 %v6061
      %v6165 = vunpack.c.h.b16 %v6061
      %v6166 = vunpack.c.l.b16 %v6062
      %v6167 = vunpack.c.h.b16 %v6062
      %v6168 = vunpack.c.l.b16 %v6063
      %v6169 = vpack.c.b16 %v6159, %v6154
      %v6170 = vpack.c.b16 %v6160, %v6155
      %v6171 = vpack.c.b16 %v6161, %v6156
      %v6172 = vpack.c.b16 %v6162, %v6157
      %v6173 = vpack.c.b16 %v6163, %v6158
      %v6174 = vpack.c.b16 %v6164, %v6164
      %v6175 = vpack.c.b16 %v6165, %v6165
      %v6176 = vpack.c.b16 %v6166, %v6166
      %v6177 = vpack.c.b16 %v6167, %v6167
      %v6178 = vpack.c.b16 %v6168, %v6168
      %v6180 = vshrl.u32 %v6169, 16
      %v6182 = vshll.u32 %v6169, 16
      %v6184 = vrot.slane %v6182, 1
      %v6185 = vor.u32 %v6180, %v6184
      %v6187 = vshll.u32 %v6174, 16
      %v6189 = vrot.slane %v6187, 1
      %v6190 = vsel %vm968, %v6185, %v6189
      %v6192 = vshrl.u32 %v6170, 16
      %v6194 = vshll.u32 %v6170, 16
      %v6196 = vrot.slane %v6194, 1
      %v6197 = vor.u32 %v6192, %v6196
      %v6199 = vshll.u32 %v6175, 16
      %v6201 = vrot.slane %v6199, 1
      %v6202 = vsel %vm968, %v6197, %v6201
      %v6204 = vshrl.u32 %v6171, 16
      %v6206 = vshll.u32 %v6171, 16
      %v6208 = vrot.slane %v6206, 1
      %v6209 = vor.u32 %v6204, %v6208
      %v6211 = vshll.u32 %v6176, 16
      %v6213 = vrot.slane %v6211, 1
      %v6214 = vsel %vm968, %v6209, %v6213
      %v6216 = vshrl.u32 %v6172, 16
      %v6218 = vshll.u32 %v6172, 16
      %v6220 = vrot.slane %v6218, 1
      %v6221 = vor.u32 %v6216, %v6220
      %v6223 = vshll.u32 %v6177, 16
      %v6225 = vrot.slane %v6223, 1
      %v6226 = vsel %vm968, %v6221, %v6225
      %v6228 = vshrl.u32 %v6173, 16
      %v6230 = vshll.u32 %v6173, 16
      %v6232 = vrot.slane %v6230, 1
      %v6233 = vor.u32 %v6228, %v6232
      %v6235 = vshll.u32 %v6178, 16
      %v6237 = vrot.slane %v6235, 1
      %v6238 = vsel %vm968, %v6233, %v6237
      %v6239 = vshrl.u32 %v6174, 16
      %v6241 = vor.u32 %v6239, %v6189
      %v6242 = vshrl.u32 %v6175, 16
      %v6244 = vor.u32 %v6242, %v6201
      %v6245 = vshrl.u32 %v6176, 16
      %v6247 = vor.u32 %v6245, %v6213
      %v6248 = vshrl.u32 %v6177, 16
      %v6250 = vor.u32 %v6248, %v6225
      %v6251 = vshrl.u32 %v6178, 16
      %v6253 = vor.u32 %v6251, %v6237
      %v6344 = vunpack.c.l.b16 %v6065
      %v6345 = vunpack.c.l.b16 %v6066
      %v6346 = vunpack.c.l.b16 %v6067
      %v6347 = vunpack.c.l.b16 %v6068
      %v6348 = vunpack.c.l.b16 %v6069
      %v6349 = vunpack.c.l.b16 %v6070
      %v6350 = vunpack.c.l.b16 %v6071
      %v6351 = vunpack.c.l.b16 %v6072
      %v6352 = vunpack.c.l.b16 %v6073
      %v6353 = vunpack.c.l.b16 %v6074
      %v6354 = vunpack.c.l.b16 %v6075
      %v6355 = vunpack.c.l.b16 %v6076
      %v6356 = vunpack.c.l.b16 %v6077
      %v6357 = vunpack.c.l.b16 %v6078
      %v6358 = vunpack.c.l.b16 %v6079
      %v6359 = vunpack.c.l.b16 %v6080
      %v6360 = vunpack.c.l.b16 %v6081
      %v6361 = vunpack.c.l.b16 %v6082
      %v6362 = vunpack.c.l.b16 %v6083
      %v6363 = vunpack.c.l.b16 %v6084
      %v6364 = vunpack.c.l.b16 %v6085
      %v6365 = vunpack.c.l.b16 %v6086
      %v6366 = vunpack.c.l.b16 %v6087
      %v6367 = vunpack.c.l.b16 %v6088
      %v6368 = vunpack.c.l.b16 %v6089
      %v6369 = vunpack.c.l.b16 %v6090
      %v6370 = vunpack.c.l.b16 %v6091
      %v6371 = vunpack.c.l.b16 %v6092
      %v6372 = vunpack.c.l.b16 %v6093
      %v6373 = vunpack.c.l.b16 %v6094
      %v6374 = vunpack.c.l.b16 %v6095
      %v6375 = vunpack.c.l.b16 %v6096
      %v6376 = vunpack.c.l.b16 %v6097
      %v6377 = vunpack.c.l.b16 %v6098
      %v6378 = vunpack.c.l.b16 %v6099
      %v6379 = vunpack.c.l.b16 %v6100
      %v6380 = vunpack.c.l.b16 %v6101
      %v6381 = vunpack.c.l.b16 %v6102
      %v6382 = vunpack.c.l.b16 %v6103
      %v6383 = vunpack.c.l.b16 %v6104
      %v6384 = vunpack.c.l.b16 %v6105
      %v6385 = vunpack.c.l.b16 %v6106
      %v6386 = vunpack.c.l.b16 %v6107
      %v6387 = vunpack.c.l.b16 %v6108
      %v6388 = vunpack.c.l.b16 %v6109
      %v6389 = vunpack.c.l.b16 %v6110
      %v6390 = vunpack.c.l.b16 %v6111
      %v6391 = vunpack.c.l.b16 %v6112
      %v6392 = vunpack.c.l.b16 %v6113
      %v6393 = vunpack.c.l.b16 %v6114
      %v6394 = vunpack.c.l.b16 %v6115
      %v6395 = vunpack.c.l.b16 %v6116
      %v6396 = vunpack.c.l.b16 %v6117
      %v6397 = vunpack.c.l.b16 %v6118
      %v6398 = vunpack.c.l.b16 %v6119
      %v6399 = vunpack.c.l.b16 %v6120
      %v6400 = vunpack.c.l.b16 %v6121
      %v6401 = vunpack.c.l.b16 %v6122
      %v6402 = vunpack.c.l.b16 %v6123
      %v6403 = vunpack.c.l.b16 %v6124
      %v6404 = vunpack.c.l.b16 %v6125
      %v6405 = vunpack.c.l.b16 %v6126
      %v6406 = vunpack.c.l.b16 %v6127
      %v6407 = vunpack.c.l.b16 %v6128
      %v6408 = vunpack.c.l.b16 %v6129
      %v6409 = vunpack.c.l.b16 %v6130
      %v6410 = vunpack.c.l.b16 %v6131
      %v6411 = vunpack.c.l.b16 %v6132
      %v6412 = vunpack.c.l.b16 %v6133
      %v6413 = vunpack.c.l.b16 %v6134
      %v6414 = vunpack.c.l.b16 %v6135
      %v6415 = vunpack.c.l.b16 %v6136
      %v6416 = vunpack.c.l.b16 %v6137
      %v6417 = vunpack.c.l.b16 %v6138
      %v6418 = vunpack.c.l.b16 %v6139
      %v6419 = vunpack.c.l.b16 %v6140
      %v6420 = vunpack.c.l.b16 %v6141
      %v6421 = vunpack.c.l.b16 %v6142
      %v6422 = vunpack.c.l.b16 %v6143
      %v6423 = vunpack.c.l.b16 %v6144
      %v6424 = vpack.c.b16 %v6345, %v6344
      %v6425 = vpack.c.b16 %v6347, %v6346
      %v6426 = vpack.c.b16 %v6349, %v6348
      %v6427 = vpack.c.b16 %v6351, %v6350
      %v6428 = vpack.c.b16 %v6353, %v6352
      %v6429 = vpack.c.b16 %v6355, %v6354
      %v6430 = vpack.c.b16 %v6357, %v6356
      %v6431 = vpack.c.b16 %v6359, %v6358
      %v6432 = vpack.c.b16 %v6361, %v6360
      %v6433 = vpack.c.b16 %v6363, %v6362
      %v6434 = vpack.c.b16 %v6365, %v6364
      %v6435 = vpack.c.b16 %v6367, %v6366
      %v6436 = vpack.c.b16 %v6369, %v6368
      %v6437 = vpack.c.b16 %v6371, %v6370
      %v6438 = vpack.c.b16 %v6373, %v6372
      %v6439 = vpack.c.b16 %v6375, %v6374
      %v6440 = vpack.c.b16 %v6377, %v6376
      %v6441 = vpack.c.b16 %v6379, %v6378
      %v6442 = vpack.c.b16 %v6381, %v6380
      %v6443 = vpack.c.b16 %v6383, %v6382
      %v6444 = vpack.c.b16 %v6385, %v6384
      %v6445 = vpack.c.b16 %v6387, %v6386
      %v6446 = vpack.c.b16 %v6389, %v6388
      %v6447 = vpack.c.b16 %v6391, %v6390
      %v6448 = vpack.c.b16 %v6393, %v6392
      %v6449 = vpack.c.b16 %v6395, %v6394
      %v6450 = vpack.c.b16 %v6397, %v6396
      %v6451 = vpack.c.b16 %v6399, %v6398
      %v6452 = vpack.c.b16 %v6401, %v6400
      %v6453 = vpack.c.b16 %v6403, %v6402
      %v6454 = vpack.c.b16 %v6405, %v6404
      %v6455 = vpack.c.b16 %v6407, %v6406
      %v6456 = vpack.c.b16 %v6409, %v6408
      %v6457 = vpack.c.b16 %v6411, %v6410
      %v6458 = vpack.c.b16 %v6413, %v6412
      %v6459 = vpack.c.b16 %v6415, %v6414
      %v6460 = vpack.c.b16 %v6417, %v6416
      %v6461 = vpack.c.b16 %v6419, %v6418
      %v6462 = vpack.c.b16 %v6421, %v6420
      %v6463 = vpack.c.b16 %v6423, %v6422
      %6504 = vmatprep.subr.bf16.mxu0 0
      %6505 = vmatpush1.bf16.msra.mxu0 %v6431
      %6506 = vmatprep.subr.bf16.mxu0 0
      %6507 = vmatpush1.bf16.msra.mxu0 %v6430
      %6508 = vmatprep.subr.bf16.mxu0 0
      %6509 = vmatpush1.bf16.msra.mxu0 %v6429
      %6510 = vmatprep.subr.bf16.mxu0 0
      %6511 = vmatpush1.bf16.msra.mxu0 %v6428
      %6512 = vmatprep.subr.bf16.mxu0 0
      %6513 = vmatpush1.bf16.msra.mxu0 %v6427
      %6514 = vmatprep.subr.bf16.mxu0 0
      %6515 = vmatpush1.bf16.msra.mxu0 %v6426
      %6516 = vmatprep.subr.bf16.mxu0 0
      %6517 = vmatpush1.bf16.msra.mxu0 %v6425
      %6518 = vmatprep.subr.bf16.mxu0 0
      %6519 = vmatpush1.bf16.msra.mxu0 %v6424
      %6520 = vmatprep.subr.bf16.mxu0 0
      %6521 = vmatpush2.bf16.msra.mxu0 %v6439
      %6522 = vmatprep.subr.bf16.mxu0 0
      %6523 = vmatpush2.bf16.msra.mxu0 %v6438
      %6524 = vmatprep.subr.bf16.mxu0 0
      %6525 = vmatpush2.bf16.msra.mxu0 %v6437
      %6526 = vmatprep.subr.bf16.mxu0 0
      %6527 = vmatpush2.bf16.msra.mxu0 %v6436
      %6528 = vmatprep.subr.bf16.mxu0 0
      %6529 = vmatpush2.bf16.msra.mxu0 %v6435
      %6530 = vmatprep.subr.bf16.mxu0 0
      %6531 = vmatpush2.bf16.msra.mxu0 %v6434
      %6532 = vmatprep.subr.bf16.mxu0 0
      %6533 = vmatpush2.bf16.msra.mxu0 %v6433
      %6534 = vmatprep.subr.bf16.mxu0 0
      %6535 = vmatpush2.bf16.msra.mxu0 %v6432
      %6536 = vmatprep.mubr.bf16.mxu0 %v6202
      %6537 = vmatmul.mubr.bf16.gmra.mxu0 %v6190
      %v6538 = vpop.f32.mrf.mxu0
      %v6539 = vadd.f32 0.0, %v6538
      %v6540 = vpop.f32.mrf.mxu0
      %v6541 = vpop.f32.mrf.mxu0
      %v6542 = vadd.f32 0.0, %v6541
      %v6543 = vpop.f32.mrf.mxu0
      %6544 = vmatprep.mubr.bf16.mxu0 %v6244
      %6545 = vmatmul.mubr.bf16.gmra.mxu0 %v6241
      %v6546 = vpop.f32.mrf.mxu0
      %v6547 = vadd.f32 0.0, %v6546
      %v6548 = vpop.f32.mrf.mxu0
      %v6549 = vpop.f32.mrf.mxu0
      %v6550 = vpop.f32.mrf.mxu0
      %6551 = vdwg.mxu0
      %6552 = vmatprep.subr.bf16.mxu0 0
      %6553 = vmatpush1.bf16.msra.mxu0 %v6447
      %6554 = vmatprep.subr.bf16.mxu0 0
      %6555 = vmatpush1.bf16.msra.mxu0 %v6446
      %6556 = vmatprep.subr.bf16.mxu0 0
      %6557 = vmatpush1.bf16.msra.mxu0 %v6445
      %6558 = vmatprep.subr.bf16.mxu0 0
      %6559 = vmatpush1.bf16.msra.mxu0 %v6444
      %6560 = vmatprep.subr.bf16.mxu0 0
      %6561 = vmatpush1.bf16.msra.mxu0 %v6443
      %6562 = vmatprep.subr.bf16.mxu0 0
      %6563 = vmatpush1.bf16.msra.mxu0 %v6442
      %6564 = vmatprep.subr.bf16.mxu0 0
      %6565 = vmatpush1.bf16.msra.mxu0 %v6441
      %6566 = vmatprep.subr.bf16.mxu0 0
      %6567 = vmatpush1.bf16.msra.mxu0 %v6440
      %6568 = vmatprep.subr.bf16.mxu0 0
      %6569 = vmatpush2.bf16.msra.mxu0 %v6455
      %6570 = vmatprep.subr.bf16.mxu0 0
      %6571 = vmatpush2.bf16.msra.mxu0 %v6454
      %6572 = vmatprep.subr.bf16.mxu0 0
      %6573 = vmatpush2.bf16.msra.mxu0 %v6453
      %6574 = vmatprep.subr.bf16.mxu0 0
      %6575 = vmatpush2.bf16.msra.mxu0 %v6452
      %6576 = vmatprep.subr.bf16.mxu0 0
      %6577 = vmatpush2.bf16.msra.mxu0 %v6451
      %6578 = vmatprep.subr.bf16.mxu0 0
      %6579 = vmatpush2.bf16.msra.mxu0 %v6450
      %6580 = vmatprep.subr.bf16.mxu0 0
      %6581 = vmatpush2.bf16.msra.mxu0 %v6449
      %6582 = vmatprep.subr.bf16.mxu0 0
      %6583 = vmatpush2.bf16.msra.mxu0 %v6448
      %6584 = vmatprep.mubr.bf16.mxu0 %v6226
      %6585 = vmatmul.mubr.bf16.gmra.mxu0 %v6214
      %v6586 = vpop.f32.mrf.mxu0
      %v6587 = vadd.f32 %v6539, %v6586
      %v6588 = vpop.f32.mrf.mxu0
      %v6589 = vpop.f32.mrf.mxu0
      %v6590 = vadd.f32 %v6542, %v6589
      %v6591 = vpop.f32.mrf.mxu0
      %6592 = vmatprep.mubr.bf16.mxu0 %v6250
      %6593 = vmatmul.mubr.bf16.gmra.mxu0 %v6247
      %v6594 = vpop.f32.mrf.mxu0
      %v6595 = vadd.f32 %v6547, %v6594
      %v6596 = vpop.f32.mrf.mxu0
      %v6597 = vpop.f32.mrf.mxu0
      %v6598 = vpop.f32.mrf.mxu0
      %6599 = vdwg.mxu0
      %6600 = vmatprep.subr.bf16.mxu0 0
      %6601 = vmatpush1.bf16.msra.mxu0 %v6463
      %6602 = vmatprep.subr.bf16.mxu0 0
      %6603 = vmatpush1.bf16.msra.mxu0 %v6462
      %6604 = vmatprep.subr.bf16.mxu0 0
      %6605 = vmatpush1.bf16.msra.mxu0 %v6461
      %6606 = vmatprep.subr.bf16.mxu0 0
      %6607 = vmatpush1.bf16.msra.mxu0 %v6460
      %6608 = vmatprep.subr.bf16.mxu0 0
      %6609 = vmatpush1.bf16.msra.mxu0 %v6459
      %6610 = vmatprep.subr.bf16.mxu0 0
      %6611 = vmatpush1.bf16.msra.mxu0 %v6458
      %6612 = vmatprep.subr.bf16.mxu0 0
      %6613 = vmatpush1.bf16.msra.mxu0 %v6457
      %6614 = vmatprep.subr.bf16.mxu0 0
      %6615 = vmatpush1.bf16.msra.mxu0 %v6456
      %6616 = vmatprep.subr.bf16.mxu0 0
      %6617 = vmatpush2.bf16.msra.mxu0 0
      %6618 = vmatprep.subr.bf16.mxu0 0
      %6619 = vmatpush2.bf16.msra.mxu0 0
      %6620 = vmatprep.subr.bf16.mxu0 0
      %6621 = vmatpush2.bf16.msra.mxu0 0
      %6622 = vmatprep.subr.bf16.mxu0 0
      %6623 = vmatpush2.bf16.msra.mxu0 0
      %6624 = vmatprep.subr.bf16.mxu0 0
      %6625 = vmatpush2.bf16.msra.mxu0 0
      %6626 = vmatprep.subr.bf16.mxu0 0
      %6627 = vmatpush2.bf16.msra.mxu0 0
      %6628 = vmatprep.subr.bf16.mxu0 0
      %6629 = vmatpush2.bf16.msra.mxu0 0
      %6630 = vmatprep.subr.bf16.mxu0 0
      %6631 = vmatpush2.bf16.msra.mxu0 0
      %6632 = vmatprep.mubr.bf16.mxu0 0
      %6633 = vmatmul.mubr.bf16.gmra.mxu0 %v6238
      %v6634 = vpop.f32.mrf.mxu0
      %v6635 = vadd.f32 %v6587, %v6634
      %v6636 = vpop.f32.mrf.mxu0
      %v6637 = vpop.f32.mrf.mxu0
      %v6638 = vadd.f32 %v6590, %v6637
      %v6639 = vpop.f32.mrf.mxu0
      %6640 = vmatprep.mubr.bf16.mxu0 0
      %6641 = vmatmul.mubr.bf16.gmra.mxu0 %v6253
      %v6642 = vpop.f32.mrf.mxu0
      %v6643 = vadd.f32 %v6595, %v6642
      %v6644 = vpop.f32.mrf.mxu0
      %v6645 = vpop.f32.mrf.mxu0
      %v6646 = vpop.f32.mrf.mxu0
      %6647 = vdwg.mxu0
      %v6651 = vunpack.c.l.b16 %v5978
      %v6652 = vunpack.c.h.b16 %v5978
      %v6653 = vunpack.c.l.b16 %v5979
      %v6654 = vunpack.c.h.b16 %v5979
      %v6655 = vunpack.c.l.b16 %v5980
      %v6656 = vpack.c.b16 %v6651, %v6651
      %v6657 = vpack.c.b16 %v6652, %v6652
      %v6658 = vpack.c.b16 %v6653, %v6653
      %v6659 = vpack.c.b16 %v6654, %v6654
      %v6660 = vpack.c.b16 %v6655, %v6655
      %v6751 = vunpack.c.l.b16 %v5981
      %v6752 = vunpack.c.l.b16 %v5982
      %v6753 = vunpack.c.l.b16 %v5983
      %v6754 = vunpack.c.l.b16 %v5984
      %v6755 = vunpack.c.l.b16 %v5985
      %v6756 = vunpack.c.l.b16 %v5986
      %v6757 = vunpack.c.l.b16 %v5987
      %v6758 = vunpack.c.l.b16 %v5988
      %v6759 = vunpack.c.l.b16 %v5989
      %v6760 = vunpack.c.l.b16 %v5990
      %v6761 = vunpack.c.l.b16 %v5991
      %v6762 = vunpack.c.l.b16 %v5992
      %v6763 = vunpack.c.l.b16 %v5993
      %v6764 = vunpack.c.l.b16 %v5994
      %v6765 = vunpack.c.l.b16 %v5995
      %v6766 = vunpack.c.l.b16 %v5996
      %v6767 = vunpack.c.l.b16 %v5997
      %v6768 = vunpack.c.l.b16 %v5998
      %v6769 = vunpack.c.l.b16 %v5999
      %v6770 = vunpack.c.l.b16 %v6000
      %v6771 = vunpack.c.l.b16 %v6001
      %v6772 = vunpack.c.l.b16 %v6002
      %v6773 = vunpack.c.l.b16 %v6003
      %v6774 = vunpack.c.l.b16 %v6004
      %v6775 = vunpack.c.l.b16 %v6005
      %v6776 = vunpack.c.l.b16 %v6006
      %v6777 = vunpack.c.l.b16 %v6007
      %v6778 = vunpack.c.l.b16 %v6008
      %v6779 = vunpack.c.l.b16 %v6009
      %v6780 = vunpack.c.l.b16 %v6010
      %v6781 = vunpack.c.l.b16 %v6011
      %v6782 = vunpack.c.l.b16 %v6012
      %v6783 = vunpack.c.l.b16 %v6013
      %v6784 = vunpack.c.l.b16 %v6014
      %v6785 = vunpack.c.l.b16 %v6015
      %v6786 = vunpack.c.l.b16 %v6016
      %v6787 = vunpack.c.l.b16 %v6017
      %v6788 = vunpack.c.l.b16 %v6018
      %v6789 = vunpack.c.l.b16 %v6019
      %v6790 = vunpack.c.l.b16 %v6020
      %v6791 = vunpack.c.l.b16 %v6021
      %v6792 = vunpack.c.l.b16 %v6022
      %v6793 = vunpack.c.l.b16 %v6023
      %v6794 = vunpack.c.l.b16 %v6024
      %v6795 = vunpack.c.l.b16 %v6025
      %v6796 = vunpack.c.l.b16 %v6026
      %v6797 = vunpack.c.l.b16 %v6027
      %v6798 = vunpack.c.l.b16 %v6028
      %v6799 = vunpack.c.l.b16 %v6029
      %v6800 = vunpack.c.l.b16 %v6030
      %v6801 = vunpack.c.l.b16 %v6031
      %v6802 = vunpack.c.l.b16 %v6032
      %v6803 = vunpack.c.l.b16 %v6033
      %v6804 = vunpack.c.l.b16 %v6034
      %v6805 = vunpack.c.l.b16 %v6035
      %v6806 = vunpack.c.l.b16 %v6036
      %v6807 = vunpack.c.l.b16 %v6037
      %v6808 = vunpack.c.l.b16 %v6038
      %v6809 = vunpack.c.l.b16 %v6039
      %v6810 = vunpack.c.l.b16 %v6040
      %v6811 = vunpack.c.l.b16 %v6041
      %v6812 = vunpack.c.l.b16 %v6042
      %v6813 = vunpack.c.l.b16 %v6043
      %v6814 = vunpack.c.l.b16 %v6044
      %v6815 = vunpack.c.l.b16 %v6045
      %v6816 = vunpack.c.l.b16 %v6046
      %v6817 = vunpack.c.l.b16 %v6047
      %v6818 = vunpack.c.l.b16 %v6048
      %v6819 = vunpack.c.l.b16 %v6049
      %v6820 = vunpack.c.l.b16 %v6050
      %v6821 = vunpack.c.l.b16 %v6051
      %v6822 = vunpack.c.l.b16 %v6052
      %v6823 = vunpack.c.l.b16 %v6053
      %v6824 = vunpack.c.l.b16 %v6054
      %v6825 = vunpack.c.l.b16 %v6055
      %v6826 = vunpack.c.l.b16 %v6056
      %v6827 = vunpack.c.l.b16 %v6057
      %v6828 = vunpack.c.l.b16 %v6058
      %v6829 = vunpack.c.l.b16 %v6059
      %v6830 = vunpack.c.l.b16 %v6060
      %v6831 = vpack.c.b16 %v6752, %v6751
      %v6832 = vpack.c.b16 %v6754, %v6753
      %v6833 = vpack.c.b16 %v6756, %v6755
      %v6834 = vpack.c.b16 %v6758, %v6757
      %v6835 = vpack.c.b16 %v6760, %v6759
      %v6836 = vpack.c.b16 %v6762, %v6761
      %v6837 = vpack.c.b16 %v6764, %v6763
      %v6838 = vpack.c.b16 %v6766, %v6765
      %v6839 = vpack.c.b16 %v6768, %v6767
      %v6840 = vpack.c.b16 %v6770, %v6769
      %v6841 = vpack.c.b16 %v6772, %v6771
      %v6842 = vpack.c.b16 %v6774, %v6773
      %v6843 = vpack.c.b16 %v6776, %v6775
      %v6844 = vpack.c.b16 %v6778, %v6777
      %v6845 = vpack.c.b16 %v6780, %v6779
      %v6846 = vpack.c.b16 %v6782, %v6781
      %v6847 = vpack.c.b16 %v6784, %v6783
      %v6848 = vpack.c.b16 %v6786, %v6785
      %v6849 = vpack.c.b16 %v6788, %v6787
      %v6850 = vpack.c.b16 %v6790, %v6789
      %v6851 = vpack.c.b16 %v6792, %v6791
      %v6852 = vpack.c.b16 %v6794, %v6793
      %v6853 = vpack.c.b16 %v6796, %v6795
      %v6854 = vpack.c.b16 %v6798, %v6797
      %v6855 = vpack.c.b16 %v6800, %v6799
      %v6856 = vpack.c.b16 %v6802, %v6801
      %v6857 = vpack.c.b16 %v6804, %v6803
      %v6858 = vpack.c.b16 %v6806, %v6805
      %v6859 = vpack.c.b16 %v6808, %v6807
      %v6860 = vpack.c.b16 %v6810, %v6809
      %v6861 = vpack.c.b16 %v6812, %v6811
      %v6862 = vpack.c.b16 %v6814, %v6813
      %v6863 = vpack.c.b16 %v6816, %v6815
      %v6864 = vpack.c.b16 %v6818, %v6817
      %v6865 = vpack.c.b16 %v6820, %v6819
      %v6866 = vpack.c.b16 %v6822, %v6821
      %v6867 = vpack.c.b16 %v6824, %v6823
      %v6868 = vpack.c.b16 %v6826, %v6825
      %v6869 = vpack.c.b16 %v6828, %v6827
      %v6870 = vpack.c.b16 %v6830, %v6829
      %6911 = vmatprep.subr.bf16.mxu0 0
      %6912 = vmatpush1.bf16.msra.mxu0 %v6838
      %6913 = vmatprep.subr.bf16.mxu0 0
      %6914 = vmatpush1.bf16.msra.mxu0 %v6837
      %6915 = vmatprep.subr.bf16.mxu0 0
      %6916 = vmatpush1.bf16.msra.mxu0 %v6836
      %6917 = vmatprep.subr.bf16.mxu0 0
      %6918 = vmatpush1.bf16.msra.mxu0 %v6835
      %6919 = vmatprep.subr.bf16.mxu0 0
      %6920 = vmatpush1.bf16.msra.mxu0 %v6834
      %6921 = vmatprep.subr.bf16.mxu0 0
      %6922 = vmatpush1.bf16.msra.mxu0 %v6833
      %6923 = vmatprep.subr.bf16.mxu0 0
      %6924 = vmatpush1.bf16.msra.mxu0 %v6832
      %6925 = vmatprep.subr.bf16.mxu0 0
      %6926 = vmatpush1.bf16.msra.mxu0 %v6831
      %6927 = vmatprep.subr.bf16.mxu0 0
      %6928 = vmatpush2.bf16.msra.mxu0 %v6846
      %6929 = vmatprep.subr.bf16.mxu0 0
      %6930 = vmatpush2.bf16.msra.mxu0 %v6845
      %6931 = vmatprep.subr.bf16.mxu0 0
      %6932 = vmatpush2.bf16.msra.mxu0 %v6844
      %6933 = vmatprep.subr.bf16.mxu0 0
      %6934 = vmatpush2.bf16.msra.mxu0 %v6843
      %6935 = vmatprep.subr.bf16.mxu0 0
      %6936 = vmatpush2.bf16.msra.mxu0 %v6842
      %6937 = vmatprep.subr.bf16.mxu0 0
      %6938 = vmatpush2.bf16.msra.mxu0 %v6841
      %6939 = vmatprep.subr.bf16.mxu0 0
      %6940 = vmatpush2.bf16.msra.mxu0 %v6840
      %6941 = vmatprep.subr.bf16.mxu0 0
      %6942 = vmatpush2.bf16.msra.mxu0 %v6839
      %6943 = vmatprep.mubr.bf16.mxu0 %v6170
      %6944 = vmatmul.mubr.bf16.gmra.mxu0 %v6169
      %v6945 = vpop.f32.mrf.mxu0
      %v6946 = vadd.f32 %v6635, %v6945
      %v6947 = vpop.f32.mrf.mxu0
      %v6948 = vpop.f32.mrf.mxu0
      %v6949 = vadd.f32 %v6638, %v6948
      %v6950 = vpop.f32.mrf.mxu0
      %6951 = vmatprep.mubr.bf16.mxu0 %v6657
      %6952 = vmatmul.mubr.bf16.gmra.mxu0 %v6656
      %v6953 = vpop.f32.mrf.mxu0
      %v6954 = vadd.f32 %v6643, %v6953
      %v6955 = vpop.f32.mrf.mxu0
      %v6956 = vpop.f32.mrf.mxu0
      %v6957 = vpop.f32.mrf.mxu0
      %6958 = vdwg.mxu0
      %6959 = vmatprep.subr.bf16.mxu0 0
      %6960 = vmatpush1.bf16.msra.mxu0 %v6854
      %6961 = vmatprep.subr.bf16.mxu0 0
      %6962 = vmatpush1.bf16.msra.mxu0 %v6853
      %6963 = vmatprep.subr.bf16.mxu0 0
      %6964 = vmatpush1.bf16.msra.mxu0 %v6852
      %6965 = vmatprep.subr.bf16.mxu0 0
      %6966 = vmatpush1.bf16.msra.mxu0 %v6851
      %6967 = vmatprep.subr.bf16.mxu0 0
      %6968 = vmatpush1.bf16.msra.mxu0 %v6850
      %6969 = vmatprep.subr.bf16.mxu0 0
      %6970 = vmatpush1.bf16.msra.mxu0 %v6849
      %6971 = vmatprep.subr.bf16.mxu0 0
      %6972 = vmatpush1.bf16.msra.mxu0 %v6848
      %6973 = vmatprep.subr.bf16.mxu0 0
      %6974 = vmatpush1.bf16.msra.mxu0 %v6847
      %6975 = vmatprep.subr.bf16.mxu0 0
      %6976 = vmatpush2.bf16.msra.mxu0 %v6862
      %6977 = vmatprep.subr.bf16.mxu0 0
      %6978 = vmatpush2.bf16.msra.mxu0 %v6861
      %6979 = vmatprep.subr.bf16.mxu0 0
      %6980 = vmatpush2.bf16.msra.mxu0 %v6860
      %6981 = vmatprep.subr.bf16.mxu0 0
      %6982 = vmatpush2.bf16.msra.mxu0 %v6859
      %6983 = vmatprep.subr.bf16.mxu0 0
      %6984 = vmatpush2.bf16.msra.mxu0 %v6858
      %6985 = vmatprep.subr.bf16.mxu0 0
      %6986 = vmatpush2.bf16.msra.mxu0 %v6857
      %6987 = vmatprep.subr.bf16.mxu0 0
      %6988 = vmatpush2.bf16.msra.mxu0 %v6856
      %6989 = vmatprep.subr.bf16.mxu0 0
      %6990 = vmatpush2.bf16.msra.mxu0 %v6855
      %6991 = vmatprep.mubr.bf16.mxu0 %v6172
      %6992 = vmatmul.mubr.bf16.gmra.mxu0 %v6171
      %v6993 = vpop.f32.mrf.mxu0
      %v6994 = vadd.f32 %v6946, %v6993
      %v6995 = vpop.f32.mrf.mxu0
      %v6996 = vpop.f32.mrf.mxu0
      %v6997 = vadd.f32 %v6949, %v6996
      %v6998 = vpop.f32.mrf.mxu0
      %6999 = vmatprep.mubr.bf16.mxu0 %v6659
      %7000 = vmatmul.mubr.bf16.gmra.mxu0 %v6658
      %v7001 = vpop.f32.mrf.mxu0
      %v7002 = vadd.f32 %v6954, %v7001
      %v7003 = vpop.f32.mrf.mxu0
      %v7004 = vpop.f32.mrf.mxu0
      %v7005 = vpop.f32.mrf.mxu0
      %7006 = vdwg.mxu0
      %7007 = vmatprep.subr.bf16.mxu0 0
      %7008 = vmatpush1.bf16.msra.mxu0 %v6870
      %7009 = vmatprep.subr.bf16.mxu0 0
      %7010 = vmatpush1.bf16.msra.mxu0 %v6869
      %7011 = vmatprep.subr.bf16.mxu0 0
      %7012 = vmatpush1.bf16.msra.mxu0 %v6868
      %7013 = vmatprep.subr.bf16.mxu0 0
      %7014 = vmatpush1.bf16.msra.mxu0 %v6867
      %7015 = vmatprep.subr.bf16.mxu0 0
      %7016 = vmatpush1.bf16.msra.mxu0 %v6866
      %7017 = vmatprep.subr.bf16.mxu0 0
      %7018 = vmatpush1.bf16.msra.mxu0 %v6865
      %7019 = vmatprep.subr.bf16.mxu0 0
      %7020 = vmatpush1.bf16.msra.mxu0 %v6864
      %7021 = vmatprep.subr.bf16.mxu0 0
      %7022 = vmatpush1.bf16.msra.mxu0 %v6863
      %7023 = vmatprep.subr.bf16.mxu0 0
      %7024 = vmatpush2.bf16.msra.mxu0 0
      %7025 = vmatprep.subr.bf16.mxu0 0
      %7026 = vmatpush2.bf16.msra.mxu0 0
      %7027 = vmatprep.subr.bf16.mxu0 0
      %7028 = vmatpush2.bf16.msra.mxu0 0
      %7029 = vmatprep.subr.bf16.mxu0 0
      %7030 = vmatpush2.bf16.msra.mxu0 0
      %7031 = vmatprep.subr.bf16.mxu0 0
      %7032 = vmatpush2.bf16.msra.mxu0 0
      %7033 = vmatprep.subr.bf16.mxu0 0
      %7034 = vmatpush2.bf16.msra.mxu0 0
      %7035 = vmatprep.subr.bf16.mxu0 0
      %7036 = vmatpush2.bf16.msra.mxu0 0
      %7037 = vmatprep.subr.bf16.mxu0 0
      %7038 = vmatpush2.bf16.msra.mxu0 0
      %7039 = vmatprep.mubr.bf16.mxu0 0
      %7040 = vmatmul.mubr.bf16.gmra.mxu0 %v6173
      %v7041 = vpop.f32.mrf.mxu0
      %v7042 = vadd.f32 %v6994, %v7041
      %v7043 = vpop.f32.mrf.mxu0
      %v7044 = vpop.f32.mrf.mxu0
      %v7045 = vadd.f32 %v6997, %v7044
      %v7046 = vpop.f32.mrf.mxu0
      %7047 = vmatprep.mubr.bf16.mxu0 0
      %7048 = vmatmul.mubr.bf16.gmra.mxu0 %v6660
      %v7049 = vpop.f32.mrf.mxu0
      %v7050 = vadd.f32 %v7002, %v7049
      %v7051 = vpop.f32.mrf.mxu0
      %v7052 = vpop.f32.mrf.mxu0
      %v7053 = vpop.f32.mrf.mxu0
      %7054 = vdwg.mxu0
      %v7055 = vld [vmem:[#allocation4] sm:$0xee]
      %v7056 = vld [vmem:[#allocation4 + $0x8] sm:$0xee]
      %v7057 = vld [vmem:[#allocation4 + $0x10] sm:$0xe]
      %s7058 = scalar_lea.vmem %s57, 640
      %v7059 = vld [vmem:[%s7058] sm:$0xf]
      %v7060 = vld [vmem:[%s7058 + $0x4] sm:$0xf]
      %v7061 = vld [vmem:[%s7058 + $0x8] sm:$0xf]
      %v7062 = vld [vmem:[%s7058 + $0xc] sm:$0xf]
      %v7063 = vld [vmem:[%s7058 + $0x10] sm:$0xf]
      %v7064 = vld [vmem:[%s7058 + $0x14] sm:$0xf]
      %v7065 = vld [vmem:[%s7058 + $0x18] sm:$0xf]
      %v7066 = vld [vmem:[%s7058 + $0x1c] sm:$0xf]
      %v7067 = vld [vmem:[%s7058 + $0x20] sm:$0xf]
      %v7068 = vld [vmem:[%s7058 + $0x24] sm:$0xf]
      %v7069 = vld [vmem:[%s7058 + $0x28] sm:$0xf]
      %v7070 = vld [vmem:[%s7058 + $0x2c] sm:$0xf]
      %v7071 = vld [vmem:[%s7058 + $0x30] sm:$0xf]
      %v7072 = vld [vmem:[%s7058 + $0x34] sm:$0xf]
      %v7073 = vld [vmem:[%s7058 + $0x38] sm:$0xf]
      %v7074 = vld [vmem:[%s7058 + $0x3c] sm:$0xf]
      %v7075 = vld [vmem:[%s7058 + $0x40] sm:$0xf]
      %v7076 = vld [vmem:[%s7058 + $0x44] sm:$0xf]
      %v7077 = vld [vmem:[%s7058 + $0x48] sm:$0xf]
      %v7078 = vld [vmem:[%s7058 + $0x4c] sm:$0xf]
      %v7079 = vld [vmem:[%s7058 + $0x50] sm:$0xf]
      %v7080 = vld [vmem:[%s7058 + $0x54] sm:$0xf]
      %v7081 = vld [vmem:[%s7058 + $0x58] sm:$0xf]
      %v7082 = vld [vmem:[%s7058 + $0x5c] sm:$0xf]
      %v7083 = vld [vmem:[%s7058 + $0x60] sm:$0xf]
      %v7084 = vld [vmem:[%s7058 + $0x64] sm:$0xf]
      %v7085 = vld [vmem:[%s7058 + $0x68] sm:$0xf]
      %v7086 = vld [vmem:[%s7058 + $0x6c] sm:$0xf]
      %v7087 = vld [vmem:[%s7058 + $0x70] sm:$0xf]
      %v7088 = vld [vmem:[%s7058 + $0x74] sm:$0xf]
      %v7089 = vld [vmem:[%s7058 + $0x78] sm:$0xf]
      %v7090 = vld [vmem:[%s7058 + $0x7c] sm:$0xf]
      %v7091 = vld [vmem:[%s7058 + $0x80] sm:$0xf]
      %v7092 = vld [vmem:[%s7058 + $0x84] sm:$0xf]
      %v7093 = vld [vmem:[%s7058 + $0x88] sm:$0xf]
      %v7094 = vld [vmem:[%s7058 + $0x8c] sm:$0xf]
      %v7095 = vld [vmem:[%s7058 + $0x90] sm:$0xf]
      %v7096 = vld [vmem:[%s7058 + $0x94] sm:$0xf]
      %v7097 = vld [vmem:[%s7058 + $0x98] sm:$0xf]
      %v7098 = vld [vmem:[%s7058 + $0x9c] sm:$0xf]
      %v7099 = vld [vmem:[%s7058 + $0xa0] sm:$0xf]
      %v7100 = vld [vmem:[%s7058 + $0xa4] sm:$0xf]
      %v7101 = vld [vmem:[%s7058 + $0xa8] sm:$0xf]
      %v7102 = vld [vmem:[%s7058 + $0xac] sm:$0xf]
      %v7103 = vld [vmem:[%s7058 + $0xb0] sm:$0xf]
      %v7104 = vld [vmem:[%s7058 + $0xb4] sm:$0xf]
      %v7105 = vld [vmem:[%s7058 + $0xb8] sm:$0xf]
      %v7106 = vld [vmem:[%s7058 + $0xbc] sm:$0xf]
      %v7107 = vld [vmem:[%s7058 + $0xc0] sm:$0xf]
      %v7108 = vld [vmem:[%s7058 + $0xc4] sm:$0xf]
      %v7109 = vld [vmem:[%s7058 + $0xc8] sm:$0xf]
      %v7110 = vld [vmem:[%s7058 + $0xcc] sm:$0xf]
      %v7111 = vld [vmem:[%s7058 + $0xd0] sm:$0xf]
      %v7112 = vld [vmem:[%s7058 + $0xd4] sm:$0xf]
      %v7113 = vld [vmem:[%s7058 + $0xd8] sm:$0xf]
      %v7114 = vld [vmem:[%s7058 + $0xdc] sm:$0xf]
      %v7115 = vld [vmem:[%s7058 + $0xe0] sm:$0xf]
      %v7116 = vld [vmem:[%s7058 + $0xe4] sm:$0xf]
      %v7117 = vld [vmem:[%s7058 + $0xe8] sm:$0xf]
      %v7118 = vld [vmem:[%s7058 + $0xec] sm:$0xf]
      %v7119 = vld [vmem:[%s7058 + $0xf0] sm:$0xf]
      %v7120 = vld [vmem:[%s7058 + $0xf4] sm:$0xf]
      %v7121 = vld [vmem:[%s7058 + $0xf8] sm:$0xf]
      %v7122 = vld [vmem:[%s7058 + $0xfc] sm:$0xf]
      %v7123 = vld [vmem:[%s7058 + $0x100] sm:$0xf]
      %v7124 = vld [vmem:[%s7058 + $0x104] sm:$0xf]
      %v7125 = vld [vmem:[%s7058 + $0x108] sm:$0xf]
      %v7126 = vld [vmem:[%s7058 + $0x10c] sm:$0xf]
      %v7127 = vld [vmem:[%s7058 + $0x110] sm:$0xf]
      %v7128 = vld [vmem:[%s7058 + $0x114] sm:$0xf]
      %v7129 = vld [vmem:[%s7058 + $0x118] sm:$0xf]
      %v7130 = vld [vmem:[%s7058 + $0x11c] sm:$0xf]
      %v7131 = vld [vmem:[%s7058 + $0x120] sm:$0xf]
      %v7132 = vld [vmem:[%s7058 + $0x124] sm:$0xf]
      %v7133 = vld [vmem:[%s7058 + $0x128] sm:$0xf]
      %v7134 = vld [vmem:[%s7058 + $0x12c] sm:$0xf]
      %v7135 = vld [vmem:[%s7058 + $0x130] sm:$0xf]
      %v7136 = vld [vmem:[%s7058 + $0x134] sm:$0xf]
      %v7137 = vld [vmem:[%s7058 + $0x138] sm:$0xf]
      %v7138 = vld [vmem:[%s7058 + $0x13c] sm:$0xf]
      %v7142 = vunpack.c.l.b16 %v7055
      %v7143 = vunpack.c.h.b16 %v7055
      %v7144 = vunpack.c.l.b16 %v7056
      %v7145 = vunpack.c.h.b16 %v7056
      %v7146 = vunpack.c.l.b16 %v7057
      %v7147 = vpack.c.b16 %v6159, %v7142
      %v7148 = vpack.c.b16 %v6160, %v7143
      %v7149 = vpack.c.b16 %v6161, %v7144
      %v7150 = vpack.c.b16 %v6162, %v7145
      %v7151 = vpack.c.b16 %v6163, %v7146
      %v7152 = vrot.slane %v7147, 1
      %v7153 = vrot.slane %v6174, 1
      %v7154 = vsel %vm1296, %v7152, %v7153
      %v7155 = vrot.slane %v7148, 1
      %v7156 = vrot.slane %v6175, 1
      %v7157 = vsel %vm1296, %v7155, %v7156
      %v7158 = vrot.slane %v7149, 1
      %v7159 = vrot.slane %v6176, 1
      %v7160 = vsel %vm1296, %v7158, %v7159
      %v7161 = vrot.slane %v7150, 1
      %v7162 = vrot.slane %v6177, 1
      %v7163 = vsel %vm1296, %v7161, %v7162
      %v7164 = vrot.slane %v7151, 1
      %v7165 = vrot.slane %v6178, 1
      %v7166 = vsel %vm1296, %v7164, %v7165
      %v7257 = vunpack.c.l.b16 %v7059
      %v7258 = vunpack.c.l.b16 %v7060
      %v7259 = vunpack.c.l.b16 %v7061
      %v7260 = vunpack.c.l.b16 %v7062
      %v7261 = vunpack.c.l.b16 %v7063
      %v7262 = vunpack.c.l.b16 %v7064
      %v7263 = vunpack.c.l.b16 %v7065
      %v7264 = vunpack.c.l.b16 %v7066
      %v7265 = vunpack.c.l.b16 %v7067
      %v7266 = vunpack.c.l.b16 %v7068
      %v7267 = vunpack.c.l.b16 %v7069
      %v7268 = vunpack.c.l.b16 %v7070
      %v7269 = vunpack.c.l.b16 %v7071
      %v7270 = vunpack.c.l.b16 %v7072
      %v7271 = vunpack.c.l.b16 %v7073
      %v7272 = vunpack.c.l.b16 %v7074
      %v7273 = vunpack.c.l.b16 %v7075
      %v7274 = vunpack.c.l.b16 %v7076
      %v7275 = vunpack.c.l.b16 %v7077
      %v7276 = vunpack.c.l.b16 %v7078
      %v7277 = vunpack.c.l.b16 %v7079
      %v7278 = vunpack.c.l.b16 %v7080
      %v7279 = vunpack.c.l.b16 %v7081
      %v7280 = vunpack.c.l.b16 %v7082
      %v7281 = vunpack.c.l.b16 %v7083
      %v7282 = vunpack.c.l.b16 %v7084
      %v7283 = vunpack.c.l.b16 %v7085
      %v7284 = vunpack.c.l.b16 %v7086
      %v7285 = vunpack.c.l.b16 %v7087
      %v7286 = vunpack.c.l.b16 %v7088
      %v7287 = vunpack.c.l.b16 %v7089
      %v7288 = vunpack.c.l.b16 %v7090
      %v7289 = vunpack.c.l.b16 %v7091
      %v7290 = vunpack.c.l.b16 %v7092
      %v7291 = vunpack.c.l.b16 %v7093
      %v7292 = vunpack.c.l.b16 %v7094
      %v7293 = vunpack.c.l.b16 %v7095
      %v7294 = vunpack.c.l.b16 %v7096
      %v7295 = vunpack.c.l.b16 %v7097
      %v7296 = vunpack.c.l.b16 %v7098
      %v7297 = vunpack.c.l.b16 %v7099
      %v7298 = vunpack.c.l.b16 %v7100
      %v7299 = vunpack.c.l.b16 %v7101
      %v7300 = vunpack.c.l.b16 %v7102
      %v7301 = vunpack.c.l.b16 %v7103
      %v7302 = vunpack.c.l.b16 %v7104
      %v7303 = vunpack.c.l.b16 %v7105
      %v7304 = vunpack.c.l.b16 %v7106
      %v7305 = vunpack.c.l.b16 %v7107
      %v7306 = vunpack.c.l.b16 %v7108
      %v7307 = vunpack.c.l.b16 %v7109
      %v7308 = vunpack.c.l.b16 %v7110
      %v7309 = vunpack.c.l.b16 %v7111
      %v7310 = vunpack.c.l.b16 %v7112
      %v7311 = vunpack.c.l.b16 %v7113
      %v7312 = vunpack.c.l.b16 %v7114
      %v7313 = vunpack.c.l.b16 %v7115
      %v7314 = vunpack.c.l.b16 %v7116
      %v7315 = vunpack.c.l.b16 %v7117
      %v7316 = vunpack.c.l.b16 %v7118
      %v7317 = vunpack.c.l.b16 %v7119
      %v7318 = vunpack.c.l.b16 %v7120
      %v7319 = vunpack.c.l.b16 %v7121
      %v7320 = vunpack.c.l.b16 %v7122
      %v7321 = vunpack.c.l.b16 %v7123
      %v7322 = vunpack.c.l.b16 %v7124
      %v7323 = vunpack.c.l.b16 %v7125
      %v7324 = vunpack.c.l.b16 %v7126
      %v7325 = vunpack.c.l.b16 %v7127
      %v7326 = vunpack.c.l.b16 %v7128
      %v7327 = vunpack.c.l.b16 %v7129
      %v7328 = vunpack.c.l.b16 %v7130
      %v7329 = vunpack.c.l.b16 %v7131
      %v7330 = vunpack.c.l.b16 %v7132
      %v7331 = vunpack.c.l.b16 %v7133
      %v7332 = vunpack.c.l.b16 %v7134
      %v7333 = vunpack.c.l.b16 %v7135
      %v7334 = vunpack.c.l.b16 %v7136
      %v7335 = vunpack.c.l.b16 %v7137
      %v7336 = vunpack.c.l.b16 %v7138
      %v7337 = vpack.c.b16 %v7258, %v7257
      %v7338 = vpack.c.b16 %v7260, %v7259
      %v7339 = vpack.c.b16 %v7262, %v7261
      %v7340 = vpack.c.b16 %v7264, %v7263
      %v7341 = vpack.c.b16 %v7266, %v7265
      %v7342 = vpack.c.b16 %v7268, %v7267
      %v7343 = vpack.c.b16 %v7270, %v7269
      %v7344 = vpack.c.b16 %v7272, %v7271
      %v7345 = vpack.c.b16 %v7274, %v7273
      %v7346 = vpack.c.b16 %v7276, %v7275
      %v7347 = vpack.c.b16 %v7278, %v7277
      %v7348 = vpack.c.b16 %v7280, %v7279
      %v7349 = vpack.c.b16 %v7282, %v7281
      %v7350 = vpack.c.b16 %v7284, %v7283
      %v7351 = vpack.c.b16 %v7286, %v7285
      %v7352 = vpack.c.b16 %v7288, %v7287
      %v7353 = vpack.c.b16 %v7290, %v7289
      %v7354 = vpack.c.b16 %v7292, %v7291
      %v7355 = vpack.c.b16 %v7294, %v7293
      %v7356 = vpack.c.b16 %v7296, %v7295
      %v7357 = vpack.c.b16 %v7298, %v7297
      %v7358 = vpack.c.b16 %v7300, %v7299
      %v7359 = vpack.c.b16 %v7302, %v7301
      %v7360 = vpack.c.b16 %v7304, %v7303
      %v7361 = vpack.c.b16 %v7306, %v7305
      %v7362 = vpack.c.b16 %v7308, %v7307
      %v7363 = vpack.c.b16 %v7310, %v7309
      %v7364 = vpack.c.b16 %v7312, %v7311
      %v7365 = vpack.c.b16 %v7314, %v7313
      %v7366 = vpack.c.b16 %v7316, %v7315
      %v7367 = vpack.c.b16 %v7318, %v7317
      %v7368 = vpack.c.b16 %v7320, %v7319
      %v7369 = vpack.c.b16 %v7322, %v7321
      %v7370 = vpack.c.b16 %v7324, %v7323
      %v7371 = vpack.c.b16 %v7326, %v7325
      %v7372 = vpack.c.b16 %v7328, %v7327
      %v7373 = vpack.c.b16 %v7330, %v7329
      %v7374 = vpack.c.b16 %v7332, %v7331
      %v7375 = vpack.c.b16 %v7334, %v7333
      %v7376 = vpack.c.b16 %v7336, %v7335
      %7417 = vmatprep.subr.bf16.mxu0 0
      %7418 = vmatpush1.bf16.msra.mxu0 %v7344
      %7419 = vmatprep.subr.bf16.mxu0 0
      %7420 = vmatpush1.bf16.msra.mxu0 %v7343
      %7421 = vmatprep.subr.bf16.mxu0 0
      %7422 = vmatpush1.bf16.msra.mxu0 %v7342
      %7423 = vmatprep.subr.bf16.mxu0 0
      %7424 = vmatpush1.bf16.msra.mxu0 %v7341
      %7425 = vmatprep.subr.bf16.mxu0 0
      %7426 = vmatpush1.bf16.msra.mxu0 %v7340
      %7427 = vmatprep.subr.bf16.mxu0 0
      %7428 = vmatpush1.bf16.msra.mxu0 %v7339
      %7429 = vmatprep.subr.bf16.mxu0 0
      %7430 = vmatpush1.bf16.msra.mxu0 %v7338
      %7431 = vmatprep.subr.bf16.mxu0 0
      %7432 = vmatpush1.bf16.msra.mxu0 %v7337
      %7433 = vmatprep.subr.bf16.mxu0 0
      %7434 = vmatpush2.bf16.msra.mxu0 %v7352
      %7435 = vmatprep.subr.bf16.mxu0 0
      %7436 = vmatpush2.bf16.msra.mxu0 %v7351
      %7437 = vmatprep.subr.bf16.mxu0 0
      %7438 = vmatpush2.bf16.msra.mxu0 %v7350
      %7439 = vmatprep.subr.bf16.mxu0 0
      %7440 = vmatpush2.bf16.msra.mxu0 %v7349
      %7441 = vmatprep.subr.bf16.mxu0 0
      %7442 = vmatpush2.bf16.msra.mxu0 %v7348
      %7443 = vmatprep.subr.bf16.mxu0 0
      %7444 = vmatpush2.bf16.msra.mxu0 %v7347
      %7445 = vmatprep.subr.bf16.mxu0 0
      %7446 = vmatpush2.bf16.msra.mxu0 %v7346
      %7447 = vmatprep.subr.bf16.mxu0 0
      %7448 = vmatpush2.bf16.msra.mxu0 %v7345
      %7449 = vmatprep.mubr.bf16.mxu0 %v7157
      %7450 = vmatmul.mubr.bf16.gmra.mxu0 %v7154
      %v7451 = vpop.f32.mrf.mxu0
      %v7452 = vadd.f32 0.0, %v7451
      %v7453 = vpop.f32.mrf.mxu0
      %v7454 = vpop.f32.mrf.mxu0
      %v7455 = vadd.f32 0.0, %v7454
      %v7456 = vpop.f32.mrf.mxu0
      %7457 = vmatprep.mubr.bf16.mxu0 %v7156
      %7458 = vmatmul.mubr.bf16.gmra.mxu0 %v7153
      %v7459 = vpop.f32.mrf.mxu0
      %v7460 = vadd.f32 0.0, %v7459
      %v7461 = vpop.f32.mrf.mxu0
      %v7462 = vpop.f32.mrf.mxu0
      %v7463 = vpop.f32.mrf.mxu0
      %7464 = vdwg.mxu0
      %7465 = vmatprep.subr.bf16.mxu0 0
      %7466 = vmatpush1.bf16.msra.mxu0 %v7360
      %7467 = vmatprep.subr.bf16.mxu0 0
      %7468 = vmatpush1.bf16.msra.mxu0 %v7359
      %7469 = vmatprep.subr.bf16.mxu0 0
      %7470 = vmatpush1.bf16.msra.mxu0 %v7358
      %7471 = vmatprep.subr.bf16.mxu0 0
      %7472 = vmatpush1.bf16.msra.mxu0 %v7357
      %7473 = vmatprep.subr.bf16.mxu0 0
      %7474 = vmatpush1.bf16.msra.mxu0 %v7356
      %7475 = vmatprep.subr.bf16.mxu0 0
      %7476 = vmatpush1.bf16.msra.mxu0 %v7355
      %7477 = vmatprep.subr.bf16.mxu0 0
      %7478 = vmatpush1.bf16.msra.mxu0 %v7354
      %7479 = vmatprep.subr.bf16.mxu0 0
      %7480 = vmatpush1.bf16.msra.mxu0 %v7353
      %7481 = vmatprep.subr.bf16.mxu0 0
      %7482 = vmatpush2.bf16.msra.mxu0 %v7368
      %7483 = vmatprep.subr.bf16.mxu0 0
      %7484 = vmatpush2.bf16.msra.mxu0 %v7367
      %7485 = vmatprep.subr.bf16.mxu0 0
      %7486 = vmatpush2.bf16.msra.mxu0 %v7366
      %7487 = vmatprep.subr.bf16.mxu0 0
      %7488 = vmatpush2.bf16.msra.mxu0 %v7365
      %7489 = vmatprep.subr.bf16.mxu0 0
      %7490 = vmatpush2.bf16.msra.mxu0 %v7364
      %7491 = vmatprep.subr.bf16.mxu0 0
      %7492 = vmatpush2.bf16.msra.mxu0 %v7363
      %7493 = vmatprep.subr.bf16.mxu0 0
      %7494 = vmatpush2.bf16.msra.mxu0 %v7362
      %7495 = vmatprep.subr.bf16.mxu0 0
      %7496 = vmatpush2.bf16.msra.mxu0 %v7361
      %7497 = vmatprep.mubr.bf16.mxu0 %v7163
      %7498 = vmatmul.mubr.bf16.gmra.mxu0 %v7160
      %v7499 = vpop.f32.mrf.mxu0
      %v7500 = vadd.f32 %v7452, %v7499
      %v7501 = vpop.f32.mrf.mxu0
      %v7502 = vpop.f32.mrf.mxu0
      %v7503 = vadd.f32 %v7455, %v7502
      %v7504 = vpop.f32.mrf.mxu0
      %7505 = vmatprep.mubr.bf16.mxu0 %v7162
      %7506 = vmatmul.mubr.bf16.gmra.mxu0 %v7159
      %v7507 = vpop.f32.mrf.mxu0
      %v7508 = vadd.f32 %v7460, %v7507
      %v7509 = vpop.f32.mrf.mxu0
      %v7510 = vpop.f32.mrf.mxu0
      %v7511 = vpop.f32.mrf.mxu0
      %7512 = vdwg.mxu0
      %7513 = vmatprep.subr.bf16.mxu0 0
      %7514 = vmatpush1.bf16.msra.mxu0 %v7376
      %7515 = vmatprep.subr.bf16.mxu0 0
      %7516 = vmatpush1.bf16.msra.mxu0 %v7375
      %7517 = vmatprep.subr.bf16.mxu0 0
      %7518 = vmatpush1.bf16.msra.mxu0 %v7374
      %7519 = vmatprep.subr.bf16.mxu0 0
      %7520 = vmatpush1.bf16.msra.mxu0 %v7373
      %7521 = vmatprep.subr.bf16.mxu0 0
      %7522 = vmatpush1.bf16.msra.mxu0 %v7372
      %7523 = vmatprep.subr.bf16.mxu0 0
      %7524 = vmatpush1.bf16.msra.mxu0 %v7371
      %7525 = vmatprep.subr.bf16.mxu0 0
      %7526 = vmatpush1.bf16.msra.mxu0 %v7370
      %7527 = vmatprep.subr.bf16.mxu0 0
      %7528 = vmatpush1.bf16.msra.mxu0 %v7369
      %7529 = vmatprep.subr.bf16.mxu0 0
      %7530 = vmatpush2.bf16.msra.mxu0 0
      %7531 = vmatprep.subr.bf16.mxu0 0
      %7532 = vmatpush2.bf16.msra.mxu0 0
      %7533 = vmatprep.subr.bf16.mxu0 0
      %7534 = vmatpush2.bf16.msra.mxu0 0
      %7535 = vmatprep.subr.bf16.mxu0 0
      %7536 = vmatpush2.bf16.msra.mxu0 0
      %7537 = vmatprep.subr.bf16.mxu0 0
      %7538 = vmatpush2.bf16.msra.mxu0 0
      %7539 = vmatprep.subr.bf16.mxu0 0
      %7540 = vmatpush2.bf16.msra.mxu0 0
      %7541 = vmatprep.subr.bf16.mxu0 0
      %7542 = vmatpush2.bf16.msra.mxu0 0
      %7543 = vmatprep.subr.bf16.mxu0 0
      %7544 = vmatpush2.bf16.msra.mxu0 0
      %7545 = vmatprep.mubr.bf16.mxu0 0
      %7546 = vmatmul.mubr.bf16.gmra.mxu0 %v7166
      %v7547 = vpop.f32.mrf.mxu0
      %v7548 = vadd.f32 %v7500, %v7547
      %v7549 = vpop.f32.mrf.mxu0
      %v7550 = vpop.f32.mrf.mxu0
      %v7551 = vadd.f32 %v7503, %v7550
      %v7552 = vpop.f32.mrf.mxu0
      %7553 = vmatprep.mubr.bf16.mxu0 0
      %7554 = vmatmul.mubr.bf16.gmra.mxu0 %v7165
      %v7555 = vpop.f32.mrf.mxu0
      %v7556 = vadd.f32 %v7508, %v7555
      %v7557 = vpop.f32.mrf.mxu0
      %v7558 = vpop.f32.mrf.mxu0
      %v7559 = vpop.f32.mrf.mxu0
      %7560 = vdwg.mxu0
      %v7561 = vadd.f32 %v7042, %v7548
      %v7562 = vadd.f32 %v7045, %v7551
      %v7563 = vadd.f32 %v7050, %v7556
      %v7564 = vld [vmem:[%s59] sm:$0x1]
      %v7566 = vlaneseq
      %v7567 = vshrl.u32 %v7566, 7
      %v7568 = vsub.s32 0, %v7567
      %v7569 = vrot.slane %v7564, %v7568
      %v7571 = vadd.f32 %v7561, %v7569
      %v7572 = vadd.f32 %v7562, %v7569
      %v7573 = vadd.f32 %v7563, %v7569
      %v7574 = vsub.f32 0.0, %v7571
      %v7575 = vsub.f32 0.0, %v7572
      %v7576 = vsub.f32 0.0, %v7573
      %v7577 = vmul.f32 %v7574, 1.442695
      %v7578 = vpow.pop %v7577
      %v7579 = vmul.f32 %v7575, 1.442695
      %v7580 = vpow.pop %v7579
      %v7581 = vmul.f32 %v7576, 1.442695
      %v7582 = vpow.pop %v7581
      %v7583 = vadd.f32 %v7578, 1.0
      %v7584 = vadd.f32 %v7580, 1.0
      %v7585 = vadd.f32 %v7582, 1.0
      %v7586 = vrcp.pop %v7583
      %v7587 = vmul.f32 1.0, %v7586
      %v7588 = vrcp.pop %v7584
      %v7589 = vmul.f32 1.0, %v7588
      %v7590 = vrcp.pop %v7585
      %v7591 = vmul.f32 1.0, %v7590
      %7592 = vst [vmem:[%s930] sm:$0xff] %v7587
      %7593 = vst [vmem:[%s930 + $0x8] sm:$0xff] %v7589
      %7594 = vst [vmem:[%s930 + $0x10] sm:$0xf] %v7591
      %p7595 = scmp.lt.s32.totalorder %s72, 1
      %s7596 = scalar_select %p7595, %s72, 1
      %s7597 = smul.addr %s7596, 3
      %s7598 = smul.addr %s7597, 8
      %s7599 = scalar_lea.vmem %s61, %s7598
      // Predicated region
      $region141: #{_lambda_.1} parent=139 // pred_check
        %p7600 = pneg %p725
      $region142: #{_lambda_.1} parent=139 // pred_check_branch
        %7602 = sbr.rel (%p7600) target = $region144
      $region143: #{_lambda_.1} parent=139 // pred_region
        _
      $region144: #{_lambda_.1} parent=139 // pred_fallthru
        _
    $region140: #{_lambda_.1} parent=5 // pred_fallthru
      _
    %p7603 = scmp.le.s32.totalorder 2, %s67
    // Predicated region
    $region145: #{_lambda_.1} parent=5 // pred_check
      %p7604 = pneg %p7603
    $region146: #{_lambda_.1} parent=5 // pred_check_branch
      %7606 = sbr.rel (%p7604) target = $region148
    $region147: #{_lambda_.1} parent=5 // pred_region
      %s7607 = ssub.s32 %s67, 2
      // Predicated region
      $region149: #{_lambda_.1} parent=147 // pred_check
        %p7608 = pneg %p731
      $region150: #{_lambda_.1} parent=147 // pred_check_branch
        %7610 = sbr.rel (%p7608) target = $region152
      $region151: #{_lambda_.1} parent=147 // pred_region
        %p7611 = scmp.lt.s32.totalorder %s73, 1
        %s7612 = scalar_select %p7611, %s73, 1
        %s7613 = smul.addr %s7612, 3
        %s7614 = smul.addr %s7613, 8
        %s7615 = scalar_lea.vmem %s61, %s7614
      $region152: #{_lambda_.1} parent=147 // pred_fallthru
        _
    $region148: #{_lambda_.1} parent=5 // pred_fallthru
      _
  $region6: #{_lambda_.1} parent=0 // loop_footer
    %s71 = sadd.s32 1, %s67
  $region7: #{_lambda_.1} parent=0 // loop_footer_branch
    %66 = sbr.rel target = $region3
  $region8: #{_lambda_.1} parent=0 // loop_exit
    _

</llo_original>
